<compile_context>
chip_gen: v7x
topology: tpu7x:2x2x1
jax: 0.10.0
libtpu: 0.0.40
codegen_flags: <defaults>
</compile_context>

<pallas_src>
import jax
import jax.numpy as jnp
from jax.experimental import pallas as pl
from jax.experimental.pallas import tpu as pltpu

CONV_OUT = 26                      # 28 - 3 + 1
POOL_OUT = 8                       # floor(26 / 3)
FEAT = 3 * POOL_OUT * POOL_OUT     # 192
NUM_CLASSES = 10


def _pick_tile(batch):
    """Pick (TB, ROWS): biggest batch tile that still gives >=2 grid steps
    (v7x two-TC sharding) while keeping live vregs ~28 via ROWS = 512 // TB."""
    if batch >= 1024:
        tb = 512
    elif batch >= 512:
        tb = 256
    else:
        tb = 128
    rows = 512 // tb               # 128->4, 256->2, 512->1 pool rows per pass
    return tb, rows


def _make_kernel(tb, rows):
    """Build the fused kernel for one batch tile of `tb` samples (lane axis).

    x3_ref : (9, 9, 9, tb) VMEM  stride-3 phase decomposition, batch on lanes
    cw_ref : (3, 9)        SMEM  conv weights, index [c, a*3+b]
    cb_ref : (3,)          SMEM  conv bias
    fcw_ref: (10, 192)     VMEM  fc weight (torch layout: feature = c*64+i*8+j)
    fcb_ref: (10, 1)       VMEM  fc bias
    out_ref: (10, tb)      VMEM  log-probabilities (class x batch)
    feat_ref: (192, tb)    VMEM  scratch for the pooled/relu'd features
    """

    def convnet_fused_kernel(x3_ref, cw_ref, cb_ref, fcw_ref, fcb_ref,
                             out_ref, feat_ref):
        # ---- conv(1->3, k=3) + maxpool(3,3) + relu, batch on lanes ----------
        for h in range(POOL_OUT // rows):      # `rows` pool rows per pass
            pooled = [None, None, None]
            for u in range(3):                 # pool-window row offset
                for v in range(3):             # pool-window col offset
                    accs = [None, None, None]
                    for a in range(3):         # conv tap row
                        for b in range(3):     # conv tap col
                            t, s = u + a, v + b
                            # patch[i, j, :] = x[3*(h*rows+i) + t, 3*j + s, :]
                            patch = x3_ref[
                                (t % 3) * 3 + (s % 3),
                                t // 3 + h * rows: t // 3 + h * rows + rows,
                                s // 3: s // 3 + POOL_OUT, :]  # (rows, 8, tb)
                            for c in range(3):
                                term = cw_ref[c, a * 3 + b] * patch
                                accs[c] = (term if accs[c] is None
                                           else accs[c] + term)
                    for c in range(3):
                        pooled[c] = accs[c] if pooled[c] is None \
                            else jnp.maximum(pooled[c], accs[c])
            # bias (hoisted out of the tap loop: max(x)+b == max(x+b) for a
            # per-channel constant) + ReLU, stage features in VMEM.
            for c in range(3):
                feat_c = jnp.maximum(pooled[c] + cb_ref[c], 0.0)
                row0 = c * 64 + h * rows * POOL_OUT
                feat_ref[row0: row0 + rows * POOL_OUT, :] = (
                    feat_c.reshape(rows * POOL_OUT, tb))

        # ---- fc(192 -> 10) on the MXU + log_softmax over the class axis ----
        logits = jnp.dot(fcw_ref[...], feat_ref[...],
                         preferred_element_type=jnp.float32) + fcb_ref[...]
        m = jnp.max(logits, axis=0, keepdims=True)
        shifted = logits - m
        lse = jnp.log(jnp.sum(jnp.exp(shifted), axis=0, keepdims=True))
        out_ref[...] = shifted - lse                           # (10, tb)

    return convnet_fused_kernel


def _convnet_forward_impl(x, conv_w, conv_b, fc_w, fc_b):
    """x: (B, 1, 28, 28) float32 NCHW. Returns (B, 10) log-probabilities."""
    B = x.shape[0]
    assert x.shape == (B, 1, 28, 28)

    tb, rows = _pick_tile(B)

    # ---- glue: stride-3 space-to-depth, batch moved to the lane axis -------
    # Only input rows/cols 0..26 are ever read by conv+pool, so crop to 27x27.
    xc = x[:, 0, :27, :27].astype(jnp.float32)                 # (B, 27, 27)
    x3 = xc.reshape(B, 9, 3, 9, 3).transpose(2, 4, 1, 3, 0)    # (r, s, i, j, B)
    x3 = x3.reshape(9, 9, 9, B)

    n_tiles = (B + tb - 1) // tb
    b_pad = n_tiles * tb
    if b_pad != B:
        x3 = jnp.pad(x3, ((0, 0), (0, 0), (0, 0), (0, b_pad - B)))

    conv_w2d = conv_w.reshape(3, 9).astype(jnp.float32)        # [c, a*3+b]
    conv_b1d = conv_b.astype(jnp.float32)
    fc_w2d = fc_w.astype(jnp.float32)                          # (10, 192)
    fc_b2d = fc_b.reshape(NUM_CLASSES, 1).astype(jnp.float32)

    out = pl.pallas_call(
        _make_kernel(tb, rows),
        out_shape=jax.ShapeDtypeStruct((NUM_CLASSES, b_pad), jnp.float32),
        grid=(n_tiles,),
        in_specs=[
            pl.BlockSpec((9, 9, 9, tb), lambda t: (0, 0, 0, t)),
            pl.BlockSpec(memory_space=pltpu.MemorySpace.SMEM),
            pl.BlockSpec(memory_space=pltpu.MemorySpace.SMEM),
            pl.BlockSpec((NUM_CLASSES, FEAT), lambda t: (0, 0)),
            pl.BlockSpec((NUM_CLASSES, 1), lambda t: (0, 0)),
        ],
        out_specs=pl.BlockSpec((NUM_CLASSES, tb), lambda t: (0, t)),
        scratch_shapes=[pltpu.VMEM((FEAT, tb), jnp.float32)],
        compiler_params=pltpu.CompilerParams(
            dimension_semantics=("parallel",)),
    )(x3, conv_w2d, conv_b1d, fc_w2d, fc_b2d)

    # (10, b_pad) -> (B, 10); padded lanes hold junk and are dropped here.
    return out[:, :B].T


convnet_forward = jax.jit(_convnet_forward_impl)


def reference_forward(x, conv_w, conv_b, fc_w, fc_b):
    """Pure-JAX reference mirroring the PyTorch forward."""
    y = jax.lax.conv_general_dilated(
        x, conv_w, window_strides=(1, 1), padding="VALID",
        dimension_numbers=("NCHW", "OIHW", "NCHW"))
    y = y + conv_b[None, :, None, None]
    y = jax.lax.reduce_window(y, -jnp.inf, jax.lax.max,
                              (1, 1, 3, 3), (1, 1, 3, 3), "VALID")
    y = jnp.maximum(y, 0.0)
    f = y.reshape(-1, FEAT)
    logits = f @ fc_w.T + fc_b
    return jax.nn.log_softmax(logits, axis=1)


if __name__ == "__main__":
    key = jax.random.PRNGKey(0)
    k_x, k_cw, k_cb, k_fw, k_fb = jax.random.split(key, 5)

    B = 2
    # 28x28 is forced by the module: view(-1, 192) with 3 channels -> 8x8 pool.
    x = jax.random.normal(k_x, (B, 1, 28, 28), dtype=jnp.float32)

    # Deterministic parameter init (PyTorch-style uniform bounds).
    cb = 1.0 / jnp.sqrt(1.0 * 3 * 3)
    conv_w = jax.random.uniform(k_cw, (3, 1, 3, 3), jnp.float32, -cb, cb)
    conv_b = jax.random.uniform(k_cb, (3,), jnp.float32, -cb, cb)
    fb = 1.0 / jnp.sqrt(float(FEAT))
    fc_w = jax.random.uniform(k_fw, (NUM_CLASSES, FEAT), jnp.float32, -fb, fb)
    fc_b = jax.random.uniform(k_fb, (NUM_CLASSES,), jnp.float32, -fb, fb)

    out = convnet_forward(x, conv_w, conv_b, fc_w, fc_b)
    out = jax.block_until_ready(out)

    ref = reference_forward(x, conv_w, conv_b, fc_w, fc_b)
    assert out.shape == (B, NUM_CLASSES)
    assert jnp.allclose(out, ref, atol=1e-4, rtol=1e-4), (
        f"max abs diff {jnp.max(jnp.abs(out - ref))}")

    print("KERNEL_OK")
</pallas_src>

<mosaic_0001>
module attributes {stable_mosaic.version = 11 : i64} {
  func.func @convnet_fused_kernel(%arg0: i32, %arg1: memref<9x9x9x128xf32, #tpu.memory_space<vmem>>, %arg2: memref<3x9xf32, #tpu.memory_space<smem>>, %arg3: memref<3xf32, #tpu.memory_space<smem>>, %arg4: memref<10x192xf32, #tpu.memory_space<vmem>>, %arg5: memref<10x1xf32, #tpu.memory_space<vmem>>, %arg6: memref<10x128xf32, #tpu.memory_space<vmem>>, %arg7: memref<192x128xf32, #tpu.memory_space<vmem>>) attributes {dimension_semantics = [#tpu.dimension_semantics<parallel>], iteration_bounds = array<i64: 1>, scalar_prefetch = 0 : i64, scratch_operands = 1 : i64, tpu.core_type = #tpu.core_type<tc>, window_params = [{transform_indices = @transform_0, window_bounds = array<i64: 9, 9, 9, 128>}, {transform_indices = @transform_1, window_bounds = array<i64: 3, 9>}, {transform_indices = @transform_2, window_bounds = array<i64: 3>}, {pipeline_mode = #tpu.pipeline_mode<synchronous>, transform_indices = @transform_3, window_bounds = array<i64: 10, 192>}, {pipeline_mode = #tpu.pipeline_mode<synchronous>, transform_indices = @transform_4, window_bounds = array<i64: 10, 1>}, {transform_indices = @transform_5, window_bounds = array<i64: 10, 128>}]} {
    %c0 = arith.constant 0 : index
    %c0_0 = arith.constant 0 : index
    %c0_1 = arith.constant 0 : index
    %c0_2 = arith.constant 0 : index
    %0 = vector.load %arg1[%c0, %c0_0, %c0_1, %c0_2] : memref<9x9x9x128xf32, #tpu.memory_space<vmem>>, vector<1x4x8x128xf32>
    %1 = vector.shape_cast %0 : vector<1x4x8x128xf32> to vector<4x8x128xf32>
    %c0_3 = arith.constant 0 : index
    %c0_4 = arith.constant 0 : index
    %2 = memref.load %arg2[%c0_3, %c0_4] : memref<3x9xf32, #tpu.memory_space<smem>>
    %3 = vector.broadcast %2 : f32 to vector<4x8x128xf32>
    %4 = arith.mulf %3, %1 : vector<4x8x128xf32>
    %c1 = arith.constant 1 : index
    %c0_5 = arith.constant 0 : index
    %5 = memref.load %arg2[%c1, %c0_5] : memref<3x9xf32, #tpu.memory_space<smem>>
    %6 = vector.broadcast %5 : f32 to vector<4x8x128xf32>
    %7 = arith.mulf %6, %1 : vector<4x8x128xf32>
    %c2 = arith.constant 2 : index
    %c0_6 = arith.constant 0 : index
    %8 = memref.load %arg2[%c2, %c0_6] : memref<3x9xf32, #tpu.memory_space<smem>>
    %9 = vector.broadcast %8 : f32 to vector<4x8x128xf32>
    %10 = arith.mulf %9, %1 : vector<4x8x128xf32>
    %c1_7 = arith.constant 1 : index
    %c0_8 = arith.constant 0 : index
    %c0_9 = arith.constant 0 : index
    %c0_10 = arith.constant 0 : index
    %11 = vector.load %arg1[%c1_7, %c0_8, %c0_9, %c0_10] : memref<9x9x9x128xf32, #tpu.memory_space<vmem>>, vector<1x4x8x128xf32>
    %12 = vector.shape_cast %11 : vector<1x4x8x128xf32> to vector<4x8x128xf32>
    %c0_11 = arith.constant 0 : index
    %c1_12 = arith.constant 1 : index
    %13 = memref.load %arg2[%c0_11, %c1_12] : memref<3x9xf32, #tpu.memory_space<smem>>
    %14 = vector.broadcast %13 : f32 to vector<4x8x128xf32>
    %15 = arith.mulf %14, %12 : vector<4x8x128xf32>
    %16 = arith.addf %4, %15 : vector<4x8x128xf32>
    %c1_13 = arith.constant 1 : index
    %c1_14 = arith.constant 1 : index
    %17 = memref.load %arg2[%c1_13, %c1_14] : memref<3x9xf32, #tpu.memory_space<smem>>
    %18 = vector.broadcast %17 : f32 to vector<4x8x128xf32>
    %19 = arith.mulf %18, %12 : vector<4x8x128xf32>
    %20 = arith.addf %7, %19 : vector<4x8x128xf32>
    %c2_15 = arith.constant 2 : index
    %c1_16 = arith.constant 1 : index
    %21 = memref.load %arg2[%c2_15, %c1_16] : memref<3x9xf32, #tpu.memory_space<smem>>
    %22 = vector.broadcast %21 : f32 to vector<4x8x128xf32>
    %23 = arith.mulf %22, %12 : vector<4x8x128xf32>
    %24 = arith.addf %10, %23 : vector<4x8x128xf32>
    %c2_17 = arith.constant 2 : index
    %c0_18 = arith.constant 0 : index
    %c0_19 = arith.constant 0 : index
    %c0_20 = arith.constant 0 : index
    %25 = vector.load %arg1[%c2_17, %c0_18, %c0_19, %c0_20] : memref<9x9x9x128xf32, #tpu.memory_space<vmem>>, vector<1x4x8x128xf32>
    %26 = vector.shape_cast %25 : vector<1x4x8x128xf32> to vector<4x8x128xf32>
    %c0_21 = arith.constant 0 : index
    %c2_22 = arith.constant 2 : index
    %27 = memref.load %arg2[%c0_21, %c2_22] : memref<3x9xf32, #tpu.memory_space<smem>>
    %28 = vector.broadcast %27 : f32 to vector<4x8x128xf32>
    %29 = arith.mulf %28, %26 : vector<4x8x128xf32>
    %30 = arith.addf %16, %29 : vector<4x8x128xf32>
    %c1_23 = arith.constant 1 : index
    %c2_24 = arith.constant 2 : index
    %31 = memref.load %arg2[%c1_23, %c2_24] : memref<3x9xf32, #tpu.memory_space<smem>>
    %32 = vector.broadcast %31 : f32 to vector<4x8x128xf32>
    %33 = arith.mulf %32, %26 : vector<4x8x128xf32>
    %34 = arith.addf %20, %33 : vector<4x8x128xf32>
    %c2_25 = arith.constant 2 : index
    %c2_26 = arith.constant 2 : index
    %35 = memref.load %arg2[%c2_25, %c2_26] : memref<3x9xf32, #tpu.memory_space<smem>>
    %36 = vector.broadcast %35 : f32 to vector<4x8x128xf32>
    %37 = arith.mulf %36, %26 : vector<4x8x128xf32>
    %38 = arith.addf %24, %37 : vector<4x8x128xf32>
    %c3 = arith.constant 3 : index
    %c0_27 = arith.constant 0 : index
    %c0_28 = arith.constant 0 : index
    %c0_29 = arith.constant 0 : index
    %39 = vector.load %arg1[%c3, %c0_27, %c0_28, %c0_29] : memref<9x9x9x128xf32, #tpu.memory_space<vmem>>, vector<1x4x8x128xf32>
    %40 = vector.shape_cast %39 : vector<1x4x8x128xf32> to vector<4x8x128xf32>
    %c0_30 = arith.constant 0 : index
    %c3_31 = arith.constant 3 : index
    %41 = memref.load %arg2[%c0_30, %c3_31] : memref<3x9xf32, #tpu.memory_space<smem>>
    %42 = vector.broadcast %41 : f32 to vector<4x8x128xf32>
    %43 = arith.mulf %42, %40 : vector<4x8x128xf32>
    %44 = arith.addf %30, %43 : vector<4x8x128xf32>
    %c1_32 = arith.constant 1 : index
    %c3_33 = arith.constant 3 : index
    %45 = memref.load %arg2[%c1_32, %c3_33] : memref<3x9xf32, #tpu.memory_space<smem>>
    %46 = vector.broadcast %45 : f32 to vector<4x8x128xf32>
    %47 = arith.mulf %46, %40 : vector<4x8x128xf32>
    %48 = arith.addf %34, %47 : vector<4x8x128xf32>
    %c2_34 = arith.constant 2 : index
    %c3_35 = arith.constant 3 : index
    %49 = memref.load %arg2[%c2_34, %c3_35] : memref<3x9xf32, #tpu.memory_space<smem>>
    %50 = vector.broadcast %49 : f32 to vector<4x8x128xf32>
    %51 = arith.mulf %50, %40 : vector<4x8x128xf32>
    %52 = arith.addf %38, %51 : vector<4x8x128xf32>
    %c4 = arith.constant 4 : index
    %c0_36 = arith.constant 0 : index
    %c0_37 = arith.constant 0 : index
    %c0_38 = arith.constant 0 : index
    %53 = vector.load %arg1[%c4, %c0_36, %c0_37, %c0_38] : memref<9x9x9x128xf32, #tpu.memory_space<vmem>>, vector<1x4x8x128xf32>
    %54 = vector.shape_cast %53 : vector<1x4x8x128xf32> to vector<4x8x128xf32>
    %c0_39 = arith.constant 0 : index
    %c4_40 = arith.constant 4 : index
    %55 = memref.load %arg2[%c0_39, %c4_40] : memref<3x9xf32, #tpu.memory_space<smem>>
    %56 = vector.broadcast %55 : f32 to vector<4x8x128xf32>
    %57 = arith.mulf %56, %54 : vector<4x8x128xf32>
    %58 = arith.addf %44, %57 : vector<4x8x128xf32>
    %c1_41 = arith.constant 1 : index
    %c4_42 = arith.constant 4 : index
    %59 = memref.load %arg2[%c1_41, %c4_42] : memref<3x9xf32, #tpu.memory_space<smem>>
    %60 = vector.broadcast %59 : f32 to vector<4x8x128xf32>
    %61 = arith.mulf %60, %54 : vector<4x8x128xf32>
    %62 = arith.addf %48, %61 : vector<4x8x128xf32>
    %c2_43 = arith.constant 2 : index
    %c4_44 = arith.constant 4 : index
    %63 = memref.load %arg2[%c2_43, %c4_44] : memref<3x9xf32, #tpu.memory_space<smem>>
    %64 = vector.broadcast %63 : f32 to vector<4x8x128xf32>
    %65 = arith.mulf %64, %54 : vector<4x8x128xf32>
    %66 = arith.addf %52, %65 : vector<4x8x128xf32>
    %c5 = arith.constant 5 : index
    %c0_45 = arith.constant 0 : index
    %c0_46 = arith.constant 0 : index
    %c0_47 = arith.constant 0 : index
    %67 = vector.load %arg1[%c5, %c0_45, %c0_46, %c0_47] : memref<9x9x9x128xf32, #tpu.memory_space<vmem>>, vector<1x4x8x128xf32>
    %68 = vector.shape_cast %67 : vector<1x4x8x128xf32> to vector<4x8x128xf32>
    %c0_48 = arith.constant 0 : index
    %c5_49 = arith.constant 5 : index
    %69 = memref.load %arg2[%c0_48, %c5_49] : memref<3x9xf32, #tpu.memory_space<smem>>
    %70 = vector.broadcast %69 : f32 to vector<4x8x128xf32>
    %71 = arith.mulf %70, %68 : vector<4x8x128xf32>
    %72 = arith.addf %58, %71 : vector<4x8x128xf32>
    %c1_50 = arith.constant 1 : index
    %c5_51 = arith.constant 5 : index
    %73 = memref.load %arg2[%c1_50, %c5_51] : memref<3x9xf32, #tpu.memory_space<smem>>
    %74 = vector.broadcast %73 : f32 to vector<4x8x128xf32>
    %75 = arith.mulf %74, %68 : vector<4x8x128xf32>
    %76 = arith.addf %62, %75 : vector<4x8x128xf32>
    %c2_52 = arith.constant 2 : index
    %c5_53 = arith.constant 5 : index
    %77 = memref.load %arg2[%c2_52, %c5_53] : memref<3x9xf32, #tpu.memory_space<smem>>
    %78 = vector.broadcast %77 : f32 to vector<4x8x128xf32>
    %79 = arith.mulf %78, %68 : vector<4x8x128xf32>
    %80 = arith.addf %66, %79 : vector<4x8x128xf32>
    %c6 = arith.constant 6 : index
    %c0_54 = arith.constant 0 : index
    %c0_55 = arith.constant 0 : index
    %c0_56 = arith.constant 0 : index
    %81 = vector.load %arg1[%c6, %c0_54, %c0_55, %c0_56] : memref<9x9x9x128xf32, #tpu.memory_space<vmem>>, vector<1x4x8x128xf32>
    %82 = vector.shape_cast %81 : vector<1x4x8x128xf32> to vector<4x8x128xf32>
    %c0_57 = arith.constant 0 : index
    %c6_58 = arith.constant 6 : index
    %83 = memref.load %arg2[%c0_57, %c6_58] : memref<3x9xf32, #tpu.memory_space<smem>>
    %84 = vector.broadcast %83 : f32 to vector<4x8x128xf32>
    %85 = arith.mulf %84, %82 : vector<4x8x128xf32>
    %86 = arith.addf %72, %85 : vector<4x8x128xf32>
    %c1_59 = arith.constant 1 : index
    %c6_60 = arith.constant 6 : index
    %87 = memref.load %arg2[%c1_59, %c6_60] : memref<3x9xf32, #tpu.memory_space<smem>>
    %88 = vector.broadcast %87 : f32 to vector<4x8x128xf32>
    %89 = arith.mulf %88, %82 : vector<4x8x128xf32>
    %90 = arith.addf %76, %89 : vector<4x8x128xf32>
    %c2_61 = arith.constant 2 : index
    %c6_62 = arith.constant 6 : index
    %91 = memref.load %arg2[%c2_61, %c6_62] : memref<3x9xf32, #tpu.memory_space<smem>>
    %92 = vector.broadcast %91 : f32 to vector<4x8x128xf32>
    %93 = arith.mulf %92, %82 : vector<4x8x128xf32>
    %94 = arith.addf %80, %93 : vector<4x8x128xf32>
    %c7 = arith.constant 7 : index
    %c0_63 = arith.constant 0 : index
    %c0_64 = arith.constant 0 : index
    %c0_65 = arith.constant 0 : index
    %95 = vector.load %arg1[%c7, %c0_63, %c0_64, %c0_65] : memref<9x9x9x128xf32, #tpu.memory_space<vmem>>, vector<1x4x8x128xf32>
    %96 = vector.shape_cast %95 : vector<1x4x8x128xf32> to vector<4x8x128xf32>
    %c0_66 = arith.constant 0 : index
    %c7_67 = arith.constant 7 : index
    %97 = memref.load %arg2[%c0_66, %c7_67] : memref<3x9xf32, #tpu.memory_space<smem>>
    %98 = vector.broadcast %97 : f32 to vector<4x8x128xf32>
    %99 = arith.mulf %98, %96 : vector<4x8x128xf32>
    %100 = arith.addf %86, %99 : vector<4x8x128xf32>
    %c1_68 = arith.constant 1 : index
    %c7_69 = arith.constant 7 : index
    %101 = memref.load %arg2[%c1_68, %c7_69] : memref<3x9xf32, #tpu.memory_space<smem>>
    %102 = vector.broadcast %101 : f32 to vector<4x8x128xf32>
    %103 = arith.mulf %102, %96 : vector<4x8x128xf32>
    %104 = arith.addf %90, %103 : vector<4x8x128xf32>
    %c2_70 = arith.constant 2 : index
    %c7_71 = arith.constant 7 : index
    %105 = memref.load %arg2[%c2_70, %c7_71] : memref<3x9xf32, #tpu.memory_space<smem>>
    %106 = vector.broadcast %105 : f32 to vector<4x8x128xf32>
    %107 = arith.mulf %106, %96 : vector<4x8x128xf32>
    %108 = arith.addf %94, %107 : vector<4x8x128xf32>
    %c8 = arith.constant 8 : index
    %c0_72 = arith.constant 0 : index
    %c0_73 = arith.constant 0 : index
    %c0_74 = arith.constant 0 : index
    %109 = vector.load %arg1[%c8, %c0_72, %c0_73, %c0_74] : memref<9x9x9x128xf32, #tpu.memory_space<vmem>>, vector<1x4x8x128xf32>
    %110 = vector.shape_cast %109 : vector<1x4x8x128xf32> to vector<4x8x128xf32>
    %c0_75 = arith.constant 0 : index
    %c8_76 = arith.constant 8 : index
    %111 = memref.load %arg2[%c0_75, %c8_76] : memref<3x9xf32, #tpu.memory_space<smem>>
    %112 = vector.broadcast %111 : f32 to vector<4x8x128xf32>
    %113 = arith.mulf %112, %110 : vector<4x8x128xf32>
    %114 = arith.addf %100, %113 : vector<4x8x128xf32>
    %c1_77 = arith.constant 1 : index
    %c8_78 = arith.constant 8 : index
    %115 = memref.load %arg2[%c1_77, %c8_78] : memref<3x9xf32, #tpu.memory_space<smem>>
    %116 = vector.broadcast %115 : f32 to vector<4x8x128xf32>
    %117 = arith.mulf %116, %110 : vector<4x8x128xf32>
    %118 = arith.addf %104, %117 : vector<4x8x128xf32>
    %c2_79 = arith.constant 2 : index
    %c8_80 = arith.constant 8 : index
    %119 = memref.load %arg2[%c2_79, %c8_80] : memref<3x9xf32, #tpu.memory_space<smem>>
    %120 = vector.broadcast %119 : f32 to vector<4x8x128xf32>
    %121 = arith.mulf %120, %110 : vector<4x8x128xf32>
    %122 = arith.addf %108, %121 : vector<4x8x128xf32>
    %c1_81 = arith.constant 1 : index
    %c0_82 = arith.constant 0 : index
    %c0_83 = arith.constant 0 : index
    %c0_84 = arith.constant 0 : index
    %123 = vector.load %arg1[%c1_81, %c0_82, %c0_83, %c0_84] : memref<9x9x9x128xf32, #tpu.memory_space<vmem>>, vector<1x4x8x128xf32>
    %124 = vector.shape_cast %123 : vector<1x4x8x128xf32> to vector<4x8x128xf32>
    %c0_85 = arith.constant 0 : index
    %c0_86 = arith.constant 0 : index
    %125 = memref.load %arg2[%c0_85, %c0_86] : memref<3x9xf32, #tpu.memory_space<smem>>
    %126 = vector.broadcast %125 : f32 to vector<4x8x128xf32>
    %127 = arith.mulf %126, %124 : vector<4x8x128xf32>
    %c1_87 = arith.constant 1 : index
    %c0_88 = arith.constant 0 : index
    %128 = memref.load %arg2[%c1_87, %c0_88] : memref<3x9xf32, #tpu.memory_space<smem>>
    %129 = vector.broadcast %128 : f32 to vector<4x8x128xf32>
    %130 = arith.mulf %129, %124 : vector<4x8x128xf32>
    %c2_89 = arith.constant 2 : index
    %c0_90 = arith.constant 0 : index
    %131 = memref.load %arg2[%c2_89, %c0_90] : memref<3x9xf32, #tpu.memory_space<smem>>
    %132 = vector.broadcast %131 : f32 to vector<4x8x128xf32>
    %133 = arith.mulf %132, %124 : vector<4x8x128xf32>
    %c2_91 = arith.constant 2 : index
    %c0_92 = arith.constant 0 : index
    %c0_93 = arith.constant 0 : index
    %c0_94 = arith.constant 0 : index
    %134 = vector.load %arg1[%c2_91, %c0_92, %c0_93, %c0_94] : memref<9x9x9x128xf32, #tpu.memory_space<vmem>>, vector<1x4x8x128xf32>
    %135 = vector.shape_cast %134 : vector<1x4x8x128xf32> to vector<4x8x128xf32>
    %c0_95 = arith.constant 0 : index
    %c1_96 = arith.constant 1 : index
    %136 = memref.load %arg2[%c0_95, %c1_96] : memref<3x9xf32, #tpu.memory_space<smem>>
    %137 = vector.broadcast %136 : f32 to vector<4x8x128xf32>
    %138 = arith.mulf %137, %135 : vector<4x8x128xf32>
    %139 = arith.addf %127, %138 : vector<4x8x128xf32>
    %c1_97 = arith.constant 1 : index
    %c1_98 = arith.constant 1 : index
    %140 = memref.load %arg2[%c1_97, %c1_98] : memref<3x9xf32, #tpu.memory_space<smem>>
    %141 = vector.broadcast %140 : f32 to vector<4x8x128xf32>
    %142 = arith.mulf %141, %135 : vector<4x8x128xf32>
    %143 = arith.addf %130, %142 : vector<4x8x128xf32>
    %c2_99 = arith.constant 2 : index
    %c1_100 = arith.constant 1 : index
    %144 = memref.load %arg2[%c2_99, %c1_100] : memref<3x9xf32, #tpu.memory_space<smem>>
    %145 = vector.broadcast %144 : f32 to vector<4x8x128xf32>
    %146 = arith.mulf %145, %135 : vector<4x8x128xf32>
    %147 = arith.addf %133, %146 : vector<4x8x128xf32>
    %c0_101 = arith.constant 0 : index
    %c0_102 = arith.constant 0 : index
    %c1_103 = arith.constant 1 : index
    %c0_104 = arith.constant 0 : index
    %148 = vector.load %arg1[%c0_101, %c0_102, %c1_103, %c0_104] : memref<9x9x9x128xf32, #tpu.memory_space<vmem>>, vector<1x4x8x128xf32>
    %149 = vector.shape_cast %148 : vector<1x4x8x128xf32> to vector<4x8x128xf32>
    %c0_105 = arith.constant 0 : index
    %c2_106 = arith.constant 2 : index
    %150 = memref.load %arg2[%c0_105, %c2_106] : memref<3x9xf32, #tpu.memory_space<smem>>
    %151 = vector.broadcast %150 : f32 to vector<4x8x128xf32>
    %152 = arith.mulf %151, %149 : vector<4x8x128xf32>
    %153 = arith.addf %139, %152 : vector<4x8x128xf32>
    %c1_107 = arith.constant 1 : index
    %c2_108 = arith.constant 2 : index
    %154 = memref.load %arg2[%c1_107, %c2_108] : memref<3x9xf32, #tpu.memory_space<smem>>
    %155 = vector.broadcast %154 : f32 to vector<4x8x128xf32>
    %156 = arith.mulf %155, %149 : vector<4x8x128xf32>
    %157 = arith.addf %143, %156 : vector<4x8x128xf32>
    %c2_109 = arith.constant 2 : index
    %c2_110 = arith.constant 2 : index
    %158 = memref.load %arg2[%c2_109, %c2_110] : memref<3x9xf32, #tpu.memory_space<smem>>
    %159 = vector.broadcast %158 : f32 to vector<4x8x128xf32>
    %160 = arith.mulf %159, %149 : vector<4x8x128xf32>
    %161 = arith.addf %147, %160 : vector<4x8x128xf32>
    %c4_111 = arith.constant 4 : index
    %c0_112 = arith.constant 0 : index
    %c0_113 = arith.constant 0 : index
    %c0_114 = arith.constant 0 : index
    %162 = vector.load %arg1[%c4_111, %c0_112, %c0_113, %c0_114] : memref<9x9x9x128xf32, #tpu.memory_space<vmem>>, vector<1x4x8x128xf32>
    %163 = vector.shape_cast %162 : vector<1x4x8x128xf32> to vector<4x8x128xf32>
    %c0_115 = arith.constant 0 : index
    %c3_116 = arith.constant 3 : index
    %164 = memref.load %arg2[%c0_115, %c3_116] : memref<3x9xf32, #tpu.memory_space<smem>>
    %165 = vector.broadcast %164 : f32 to vector<4x8x128xf32>
    %166 = arith.mulf %165, %163 : vector<4x8x128xf32>
    %167 = arith.addf %153, %166 : vector<4x8x128xf32>
    %c1_117 = arith.constant 1 : index
    %c3_118 = arith.constant 3 : index
    %168 = memref.load %arg2[%c1_117, %c3_118] : memref<3x9xf32, #tpu.memory_space<smem>>
    %169 = vector.broadcast %168 : f32 to vector<4x8x128xf32>
    %170 = arith.mulf %169, %163 : vector<4x8x128xf32>
    %171 = arith.addf %157, %170 : vector<4x8x128xf32>
    %c2_119 = arith.constant 2 : index
    %c3_120 = arith.constant 3 : index
    %172 = memref.load %arg2[%c2_119, %c3_120] : memref<3x9xf32, #tpu.memory_space<smem>>
    %173 = vector.broadcast %172 : f32 to vector<4x8x128xf32>
    %174 = arith.mulf %173, %163 : vector<4x8x128xf32>
    %175 = arith.addf %161, %174 : vector<4x8x128xf32>
    %c5_121 = arith.constant 5 : index
    %c0_122 = arith.constant 0 : index
    %c0_123 = arith.constant 0 : index
    %c0_124 = arith.constant 0 : index
    %176 = vector.load %arg1[%c5_121, %c0_122, %c0_123, %c0_124] : memref<9x9x9x128xf32, #tpu.memory_space<vmem>>, vector<1x4x8x128xf32>
    %177 = vector.shape_cast %176 : vector<1x4x8x128xf32> to vector<4x8x128xf32>
    %c0_125 = arith.constant 0 : index
    %c4_126 = arith.constant 4 : index
    %178 = memref.load %arg2[%c0_125, %c4_126] : memref<3x9xf32, #tpu.memory_space<smem>>
    %179 = vector.broadcast %178 : f32 to vector<4x8x128xf32>
    %180 = arith.mulf %179, %177 : vector<4x8x128xf32>
    %181 = arith.addf %167, %180 : vector<4x8x128xf32>
    %c1_127 = arith.constant 1 : index
    %c4_128 = arith.constant 4 : index
    %182 = memref.load %arg2[%c1_127, %c4_128] : memref<3x9xf32, #tpu.memory_space<smem>>
    %183 = vector.broadcast %182 : f32 to vector<4x8x128xf32>
    %184 = arith.mulf %183, %177 : vector<4x8x128xf32>
    %185 = arith.addf %171, %184 : vector<4x8x128xf32>
    %c2_129 = arith.constant 2 : index
    %c4_130 = arith.constant 4 : index
    %186 = memref.load %arg2[%c2_129, %c4_130] : memref<3x9xf32, #tpu.memory_space<smem>>
    %187 = vector.broadcast %186 : f32 to vector<4x8x128xf32>
    %188 = arith.mulf %187, %177 : vector<4x8x128xf32>
    %189 = arith.addf %175, %188 : vector<4x8x128xf32>
    %c3_131 = arith.constant 3 : index
    %c0_132 = arith.constant 0 : index
    %c1_133 = arith.constant 1 : index
    %c0_134 = arith.constant 0 : index
    %190 = vector.load %arg1[%c3_131, %c0_132, %c1_133, %c0_134] : memref<9x9x9x128xf32, #tpu.memory_space<vmem>>, vector<1x4x8x128xf32>
    %191 = vector.shape_cast %190 : vector<1x4x8x128xf32> to vector<4x8x128xf32>
    %c0_135 = arith.constant 0 : index
    %c5_136 = arith.constant 5 : index
    %192 = memref.load %arg2[%c0_135, %c5_136] : memref<3x9xf32, #tpu.memory_space<smem>>
    %193 = vector.broadcast %192 : f32 to vector<4x8x128xf32>
    %194 = arith.mulf %193, %191 : vector<4x8x128xf32>
    %195 = arith.addf %181, %194 : vector<4x8x128xf32>
    %c1_137 = arith.constant 1 : index
    %c5_138 = arith.constant 5 : index
    %196 = memref.load %arg2[%c1_137, %c5_138] : memref<3x9xf32, #tpu.memory_space<smem>>
    %197 = vector.broadcast %196 : f32 to vector<4x8x128xf32>
    %198 = arith.mulf %197, %191 : vector<4x8x128xf32>
    %199 = arith.addf %185, %198 : vector<4x8x128xf32>
    %c2_139 = arith.constant 2 : index
    %c5_140 = arith.constant 5 : index
    %200 = memref.load %arg2[%c2_139, %c5_140] : memref<3x9xf32, #tpu.memory_space<smem>>
    %201 = vector.broadcast %200 : f32 to vector<4x8x128xf32>
    %202 = arith.mulf %201, %191 : vector<4x8x128xf32>
    %203 = arith.addf %189, %202 : vector<4x8x128xf32>
    %c7_141 = arith.constant 7 : index
    %c0_142 = arith.constant 0 : index
    %c0_143 = arith.constant 0 : index
    %c0_144 = arith.constant 0 : index
    %204 = vector.load %arg1[%c7_141, %c0_142, %c0_143, %c0_144] : memref<9x9x9x128xf32, #tpu.memory_space<vmem>>, vector<1x4x8x128xf32>
    %205 = vector.shape_cast %204 : vector<1x4x8x128xf32> to vector<4x8x128xf32>
    %c0_145 = arith.constant 0 : index
    %c6_146 = arith.constant 6 : index
    %206 = memref.load %arg2[%c0_145, %c6_146] : memref<3x9xf32, #tpu.memory_space<smem>>
    %207 = vector.broadcast %206 : f32 to vector<4x8x128xf32>
    %208 = arith.mulf %207, %205 : vector<4x8x128xf32>
    %209 = arith.addf %195, %208 : vector<4x8x128xf32>
    %c1_147 = arith.constant 1 : index
    %c6_148 = arith.constant 6 : index
    %210 = memref.load %arg2[%c1_147, %c6_148] : memref<3x9xf32, #tpu.memory_space<smem>>
    %211 = vector.broadcast %210 : f32 to vector<4x8x128xf32>
    %212 = arith.mulf %211, %205 : vector<4x8x128xf32>
    %213 = arith.addf %199, %212 : vector<4x8x128xf32>
    %c2_149 = arith.constant 2 : index
    %c6_150 = arith.constant 6 : index
    %214 = memref.load %arg2[%c2_149, %c6_150] : memref<3x9xf32, #tpu.memory_space<smem>>
    %215 = vector.broadcast %214 : f32 to vector<4x8x128xf32>
    %216 = arith.mulf %215, %205 : vector<4x8x128xf32>
    %217 = arith.addf %203, %216 : vector<4x8x128xf32>
    %c8_151 = arith.constant 8 : index
    %c0_152 = arith.constant 0 : index
    %c0_153 = arith.constant 0 : index
    %c0_154 = arith.constant 0 : index
    %218 = vector.load %arg1[%c8_151, %c0_152, %c0_153, %c0_154] : memref<9x9x9x128xf32, #tpu.memory_space<vmem>>, vector<1x4x8x128xf32>
    %219 = vector.shape_cast %218 : vector<1x4x8x128xf32> to vector<4x8x128xf32>
    %c0_155 = arith.constant 0 : index
    %c7_156 = arith.constant 7 : index
    %220 = memref.load %arg2[%c0_155, %c7_156] : memref<3x9xf32, #tpu.memory_space<smem>>
    %221 = vector.broadcast %220 : f32 to vector<4x8x128xf32>
    %222 = arith.mulf %221, %219 : vector<4x8x128xf32>
    %223 = arith.addf %209, %222 : vector<4x8x128xf32>
    %c1_157 = arith.constant 1 : index
    %c7_158 = arith.constant 7 : index
    %224 = memref.load %arg2[%c1_157, %c7_158] : memref<3x9xf32, #tpu.memory_space<smem>>
    %225 = vector.broadcast %224 : f32 to vector<4x8x128xf32>
    %226 = arith.mulf %225, %219 : vector<4x8x128xf32>
    %227 = arith.addf %213, %226 : vector<4x8x128xf32>
    %c2_159 = arith.constant 2 : index
    %c7_160 = arith.constant 7 : index
    %228 = memref.load %arg2[%c2_159, %c7_160] : memref<3x9xf32, #tpu.memory_space<smem>>
    %229 = vector.broadcast %228 : f32 to vector<4x8x128xf32>
    %230 = arith.mulf %229, %219 : vector<4x8x128xf32>
    %231 = arith.addf %217, %230 : vector<4x8x128xf32>
    %c6_161 = arith.constant 6 : index
    %c0_162 = arith.constant 0 : index
    %c1_163 = arith.constant 1 : index
    %c0_164 = arith.constant 0 : index
    %232 = vector.load %arg1[%c6_161, %c0_162, %c1_163, %c0_164] : memref<9x9x9x128xf32, #tpu.memory_space<vmem>>, vector<1x4x8x128xf32>
    %233 = vector.shape_cast %232 : vector<1x4x8x128xf32> to vector<4x8x128xf32>
    %c0_165 = arith.constant 0 : index
    %c8_166 = arith.constant 8 : index
    %234 = memref.load %arg2[%c0_165, %c8_166] : memref<3x9xf32, #tpu.memory_space<smem>>
    %235 = vector.broadcast %234 : f32 to vector<4x8x128xf32>
    %236 = arith.mulf %235, %233 : vector<4x8x128xf32>
    %237 = arith.addf %223, %236 : vector<4x8x128xf32>
    %c1_167 = arith.constant 1 : index
    %c8_168 = arith.constant 8 : index
    %238 = memref.load %arg2[%c1_167, %c8_168] : memref<3x9xf32, #tpu.memory_space<smem>>
    %239 = vector.broadcast %238 : f32 to vector<4x8x128xf32>
    %240 = arith.mulf %239, %233 : vector<4x8x128xf32>
    %241 = arith.addf %227, %240 : vector<4x8x128xf32>
    %c2_169 = arith.constant 2 : index
    %c8_170 = arith.constant 8 : index
    %242 = memref.load %arg2[%c2_169, %c8_170] : memref<3x9xf32, #tpu.memory_space<smem>>
    %243 = vector.broadcast %242 : f32 to vector<4x8x128xf32>
    %244 = arith.mulf %243, %233 : vector<4x8x128xf32>
    %245 = arith.addf %231, %244 : vector<4x8x128xf32>
    %246 = arith.maximumf %114, %237 : vector<4x8x128xf32>
    %247 = arith.maximumf %118, %241 : vector<4x8x128xf32>
    %248 = arith.maximumf %122, %245 : vector<4x8x128xf32>
    %c2_171 = arith.constant 2 : index
    %c0_172 = arith.constant 0 : index
    %c0_173 = arith.constant 0 : index
    %c0_174 = arith.constant 0 : index
    %249 = vector.load %arg1[%c2_171, %c0_172, %c0_173, %c0_174] : memref<9x9x9x128xf32, #tpu.memory_space<vmem>>, vector<1x4x8x128xf32>
    %250 = vector.shape_cast %249 : vector<1x4x8x128xf32> to vector<4x8x128xf32>
    %c0_175 = arith.constant 0 : index
    %c0_176 = arith.constant 0 : index
    %251 = memref.load %arg2[%c0_175, %c0_176] : memref<3x9xf32, #tpu.memory_space<smem>>
    %252 = vector.broadcast %251 : f32 to vector<4x8x128xf32>
    %253 = arith.mulf %252, %250 : vector<4x8x128xf32>
    %c1_177 = arith.constant 1 : index
    %c0_178 = arith.constant 0 : index
    %254 = memref.load %arg2[%c1_177, %c0_178] : memref<3x9xf32, #tpu.memory_space<smem>>
    %255 = vector.broadcast %254 : f32 to vector<4x8x128xf32>
    %256 = arith.mulf %255, %250 : vector<4x8x128xf32>
    %c2_179 = arith.constant 2 : index
    %c0_180 = arith.constant 0 : index
    %257 = memref.load %arg2[%c2_179, %c0_180] : memref<3x9xf32, #tpu.memory_space<smem>>
    %258 = vector.broadcast %257 : f32 to vector<4x8x128xf32>
    %259 = arith.mulf %258, %250 : vector<4x8x128xf32>
    %c0_181 = arith.constant 0 : index
    %c0_182 = arith.constant 0 : index
    %c1_183 = arith.constant 1 : index
    %c0_184 = arith.constant 0 : index
    %260 = vector.load %arg1[%c0_181, %c0_182, %c1_183, %c0_184] : memref<9x9x9x128xf32, #tpu.memory_space<vmem>>, vector<1x4x8x128xf32>
    %261 = vector.shape_cast %260 : vector<1x4x8x128xf32> to vector<4x8x128xf32>
    %c0_185 = arith.constant 0 : index
    %c1_186 = arith.constant 1 : index
    %262 = memref.load %arg2[%c0_185, %c1_186] : memref<3x9xf32, #tpu.memory_space<smem>>
    %263 = vector.broadcast %262 : f32 to vector<4x8x128xf32>
    %264 = arith.mulf %263, %261 : vector<4x8x128xf32>
    %265 = arith.addf %253, %264 : vector<4x8x128xf32>
    %c1_187 = arith.constant 1 : index
    %c1_188 = arith.constant 1 : index
    %266 = memref.load %arg2[%c1_187, %c1_188] : memref<3x9xf32, #tpu.memory_space<smem>>
    %267 = vector.broadcast %266 : f32 to vector<4x8x128xf32>
    %268 = arith.mulf %267, %261 : vector<4x8x128xf32>
    %269 = arith.addf %256, %268 : vector<4x8x128xf32>
    %c2_189 = arith.constant 2 : index
    %c1_190 = arith.constant 1 : index
    %270 = memref.load %arg2[%c2_189, %c1_190] : memref<3x9xf32, #tpu.memory_space<smem>>
    %271 = vector.broadcast %270 : f32 to vector<4x8x128xf32>
    %272 = arith.mulf %271, %261 : vector<4x8x128xf32>
    %273 = arith.addf %259, %272 : vector<4x8x128xf32>
    %c1_191 = arith.constant 1 : index
    %c0_192 = arith.constant 0 : index
    %c1_193 = arith.constant 1 : index
    %c0_194 = arith.constant 0 : index
    %274 = vector.load %arg1[%c1_191, %c0_192, %c1_193, %c0_194] : memref<9x9x9x128xf32, #tpu.memory_space<vmem>>, vector<1x4x8x128xf32>
    %275 = vector.shape_cast %274 : vector<1x4x8x128xf32> to vector<4x8x128xf32>
    %c0_195 = arith.constant 0 : index
    %c2_196 = arith.constant 2 : index
    %276 = memref.load %arg2[%c0_195, %c2_196] : memref<3x9xf32, #tpu.memory_space<smem>>
    %277 = vector.broadcast %276 : f32 to vector<4x8x128xf32>
    %278 = arith.mulf %277, %275 : vector<4x8x128xf32>
    %279 = arith.addf %265, %278 : vector<4x8x128xf32>
    %c1_197 = arith.constant 1 : index
    %c2_198 = arith.constant 2 : index
    %280 = memref.load %arg2[%c1_197, %c2_198] : memref<3x9xf32, #tpu.memory_space<smem>>
    %281 = vector.broadcast %280 : f32 to vector<4x8x128xf32>
    %282 = arith.mulf %281, %275 : vector<4x8x128xf32>
    %283 = arith.addf %269, %282 : vector<4x8x128xf32>
    %c2_199 = arith.constant 2 : index
    %c2_200 = arith.constant 2 : index
    %284 = memref.load %arg2[%c2_199, %c2_200] : memref<3x9xf32, #tpu.memory_space<smem>>
    %285 = vector.broadcast %284 : f32 to vector<4x8x128xf32>
    %286 = arith.mulf %285, %275 : vector<4x8x128xf32>
    %287 = arith.addf %273, %286 : vector<4x8x128xf32>
    %c5_201 = arith.constant 5 : index
    %c0_202 = arith.constant 0 : index
    %c0_203 = arith.constant 0 : index
    %c0_204 = arith.constant 0 : index
    %288 = vector.load %arg1[%c5_201, %c0_202, %c0_203, %c0_204] : memref<9x9x9x128xf32, #tpu.memory_space<vmem>>, vector<1x4x8x128xf32>
    %289 = vector.shape_cast %288 : vector<1x4x8x128xf32> to vector<4x8x128xf32>
    %c0_205 = arith.constant 0 : index
    %c3_206 = arith.constant 3 : index
    %290 = memref.load %arg2[%c0_205, %c3_206] : memref<3x9xf32, #tpu.memory_space<smem>>
    %291 = vector.broadcast %290 : f32 to vector<4x8x128xf32>
    %292 = arith.mulf %291, %289 : vector<4x8x128xf32>
    %293 = arith.addf %279, %292 : vector<4x8x128xf32>
    %c1_207 = arith.constant 1 : index
    %c3_208 = arith.constant 3 : index
    %294 = memref.load %arg2[%c1_207, %c3_208] : memref<3x9xf32, #tpu.memory_space<smem>>
    %295 = vector.broadcast %294 : f32 to vector<4x8x128xf32>
    %296 = arith.mulf %295, %289 : vector<4x8x128xf32>
    %297 = arith.addf %283, %296 : vector<4x8x128xf32>
    %c2_209 = arith.constant 2 : index
    %c3_210 = arith.constant 3 : index
    %298 = memref.load %arg2[%c2_209, %c3_210] : memref<3x9xf32, #tpu.memory_space<smem>>
    %299 = vector.broadcast %298 : f32 to vector<4x8x128xf32>
    %300 = arith.mulf %299, %289 : vector<4x8x128xf32>
    %301 = arith.addf %287, %300 : vector<4x8x128xf32>
    %c3_211 = arith.constant 3 : index
    %c0_212 = arith.constant 0 : index
    %c1_213 = arith.constant 1 : index
    %c0_214 = arith.constant 0 : index
    %302 = vector.load %arg1[%c3_211, %c0_212, %c1_213, %c0_214] : memref<9x9x9x128xf32, #tpu.memory_space<vmem>>, vector<1x4x8x128xf32>
    %303 = vector.shape_cast %302 : vector<1x4x8x128xf32> to vector<4x8x128xf32>
    %c0_215 = arith.constant 0 : index
    %c4_216 = arith.constant 4 : index
    %304 = memref.load %arg2[%c0_215, %c4_216] : memref<3x9xf32, #tpu.memory_space<smem>>
    %305 = vector.broadcast %304 : f32 to vector<4x8x128xf32>
    %306 = arith.mulf %305, %303 : vector<4x8x128xf32>
    %307 = arith.addf %293, %306 : vector<4x8x128xf32>
    %c1_217 = arith.constant 1 : index
    %c4_218 = arith.constant 4 : index
    %308 = memref.load %arg2[%c1_217, %c4_218] : memref<3x9xf32, #tpu.memory_space<smem>>
    %309 = vector.broadcast %308 : f32 to vector<4x8x128xf32>
    %310 = arith.mulf %309, %303 : vector<4x8x128xf32>
    %311 = arith.addf %297, %310 : vector<4x8x128xf32>
    %c2_219 = arith.constant 2 : index
    %c4_220 = arith.constant 4 : index
    %312 = memref.load %arg2[%c2_219, %c4_220] : memref<3x9xf32, #tpu.memory_space<smem>>
    %313 = vector.broadcast %312 : f32 to vector<4x8x128xf32>
    %314 = arith.mulf %313, %303 : vector<4x8x128xf32>
    %315 = arith.addf %301, %314 : vector<4x8x128xf32>
    %c4_221 = arith.constant 4 : index
    %c0_222 = arith.constant 0 : index
    %c1_223 = arith.constant 1 : index
    %c0_224 = arith.constant 0 : index
    %316 = vector.load %arg1[%c4_221, %c0_222, %c1_223, %c0_224] : memref<9x9x9x128xf32, #tpu.memory_space<vmem>>, vector<1x4x8x128xf32>
    %317 = vector.shape_cast %316 : vector<1x4x8x128xf32> to vector<4x8x128xf32>
    %c0_225 = arith.constant 0 : index
    %c5_226 = arith.constant 5 : index
    %318 = memref.load %arg2[%c0_225, %c5_226] : memref<3x9xf32, #tpu.memory_space<smem>>
    %319 = vector.broadcast %318 : f32 to vector<4x8x128xf32>
    %320 = arith.mulf %319, %317 : vector<4x8x128xf32>
    %321 = arith.addf %307, %320 : vector<4x8x128xf32>
    %c1_227 = arith.constant 1 : index
    %c5_228 = arith.constant 5 : index
    %322 = memref.load %arg2[%c1_227, %c5_228] : memref<3x9xf32, #tpu.memory_space<smem>>
    %323 = vector.broadcast %322 : f32 to vector<4x8x128xf32>
    %324 = arith.mulf %323, %317 : vector<4x8x128xf32>
    %325 = arith.addf %311, %324 : vector<4x8x128xf32>
    %c2_229 = arith.constant 2 : index
    %c5_230 = arith.constant 5 : index
    %326 = memref.load %arg2[%c2_229, %c5_230] : memref<3x9xf32, #tpu.memory_space<smem>>
    %327 = vector.broadcast %326 : f32 to vector<4x8x128xf32>
    %328 = arith.mulf %327, %317 : vector<4x8x128xf32>
    %329 = arith.addf %315, %328 : vector<4x8x128xf32>
    %c8_231 = arith.constant 8 : index
    %c0_232 = arith.constant 0 : index
    %c0_233 = arith.constant 0 : index
    %c0_234 = arith.constant 0 : index
    %330 = vector.load %arg1[%c8_231, %c0_232, %c0_233, %c0_234] : memref<9x9x9x128xf32, #tpu.memory_space<vmem>>, vector<1x4x8x128xf32>
    %331 = vector.shape_cast %330 : vector<1x4x8x128xf32> to vector<4x8x128xf32>
    %c0_235 = arith.constant 0 : index
    %c6_236 = arith.constant 6 : index
    %332 = memref.load %arg2[%c0_235, %c6_236] : memref<3x9xf32, #tpu.memory_space<smem>>
    %333 = vector.broadcast %332 : f32 to vector<4x8x128xf32>
    %334 = arith.mulf %333, %331 : vector<4x8x128xf32>
    %335 = arith.addf %321, %334 : vector<4x8x128xf32>
    %c1_237 = arith.constant 1 : index
    %c6_238 = arith.constant 6 : index
    %336 = memref.load %arg2[%c1_237, %c6_238] : memref<3x9xf32, #tpu.memory_space<smem>>
    %337 = vector.broadcast %336 : f32 to vector<4x8x128xf32>
    %338 = arith.mulf %337, %331 : vector<4x8x128xf32>
    %339 = arith.addf %325, %338 : vector<4x8x128xf32>
    %c2_239 = arith.constant 2 : index
    %c6_240 = arith.constant 6 : index
    %340 = memref.load %arg2[%c2_239, %c6_240] : memref<3x9xf32, #tpu.memory_space<smem>>
    %341 = vector.broadcast %340 : f32 to vector<4x8x128xf32>
    %342 = arith.mulf %341, %331 : vector<4x8x128xf32>
    %343 = arith.addf %329, %342 : vector<4x8x128xf32>
    %c6_241 = arith.constant 6 : index
    %c0_242 = arith.constant 0 : index
    %c1_243 = arith.constant 1 : index
    %c0_244 = arith.constant 0 : index
    %344 = vector.load %arg1[%c6_241, %c0_242, %c1_243, %c0_244] : memref<9x9x9x128xf32, #tpu.memory_space<vmem>>, vector<1x4x8x128xf32>
    %345 = vector.shape_cast %344 : vector<1x4x8x128xf32> to vector<4x8x128xf32>
    %c0_245 = arith.constant 0 : index
    %c7_246 = arith.constant 7 : index
    %346 = memref.load %arg2[%c0_245, %c7_246] : memref<3x9xf32, #tpu.memory_space<smem>>
    %347 = vector.broadcast %346 : f32 to vector<4x8x128xf32>
    %348 = arith.mulf %347, %345 : vector<4x8x128xf32>
    %349 = arith.addf %335, %348 : vector<4x8x128xf32>
    %c1_247 = arith.constant 1 : index
    %c7_248 = arith.constant 7 : index
    %350 = memref.load %arg2[%c1_247, %c7_248] : memref<3x9xf32, #tpu.memory_space<smem>>
    %351 = vector.broadcast %350 : f32 to vector<4x8x128xf32>
    %352 = arith.mulf %351, %345 : vector<4x8x128xf32>
    %353 = arith.addf %339, %352 : vector<4x8x128xf32>
    %c2_249 = arith.constant 2 : index
    %c7_250 = arith.constant 7 : index
    %354 = memref.load %arg2[%c2_249, %c7_250] : memref<3x9xf32, #tpu.memory_space<smem>>
    %355 = vector.broadcast %354 : f32 to vector<4x8x128xf32>
    %356 = arith.mulf %355, %345 : vector<4x8x128xf32>
    %357 = arith.addf %343, %356 : vector<4x8x128xf32>
    %c7_251 = arith.constant 7 : index
    %c0_252 = arith.constant 0 : index
    %c1_253 = arith.constant 1 : index
    %c0_254 = arith.constant 0 : index
    %358 = vector.load %arg1[%c7_251, %c0_252, %c1_253, %c0_254] : memref<9x9x9x128xf32, #tpu.memory_space<vmem>>, vector<1x4x8x128xf32>
    %359 = vector.shape_cast %358 : vector<1x4x8x128xf32> to vector<4x8x128xf32>
    %c0_255 = arith.constant 0 : index
    %c8_256 = arith.constant 8 : index
    %360 = memref.load %arg2[%c0_255, %c8_256] : memref<3x9xf32, #tpu.memory_space<smem>>
    %361 = vector.broadcast %360 : f32 to vector<4x8x128xf32>
    %362 = arith.mulf %361, %359 : vector<4x8x128xf32>
    %363 = arith.addf %349, %362 : vector<4x8x128xf32>
    %c1_257 = arith.constant 1 : index
    %c8_258 = arith.constant 8 : index
    %364 = memref.load %arg2[%c1_257, %c8_258] : memref<3x9xf32, #tpu.memory_space<smem>>
    %365 = vector.broadcast %364 : f32 to vector<4x8x128xf32>
    %366 = arith.mulf %365, %359 : vector<4x8x128xf32>
    %367 = arith.addf %353, %366 : vector<4x8x128xf32>
    %c2_259 = arith.constant 2 : index
    %c8_260 = arith.constant 8 : index
    %368 = memref.load %arg2[%c2_259, %c8_260] : memref<3x9xf32, #tpu.memory_space<smem>>
    %369 = vector.broadcast %368 : f32 to vector<4x8x128xf32>
    %370 = arith.mulf %369, %359 : vector<4x8x128xf32>
    %371 = arith.addf %357, %370 : vector<4x8x128xf32>
    %372 = arith.maximumf %246, %363 : vector<4x8x128xf32>
    %373 = arith.maximumf %247, %367 : vector<4x8x128xf32>
    %374 = arith.maximumf %248, %371 : vector<4x8x128xf32>
    %c3_261 = arith.constant 3 : index
    %c0_262 = arith.constant 0 : index
    %c0_263 = arith.constant 0 : index
    %c0_264 = arith.constant 0 : index
    %375 = vector.load %arg1[%c3_261, %c0_262, %c0_263, %c0_264] : memref<9x9x9x128xf32, #tpu.memory_space<vmem>>, vector<1x4x8x128xf32>
    %376 = vector.shape_cast %375 : vector<1x4x8x128xf32> to vector<4x8x128xf32>
    %c0_265 = arith.constant 0 : index
    %c0_266 = arith.constant 0 : index
    %377 = memref.load %arg2[%c0_265, %c0_266] : memref<3x9xf32, #tpu.memory_space<smem>>
    %378 = vector.broadcast %377 : f32 to vector<4x8x128xf32>
    %379 = arith.mulf %378, %376 : vector<4x8x128xf32>
    %c1_267 = arith.constant 1 : index
    %c0_268 = arith.constant 0 : index
    %380 = memref.load %arg2[%c1_267, %c0_268] : memref<3x9xf32, #tpu.memory_space<smem>>
    %381 = vector.broadcast %380 : f32 to vector<4x8x128xf32>
    %382 = arith.mulf %381, %376 : vector<4x8x128xf32>
    %c2_269 = arith.constant 2 : index
    %c0_270 = arith.constant 0 : index
    %383 = memref.load %arg2[%c2_269, %c0_270] : memref<3x9xf32, #tpu.memory_space<smem>>
    %384 = vector.broadcast %383 : f32 to vector<4x8x128xf32>
    %385 = arith.mulf %384, %376 : vector<4x8x128xf32>
    %c4_271 = arith.constant 4 : index
    %c0_272 = arith.constant 0 : index
    %c0_273 = arith.constant 0 : index
    %c0_274 = arith.constant 0 : index
    %386 = vector.load %arg1[%c4_271, %c0_272, %c0_273, %c0_274] : memref<9x9x9x128xf32, #tpu.memory_space<vmem>>, vector<1x4x8x128xf32>
    %387 = vector.shape_cast %386 : vector<1x4x8x128xf32> to vector<4x8x128xf32>
    %c0_275 = arith.constant 0 : index
    %c1_276 = arith.constant 1 : index
    %388 = memref.load %arg2[%c0_275, %c1_276] : memref<3x9xf32, #tpu.memory_space<smem>>
    %389 = vector.broadcast %388 : f32 to vector<4x8x128xf32>
    %390 = arith.mulf %389, %387 : vector<4x8x128xf32>
    %391 = arith.addf %379, %390 : vector<4x8x128xf32>
    %c1_277 = arith.constant 1 : index
    %c1_278 = arith.constant 1 : index
    %392 = memref.load %arg2[%c1_277, %c1_278] : memref<3x9xf32, #tpu.memory_space<smem>>
    %393 = vector.broadcast %392 : f32 to vector<4x8x128xf32>
    %394 = arith.mulf %393, %387 : vector<4x8x128xf32>
    %395 = arith.addf %382, %394 : vector<4x8x128xf32>
    %c2_279 = arith.constant 2 : index
    %c1_280 = arith.constant 1 : index
    %396 = memref.load %arg2[%c2_279, %c1_280] : memref<3x9xf32, #tpu.memory_space<smem>>
    %397 = vector.broadcast %396 : f32 to vector<4x8x128xf32>
    %398 = arith.mulf %397, %387 : vector<4x8x128xf32>
    %399 = arith.addf %385, %398 : vector<4x8x128xf32>
    %c5_281 = arith.constant 5 : index
    %c0_282 = arith.constant 0 : index
    %c0_283 = arith.constant 0 : index
    %c0_284 = arith.constant 0 : index
    %400 = vector.load %arg1[%c5_281, %c0_282, %c0_283, %c0_284] : memref<9x9x9x128xf32, #tpu.memory_space<vmem>>, vector<1x4x8x128xf32>
    %401 = vector.shape_cast %400 : vector<1x4x8x128xf32> to vector<4x8x128xf32>
    %c0_285 = arith.constant 0 : index
    %c2_286 = arith.constant 2 : index
    %402 = memref.load %arg2[%c0_285, %c2_286] : memref<3x9xf32, #tpu.memory_space<smem>>
    %403 = vector.broadcast %402 : f32 to vector<4x8x128xf32>
    %404 = arith.mulf %403, %401 : vector<4x8x128xf32>
    %405 = arith.addf %391, %404 : vector<4x8x128xf32>
    %c1_287 = arith.constant 1 : index
    %c2_288 = arith.constant 2 : index
    %406 = memref.load %arg2[%c1_287, %c2_288] : memref<3x9xf32, #tpu.memory_space<smem>>
    %407 = vector.broadcast %406 : f32 to vector<4x8x128xf32>
    %408 = arith.mulf %407, %401 : vector<4x8x128xf32>
    %409 = arith.addf %395, %408 : vector<4x8x128xf32>
    %c2_289 = arith.constant 2 : index
    %c2_290 = arith.constant 2 : index
    %410 = memref.load %arg2[%c2_289, %c2_290] : memref<3x9xf32, #tpu.memory_space<smem>>
    %411 = vector.broadcast %410 : f32 to vector<4x8x128xf32>
    %412 = arith.mulf %411, %401 : vector<4x8x128xf32>
    %413 = arith.addf %399, %412 : vector<4x8x128xf32>
    %c6_291 = arith.constant 6 : index
    %c0_292 = arith.constant 0 : index
    %c0_293 = arith.constant 0 : index
    %c0_294 = arith.constant 0 : index
    %414 = vector.load %arg1[%c6_291, %c0_292, %c0_293, %c0_294] : memref<9x9x9x128xf32, #tpu.memory_space<vmem>>, vector<1x4x8x128xf32>
    %415 = vector.shape_cast %414 : vector<1x4x8x128xf32> to vector<4x8x128xf32>
    %c0_295 = arith.constant 0 : index
    %c3_296 = arith.constant 3 : index
    %416 = memref.load %arg2[%c0_295, %c3_296] : memref<3x9xf32, #tpu.memory_space<smem>>
    %417 = vector.broadcast %416 : f32 to vector<4x8x128xf32>
    %418 = arith.mulf %417, %415 : vector<4x8x128xf32>
    %419 = arith.addf %405, %418 : vector<4x8x128xf32>
    %c1_297 = arith.constant 1 : index
    %c3_298 = arith.constant 3 : index
    %420 = memref.load %arg2[%c1_297, %c3_298] : memref<3x9xf32, #tpu.memory_space<smem>>
    %421 = vector.broadcast %420 : f32 to vector<4x8x128xf32>
    %422 = arith.mulf %421, %415 : vector<4x8x128xf32>
    %423 = arith.addf %409, %422 : vector<4x8x128xf32>
    %c2_299 = arith.constant 2 : index
    %c3_300 = arith.constant 3 : index
    %424 = memref.load %arg2[%c2_299, %c3_300] : memref<3x9xf32, #tpu.memory_space<smem>>
    %425 = vector.broadcast %424 : f32 to vector<4x8x128xf32>
    %426 = arith.mulf %425, %415 : vector<4x8x128xf32>
    %427 = arith.addf %413, %426 : vector<4x8x128xf32>
    %c7_301 = arith.constant 7 : index
    %c0_302 = arith.constant 0 : index
    %c0_303 = arith.constant 0 : index
    %c0_304 = arith.constant 0 : index
    %428 = vector.load %arg1[%c7_301, %c0_302, %c0_303, %c0_304] : memref<9x9x9x128xf32, #tpu.memory_space<vmem>>, vector<1x4x8x128xf32>
    %429 = vector.shape_cast %428 : vector<1x4x8x128xf32> to vector<4x8x128xf32>
    %c0_305 = arith.constant 0 : index
    %c4_306 = arith.constant 4 : index
    %430 = memref.load %arg2[%c0_305, %c4_306] : memref<3x9xf32, #tpu.memory_space<smem>>
    %431 = vector.broadcast %430 : f32 to vector<4x8x128xf32>
    %432 = arith.mulf %431, %429 : vector<4x8x128xf32>
    %433 = arith.addf %419, %432 : vector<4x8x128xf32>
    %c1_307 = arith.constant 1 : index
    %c4_308 = arith.constant 4 : index
    %434 = memref.load %arg2[%c1_307, %c4_308] : memref<3x9xf32, #tpu.memory_space<smem>>
    %435 = vector.broadcast %434 : f32 to vector<4x8x128xf32>
    %436 = arith.mulf %435, %429 : vector<4x8x128xf32>
    %437 = arith.addf %423, %436 : vector<4x8x128xf32>
    %c2_309 = arith.constant 2 : index
    %c4_310 = arith.constant 4 : index
    %438 = memref.load %arg2[%c2_309, %c4_310] : memref<3x9xf32, #tpu.memory_space<smem>>
    %439 = vector.broadcast %438 : f32 to vector<4x8x128xf32>
    %440 = arith.mulf %439, %429 : vector<4x8x128xf32>
    %441 = arith.addf %427, %440 : vector<4x8x128xf32>
    %c8_311 = arith.constant 8 : index
    %c0_312 = arith.constant 0 : index
    %c0_313 = arith.constant 0 : index
    %c0_314 = arith.constant 0 : index
    %442 = vector.load %arg1[%c8_311, %c0_312, %c0_313, %c0_314] : memref<9x9x9x128xf32, #tpu.memory_space<vmem>>, vector<1x4x8x128xf32>
    %443 = vector.shape_cast %442 : vector<1x4x8x128xf32> to vector<4x8x128xf32>
    %c0_315 = arith.constant 0 : index
    %c5_316 = arith.constant 5 : index
    %444 = memref.load %arg2[%c0_315, %c5_316] : memref<3x9xf32, #tpu.memory_space<smem>>
    %445 = vector.broadcast %444 : f32 to vector<4x8x128xf32>
    %446 = arith.mulf %445, %443 : vector<4x8x128xf32>
    %447 = arith.addf %433, %446 : vector<4x8x128xf32>
    %c1_317 = arith.constant 1 : index
    %c5_318 = arith.constant 5 : index
    %448 = memref.load %arg2[%c1_317, %c5_318] : memref<3x9xf32, #tpu.memory_space<smem>>
    %449 = vector.broadcast %448 : f32 to vector<4x8x128xf32>
    %450 = arith.mulf %449, %443 : vector<4x8x128xf32>
    %451 = arith.addf %437, %450 : vector<4x8x128xf32>
    %c2_319 = arith.constant 2 : index
    %c5_320 = arith.constant 5 : index
    %452 = memref.load %arg2[%c2_319, %c5_320] : memref<3x9xf32, #tpu.memory_space<smem>>
    %453 = vector.broadcast %452 : f32 to vector<4x8x128xf32>
    %454 = arith.mulf %453, %443 : vector<4x8x128xf32>
    %455 = arith.addf %441, %454 : vector<4x8x128xf32>
    %c0_321 = arith.constant 0 : index
    %c1_322 = arith.constant 1 : index
    %c0_323 = arith.constant 0 : index
    %c0_324 = arith.constant 0 : index
    %456 = vector.load %arg1[%c0_321, %c1_322, %c0_323, %c0_324] : memref<9x9x9x128xf32, #tpu.memory_space<vmem>>, vector<1x4x8x128xf32>
    %457 = vector.shape_cast %456 : vector<1x4x8x128xf32> to vector<4x8x128xf32>
    %c0_325 = arith.constant 0 : index
    %c6_326 = arith.constant 6 : index
    %458 = memref.load %arg2[%c0_325, %c6_326] : memref<3x9xf32, #tpu.memory_space<smem>>
    %459 = vector.broadcast %458 : f32 to vector<4x8x128xf32>
    %460 = arith.mulf %459, %457 : vector<4x8x128xf32>
    %461 = arith.addf %447, %460 : vector<4x8x128xf32>
    %c1_327 = arith.constant 1 : index
    %c6_328 = arith.constant 6 : index
    %462 = memref.load %arg2[%c1_327, %c6_328] : memref<3x9xf32, #tpu.memory_space<smem>>
    %463 = vector.broadcast %462 : f32 to vector<4x8x128xf32>
    %464 = arith.mulf %463, %457 : vector<4x8x128xf32>
    %465 = arith.addf %451, %464 : vector<4x8x128xf32>
    %c2_329 = arith.constant 2 : index
    %c6_330 = arith.constant 6 : index
    %466 = memref.load %arg2[%c2_329, %c6_330] : memref<3x9xf32, #tpu.memory_space<smem>>
    %467 = vector.broadcast %466 : f32 to vector<4x8x128xf32>
    %468 = arith.mulf %467, %457 : vector<4x8x128xf32>
    %469 = arith.addf %455, %468 : vector<4x8x128xf32>
    %c1_331 = arith.constant 1 : index
    %c1_332 = arith.constant 1 : index
    %c0_333 = arith.constant 0 : index
    %c0_334 = arith.constant 0 : index
    %470 = vector.load %arg1[%c1_331, %c1_332, %c0_333, %c0_334] : memref<9x9x9x128xf32, #tpu.memory_space<vmem>>, vector<1x4x8x128xf32>
    %471 = vector.shape_cast %470 : vector<1x4x8x128xf32> to vector<4x8x128xf32>
    %c0_335 = arith.constant 0 : index
    %c7_336 = arith.constant 7 : index
    %472 = memref.load %arg2[%c0_335, %c7_336] : memref<3x9xf32, #tpu.memory_space<smem>>
    %473 = vector.broadcast %472 : f32 to vector<4x8x128xf32>
    %474 = arith.mulf %473, %471 : vector<4x8x128xf32>
    %475 = arith.addf %461, %474 : vector<4x8x128xf32>
    %c1_337 = arith.constant 1 : index
    %c7_338 = arith.constant 7 : index
    %476 = memref.load %arg2[%c1_337, %c7_338] : memref<3x9xf32, #tpu.memory_space<smem>>
    %477 = vector.broadcast %476 : f32 to vector<4x8x128xf32>
    %478 = arith.mulf %477, %471 : vector<4x8x128xf32>
    %479 = arith.addf %465, %478 : vector<4x8x128xf32>
    %c2_339 = arith.constant 2 : index
    %c7_340 = arith.constant 7 : index
    %480 = memref.load %arg2[%c2_339, %c7_340] : memref<3x9xf32, #tpu.memory_space<smem>>
    %481 = vector.broadcast %480 : f32 to vector<4x8x128xf32>
    %482 = arith.mulf %481, %471 : vector<4x8x128xf32>
    %483 = arith.addf %469, %482 : vector<4x8x128xf32>
    %c2_341 = arith.constant 2 : index
    %c1_342 = arith.constant 1 : index
    %c0_343 = arith.constant 0 : index
    %c0_344 = arith.constant 0 : index
    %484 = vector.load %arg1[%c2_341, %c1_342, %c0_343, %c0_344] : memref<9x9x9x128xf32, #tpu.memory_space<vmem>>, vector<1x4x8x128xf32>
    %485 = vector.shape_cast %484 : vector<1x4x8x128xf32> to vector<4x8x128xf32>
    %c0_345 = arith.constant 0 : index
    %c8_346 = arith.constant 8 : index
    %486 = memref.load %arg2[%c0_345, %c8_346] : memref<3x9xf32, #tpu.memory_space<smem>>
    %487 = vector.broadcast %486 : f32 to vector<4x8x128xf32>
    %488 = arith.mulf %487, %485 : vector<4x8x128xf32>
    %489 = arith.addf %475, %488 : vector<4x8x128xf32>
    %c1_347 = arith.constant 1 : index
    %c8_348 = arith.constant 8 : index
    %490 = memref.load %arg2[%c1_347, %c8_348] : memref<3x9xf32, #tpu.memory_space<smem>>
    %491 = vector.broadcast %490 : f32 to vector<4x8x128xf32>
    %492 = arith.mulf %491, %485 : vector<4x8x128xf32>
    %493 = arith.addf %479, %492 : vector<4x8x128xf32>
    %c2_349 = arith.constant 2 : index
    %c8_350 = arith.constant 8 : index
    %494 = memref.load %arg2[%c2_349, %c8_350] : memref<3x9xf32, #tpu.memory_space<smem>>
    %495 = vector.broadcast %494 : f32 to vector<4x8x128xf32>
    %496 = arith.mulf %495, %485 : vector<4x8x128xf32>
    %497 = arith.addf %483, %496 : vector<4x8x128xf32>
    %498 = arith.maximumf %372, %489 : vector<4x8x128xf32>
    %499 = arith.maximumf %373, %493 : vector<4x8x128xf32>
    %500 = arith.maximumf %374, %497 : vector<4x8x128xf32>
    %c4_351 = arith.constant 4 : index
    %c0_352 = arith.constant 0 : index
    %c0_353 = arith.constant 0 : index
    %c0_354 = arith.constant 0 : index
    %501 = vector.load %arg1[%c4_351, %c0_352, %c0_353, %c0_354] : memref<9x9x9x128xf32, #tpu.memory_space<vmem>>, vector<1x4x8x128xf32>
    %502 = vector.shape_cast %501 : vector<1x4x8x128xf32> to vector<4x8x128xf32>
    %c0_355 = arith.constant 0 : index
    %c0_356 = arith.constant 0 : index
    %503 = memref.load %arg2[%c0_355, %c0_356] : memref<3x9xf32, #tpu.memory_space<smem>>
    %504 = vector.broadcast %503 : f32 to vector<4x8x128xf32>
    %505 = arith.mulf %504, %502 : vector<4x8x128xf32>
    %c1_357 = arith.constant 1 : index
    %c0_358 = arith.constant 0 : index
    %506 = memref.load %arg2[%c1_357, %c0_358] : memref<3x9xf32, #tpu.memory_space<smem>>
    %507 = vector.broadcast %506 : f32 to vector<4x8x128xf32>
    %508 = arith.mulf %507, %502 : vector<4x8x128xf32>
    %c2_359 = arith.constant 2 : index
    %c0_360 = arith.constant 0 : index
    %509 = memref.load %arg2[%c2_359, %c0_360] : memref<3x9xf32, #tpu.memory_space<smem>>
    %510 = vector.broadcast %509 : f32 to vector<4x8x128xf32>
    %511 = arith.mulf %510, %502 : vector<4x8x128xf32>
    %c5_361 = arith.constant 5 : index
    %c0_362 = arith.constant 0 : index
    %c0_363 = arith.constant 0 : index
    %c0_364 = arith.constant 0 : index
    %512 = vector.load %arg1[%c5_361, %c0_362, %c0_363, %c0_364] : memref<9x9x9x128xf32, #tpu.memory_space<vmem>>, vector<1x4x8x128xf32>
    %513 = vector.shape_cast %512 : vector<1x4x8x128xf32> to vector<4x8x128xf32>
    %c0_365 = arith.constant 0 : index
    %c1_366 = arith.constant 1 : index
    %514 = memref.load %arg2[%c0_365, %c1_366] : memref<3x9xf32, #tpu.memory_space<smem>>
    %515 = vector.broadcast %514 : f32 to vector<4x8x128xf32>
    %516 = arith.mulf %515, %513 : vector<4x8x128xf32>
    %517 = arith.addf %505, %516 : vector<4x8x128xf32>
    %c1_367 = arith.constant 1 : index
    %c1_368 = arith.constant 1 : index
    %518 = memref.load %arg2[%c1_367, %c1_368] : memref<3x9xf32, #tpu.memory_space<smem>>
    %519 = vector.broadcast %518 : f32 to vector<4x8x128xf32>
    %520 = arith.mulf %519, %513 : vector<4x8x128xf32>
    %521 = arith.addf %508, %520 : vector<4x8x128xf32>
    %c2_369 = arith.constant 2 : index
    %c1_370 = arith.constant 1 : index
    %522 = memref.load %arg2[%c2_369, %c1_370] : memref<3x9xf32, #tpu.memory_space<smem>>
    %523 = vector.broadcast %522 : f32 to vector<4x8x128xf32>
    %524 = arith.mulf %523, %513 : vector<4x8x128xf32>
    %525 = arith.addf %511, %524 : vector<4x8x128xf32>
    %c3_371 = arith.constant 3 : index
    %c0_372 = arith.constant 0 : index
    %c1_373 = arith.constant 1 : index
    %c0_374 = arith.constant 0 : index
    %526 = vector.load %arg1[%c3_371, %c0_372, %c1_373, %c0_374] : memref<9x9x9x128xf32, #tpu.memory_space<vmem>>, vector<1x4x8x128xf32>
    %527 = vector.shape_cast %526 : vector<1x4x8x128xf32> to vector<4x8x128xf32>
    %c0_375 = arith.constant 0 : index
    %c2_376 = arith.constant 2 : index
    %528 = memref.load %arg2[%c0_375, %c2_376] : memref<3x9xf32, #tpu.memory_space<smem>>
    %529 = vector.broadcast %528 : f32 to vector<4x8x128xf32>
    %530 = arith.mulf %529, %527 : vector<4x8x128xf32>
    %531 = arith.addf %517, %530 : vector<4x8x128xf32>
    %c1_377 = arith.constant 1 : index
    %c2_378 = arith.constant 2 : index
    %532 = memref.load %arg2[%c1_377, %c2_378] : memref<3x9xf32, #tpu.memory_space<smem>>
    %533 = vector.broadcast %532 : f32 to vector<4x8x128xf32>
    %534 = arith.mulf %533, %527 : vector<4x8x128xf32>
    %535 = arith.addf %521, %534 : vector<4x8x128xf32>
    %c2_379 = arith.constant 2 : index
    %c2_380 = arith.constant 2 : index
    %536 = memref.load %arg2[%c2_379, %c2_380] : memref<3x9xf32, #tpu.memory_space<smem>>
    %537 = vector.broadcast %536 : f32 to vector<4x8x128xf32>
    %538 = arith.mulf %537, %527 : vector<4x8x128xf32>
    %539 = arith.addf %525, %538 : vector<4x8x128xf32>
    %c7_381 = arith.constant 7 : index
    %c0_382 = arith.constant 0 : index
    %c0_383 = arith.constant 0 : index
    %c0_384 = arith.constant 0 : index
    %540 = vector.load %arg1[%c7_381, %c0_382, %c0_383, %c0_384] : memref<9x9x9x128xf32, #tpu.memory_space<vmem>>, vector<1x4x8x128xf32>
    %541 = vector.shape_cast %540 : vector<1x4x8x128xf32> to vector<4x8x128xf32>
    %c0_385 = arith.constant 0 : index
    %c3_386 = arith.constant 3 : index
    %542 = memref.load %arg2[%c0_385, %c3_386] : memref<3x9xf32, #tpu.memory_space<smem>>
    %543 = vector.broadcast %542 : f32 to vector<4x8x128xf32>
    %544 = arith.mulf %543, %541 : vector<4x8x128xf32>
    %545 = arith.addf %531, %544 : vector<4x8x128xf32>
    %c1_387 = arith.constant 1 : index
    %c3_388 = arith.constant 3 : index
    %546 = memref.load %arg2[%c1_387, %c3_388] : memref<3x9xf32, #tpu.memory_space<smem>>
    %547 = vector.broadcast %546 : f32 to vector<4x8x128xf32>
    %548 = arith.mulf %547, %541 : vector<4x8x128xf32>
    %549 = arith.addf %535, %548 : vector<4x8x128xf32>
    %c2_389 = arith.constant 2 : index
    %c3_390 = arith.constant 3 : index
    %550 = memref.load %arg2[%c2_389, %c3_390] : memref<3x9xf32, #tpu.memory_space<smem>>
    %551 = vector.broadcast %550 : f32 to vector<4x8x128xf32>
    %552 = arith.mulf %551, %541 : vector<4x8x128xf32>
    %553 = arith.addf %539, %552 : vector<4x8x128xf32>
    %c8_391 = arith.constant 8 : index
    %c0_392 = arith.constant 0 : index
    %c0_393 = arith.constant 0 : index
    %c0_394 = arith.constant 0 : index
    %554 = vector.load %arg1[%c8_391, %c0_392, %c0_393, %c0_394] : memref<9x9x9x128xf32, #tpu.memory_space<vmem>>, vector<1x4x8x128xf32>
    %555 = vector.shape_cast %554 : vector<1x4x8x128xf32> to vector<4x8x128xf32>
    %c0_395 = arith.constant 0 : index
    %c4_396 = arith.constant 4 : index
    %556 = memref.load %arg2[%c0_395, %c4_396] : memref<3x9xf32, #tpu.memory_space<smem>>
    %557 = vector.broadcast %556 : f32 to vector<4x8x128xf32>
    %558 = arith.mulf %557, %555 : vector<4x8x128xf32>
    %559 = arith.addf %545, %558 : vector<4x8x128xf32>
    %c1_397 = arith.constant 1 : index
    %c4_398 = arith.constant 4 : index
    %560 = memref.load %arg2[%c1_397, %c4_398] : memref<3x9xf32, #tpu.memory_space<smem>>
    %561 = vector.broadcast %560 : f32 to vector<4x8x128xf32>
    %562 = arith.mulf %561, %555 : vector<4x8x128xf32>
    %563 = arith.addf %549, %562 : vector<4x8x128xf32>
    %c2_399 = arith.constant 2 : index
    %c4_400 = arith.constant 4 : index
    %564 = memref.load %arg2[%c2_399, %c4_400] : memref<3x9xf32, #tpu.memory_space<smem>>
    %565 = vector.broadcast %564 : f32 to vector<4x8x128xf32>
    %566 = arith.mulf %565, %555 : vector<4x8x128xf32>
    %567 = arith.addf %553, %566 : vector<4x8x128xf32>
    %c6_401 = arith.constant 6 : index
    %c0_402 = arith.constant 0 : index
    %c1_403 = arith.constant 1 : index
    %c0_404 = arith.constant 0 : index
    %568 = vector.load %arg1[%c6_401, %c0_402, %c1_403, %c0_404] : memref<9x9x9x128xf32, #tpu.memory_space<vmem>>, vector<1x4x8x128xf32>
    %569 = vector.shape_cast %568 : vector<1x4x8x128xf32> to vector<4x8x128xf32>
    %c0_405 = arith.constant 0 : index
    %c5_406 = arith.constant 5 : index
    %570 = memref.load %arg2[%c0_405, %c5_406] : memref<3x9xf32, #tpu.memory_space<smem>>
    %571 = vector.broadcast %570 : f32 to vector<4x8x128xf32>
    %572 = arith.mulf %571, %569 : vector<4x8x128xf32>
    %573 = arith.addf %559, %572 : vector<4x8x128xf32>
    %c1_407 = arith.constant 1 : index
    %c5_408 = arith.constant 5 : index
    %574 = memref.load %arg2[%c1_407, %c5_408] : memref<3x9xf32, #tpu.memory_space<smem>>
    %575 = vector.broadcast %574 : f32 to vector<4x8x128xf32>
    %576 = arith.mulf %575, %569 : vector<4x8x128xf32>
    %577 = arith.addf %563, %576 : vector<4x8x128xf32>
    %c2_409 = arith.constant 2 : index
    %c5_410 = arith.constant 5 : index
    %578 = memref.load %arg2[%c2_409, %c5_410] : memref<3x9xf32, #tpu.memory_space<smem>>
    %579 = vector.broadcast %578 : f32 to vector<4x8x128xf32>
    %580 = arith.mulf %579, %569 : vector<4x8x128xf32>
    %581 = arith.addf %567, %580 : vector<4x8x128xf32>
    %c1_411 = arith.constant 1 : index
    %c1_412 = arith.constant 1 : index
    %c0_413 = arith.constant 0 : index
    %c0_414 = arith.constant 0 : index
    %582 = vector.load %arg1[%c1_411, %c1_412, %c0_413, %c0_414] : memref<9x9x9x128xf32, #tpu.memory_space<vmem>>, vector<1x4x8x128xf32>
    %583 = vector.shape_cast %582 : vector<1x4x8x128xf32> to vector<4x8x128xf32>
    %c0_415 = arith.constant 0 : index
    %c6_416 = arith.constant 6 : index
    %584 = memref.load %arg2[%c0_415, %c6_416] : memref<3x9xf32, #tpu.memory_space<smem>>
    %585 = vector.broadcast %584 : f32 to vector<4x8x128xf32>
    %586 = arith.mulf %585, %583 : vector<4x8x128xf32>
    %587 = arith.addf %573, %586 : vector<4x8x128xf32>
    %c1_417 = arith.constant 1 : index
    %c6_418 = arith.constant 6 : index
    %588 = memref.load %arg2[%c1_417, %c6_418] : memref<3x9xf32, #tpu.memory_space<smem>>
    %589 = vector.broadcast %588 : f32 to vector<4x8x128xf32>
    %590 = arith.mulf %589, %583 : vector<4x8x128xf32>
    %591 = arith.addf %577, %590 : vector<4x8x128xf32>
    %c2_419 = arith.constant 2 : index
    %c6_420 = arith.constant 6 : index
    %592 = memref.load %arg2[%c2_419, %c6_420] : memref<3x9xf32, #tpu.memory_space<smem>>
    %593 = vector.broadcast %592 : f32 to vector<4x8x128xf32>
    %594 = arith.mulf %593, %583 : vector<4x8x128xf32>
    %595 = arith.addf %581, %594 : vector<4x8x128xf32>
    %c2_421 = arith.constant 2 : index
    %c1_422 = arith.constant 1 : index
    %c0_423 = arith.constant 0 : index
    %c0_424 = arith.constant 0 : index
    %596 = vector.load %arg1[%c2_421, %c1_422, %c0_423, %c0_424] : memref<9x9x9x128xf32, #tpu.memory_space<vmem>>, vector<1x4x8x128xf32>
    %597 = vector.shape_cast %596 : vector<1x4x8x128xf32> to vector<4x8x128xf32>
    %c0_425 = arith.constant 0 : index
    %c7_426 = arith.constant 7 : index
    %598 = memref.load %arg2[%c0_425, %c7_426] : memref<3x9xf32, #tpu.memory_space<smem>>
    %599 = vector.broadcast %598 : f32 to vector<4x8x128xf32>
    %600 = arith.mulf %599, %597 : vector<4x8x128xf32>
    %601 = arith.addf %587, %600 : vector<4x8x128xf32>
    %c1_427 = arith.constant 1 : index
    %c7_428 = arith.constant 7 : index
    %602 = memref.load %arg2[%c1_427, %c7_428] : memref<3x9xf32, #tpu.memory_space<smem>>
    %603 = vector.broadcast %602 : f32 to vector<4x8x128xf32>
    %604 = arith.mulf %603, %597 : vector<4x8x128xf32>
    %605 = arith.addf %591, %604 : vector<4x8x128xf32>
    %c2_429 = arith.constant 2 : index
    %c7_430 = arith.constant 7 : index
    %606 = memref.load %arg2[%c2_429, %c7_430] : memref<3x9xf32, #tpu.memory_space<smem>>
    %607 = vector.broadcast %606 : f32 to vector<4x8x128xf32>
    %608 = arith.mulf %607, %597 : vector<4x8x128xf32>
    %609 = arith.addf %595, %608 : vector<4x8x128xf32>
    %c0_431 = arith.constant 0 : index
    %c1_432 = arith.constant 1 : index
    %c1_433 = arith.constant 1 : index
    %c0_434 = arith.constant 0 : index
    %610 = vector.load %arg1[%c0_431, %c1_432, %c1_433, %c0_434] : memref<9x9x9x128xf32, #tpu.memory_space<vmem>>, vector<1x4x8x128xf32>
    %611 = vector.shape_cast %610 : vector<1x4x8x128xf32> to vector<4x8x128xf32>
    %c0_435 = arith.constant 0 : index
    %c8_436 = arith.constant 8 : index
    %612 = memref.load %arg2[%c0_435, %c8_436] : memref<3x9xf32, #tpu.memory_space<smem>>
    %613 = vector.broadcast %612 : f32 to vector<4x8x128xf32>
    %614 = arith.mulf %613, %611 : vector<4x8x128xf32>
    %615 = arith.addf %601, %614 : vector<4x8x128xf32>
    %c1_437 = arith.constant 1 : index
    %c8_438 = arith.constant 8 : index
    %616 = memref.load %arg2[%c1_437, %c8_438] : memref<3x9xf32, #tpu.memory_space<smem>>
    %617 = vector.broadcast %616 : f32 to vector<4x8x128xf32>
    %618 = arith.mulf %617, %611 : vector<4x8x128xf32>
    %619 = arith.addf %605, %618 : vector<4x8x128xf32>
    %c2_439 = arith.constant 2 : index
    %c8_440 = arith.constant 8 : index
    %620 = memref.load %arg2[%c2_439, %c8_440] : memref<3x9xf32, #tpu.memory_space<smem>>
    %621 = vector.broadcast %620 : f32 to vector<4x8x128xf32>
    %622 = arith.mulf %621, %611 : vector<4x8x128xf32>
    %623 = arith.addf %609, %622 : vector<4x8x128xf32>
    %624 = arith.maximumf %498, %615 : vector<4x8x128xf32>
    %625 = arith.maximumf %499, %619 : vector<4x8x128xf32>
    %626 = arith.maximumf %500, %623 : vector<4x8x128xf32>
    %c5_441 = arith.constant 5 : index
    %c0_442 = arith.constant 0 : index
    %c0_443 = arith.constant 0 : index
    %c0_444 = arith.constant 0 : index
    %627 = vector.load %arg1[%c5_441, %c0_442, %c0_443, %c0_444] : memref<9x9x9x128xf32, #tpu.memory_space<vmem>>, vector<1x4x8x128xf32>
    %628 = vector.shape_cast %627 : vector<1x4x8x128xf32> to vector<4x8x128xf32>
    %c0_445 = arith.constant 0 : index
    %c0_446 = arith.constant 0 : index
    %629 = memref.load %arg2[%c0_445, %c0_446] : memref<3x9xf32, #tpu.memory_space<smem>>
    %630 = vector.broadcast %629 : f32 to vector<4x8x128xf32>
    %631 = arith.mulf %630, %628 : vector<4x8x128xf32>
    %c1_447 = arith.constant 1 : index
    %c0_448 = arith.constant 0 : index
    %632 = memref.load %arg2[%c1_447, %c0_448] : memref<3x9xf32, #tpu.memory_space<smem>>
    %633 = vector.broadcast %632 : f32 to vector<4x8x128xf32>
    %634 = arith.mulf %633, %628 : vector<4x8x128xf32>
    %c2_449 = arith.constant 2 : index
    %c0_450 = arith.constant 0 : index
    %635 = memref.load %arg2[%c2_449, %c0_450] : memref<3x9xf32, #tpu.memory_space<smem>>
    %636 = vector.broadcast %635 : f32 to vector<4x8x128xf32>
    %637 = arith.mulf %636, %628 : vector<4x8x128xf32>
    %c3_451 = arith.constant 3 : index
    %c0_452 = arith.constant 0 : index
    %c1_453 = arith.constant 1 : index
    %c0_454 = arith.constant 0 : index
    %638 = vector.load %arg1[%c3_451, %c0_452, %c1_453, %c0_454] : memref<9x9x9x128xf32, #tpu.memory_space<vmem>>, vector<1x4x8x128xf32>
    %639 = vector.shape_cast %638 : vector<1x4x8x128xf32> to vector<4x8x128xf32>
    %c0_455 = arith.constant 0 : index
    %c1_456 = arith.constant 1 : index
    %640 = memref.load %arg2[%c0_455, %c1_456] : memref<3x9xf32, #tpu.memory_space<smem>>
    %641 = vector.broadcast %640 : f32 to vector<4x8x128xf32>
    %642 = arith.mulf %641, %639 : vector<4x8x128xf32>
    %643 = arith.addf %631, %642 : vector<4x8x128xf32>
    %c1_457 = arith.constant 1 : index
    %c1_458 = arith.constant 1 : index
    %644 = memref.load %arg2[%c1_457, %c1_458] : memref<3x9xf32, #tpu.memory_space<smem>>
    %645 = vector.broadcast %644 : f32 to vector<4x8x128xf32>
    %646 = arith.mulf %645, %639 : vector<4x8x128xf32>
    %647 = arith.addf %634, %646 : vector<4x8x128xf32>
    %c2_459 = arith.constant 2 : index
    %c1_460 = arith.constant 1 : index
    %648 = memref.load %arg2[%c2_459, %c1_460] : memref<3x9xf32, #tpu.memory_space<smem>>
    %649 = vector.broadcast %648 : f32 to vector<4x8x128xf32>
    %650 = arith.mulf %649, %639 : vector<4x8x128xf32>
    %651 = arith.addf %637, %650 : vector<4x8x128xf32>
    %c4_461 = arith.constant 4 : index
    %c0_462 = arith.constant 0 : index
    %c1_463 = arith.constant 1 : index
    %c0_464 = arith.constant 0 : index
    %652 = vector.load %arg1[%c4_461, %c0_462, %c1_463, %c0_464] : memref<9x9x9x128xf32, #tpu.memory_space<vmem>>, vector<1x4x8x128xf32>
    %653 = vector.shape_cast %652 : vector<1x4x8x128xf32> to vector<4x8x128xf32>
    %c0_465 = arith.constant 0 : index
    %c2_466 = arith.constant 2 : index
    %654 = memref.load %arg2[%c0_465, %c2_466] : memref<3x9xf32, #tpu.memory_space<smem>>
    %655 = vector.broadcast %654 : f32 to vector<4x8x128xf32>
    %656 = arith.mulf %655, %653 : vector<4x8x128xf32>
    %657 = arith.addf %643, %656 : vector<4x8x128xf32>
    %c1_467 = arith.constant 1 : index
    %c2_468 = arith.constant 2 : index
    %658 = memref.load %arg2[%c1_467, %c2_468] : memref<3x9xf32, #tpu.memory_space<smem>>
    %659 = vector.broadcast %658 : f32 to vector<4x8x128xf32>
    %660 = arith.mulf %659, %653 : vector<4x8x128xf32>
    %661 = arith.addf %647, %660 : vector<4x8x128xf32>
    %c2_469 = arith.constant 2 : index
    %c2_470 = arith.constant 2 : index
    %662 = memref.load %arg2[%c2_469, %c2_470] : memref<3x9xf32, #tpu.memory_space<smem>>
    %663 = vector.broadcast %662 : f32 to vector<4x8x128xf32>
    %664 = arith.mulf %663, %653 : vector<4x8x128xf32>
    %665 = arith.addf %651, %664 : vector<4x8x128xf32>
    %c8_471 = arith.constant 8 : index
    %c0_472 = arith.constant 0 : index
    %c0_473 = arith.constant 0 : index
    %c0_474 = arith.constant 0 : index
    %666 = vector.load %arg1[%c8_471, %c0_472, %c0_473, %c0_474] : memref<9x9x9x128xf32, #tpu.memory_space<vmem>>, vector<1x4x8x128xf32>
    %667 = vector.shape_cast %666 : vector<1x4x8x128xf32> to vector<4x8x128xf32>
    %c0_475 = arith.constant 0 : index
    %c3_476 = arith.constant 3 : index
    %668 = memref.load %arg2[%c0_475, %c3_476] : memref<3x9xf32, #tpu.memory_space<smem>>
    %669 = vector.broadcast %668 : f32 to vector<4x8x128xf32>
    %670 = arith.mulf %669, %667 : vector<4x8x128xf32>
    %671 = arith.addf %657, %670 : vector<4x8x128xf32>
    %c1_477 = arith.constant 1 : index
    %c3_478 = arith.constant 3 : index
    %672 = memref.load %arg2[%c1_477, %c3_478] : memref<3x9xf32, #tpu.memory_space<smem>>
    %673 = vector.broadcast %672 : f32 to vector<4x8x128xf32>
    %674 = arith.mulf %673, %667 : vector<4x8x128xf32>
    %675 = arith.addf %661, %674 : vector<4x8x128xf32>
    %c2_479 = arith.constant 2 : index
    %c3_480 = arith.constant 3 : index
    %676 = memref.load %arg2[%c2_479, %c3_480] : memref<3x9xf32, #tpu.memory_space<smem>>
    %677 = vector.broadcast %676 : f32 to vector<4x8x128xf32>
    %678 = arith.mulf %677, %667 : vector<4x8x128xf32>
    %679 = arith.addf %665, %678 : vector<4x8x128xf32>
    %c6_481 = arith.constant 6 : index
    %c0_482 = arith.constant 0 : index
    %c1_483 = arith.constant 1 : index
    %c0_484 = arith.constant 0 : index
    %680 = vector.load %arg1[%c6_481, %c0_482, %c1_483, %c0_484] : memref<9x9x9x128xf32, #tpu.memory_space<vmem>>, vector<1x4x8x128xf32>
    %681 = vector.shape_cast %680 : vector<1x4x8x128xf32> to vector<4x8x128xf32>
    %c0_485 = arith.constant 0 : index
    %c4_486 = arith.constant 4 : index
    %682 = memref.load %arg2[%c0_485, %c4_486] : memref<3x9xf32, #tpu.memory_space<smem>>
    %683 = vector.broadcast %682 : f32 to vector<4x8x128xf32>
    %684 = arith.mulf %683, %681 : vector<4x8x128xf32>
    %685 = arith.addf %671, %684 : vector<4x8x128xf32>
    %c1_487 = arith.constant 1 : index
    %c4_488 = arith.constant 4 : index
    %686 = memref.load %arg2[%c1_487, %c4_488] : memref<3x9xf32, #tpu.memory_space<smem>>
    %687 = vector.broadcast %686 : f32 to vector<4x8x128xf32>
    %688 = arith.mulf %687, %681 : vector<4x8x128xf32>
    %689 = arith.addf %675, %688 : vector<4x8x128xf32>
    %c2_489 = arith.constant 2 : index
    %c4_490 = arith.constant 4 : index
    %690 = memref.load %arg2[%c2_489, %c4_490] : memref<3x9xf32, #tpu.memory_space<smem>>
    %691 = vector.broadcast %690 : f32 to vector<4x8x128xf32>
    %692 = arith.mulf %691, %681 : vector<4x8x128xf32>
    %693 = arith.addf %679, %692 : vector<4x8x128xf32>
    %c7_491 = arith.constant 7 : index
    %c0_492 = arith.constant 0 : index
    %c1_493 = arith.constant 1 : index
    %c0_494 = arith.constant 0 : index
    %694 = vector.load %arg1[%c7_491, %c0_492, %c1_493, %c0_494] : memref<9x9x9x128xf32, #tpu.memory_space<vmem>>, vector<1x4x8x128xf32>
    %695 = vector.shape_cast %694 : vector<1x4x8x128xf32> to vector<4x8x128xf32>
    %c0_495 = arith.constant 0 : index
    %c5_496 = arith.constant 5 : index
    %696 = memref.load %arg2[%c0_495, %c5_496] : memref<3x9xf32, #tpu.memory_space<smem>>
    %697 = vector.broadcast %696 : f32 to vector<4x8x128xf32>
    %698 = arith.mulf %697, %695 : vector<4x8x128xf32>
    %699 = arith.addf %685, %698 : vector<4x8x128xf32>
    %c1_497 = arith.constant 1 : index
    %c5_498 = arith.constant 5 : index
    %700 = memref.load %arg2[%c1_497, %c5_498] : memref<3x9xf32, #tpu.memory_space<smem>>
    %701 = vector.broadcast %700 : f32 to vector<4x8x128xf32>
    %702 = arith.mulf %701, %695 : vector<4x8x128xf32>
    %703 = arith.addf %689, %702 : vector<4x8x128xf32>
    %c2_499 = arith.constant 2 : index
    %c5_500 = arith.constant 5 : index
    %704 = memref.load %arg2[%c2_499, %c5_500] : memref<3x9xf32, #tpu.memory_space<smem>>
    %705 = vector.broadcast %704 : f32 to vector<4x8x128xf32>
    %706 = arith.mulf %705, %695 : vector<4x8x128xf32>
    %707 = arith.addf %693, %706 : vector<4x8x128xf32>
    %c2_501 = arith.constant 2 : index
    %c1_502 = arith.constant 1 : index
    %c0_503 = arith.constant 0 : index
    %c0_504 = arith.constant 0 : index
    %708 = vector.load %arg1[%c2_501, %c1_502, %c0_503, %c0_504] : memref<9x9x9x128xf32, #tpu.memory_space<vmem>>, vector<1x4x8x128xf32>
    %709 = vector.shape_cast %708 : vector<1x4x8x128xf32> to vector<4x8x128xf32>
    %c0_505 = arith.constant 0 : index
    %c6_506 = arith.constant 6 : index
    %710 = memref.load %arg2[%c0_505, %c6_506] : memref<3x9xf32, #tpu.memory_space<smem>>
    %711 = vector.broadcast %710 : f32 to vector<4x8x128xf32>
    %712 = arith.mulf %711, %709 : vector<4x8x128xf32>
    %713 = arith.addf %699, %712 : vector<4x8x128xf32>
    %c1_507 = arith.constant 1 : index
    %c6_508 = arith.constant 6 : index
    %714 = memref.load %arg2[%c1_507, %c6_508] : memref<3x9xf32, #tpu.memory_space<smem>>
    %715 = vector.broadcast %714 : f32 to vector<4x8x128xf32>
    %716 = arith.mulf %715, %709 : vector<4x8x128xf32>
    %717 = arith.addf %703, %716 : vector<4x8x128xf32>
    %c2_509 = arith.constant 2 : index
    %c6_510 = arith.constant 6 : index
    %718 = memref.load %arg2[%c2_509, %c6_510] : memref<3x9xf32, #tpu.memory_space<smem>>
    %719 = vector.broadcast %718 : f32 to vector<4x8x128xf32>
    %720 = arith.mulf %719, %709 : vector<4x8x128xf32>
    %721 = arith.addf %707, %720 : vector<4x8x128xf32>
    %c0_511 = arith.constant 0 : index
    %c1_512 = arith.constant 1 : index
    %c1_513 = arith.constant 1 : index
    %c0_514 = arith.constant 0 : index
    %722 = vector.load %arg1[%c0_511, %c1_512, %c1_513, %c0_514] : memref<9x9x9x128xf32, #tpu.memory_space<vmem>>, vector<1x4x8x128xf32>
    %723 = vector.shape_cast %722 : vector<1x4x8x128xf32> to vector<4x8x128xf32>
    %c0_515 = arith.constant 0 : index
    %c7_516 = arith.constant 7 : index
    %724 = memref.load %arg2[%c0_515, %c7_516] : memref<3x9xf32, #tpu.memory_space<smem>>
    %725 = vector.broadcast %724 : f32 to vector<4x8x128xf32>
    %726 = arith.mulf %725, %723 : vector<4x8x128xf32>
    %727 = arith.addf %713, %726 : vector<4x8x128xf32>
    %c1_517 = arith.constant 1 : index
    %c7_518 = arith.constant 7 : index
    %728 = memref.load %arg2[%c1_517, %c7_518] : memref<3x9xf32, #tpu.memory_space<smem>>
    %729 = vector.broadcast %728 : f32 to vector<4x8x128xf32>
    %730 = arith.mulf %729, %723 : vector<4x8x128xf32>
    %731 = arith.addf %717, %730 : vector<4x8x128xf32>
    %c2_519 = arith.constant 2 : index
    %c7_520 = arith.constant 7 : index
    %732 = memref.load %arg2[%c2_519, %c7_520] : memref<3x9xf32, #tpu.memory_space<smem>>
    %733 = vector.broadcast %732 : f32 to vector<4x8x128xf32>
    %734 = arith.mulf %733, %723 : vector<4x8x128xf32>
    %735 = arith.addf %721, %734 : vector<4x8x128xf32>
    %c1_521 = arith.constant 1 : index
    %c1_522 = arith.constant 1 : index
    %c1_523 = arith.constant 1 : index
    %c0_524 = arith.constant 0 : index
    %736 = vector.load %arg1[%c1_521, %c1_522, %c1_523, %c0_524] : memref<9x9x9x128xf32, #tpu.memory_space<vmem>>, vector<1x4x8x128xf32>
    %737 = vector.shape_cast %736 : vector<1x4x8x128xf32> to vector<4x8x128xf32>
    %c0_525 = arith.constant 0 : index
    %c8_526 = arith.constant 8 : index
    %738 = memref.load %arg2[%c0_525, %c8_526] : memref<3x9xf32, #tpu.memory_space<smem>>
    %739 = vector.broadcast %738 : f32 to vector<4x8x128xf32>
    %740 = arith.mulf %739, %737 : vector<4x8x128xf32>
    %741 = arith.addf %727, %740 : vector<4x8x128xf32>
    %c1_527 = arith.constant 1 : index
    %c8_528 = arith.constant 8 : index
    %742 = memref.load %arg2[%c1_527, %c8_528] : memref<3x9xf32, #tpu.memory_space<smem>>
    %743 = vector.broadcast %742 : f32 to vector<4x8x128xf32>
    %744 = arith.mulf %743, %737 : vector<4x8x128xf32>
    %745 = arith.addf %731, %744 : vector<4x8x128xf32>
    %c2_529 = arith.constant 2 : index
    %c8_530 = arith.constant 8 : index
    %746 = memref.load %arg2[%c2_529, %c8_530] : memref<3x9xf32, #tpu.memory_space<smem>>
    %747 = vector.broadcast %746 : f32 to vector<4x8x128xf32>
    %748 = arith.mulf %747, %737 : vector<4x8x128xf32>
    %749 = arith.addf %735, %748 : vector<4x8x128xf32>
    %750 = arith.maximumf %624, %741 : vector<4x8x128xf32>
    %751 = arith.maximumf %625, %745 : vector<4x8x128xf32>
    %752 = arith.maximumf %626, %749 : vector<4x8x128xf32>
    %c6_531 = arith.constant 6 : index
    %c0_532 = arith.constant 0 : index
    %c0_533 = arith.constant 0 : index
    %c0_534 = arith.constant 0 : index
    %753 = vector.load %arg1[%c6_531, %c0_532, %c0_533, %c0_534] : memref<9x9x9x128xf32, #tpu.memory_space<vmem>>, vector<1x4x8x128xf32>
    %754 = vector.shape_cast %753 : vector<1x4x8x128xf32> to vector<4x8x128xf32>
    %c0_535 = arith.constant 0 : index
    %c0_536 = arith.constant 0 : index
    %755 = memref.load %arg2[%c0_535, %c0_536] : memref<3x9xf32, #tpu.memory_space<smem>>
    %756 = vector.broadcast %755 : f32 to vector<4x8x128xf32>
    %757 = arith.mulf %756, %754 : vector<4x8x128xf32>
    %c1_537 = arith.constant 1 : index
    %c0_538 = arith.constant 0 : index
    %758 = memref.load %arg2[%c1_537, %c0_538] : memref<3x9xf32, #tpu.memory_space<smem>>
    %759 = vector.broadcast %758 : f32 to vector<4x8x128xf32>
    %760 = arith.mulf %759, %754 : vector<4x8x128xf32>
    %c2_539 = arith.constant 2 : index
    %c0_540 = arith.constant 0 : index
    %761 = memref.load %arg2[%c2_539, %c0_540] : memref<3x9xf32, #tpu.memory_space<smem>>
    %762 = vector.broadcast %761 : f32 to vector<4x8x128xf32>
    %763 = arith.mulf %762, %754 : vector<4x8x128xf32>
    %c7_541 = arith.constant 7 : index
    %c0_542 = arith.constant 0 : index
    %c0_543 = arith.constant 0 : index
    %c0_544 = arith.constant 0 : index
    %764 = vector.load %arg1[%c7_541, %c0_542, %c0_543, %c0_544] : memref<9x9x9x128xf32, #tpu.memory_space<vmem>>, vector<1x4x8x128xf32>
    %765 = vector.shape_cast %764 : vector<1x4x8x128xf32> to vector<4x8x128xf32>
    %c0_545 = arith.constant 0 : index
    %c1_546 = arith.constant 1 : index
    %766 = memref.load %arg2[%c0_545, %c1_546] : memref<3x9xf32, #tpu.memory_space<smem>>
    %767 = vector.broadcast %766 : f32 to vector<4x8x128xf32>
    %768 = arith.mulf %767, %765 : vector<4x8x128xf32>
    %769 = arith.addf %757, %768 : vector<4x8x128xf32>
    %c1_547 = arith.constant 1 : index
    %c1_548 = arith.constant 1 : index
    %770 = memref.load %arg2[%c1_547, %c1_548] : memref<3x9xf32, #tpu.memory_space<smem>>
    %771 = vector.broadcast %770 : f32 to vector<4x8x128xf32>
    %772 = arith.mulf %771, %765 : vector<4x8x128xf32>
    %773 = arith.addf %760, %772 : vector<4x8x128xf32>
    %c2_549 = arith.constant 2 : index
    %c1_550 = arith.constant 1 : index
    %774 = memref.load %arg2[%c2_549, %c1_550] : memref<3x9xf32, #tpu.memory_space<smem>>
    %775 = vector.broadcast %774 : f32 to vector<4x8x128xf32>
    %776 = arith.mulf %775, %765 : vector<4x8x128xf32>
    %777 = arith.addf %763, %776 : vector<4x8x128xf32>
    %c8_551 = arith.constant 8 : index
    %c0_552 = arith.constant 0 : index
    %c0_553 = arith.constant 0 : index
    %c0_554 = arith.constant 0 : index
    %778 = vector.load %arg1[%c8_551, %c0_552, %c0_553, %c0_554] : memref<9x9x9x128xf32, #tpu.memory_space<vmem>>, vector<1x4x8x128xf32>
    %779 = vector.shape_cast %778 : vector<1x4x8x128xf32> to vector<4x8x128xf32>
    %c0_555 = arith.constant 0 : index
    %c2_556 = arith.constant 2 : index
    %780 = memref.load %arg2[%c0_555, %c2_556] : memref<3x9xf32, #tpu.memory_space<smem>>
    %781 = vector.broadcast %780 : f32 to vector<4x8x128xf32>
    %782 = arith.mulf %781, %779 : vector<4x8x128xf32>
    %783 = arith.addf %769, %782 : vector<4x8x128xf32>
    %c1_557 = arith.constant 1 : index
    %c2_558 = arith.constant 2 : index
    %784 = memref.load %arg2[%c1_557, %c2_558] : memref<3x9xf32, #tpu.memory_space<smem>>
    %785 = vector.broadcast %784 : f32 to vector<4x8x128xf32>
    %786 = arith.mulf %785, %779 : vector<4x8x128xf32>
    %787 = arith.addf %773, %786 : vector<4x8x128xf32>
    %c2_559 = arith.constant 2 : index
    %c2_560 = arith.constant 2 : index
    %788 = memref.load %arg2[%c2_559, %c2_560] : memref<3x9xf32, #tpu.memory_space<smem>>
    %789 = vector.broadcast %788 : f32 to vector<4x8x128xf32>
    %790 = arith.mulf %789, %779 : vector<4x8x128xf32>
    %791 = arith.addf %777, %790 : vector<4x8x128xf32>
    %c0_561 = arith.constant 0 : index
    %c1_562 = arith.constant 1 : index
    %c0_563 = arith.constant 0 : index
    %c0_564 = arith.constant 0 : index
    %792 = vector.load %arg1[%c0_561, %c1_562, %c0_563, %c0_564] : memref<9x9x9x128xf32, #tpu.memory_space<vmem>>, vector<1x4x8x128xf32>
    %793 = vector.shape_cast %792 : vector<1x4x8x128xf32> to vector<4x8x128xf32>
    %c0_565 = arith.constant 0 : index
    %c3_566 = arith.constant 3 : index
    %794 = memref.load %arg2[%c0_565, %c3_566] : memref<3x9xf32, #tpu.memory_space<smem>>
    %795 = vector.broadcast %794 : f32 to vector<4x8x128xf32>
    %796 = arith.mulf %795, %793 : vector<4x8x128xf32>
    %797 = arith.addf %783, %796 : vector<4x8x128xf32>
    %c1_567 = arith.constant 1 : index
    %c3_568 = arith.constant 3 : index
    %798 = memref.load %arg2[%c1_567, %c3_568] : memref<3x9xf32, #tpu.memory_space<smem>>
    %799 = vector.broadcast %798 : f32 to vector<4x8x128xf32>
    %800 = arith.mulf %799, %793 : vector<4x8x128xf32>
    %801 = arith.addf %787, %800 : vector<4x8x128xf32>
    %c2_569 = arith.constant 2 : index
    %c3_570 = arith.constant 3 : index
    %802 = memref.load %arg2[%c2_569, %c3_570] : memref<3x9xf32, #tpu.memory_space<smem>>
    %803 = vector.broadcast %802 : f32 to vector<4x8x128xf32>
    %804 = arith.mulf %803, %793 : vector<4x8x128xf32>
    %805 = arith.addf %791, %804 : vector<4x8x128xf32>
    %c1_571 = arith.constant 1 : index
    %c1_572 = arith.constant 1 : index
    %c0_573 = arith.constant 0 : index
    %c0_574 = arith.constant 0 : index
    %806 = vector.load %arg1[%c1_571, %c1_572, %c0_573, %c0_574] : memref<9x9x9x128xf32, #tpu.memory_space<vmem>>, vector<1x4x8x128xf32>
    %807 = vector.shape_cast %806 : vector<1x4x8x128xf32> to vector<4x8x128xf32>
    %c0_575 = arith.constant 0 : index
    %c4_576 = arith.constant 4 : index
    %808 = memref.load %arg2[%c0_575, %c4_576] : memref<3x9xf32, #tpu.memory_space<smem>>
    %809 = vector.broadcast %808 : f32 to vector<4x8x128xf32>
    %810 = arith.mulf %809, %807 : vector<4x8x128xf32>
    %811 = arith.addf %797, %810 : vector<4x8x128xf32>
    %c1_577 = arith.constant 1 : index
    %c4_578 = arith.constant 4 : index
    %812 = memref.load %arg2[%c1_577, %c4_578] : memref<3x9xf32, #tpu.memory_space<smem>>
    %813 = vector.broadcast %812 : f32 to vector<4x8x128xf32>
    %814 = arith.mulf %813, %807 : vector<4x8x128xf32>
    %815 = arith.addf %801, %814 : vector<4x8x128xf32>
    %c2_579 = arith.constant 2 : index
    %c4_580 = arith.constant 4 : index
    %816 = memref.load %arg2[%c2_579, %c4_580] : memref<3x9xf32, #tpu.memory_space<smem>>
    %817 = vector.broadcast %816 : f32 to vector<4x8x128xf32>
    %818 = arith.mulf %817, %807 : vector<4x8x128xf32>
    %819 = arith.addf %805, %818 : vector<4x8x128xf32>
    %c2_581 = arith.constant 2 : index
    %c1_582 = arith.constant 1 : index
    %c0_583 = arith.constant 0 : index
    %c0_584 = arith.constant 0 : index
    %820 = vector.load %arg1[%c2_581, %c1_582, %c0_583, %c0_584] : memref<9x9x9x128xf32, #tpu.memory_space<vmem>>, vector<1x4x8x128xf32>
    %821 = vector.shape_cast %820 : vector<1x4x8x128xf32> to vector<4x8x128xf32>
    %c0_585 = arith.constant 0 : index
    %c5_586 = arith.constant 5 : index
    %822 = memref.load %arg2[%c0_585, %c5_586] : memref<3x9xf32, #tpu.memory_space<smem>>
    %823 = vector.broadcast %822 : f32 to vector<4x8x128xf32>
    %824 = arith.mulf %823, %821 : vector<4x8x128xf32>
    %825 = arith.addf %811, %824 : vector<4x8x128xf32>
    %c1_587 = arith.constant 1 : index
    %c5_588 = arith.constant 5 : index
    %826 = memref.load %arg2[%c1_587, %c5_588] : memref<3x9xf32, #tpu.memory_space<smem>>
    %827 = vector.broadcast %826 : f32 to vector<4x8x128xf32>
    %828 = arith.mulf %827, %821 : vector<4x8x128xf32>
    %829 = arith.addf %815, %828 : vector<4x8x128xf32>
    %c2_589 = arith.constant 2 : index
    %c5_590 = arith.constant 5 : index
    %830 = memref.load %arg2[%c2_589, %c5_590] : memref<3x9xf32, #tpu.memory_space<smem>>
    %831 = vector.broadcast %830 : f32 to vector<4x8x128xf32>
    %832 = arith.mulf %831, %821 : vector<4x8x128xf32>
    %833 = arith.addf %819, %832 : vector<4x8x128xf32>
    %c3_591 = arith.constant 3 : index
    %c1_592 = arith.constant 1 : index
    %c0_593 = arith.constant 0 : index
    %c0_594 = arith.constant 0 : index
    %834 = vector.load %arg1[%c3_591, %c1_592, %c0_593, %c0_594] : memref<9x9x9x128xf32, #tpu.memory_space<vmem>>, vector<1x4x8x128xf32>
    %835 = vector.shape_cast %834 : vector<1x4x8x128xf32> to vector<4x8x128xf32>
    %c0_595 = arith.constant 0 : index
    %c6_596 = arith.constant 6 : index
    %836 = memref.load %arg2[%c0_595, %c6_596] : memref<3x9xf32, #tpu.memory_space<smem>>
    %837 = vector.broadcast %836 : f32 to vector<4x8x128xf32>
    %838 = arith.mulf %837, %835 : vector<4x8x128xf32>
    %839 = arith.addf %825, %838 : vector<4x8x128xf32>
    %c1_597 = arith.constant 1 : index
    %c6_598 = arith.constant 6 : index
    %840 = memref.load %arg2[%c1_597, %c6_598] : memref<3x9xf32, #tpu.memory_space<smem>>
    %841 = vector.broadcast %840 : f32 to vector<4x8x128xf32>
    %842 = arith.mulf %841, %835 : vector<4x8x128xf32>
    %843 = arith.addf %829, %842 : vector<4x8x128xf32>
    %c2_599 = arith.constant 2 : index
    %c6_600 = arith.constant 6 : index
    %844 = memref.load %arg2[%c2_599, %c6_600] : memref<3x9xf32, #tpu.memory_space<smem>>
    %845 = vector.broadcast %844 : f32 to vector<4x8x128xf32>
    %846 = arith.mulf %845, %835 : vector<4x8x128xf32>
    %847 = arith.addf %833, %846 : vector<4x8x128xf32>
    %c4_601 = arith.constant 4 : index
    %c1_602 = arith.constant 1 : index
    %c0_603 = arith.constant 0 : index
    %c0_604 = arith.constant 0 : index
    %848 = vector.load %arg1[%c4_601, %c1_602, %c0_603, %c0_604] : memref<9x9x9x128xf32, #tpu.memory_space<vmem>>, vector<1x4x8x128xf32>
    %849 = vector.shape_cast %848 : vector<1x4x8x128xf32> to vector<4x8x128xf32>
    %c0_605 = arith.constant 0 : index
    %c7_606 = arith.constant 7 : index
    %850 = memref.load %arg2[%c0_605, %c7_606] : memref<3x9xf32, #tpu.memory_space<smem>>
    %851 = vector.broadcast %850 : f32 to vector<4x8x128xf32>
    %852 = arith.mulf %851, %849 : vector<4x8x128xf32>
    %853 = arith.addf %839, %852 : vector<4x8x128xf32>
    %c1_607 = arith.constant 1 : index
    %c7_608 = arith.constant 7 : index
    %854 = memref.load %arg2[%c1_607, %c7_608] : memref<3x9xf32, #tpu.memory_space<smem>>
    %855 = vector.broadcast %854 : f32 to vector<4x8x128xf32>
    %856 = arith.mulf %855, %849 : vector<4x8x128xf32>
    %857 = arith.addf %843, %856 : vector<4x8x128xf32>
    %c2_609 = arith.constant 2 : index
    %c7_610 = arith.constant 7 : index
    %858 = memref.load %arg2[%c2_609, %c7_610] : memref<3x9xf32, #tpu.memory_space<smem>>
    %859 = vector.broadcast %858 : f32 to vector<4x8x128xf32>
    %860 = arith.mulf %859, %849 : vector<4x8x128xf32>
    %861 = arith.addf %847, %860 : vector<4x8x128xf32>
    %c5_611 = arith.constant 5 : index
    %c1_612 = arith.constant 1 : index
    %c0_613 = arith.constant 0 : index
    %c0_614 = arith.constant 0 : index
    %862 = vector.load %arg1[%c5_611, %c1_612, %c0_613, %c0_614] : memref<9x9x9x128xf32, #tpu.memory_space<vmem>>, vector<1x4x8x128xf32>
    %863 = vector.shape_cast %862 : vector<1x4x8x128xf32> to vector<4x8x128xf32>
    %c0_615 = arith.constant 0 : index
    %c8_616 = arith.constant 8 : index
    %864 = memref.load %arg2[%c0_615, %c8_616] : memref<3x9xf32, #tpu.memory_space<smem>>
    %865 = vector.broadcast %864 : f32 to vector<4x8x128xf32>
    %866 = arith.mulf %865, %863 : vector<4x8x128xf32>
    %867 = arith.addf %853, %866 : vector<4x8x128xf32>
    %c1_617 = arith.constant 1 : index
    %c8_618 = arith.constant 8 : index
    %868 = memref.load %arg2[%c1_617, %c8_618] : memref<3x9xf32, #tpu.memory_space<smem>>
    %869 = vector.broadcast %868 : f32 to vector<4x8x128xf32>
    %870 = arith.mulf %869, %863 : vector<4x8x128xf32>
    %871 = arith.addf %857, %870 : vector<4x8x128xf32>
    %c2_619 = arith.constant 2 : index
    %c8_620 = arith.constant 8 : index
    %872 = memref.load %arg2[%c2_619, %c8_620] : memref<3x9xf32, #tpu.memory_space<smem>>
    %873 = vector.broadcast %872 : f32 to vector<4x8x128xf32>
    %874 = arith.mulf %873, %863 : vector<4x8x128xf32>
    %875 = arith.addf %861, %874 : vector<4x8x128xf32>
    %876 = arith.maximumf %750, %867 : vector<4x8x128xf32>
    %877 = arith.maximumf %751, %871 : vector<4x8x128xf32>
    %878 = arith.maximumf %752, %875 : vector<4x8x128xf32>
    %c7_621 = arith.constant 7 : index
    %c0_622 = arith.constant 0 : index
    %c0_623 = arith.constant 0 : index
    %c0_624 = arith.constant 0 : index
    %879 = vector.load %arg1[%c7_621, %c0_622, %c0_623, %c0_624] : memref<9x9x9x128xf32, #tpu.memory_space<vmem>>, vector<1x4x8x128xf32>
    %880 = vector.shape_cast %879 : vector<1x4x8x128xf32> to vector<4x8x128xf32>
    %c0_625 = arith.constant 0 : index
    %c0_626 = arith.constant 0 : index
    %881 = memref.load %arg2[%c0_625, %c0_626] : memref<3x9xf32, #tpu.memory_space<smem>>
    %882 = vector.broadcast %881 : f32 to vector<4x8x128xf32>
    %883 = arith.mulf %882, %880 : vector<4x8x128xf32>
    %c1_627 = arith.constant 1 : index
    %c0_628 = arith.constant 0 : index
    %884 = memref.load %arg2[%c1_627, %c0_628] : memref<3x9xf32, #tpu.memory_space<smem>>
    %885 = vector.broadcast %884 : f32 to vector<4x8x128xf32>
    %886 = arith.mulf %885, %880 : vector<4x8x128xf32>
    %c2_629 = arith.constant 2 : index
    %c0_630 = arith.constant 0 : index
    %887 = memref.load %arg2[%c2_629, %c0_630] : memref<3x9xf32, #tpu.memory_space<smem>>
    %888 = vector.broadcast %887 : f32 to vector<4x8x128xf32>
    %889 = arith.mulf %888, %880 : vector<4x8x128xf32>
    %c8_631 = arith.constant 8 : index
    %c0_632 = arith.constant 0 : index
    %c0_633 = arith.constant 0 : index
    %c0_634 = arith.constant 0 : index
    %890 = vector.load %arg1[%c8_631, %c0_632, %c0_633, %c0_634] : memref<9x9x9x128xf32, #tpu.memory_space<vmem>>, vector<1x4x8x128xf32>
    %891 = vector.shape_cast %890 : vector<1x4x8x128xf32> to vector<4x8x128xf32>
    %c0_635 = arith.constant 0 : index
    %c1_636 = arith.constant 1 : index
    %892 = memref.load %arg2[%c0_635, %c1_636] : memref<3x9xf32, #tpu.memory_space<smem>>
    %893 = vector.broadcast %892 : f32 to vector<4x8x128xf32>
    %894 = arith.mulf %893, %891 : vector<4x8x128xf32>
    %895 = arith.addf %883, %894 : vector<4x8x128xf32>
    %c1_637 = arith.constant 1 : index
    %c1_638 = arith.constant 1 : index
    %896 = memref.load %arg2[%c1_637, %c1_638] : memref<3x9xf32, #tpu.memory_space<smem>>
    %897 = vector.broadcast %896 : f32 to vector<4x8x128xf32>
    %898 = arith.mulf %897, %891 : vector<4x8x128xf32>
    %899 = arith.addf %886, %898 : vector<4x8x128xf32>
    %c2_639 = arith.constant 2 : index
    %c1_640 = arith.constant 1 : index
    %900 = memref.load %arg2[%c2_639, %c1_640] : memref<3x9xf32, #tpu.memory_space<smem>>
    %901 = vector.broadcast %900 : f32 to vector<4x8x128xf32>
    %902 = arith.mulf %901, %891 : vector<4x8x128xf32>
    %903 = arith.addf %889, %902 : vector<4x8x128xf32>
    %c6_641 = arith.constant 6 : index
    %c0_642 = arith.constant 0 : index
    %c1_643 = arith.constant 1 : index
    %c0_644 = arith.constant 0 : index
    %904 = vector.load %arg1[%c6_641, %c0_642, %c1_643, %c0_644] : memref<9x9x9x128xf32, #tpu.memory_space<vmem>>, vector<1x4x8x128xf32>
    %905 = vector.shape_cast %904 : vector<1x4x8x128xf32> to vector<4x8x128xf32>
    %c0_645 = arith.constant 0 : index
    %c2_646 = arith.constant 2 : index
    %906 = memref.load %arg2[%c0_645, %c2_646] : memref<3x9xf32, #tpu.memory_space<smem>>
    %907 = vector.broadcast %906 : f32 to vector<4x8x128xf32>
    %908 = arith.mulf %907, %905 : vector<4x8x128xf32>
    %909 = arith.addf %895, %908 : vector<4x8x128xf32>
    %c1_647 = arith.constant 1 : index
    %c2_648 = arith.constant 2 : index
    %910 = memref.load %arg2[%c1_647, %c2_648] : memref<3x9xf32, #tpu.memory_space<smem>>
    %911 = vector.broadcast %910 : f32 to vector<4x8x128xf32>
    %912 = arith.mulf %911, %905 : vector<4x8x128xf32>
    %913 = arith.addf %899, %912 : vector<4x8x128xf32>
    %c2_649 = arith.constant 2 : index
    %c2_650 = arith.constant 2 : index
    %914 = memref.load %arg2[%c2_649, %c2_650] : memref<3x9xf32, #tpu.memory_space<smem>>
    %915 = vector.broadcast %914 : f32 to vector<4x8x128xf32>
    %916 = arith.mulf %915, %905 : vector<4x8x128xf32>
    %917 = arith.addf %903, %916 : vector<4x8x128xf32>
    %c1_651 = arith.constant 1 : index
    %c1_652 = arith.constant 1 : index
    %c0_653 = arith.constant 0 : index
    %c0_654 = arith.constant 0 : index
    %918 = vector.load %arg1[%c1_651, %c1_652, %c0_653, %c0_654] : memref<9x9x9x128xf32, #tpu.memory_space<vmem>>, vector<1x4x8x128xf32>
    %919 = vector.shape_cast %918 : vector<1x4x8x128xf32> to vector<4x8x128xf32>
    %c0_655 = arith.constant 0 : index
    %c3_656 = arith.constant 3 : index
    %920 = memref.load %arg2[%c0_655, %c3_656] : memref<3x9xf32, #tpu.memory_space<smem>>
    %921 = vector.broadcast %920 : f32 to vector<4x8x128xf32>
    %922 = arith.mulf %921, %919 : vector<4x8x128xf32>
    %923 = arith.addf %909, %922 : vector<4x8x128xf32>
    %c1_657 = arith.constant 1 : index
    %c3_658 = arith.constant 3 : index
    %924 = memref.load %arg2[%c1_657, %c3_658] : memref<3x9xf32, #tpu.memory_space<smem>>
    %925 = vector.broadcast %924 : f32 to vector<4x8x128xf32>
    %926 = arith.mulf %925, %919 : vector<4x8x128xf32>
    %927 = arith.addf %913, %926 : vector<4x8x128xf32>
    %c2_659 = arith.constant 2 : index
    %c3_660 = arith.constant 3 : index
    %928 = memref.load %arg2[%c2_659, %c3_660] : memref<3x9xf32, #tpu.memory_space<smem>>
    %929 = vector.broadcast %928 : f32 to vector<4x8x128xf32>
    %930 = arith.mulf %929, %919 : vector<4x8x128xf32>
    %931 = arith.addf %917, %930 : vector<4x8x128xf32>
    %c2_661 = arith.constant 2 : index
    %c1_662 = arith.constant 1 : index
    %c0_663 = arith.constant 0 : index
    %c0_664 = arith.constant 0 : index
    %932 = vector.load %arg1[%c2_661, %c1_662, %c0_663, %c0_664] : memref<9x9x9x128xf32, #tpu.memory_space<vmem>>, vector<1x4x8x128xf32>
    %933 = vector.shape_cast %932 : vector<1x4x8x128xf32> to vector<4x8x128xf32>
    %c0_665 = arith.constant 0 : index
    %c4_666 = arith.constant 4 : index
    %934 = memref.load %arg2[%c0_665, %c4_666] : memref<3x9xf32, #tpu.memory_space<smem>>
    %935 = vector.broadcast %934 : f32 to vector<4x8x128xf32>
    %936 = arith.mulf %935, %933 : vector<4x8x128xf32>
    %937 = arith.addf %923, %936 : vector<4x8x128xf32>
    %c1_667 = arith.constant 1 : index
    %c4_668 = arith.constant 4 : index
    %938 = memref.load %arg2[%c1_667, %c4_668] : memref<3x9xf32, #tpu.memory_space<smem>>
    %939 = vector.broadcast %938 : f32 to vector<4x8x128xf32>
    %940 = arith.mulf %939, %933 : vector<4x8x128xf32>
    %941 = arith.addf %927, %940 : vector<4x8x128xf32>
    %c2_669 = arith.constant 2 : index
    %c4_670 = arith.constant 4 : index
    %942 = memref.load %arg2[%c2_669, %c4_670] : memref<3x9xf32, #tpu.memory_space<smem>>
    %943 = vector.broadcast %942 : f32 to vector<4x8x128xf32>
    %944 = arith.mulf %943, %933 : vector<4x8x128xf32>
    %945 = arith.addf %931, %944 : vector<4x8x128xf32>
    %c0_671 = arith.constant 0 : index
    %c1_672 = arith.constant 1 : index
    %c1_673 = arith.constant 1 : index
    %c0_674 = arith.constant 0 : index
    %946 = vector.load %arg1[%c0_671, %c1_672, %c1_673, %c0_674] : memref<9x9x9x128xf32, #tpu.memory_space<vmem>>, vector<1x4x8x128xf32>
    %947 = vector.shape_cast %946 : vector<1x4x8x128xf32> to vector<4x8x128xf32>
    %c0_675 = arith.constant 0 : index
    %c5_676 = arith.constant 5 : index
    %948 = memref.load %arg2[%c0_675, %c5_676] : memref<3x9xf32, #tpu.memory_space<smem>>
    %949 = vector.broadcast %948 : f32 to vector<4x8x128xf32>
    %950 = arith.mulf %949, %947 : vector<4x8x128xf32>
    %951 = arith.addf %937, %950 : vector<4x8x128xf32>
    %c1_677 = arith.constant 1 : index
    %c5_678 = arith.constant 5 : index
    %952 = memref.load %arg2[%c1_677, %c5_678] : memref<3x9xf32, #tpu.memory_space<smem>>
    %953 = vector.broadcast %952 : f32 to vector<4x8x128xf32>
    %954 = arith.mulf %953, %947 : vector<4x8x128xf32>
    %955 = arith.addf %941, %954 : vector<4x8x128xf32>
    %c2_679 = arith.constant 2 : index
    %c5_680 = arith.constant 5 : index
    %956 = memref.load %arg2[%c2_679, %c5_680] : memref<3x9xf32, #tpu.memory_space<smem>>
    %957 = vector.broadcast %956 : f32 to vector<4x8x128xf32>
    %958 = arith.mulf %957, %947 : vector<4x8x128xf32>
    %959 = arith.addf %945, %958 : vector<4x8x128xf32>
    %c4_681 = arith.constant 4 : index
    %c1_682 = arith.constant 1 : index
    %c0_683 = arith.constant 0 : index
    %c0_684 = arith.constant 0 : index
    %960 = vector.load %arg1[%c4_681, %c1_682, %c0_683, %c0_684] : memref<9x9x9x128xf32, #tpu.memory_space<vmem>>, vector<1x4x8x128xf32>
    %961 = vector.shape_cast %960 : vector<1x4x8x128xf32> to vector<4x8x128xf32>
    %c0_685 = arith.constant 0 : index
    %c6_686 = arith.constant 6 : index
    %962 = memref.load %arg2[%c0_685, %c6_686] : memref<3x9xf32, #tpu.memory_space<smem>>
    %963 = vector.broadcast %962 : f32 to vector<4x8x128xf32>
    %964 = arith.mulf %963, %961 : vector<4x8x128xf32>
    %965 = arith.addf %951, %964 : vector<4x8x128xf32>
    %c1_687 = arith.constant 1 : index
    %c6_688 = arith.constant 6 : index
    %966 = memref.load %arg2[%c1_687, %c6_688] : memref<3x9xf32, #tpu.memory_space<smem>>
    %967 = vector.broadcast %966 : f32 to vector<4x8x128xf32>
    %968 = arith.mulf %967, %961 : vector<4x8x128xf32>
    %969 = arith.addf %955, %968 : vector<4x8x128xf32>
    %c2_689 = arith.constant 2 : index
    %c6_690 = arith.constant 6 : index
    %970 = memref.load %arg2[%c2_689, %c6_690] : memref<3x9xf32, #tpu.memory_space<smem>>
    %971 = vector.broadcast %970 : f32 to vector<4x8x128xf32>
    %972 = arith.mulf %971, %961 : vector<4x8x128xf32>
    %973 = arith.addf %959, %972 : vector<4x8x128xf32>
    %c5_691 = arith.constant 5 : index
    %c1_692 = arith.constant 1 : index
    %c0_693 = arith.constant 0 : index
    %c0_694 = arith.constant 0 : index
    %974 = vector.load %arg1[%c5_691, %c1_692, %c0_693, %c0_694] : memref<9x9x9x128xf32, #tpu.memory_space<vmem>>, vector<1x4x8x128xf32>
    %975 = vector.shape_cast %974 : vector<1x4x8x128xf32> to vector<4x8x128xf32>
    %c0_695 = arith.constant 0 : index
    %c7_696 = arith.constant 7 : index
    %976 = memref.load %arg2[%c0_695, %c7_696] : memref<3x9xf32, #tpu.memory_space<smem>>
    %977 = vector.broadcast %976 : f32 to vector<4x8x128xf32>
    %978 = arith.mulf %977, %975 : vector<4x8x128xf32>
    %979 = arith.addf %965, %978 : vector<4x8x128xf32>
    %c1_697 = arith.constant 1 : index
    %c7_698 = arith.constant 7 : index
    %980 = memref.load %arg2[%c1_697, %c7_698] : memref<3x9xf32, #tpu.memory_space<smem>>
    %981 = vector.broadcast %980 : f32 to vector<4x8x128xf32>
    %982 = arith.mulf %981, %975 : vector<4x8x128xf32>
    %983 = arith.addf %969, %982 : vector<4x8x128xf32>
    %c2_699 = arith.constant 2 : index
    %c7_700 = arith.constant 7 : index
    %984 = memref.load %arg2[%c2_699, %c7_700] : memref<3x9xf32, #tpu.memory_space<smem>>
    %985 = vector.broadcast %984 : f32 to vector<4x8x128xf32>
    %986 = arith.mulf %985, %975 : vector<4x8x128xf32>
    %987 = arith.addf %973, %986 : vector<4x8x128xf32>
    %c3_701 = arith.constant 3 : index
    %c1_702 = arith.constant 1 : index
    %c1_703 = arith.constant 1 : index
    %c0_704 = arith.constant 0 : index
    %988 = vector.load %arg1[%c3_701, %c1_702, %c1_703, %c0_704] : memref<9x9x9x128xf32, #tpu.memory_space<vmem>>, vector<1x4x8x128xf32>
    %989 = vector.shape_cast %988 : vector<1x4x8x128xf32> to vector<4x8x128xf32>
    %c0_705 = arith.constant 0 : index
    %c8_706 = arith.constant 8 : index
    %990 = memref.load %arg2[%c0_705, %c8_706] : memref<3x9xf32, #tpu.memory_space<smem>>
    %991 = vector.broadcast %990 : f32 to vector<4x8x128xf32>
    %992 = arith.mulf %991, %989 : vector<4x8x128xf32>
    %993 = arith.addf %979, %992 : vector<4x8x128xf32>
    %c1_707 = arith.constant 1 : index
    %c8_708 = arith.constant 8 : index
    %994 = memref.load %arg2[%c1_707, %c8_708] : memref<3x9xf32, #tpu.memory_space<smem>>
    %995 = vector.broadcast %994 : f32 to vector<4x8x128xf32>
    %996 = arith.mulf %995, %989 : vector<4x8x128xf32>
    %997 = arith.addf %983, %996 : vector<4x8x128xf32>
    %c2_709 = arith.constant 2 : index
    %c8_710 = arith.constant 8 : index
    %998 = memref.load %arg2[%c2_709, %c8_710] : memref<3x9xf32, #tpu.memory_space<smem>>
    %999 = vector.broadcast %998 : f32 to vector<4x8x128xf32>
    %1000 = arith.mulf %999, %989 : vector<4x8x128xf32>
    %1001 = arith.addf %987, %1000 : vector<4x8x128xf32>
    %1002 = arith.maximumf %876, %993 : vector<4x8x128xf32>
    %1003 = arith.maximumf %877, %997 : vector<4x8x128xf32>
    %1004 = arith.maximumf %878, %1001 : vector<4x8x128xf32>
    %c8_711 = arith.constant 8 : index
    %c0_712 = arith.constant 0 : index
    %c0_713 = arith.constant 0 : index
    %c0_714 = arith.constant 0 : index
    %1005 = vector.load %arg1[%c8_711, %c0_712, %c0_713, %c0_714] : memref<9x9x9x128xf32, #tpu.memory_space<vmem>>, vector<1x4x8x128xf32>
    %1006 = vector.shape_cast %1005 : vector<1x4x8x128xf32> to vector<4x8x128xf32>
    %c0_715 = arith.constant 0 : index
    %c0_716 = arith.constant 0 : index
    %1007 = memref.load %arg2[%c0_715, %c0_716] : memref<3x9xf32, #tpu.memory_space<smem>>
    %1008 = vector.broadcast %1007 : f32 to vector<4x8x128xf32>
    %1009 = arith.mulf %1008, %1006 : vector<4x8x128xf32>
    %c1_717 = arith.constant 1 : index
    %c0_718 = arith.constant 0 : index
    %1010 = memref.load %arg2[%c1_717, %c0_718] : memref<3x9xf32, #tpu.memory_space<smem>>
    %1011 = vector.broadcast %1010 : f32 to vector<4x8x128xf32>
    %1012 = arith.mulf %1011, %1006 : vector<4x8x128xf32>
    %c2_719 = arith.constant 2 : index
    %c0_720 = arith.constant 0 : index
    %1013 = memref.load %arg2[%c2_719, %c0_720] : memref<3x9xf32, #tpu.memory_space<smem>>
    %1014 = vector.broadcast %1013 : f32 to vector<4x8x128xf32>
    %1015 = arith.mulf %1014, %1006 : vector<4x8x128xf32>
    %c6_721 = arith.constant 6 : index
    %c0_722 = arith.constant 0 : index
    %c1_723 = arith.constant 1 : index
    %c0_724 = arith.constant 0 : index
    %1016 = vector.load %arg1[%c6_721, %c0_722, %c1_723, %c0_724] : memref<9x9x9x128xf32, #tpu.memory_space<vmem>>, vector<1x4x8x128xf32>
    %1017 = vector.shape_cast %1016 : vector<1x4x8x128xf32> to vector<4x8x128xf32>
    %c0_725 = arith.constant 0 : index
    %c1_726 = arith.constant 1 : index
    %1018 = memref.load %arg2[%c0_725, %c1_726] : memref<3x9xf32, #tpu.memory_space<smem>>
    %1019 = vector.broadcast %1018 : f32 to vector<4x8x128xf32>
    %1020 = arith.mulf %1019, %1017 : vector<4x8x128xf32>
    %1021 = arith.addf %1009, %1020 : vector<4x8x128xf32>
    %c1_727 = arith.constant 1 : index
    %c1_728 = arith.constant 1 : index
    %1022 = memref.load %arg2[%c1_727, %c1_728] : memref<3x9xf32, #tpu.memory_space<smem>>
    %1023 = vector.broadcast %1022 : f32 to vector<4x8x128xf32>
    %1024 = arith.mulf %1023, %1017 : vector<4x8x128xf32>
    %1025 = arith.addf %1012, %1024 : vector<4x8x128xf32>
    %c2_729 = arith.constant 2 : index
    %c1_730 = arith.constant 1 : index
    %1026 = memref.load %arg2[%c2_729, %c1_730] : memref<3x9xf32, #tpu.memory_space<smem>>
    %1027 = vector.broadcast %1026 : f32 to vector<4x8x128xf32>
    %1028 = arith.mulf %1027, %1017 : vector<4x8x128xf32>
    %1029 = arith.addf %1015, %1028 : vector<4x8x128xf32>
    %c7_731 = arith.constant 7 : index
    %c0_732 = arith.constant 0 : index
    %c1_733 = arith.constant 1 : index
    %c0_734 = arith.constant 0 : index
    %1030 = vector.load %arg1[%c7_731, %c0_732, %c1_733, %c0_734] : memref<9x9x9x128xf32, #tpu.memory_space<vmem>>, vector<1x4x8x128xf32>
    %1031 = vector.shape_cast %1030 : vector<1x4x8x128xf32> to vector<4x8x128xf32>
    %c0_735 = arith.constant 0 : index
    %c2_736 = arith.constant 2 : index
    %1032 = memref.load %arg2[%c0_735, %c2_736] : memref<3x9xf32, #tpu.memory_space<smem>>
    %1033 = vector.broadcast %1032 : f32 to vector<4x8x128xf32>
    %1034 = arith.mulf %1033, %1031 : vector<4x8x128xf32>
    %1035 = arith.addf %1021, %1034 : vector<4x8x128xf32>
    %c1_737 = arith.constant 1 : index
    %c2_738 = arith.constant 2 : index
    %1036 = memref.load %arg2[%c1_737, %c2_738] : memref<3x9xf32, #tpu.memory_space<smem>>
    %1037 = vector.broadcast %1036 : f32 to vector<4x8x128xf32>
    %1038 = arith.mulf %1037, %1031 : vector<4x8x128xf32>
    %1039 = arith.addf %1025, %1038 : vector<4x8x128xf32>
    %c2_739 = arith.constant 2 : index
    %c2_740 = arith.constant 2 : index
    %1040 = memref.load %arg2[%c2_739, %c2_740] : memref<3x9xf32, #tpu.memory_space<smem>>
    %1041 = vector.broadcast %1040 : f32 to vector<4x8x128xf32>
    %1042 = arith.mulf %1041, %1031 : vector<4x8x128xf32>
    %1043 = arith.addf %1029, %1042 : vector<4x8x128xf32>
    %c2_741 = arith.constant 2 : index
    %c1_742 = arith.constant 1 : index
    %c0_743 = arith.constant 0 : index
    %c0_744 = arith.constant 0 : index
    %1044 = vector.load %arg1[%c2_741, %c1_742, %c0_743, %c0_744] : memref<9x9x9x128xf32, #tpu.memory_space<vmem>>, vector<1x4x8x128xf32>
    %1045 = vector.shape_cast %1044 : vector<1x4x8x128xf32> to vector<4x8x128xf32>
    %c0_745 = arith.constant 0 : index
    %c3_746 = arith.constant 3 : index
    %1046 = memref.load %arg2[%c0_745, %c3_746] : memref<3x9xf32, #tpu.memory_space<smem>>
    %1047 = vector.broadcast %1046 : f32 to vector<4x8x128xf32>
    %1048 = arith.mulf %1047, %1045 : vector<4x8x128xf32>
    %1049 = arith.addf %1035, %1048 : vector<4x8x128xf32>
    %c1_747 = arith.constant 1 : index
    %c3_748 = arith.constant 3 : index
    %1050 = memref.load %arg2[%c1_747, %c3_748] : memref<3x9xf32, #tpu.memory_space<smem>>
    %1051 = vector.broadcast %1050 : f32 to vector<4x8x128xf32>
    %1052 = arith.mulf %1051, %1045 : vector<4x8x128xf32>
    %1053 = arith.addf %1039, %1052 : vector<4x8x128xf32>
    %c2_749 = arith.constant 2 : index
    %c3_750 = arith.constant 3 : index
    %1054 = memref.load %arg2[%c2_749, %c3_750] : memref<3x9xf32, #tpu.memory_space<smem>>
    %1055 = vector.broadcast %1054 : f32 to vector<4x8x128xf32>
    %1056 = arith.mulf %1055, %1045 : vector<4x8x128xf32>
    %1057 = arith.addf %1043, %1056 : vector<4x8x128xf32>
    %c0_751 = arith.constant 0 : index
    %c1_752 = arith.constant 1 : index
    %c1_753 = arith.constant 1 : index
    %c0_754 = arith.constant 0 : index
    %1058 = vector.load %arg1[%c0_751, %c1_752, %c1_753, %c0_754] : memref<9x9x9x128xf32, #tpu.memory_space<vmem>>, vector<1x4x8x128xf32>
    %1059 = vector.shape_cast %1058 : vector<1x4x8x128xf32> to vector<4x8x128xf32>
    %c0_755 = arith.constant 0 : index
    %c4_756 = arith.constant 4 : index
    %1060 = memref.load %arg2[%c0_755, %c4_756] : memref<3x9xf32, #tpu.memory_space<smem>>
    %1061 = vector.broadcast %1060 : f32 to vector<4x8x128xf32>
    %1062 = arith.mulf %1061, %1059 : vector<4x8x128xf32>
    %1063 = arith.addf %1049, %1062 : vector<4x8x128xf32>
    %c1_757 = arith.constant 1 : index
    %c4_758 = arith.constant 4 : index
    %1064 = memref.load %arg2[%c1_757, %c4_758] : memref<3x9xf32, #tpu.memory_space<smem>>
    %1065 = vector.broadcast %1064 : f32 to vector<4x8x128xf32>
    %1066 = arith.mulf %1065, %1059 : vector<4x8x128xf32>
    %1067 = arith.addf %1053, %1066 : vector<4x8x128xf32>
    %c2_759 = arith.constant 2 : index
    %c4_760 = arith.constant 4 : index
    %1068 = memref.load %arg2[%c2_759, %c4_760] : memref<3x9xf32, #tpu.memory_space<smem>>
    %1069 = vector.broadcast %1068 : f32 to vector<4x8x128xf32>
    %1070 = arith.mulf %1069, %1059 : vector<4x8x128xf32>
    %1071 = arith.addf %1057, %1070 : vector<4x8x128xf32>
    %c1_761 = arith.constant 1 : index
    %c1_762 = arith.constant 1 : index
    %c1_763 = arith.constant 1 : index
    %c0_764 = arith.constant 0 : index
    %1072 = vector.load %arg1[%c1_761, %c1_762, %c1_763, %c0_764] : memref<9x9x9x128xf32, #tpu.memory_space<vmem>>, vector<1x4x8x128xf32>
    %1073 = vector.shape_cast %1072 : vector<1x4x8x128xf32> to vector<4x8x128xf32>
    %c0_765 = arith.constant 0 : index
    %c5_766 = arith.constant 5 : index
    %1074 = memref.load %arg2[%c0_765, %c5_766] : memref<3x9xf32, #tpu.memory_space<smem>>
    %1075 = vector.broadcast %1074 : f32 to vector<4x8x128xf32>
    %1076 = arith.mulf %1075, %1073 : vector<4x8x128xf32>
    %1077 = arith.addf %1063, %1076 : vector<4x8x128xf32>
    %c1_767 = arith.constant 1 : index
    %c5_768 = arith.constant 5 : index
    %1078 = memref.load %arg2[%c1_767, %c5_768] : memref<3x9xf32, #tpu.memory_space<smem>>
    %1079 = vector.broadcast %1078 : f32 to vector<4x8x128xf32>
    %1080 = arith.mulf %1079, %1073 : vector<4x8x128xf32>
    %1081 = arith.addf %1067, %1080 : vector<4x8x128xf32>
    %c2_769 = arith.constant 2 : index
    %c5_770 = arith.constant 5 : index
    %1082 = memref.load %arg2[%c2_769, %c5_770] : memref<3x9xf32, #tpu.memory_space<smem>>
    %1083 = vector.broadcast %1082 : f32 to vector<4x8x128xf32>
    %1084 = arith.mulf %1083, %1073 : vector<4x8x128xf32>
    %1085 = arith.addf %1071, %1084 : vector<4x8x128xf32>
    %c5_771 = arith.constant 5 : index
    %c1_772 = arith.constant 1 : index
    %c0_773 = arith.constant 0 : index
    %c0_774 = arith.constant 0 : index
    %1086 = vector.load %arg1[%c5_771, %c1_772, %c0_773, %c0_774] : memref<9x9x9x128xf32, #tpu.memory_space<vmem>>, vector<1x4x8x128xf32>
    %1087 = vector.shape_cast %1086 : vector<1x4x8x128xf32> to vector<4x8x128xf32>
    %c0_775 = arith.constant 0 : index
    %c6_776 = arith.constant 6 : index
    %1088 = memref.load %arg2[%c0_775, %c6_776] : memref<3x9xf32, #tpu.memory_space<smem>>
    %1089 = vector.broadcast %1088 : f32 to vector<4x8x128xf32>
    %1090 = arith.mulf %1089, %1087 : vector<4x8x128xf32>
    %1091 = arith.addf %1077, %1090 : vector<4x8x128xf32>
    %c1_777 = arith.constant 1 : index
    %c6_778 = arith.constant 6 : index
    %1092 = memref.load %arg2[%c1_777, %c6_778] : memref<3x9xf32, #tpu.memory_space<smem>>
    %1093 = vector.broadcast %1092 : f32 to vector<4x8x128xf32>
    %1094 = arith.mulf %1093, %1087 : vector<4x8x128xf32>
    %1095 = arith.addf %1081, %1094 : vector<4x8x128xf32>
    %c2_779 = arith.constant 2 : index
    %c6_780 = arith.constant 6 : index
    %1096 = memref.load %arg2[%c2_779, %c6_780] : memref<3x9xf32, #tpu.memory_space<smem>>
    %1097 = vector.broadcast %1096 : f32 to vector<4x8x128xf32>
    %1098 = arith.mulf %1097, %1087 : vector<4x8x128xf32>
    %1099 = arith.addf %1085, %1098 : vector<4x8x128xf32>
    %c3_781 = arith.constant 3 : index
    %c1_782 = arith.constant 1 : index
    %c1_783 = arith.constant 1 : index
    %c0_784 = arith.constant 0 : index
    %1100 = vector.load %arg1[%c3_781, %c1_782, %c1_783, %c0_784] : memref<9x9x9x128xf32, #tpu.memory_space<vmem>>, vector<1x4x8x128xf32>
    %1101 = vector.shape_cast %1100 : vector<1x4x8x128xf32> to vector<4x8x128xf32>
    %c0_785 = arith.constant 0 : index
    %c7_786 = arith.constant 7 : index
    %1102 = memref.load %arg2[%c0_785, %c7_786] : memref<3x9xf32, #tpu.memory_space<smem>>
    %1103 = vector.broadcast %1102 : f32 to vector<4x8x128xf32>
    %1104 = arith.mulf %1103, %1101 : vector<4x8x128xf32>
    %1105 = arith.addf %1091, %1104 : vector<4x8x128xf32>
    %c1_787 = arith.constant 1 : index
    %c7_788 = arith.constant 7 : index
    %1106 = memref.load %arg2[%c1_787, %c7_788] : memref<3x9xf32, #tpu.memory_space<smem>>
    %1107 = vector.broadcast %1106 : f32 to vector<4x8x128xf32>
    %1108 = arith.mulf %1107, %1101 : vector<4x8x128xf32>
    %1109 = arith.addf %1095, %1108 : vector<4x8x128xf32>
    %c2_789 = arith.constant 2 : index
    %c7_790 = arith.constant 7 : index
    %1110 = memref.load %arg2[%c2_789, %c7_790] : memref<3x9xf32, #tpu.memory_space<smem>>
    %1111 = vector.broadcast %1110 : f32 to vector<4x8x128xf32>
    %1112 = arith.mulf %1111, %1101 : vector<4x8x128xf32>
    %1113 = arith.addf %1099, %1112 : vector<4x8x128xf32>
    %c4_791 = arith.constant 4 : index
    %c1_792 = arith.constant 1 : index
    %c1_793 = arith.constant 1 : index
    %c0_794 = arith.constant 0 : index
    %1114 = vector.load %arg1[%c4_791, %c1_792, %c1_793, %c0_794] : memref<9x9x9x128xf32, #tpu.memory_space<vmem>>, vector<1x4x8x128xf32>
    %1115 = vector.shape_cast %1114 : vector<1x4x8x128xf32> to vector<4x8x128xf32>
    %c0_795 = arith.constant 0 : index
    %c8_796 = arith.constant 8 : index
    %1116 = memref.load %arg2[%c0_795, %c8_796] : memref<3x9xf32, #tpu.memory_space<smem>>
    %1117 = vector.broadcast %1116 : f32 to vector<4x8x128xf32>
    %1118 = arith.mulf %1117, %1115 : vector<4x8x128xf32>
    %1119 = arith.addf %1105, %1118 : vector<4x8x128xf32>
    %c1_797 = arith.constant 1 : index
    %c8_798 = arith.constant 8 : index
    %1120 = memref.load %arg2[%c1_797, %c8_798] : memref<3x9xf32, #tpu.memory_space<smem>>
    %1121 = vector.broadcast %1120 : f32 to vector<4x8x128xf32>
    %1122 = arith.mulf %1121, %1115 : vector<4x8x128xf32>
    %1123 = arith.addf %1109, %1122 : vector<4x8x128xf32>
    %c2_799 = arith.constant 2 : index
    %c8_800 = arith.constant 8 : index
    %1124 = memref.load %arg2[%c2_799, %c8_800] : memref<3x9xf32, #tpu.memory_space<smem>>
    %1125 = vector.broadcast %1124 : f32 to vector<4x8x128xf32>
    %1126 = arith.mulf %1125, %1115 : vector<4x8x128xf32>
    %1127 = arith.addf %1113, %1126 : vector<4x8x128xf32>
    %1128 = arith.maximumf %1002, %1119 : vector<4x8x128xf32>
    %1129 = arith.maximumf %1003, %1123 : vector<4x8x128xf32>
    %1130 = arith.maximumf %1004, %1127 : vector<4x8x128xf32>
    %c0_801 = arith.constant 0 : index
    %1131 = memref.load %arg3[%c0_801] : memref<3xf32, #tpu.memory_space<smem>>
    %1132 = vector.broadcast %1131 : f32 to vector<4x8x128xf32>
    %1133 = arith.addf %1128, %1132 : vector<4x8x128xf32>
    %cst = arith.constant 0.000000e+00 : f32
    %1134 = vector.broadcast %cst : f32 to vector<4x8x128xf32>
    %1135 = arith.maximumf %1133, %1134 : vector<4x8x128xf32>
    %1136 = vector.shape_cast %1135 : vector<4x8x128xf32> to vector<32x128xf32>
    %c0_802 = arith.constant 0 : index
    %c0_803 = arith.constant 0 : index
    %1137 = vector.load %arg7[%c0_802, %c0_803] : memref<192x128xf32, #tpu.memory_space<vmem>>, vector<32x128xf32>
    tpu.vector_store %arg7[%c0_802, %c0_803], %1136 {strides = array<i32>} : memref<192x128xf32, #tpu.memory_space<vmem>>, vector<32x128xf32>,
    %c1_804 = arith.constant 1 : index
    %1138 = memref.load %arg3[%c1_804] : memref<3xf32, #tpu.memory_space<smem>>
    %1139 = vector.broadcast %1138 : f32 to vector<4x8x128xf32>
    %1140 = arith.addf %1129, %1139 : vector<4x8x128xf32>
    %cst_805 = arith.constant 0.000000e+00 : f32
    %1141 = vector.broadcast %cst_805 : f32 to vector<4x8x128xf32>
    %1142 = arith.maximumf %1140, %1141 : vector<4x8x128xf32>
    %1143 = vector.shape_cast %1142 : vector<4x8x128xf32> to vector<32x128xf32>
    %c64 = arith.constant 64 : index
    %c0_806 = arith.constant 0 : index
    %1144 = vector.load %arg7[%c64, %c0_806] : memref<192x128xf32, #tpu.memory_space<vmem>>, vector<32x128xf32>
    tpu.vector_store %arg7[%c64, %c0_806], %1143 {strides = array<i32>} : memref<192x128xf32, #tpu.memory_space<vmem>>, vector<32x128xf32>,
    %c2_807 = arith.constant 2 : index
    %1145 = memref.load %arg3[%c2_807] : memref<3xf32, #tpu.memory_space<smem>>
    %1146 = vector.broadcast %1145 : f32 to vector<4x8x128xf32>
    %1147 = arith.addf %1130, %1146 : vector<4x8x128xf32>
    %cst_808 = arith.constant 0.000000e+00 : f32
    %1148 = vector.broadcast %cst_808 : f32 to vector<4x8x128xf32>
    %1149 = arith.maximumf %1147, %1148 : vector<4x8x128xf32>
    %1150 = vector.shape_cast %1149 : vector<4x8x128xf32> to vector<32x128xf32>
    %c128 = arith.constant 128 : index
    %c0_809 = arith.constant 0 : index
    %1151 = vector.load %arg7[%c128, %c0_809] : memref<192x128xf32, #tpu.memory_space<vmem>>, vector<32x128xf32>
    tpu.vector_store %arg7[%c128, %c0_809], %1150 {strides = array<i32>} : memref<192x128xf32, #tpu.memory_space<vmem>>, vector<32x128xf32>,
    %c0_810 = arith.constant 0 : index
    %c4_811 = arith.constant 4 : index
    %c0_812 = arith.constant 0 : index
    %c0_813 = arith.constant 0 : index
    %1152 = vector.load %arg1[%c0_810, %c4_811, %c0_812, %c0_813] : memref<9x9x9x128xf32, #tpu.memory_space<vmem>>, vector<1x4x8x128xf32>
    %1153 = vector.shape_cast %1152 : vector<1x4x8x128xf32> to vector<4x8x128xf32>
    %c0_814 = arith.constant 0 : index
    %c0_815 = arith.constant 0 : index
    %1154 = memref.load %arg2[%c0_814, %c0_815] : memref<3x9xf32, #tpu.memory_space<smem>>
    %1155 = vector.broadcast %1154 : f32 to vector<4x8x128xf32>
    %1156 = arith.mulf %1155, %1153 : vector<4x8x128xf32>
    %c1_816 = arith.constant 1 : index
    %c0_817 = arith.constant 0 : index
    %1157 = memref.load %arg2[%c1_816, %c0_817] : memref<3x9xf32, #tpu.memory_space<smem>>
    %1158 = vector.broadcast %1157 : f32 to vector<4x8x128xf32>
    %1159 = arith.mulf %1158, %1153 : vector<4x8x128xf32>
    %c2_818 = arith.constant 2 : index
    %c0_819 = arith.constant 0 : index
    %1160 = memref.load %arg2[%c2_818, %c0_819] : memref<3x9xf32, #tpu.memory_space<smem>>
    %1161 = vector.broadcast %1160 : f32 to vector<4x8x128xf32>
    %1162 = arith.mulf %1161, %1153 : vector<4x8x128xf32>
    %c1_820 = arith.constant 1 : index
    %c4_821 = arith.constant 4 : index
    %c0_822 = arith.constant 0 : index
    %c0_823 = arith.constant 0 : index
    %1163 = vector.load %arg1[%c1_820, %c4_821, %c0_822, %c0_823] : memref<9x9x9x128xf32, #tpu.memory_space<vmem>>, vector<1x4x8x128xf32>
    %1164 = vector.shape_cast %1163 : vector<1x4x8x128xf32> to vector<4x8x128xf32>
    %c0_824 = arith.constant 0 : index
    %c1_825 = arith.constant 1 : index
    %1165 = memref.load %arg2[%c0_824, %c1_825] : memref<3x9xf32, #tpu.memory_space<smem>>
    %1166 = vector.broadcast %1165 : f32 to vector<4x8x128xf32>
    %1167 = arith.mulf %1166, %1164 : vector<4x8x128xf32>
    %1168 = arith.addf %1156, %1167 : vector<4x8x128xf32>
    %c1_826 = arith.constant 1 : index
    %c1_827 = arith.constant 1 : index
    %1169 = memref.load %arg2[%c1_826, %c1_827] : memref<3x9xf32, #tpu.memory_space<smem>>
    %1170 = vector.broadcast %1169 : f32 to vector<4x8x128xf32>
    %1171 = arith.mulf %1170, %1164 : vector<4x8x128xf32>
    %1172 = arith.addf %1159, %1171 : vector<4x8x128xf32>
    %c2_828 = arith.constant 2 : index
    %c1_829 = arith.constant 1 : index
    %1173 = memref.load %arg2[%c2_828, %c1_829] : memref<3x9xf32, #tpu.memory_space<smem>>
    %1174 = vector.broadcast %1173 : f32 to vector<4x8x128xf32>
    %1175 = arith.mulf %1174, %1164 : vector<4x8x128xf32>
    %1176 = arith.addf %1162, %1175 : vector<4x8x128xf32>
    %c2_830 = arith.constant 2 : index
    %c4_831 = arith.constant 4 : index
    %c0_832 = arith.constant 0 : index
    %c0_833 = arith.constant 0 : index
    %1177 = vector.load %arg1[%c2_830, %c4_831, %c0_832, %c0_833] : memref<9x9x9x128xf32, #tpu.memory_space<vmem>>, vector<1x4x8x128xf32>
    %1178 = vector.shape_cast %1177 : vector<1x4x8x128xf32> to vector<4x8x128xf32>
    %c0_834 = arith.constant 0 : index
    %c2_835 = arith.constant 2 : index
    %1179 = memref.load %arg2[%c0_834, %c2_835] : memref<3x9xf32, #tpu.memory_space<smem>>
    %1180 = vector.broadcast %1179 : f32 to vector<4x8x128xf32>
    %1181 = arith.mulf %1180, %1178 : vector<4x8x128xf32>
    %1182 = arith.addf %1168, %1181 : vector<4x8x128xf32>
    %c1_836 = arith.constant 1 : index
    %c2_837 = arith.constant 2 : index
    %1183 = memref.load %arg2[%c1_836, %c2_837] : memref<3x9xf32, #tpu.memory_space<smem>>
    %1184 = vector.broadcast %1183 : f32 to vector<4x8x128xf32>
    %1185 = arith.mulf %1184, %1178 : vector<4x8x128xf32>
    %1186 = arith.addf %1172, %1185 : vector<4x8x128xf32>
    %c2_838 = arith.constant 2 : index
    %c2_839 = arith.constant 2 : index
    %1187 = memref.load %arg2[%c2_838, %c2_839] : memref<3x9xf32, #tpu.memory_space<smem>>
    %1188 = vector.broadcast %1187 : f32 to vector<4x8x128xf32>
    %1189 = arith.mulf %1188, %1178 : vector<4x8x128xf32>
    %1190 = arith.addf %1176, %1189 : vector<4x8x128xf32>
    %c3_840 = arith.constant 3 : index
    %c4_841 = arith.constant 4 : index
    %c0_842 = arith.constant 0 : index
    %c0_843 = arith.constant 0 : index
    %1191 = vector.load %arg1[%c3_840, %c4_841, %c0_842, %c0_843] : memref<9x9x9x128xf32, #tpu.memory_space<vmem>>, vector<1x4x8x128xf32>
    %1192 = vector.shape_cast %1191 : vector<1x4x8x128xf32> to vector<4x8x128xf32>
    %c0_844 = arith.constant 0 : index
    %c3_845 = arith.constant 3 : index
    %1193 = memref.load %arg2[%c0_844, %c3_845] : memref<3x9xf32, #tpu.memory_space<smem>>
    %1194 = vector.broadcast %1193 : f32 to vector<4x8x128xf32>
    %1195 = arith.mulf %1194, %1192 : vector<4x8x128xf32>
    %1196 = arith.addf %1182, %1195 : vector<4x8x128xf32>
    %c1_846 = arith.constant 1 : index
    %c3_847 = arith.constant 3 : index
    %1197 = memref.load %arg2[%c1_846, %c3_847] : memref<3x9xf32, #tpu.memory_space<smem>>
    %1198 = vector.broadcast %1197 : f32 to vector<4x8x128xf32>
    %1199 = arith.mulf %1198, %1192 : vector<4x8x128xf32>
    %1200 = arith.addf %1186, %1199 : vector<4x8x128xf32>
    %c2_848 = arith.constant 2 : index
    %c3_849 = arith.constant 3 : index
    %1201 = memref.load %arg2[%c2_848, %c3_849] : memref<3x9xf32, #tpu.memory_space<smem>>
    %1202 = vector.broadcast %1201 : f32 to vector<4x8x128xf32>
    %1203 = arith.mulf %1202, %1192 : vector<4x8x128xf32>
    %1204 = arith.addf %1190, %1203 : vector<4x8x128xf32>
    %c4_850 = arith.constant 4 : index
    %c4_851 = arith.constant 4 : index
    %c0_852 = arith.constant 0 : index
    %c0_853 = arith.constant 0 : index
    %1205 = vector.load %arg1[%c4_850, %c4_851, %c0_852, %c0_853] : memref<9x9x9x128xf32, #tpu.memory_space<vmem>>, vector<1x4x8x128xf32>
    %1206 = vector.shape_cast %1205 : vector<1x4x8x128xf32> to vector<4x8x128xf32>
    %c0_854 = arith.constant 0 : index
    %c4_855 = arith.constant 4 : index
    %1207 = memref.load %arg2[%c0_854, %c4_855] : memref<3x9xf32, #tpu.memory_space<smem>>
    %1208 = vector.broadcast %1207 : f32 to vector<4x8x128xf32>
    %1209 = arith.mulf %1208, %1206 : vector<4x8x128xf32>
    %1210 = arith.addf %1196, %1209 : vector<4x8x128xf32>
    %c1_856 = arith.constant 1 : index
    %c4_857 = arith.constant 4 : index
    %1211 = memref.load %arg2[%c1_856, %c4_857] : memref<3x9xf32, #tpu.memory_space<smem>>
    %1212 = vector.broadcast %1211 : f32 to vector<4x8x128xf32>
    %1213 = arith.mulf %1212, %1206 : vector<4x8x128xf32>
    %1214 = arith.addf %1200, %1213 : vector<4x8x128xf32>
    %c2_858 = arith.constant 2 : index
    %c4_859 = arith.constant 4 : index
    %1215 = memref.load %arg2[%c2_858, %c4_859] : memref<3x9xf32, #tpu.memory_space<smem>>
    %1216 = vector.broadcast %1215 : f32 to vector<4x8x128xf32>
    %1217 = arith.mulf %1216, %1206 : vector<4x8x128xf32>
    %1218 = arith.addf %1204, %1217 : vector<4x8x128xf32>
    %c5_860 = arith.constant 5 : index
    %c4_861 = arith.constant 4 : index
    %c0_862 = arith.constant 0 : index
    %c0_863 = arith.constant 0 : index
    %1219 = vector.load %arg1[%c5_860, %c4_861, %c0_862, %c0_863] : memref<9x9x9x128xf32, #tpu.memory_space<vmem>>, vector<1x4x8x128xf32>
    %1220 = vector.shape_cast %1219 : vector<1x4x8x128xf32> to vector<4x8x128xf32>
    %c0_864 = arith.constant 0 : index
    %c5_865 = arith.constant 5 : index
    %1221 = memref.load %arg2[%c0_864, %c5_865] : memref<3x9xf32, #tpu.memory_space<smem>>
    %1222 = vector.broadcast %1221 : f32 to vector<4x8x128xf32>
    %1223 = arith.mulf %1222, %1220 : vector<4x8x128xf32>
    %1224 = arith.addf %1210, %1223 : vector<4x8x128xf32>
    %c1_866 = arith.constant 1 : index
    %c5_867 = arith.constant 5 : index
    %1225 = memref.load %arg2[%c1_866, %c5_867] : memref<3x9xf32, #tpu.memory_space<smem>>
    %1226 = vector.broadcast %1225 : f32 to vector<4x8x128xf32>
    %1227 = arith.mulf %1226, %1220 : vector<4x8x128xf32>
    %1228 = arith.addf %1214, %1227 : vector<4x8x128xf32>
    %c2_868 = arith.constant 2 : index
    %c5_869 = arith.constant 5 : index
    %1229 = memref.load %arg2[%c2_868, %c5_869] : memref<3x9xf32, #tpu.memory_space<smem>>
    %1230 = vector.broadcast %1229 : f32 to vector<4x8x128xf32>
    %1231 = arith.mulf %1230, %1220 : vector<4x8x128xf32>
    %1232 = arith.addf %1218, %1231 : vector<4x8x128xf32>
    %c6_870 = arith.constant 6 : index
    %c4_871 = arith.constant 4 : index
    %c0_872 = arith.constant 0 : index
    %c0_873 = arith.constant 0 : index
    %1233 = vector.load %arg1[%c6_870, %c4_871, %c0_872, %c0_873] : memref<9x9x9x128xf32, #tpu.memory_space<vmem>>, vector<1x4x8x128xf32>
    %1234 = vector.shape_cast %1233 : vector<1x4x8x128xf32> to vector<4x8x128xf32>
    %c0_874 = arith.constant 0 : index
    %c6_875 = arith.constant 6 : index
    %1235 = memref.load %arg2[%c0_874, %c6_875] : memref<3x9xf32, #tpu.memory_space<smem>>
    %1236 = vector.broadcast %1235 : f32 to vector<4x8x128xf32>
    %1237 = arith.mulf %1236, %1234 : vector<4x8x128xf32>
    %1238 = arith.addf %1224, %1237 : vector<4x8x128xf32>
    %c1_876 = arith.constant 1 : index
    %c6_877 = arith.constant 6 : index
    %1239 = memref.load %arg2[%c1_876, %c6_877] : memref<3x9xf32, #tpu.memory_space<smem>>
    %1240 = vector.broadcast %1239 : f32 to vector<4x8x128xf32>
    %1241 = arith.mulf %1240, %1234 : vector<4x8x128xf32>
    %1242 = arith.addf %1228, %1241 : vector<4x8x128xf32>
    %c2_878 = arith.constant 2 : index
    %c6_879 = arith.constant 6 : index
    %1243 = memref.load %arg2[%c2_878, %c6_879] : memref<3x9xf32, #tpu.memory_space<smem>>
    %1244 = vector.broadcast %1243 : f32 to vector<4x8x128xf32>
    %1245 = arith.mulf %1244, %1234 : vector<4x8x128xf32>
    %1246 = arith.addf %1232, %1245 : vector<4x8x128xf32>
    %c7_880 = arith.constant 7 : index
    %c4_881 = arith.constant 4 : index
    %c0_882 = arith.constant 0 : index
    %c0_883 = arith.constant 0 : index
    %1247 = vector.load %arg1[%c7_880, %c4_881, %c0_882, %c0_883] : memref<9x9x9x128xf32, #tpu.memory_space<vmem>>, vector<1x4x8x128xf32>
    %1248 = vector.shape_cast %1247 : vector<1x4x8x128xf32> to vector<4x8x128xf32>
    %c0_884 = arith.constant 0 : index
    %c7_885 = arith.constant 7 : index
    %1249 = memref.load %arg2[%c0_884, %c7_885] : memref<3x9xf32, #tpu.memory_space<smem>>
    %1250 = vector.broadcast %1249 : f32 to vector<4x8x128xf32>
    %1251 = arith.mulf %1250, %1248 : vector<4x8x128xf32>
    %1252 = arith.addf %1238, %1251 : vector<4x8x128xf32>
    %c1_886 = arith.constant 1 : index
    %c7_887 = arith.constant 7 : index
    %1253 = memref.load %arg2[%c1_886, %c7_887] : memref<3x9xf32, #tpu.memory_space<smem>>
    %1254 = vector.broadcast %1253 : f32 to vector<4x8x128xf32>
    %1255 = arith.mulf %1254, %1248 : vector<4x8x128xf32>
    %1256 = arith.addf %1242, %1255 : vector<4x8x128xf32>
    %c2_888 = arith.constant 2 : index
    %c7_889 = arith.constant 7 : index
    %1257 = memref.load %arg2[%c2_888, %c7_889] : memref<3x9xf32, #tpu.memory_space<smem>>
    %1258 = vector.broadcast %1257 : f32 to vector<4x8x128xf32>
    %1259 = arith.mulf %1258, %1248 : vector<4x8x128xf32>
    %1260 = arith.addf %1246, %1259 : vector<4x8x128xf32>
    %c8_890 = arith.constant 8 : index
    %c4_891 = arith.constant 4 : index
    %c0_892 = arith.constant 0 : index
    %c0_893 = arith.constant 0 : index
    %1261 = vector.load %arg1[%c8_890, %c4_891, %c0_892, %c0_893] : memref<9x9x9x128xf32, #tpu.memory_space<vmem>>, vector<1x4x8x128xf32>
    %1262 = vector.shape_cast %1261 : vector<1x4x8x128xf32> to vector<4x8x128xf32>
    %c0_894 = arith.constant 0 : index
    %c8_895 = arith.constant 8 : index
    %1263 = memref.load %arg2[%c0_894, %c8_895] : memref<3x9xf32, #tpu.memory_space<smem>>
    %1264 = vector.broadcast %1263 : f32 to vector<4x8x128xf32>
    %1265 = arith.mulf %1264, %1262 : vector<4x8x128xf32>
    %1266 = arith.addf %1252, %1265 : vector<4x8x128xf32>
    %c1_896 = arith.constant 1 : index
    %c8_897 = arith.constant 8 : index
    %1267 = memref.load %arg2[%c1_896, %c8_897] : memref<3x9xf32, #tpu.memory_space<smem>>
    %1268 = vector.broadcast %1267 : f32 to vector<4x8x128xf32>
    %1269 = arith.mulf %1268, %1262 : vector<4x8x128xf32>
    %1270 = arith.addf %1256, %1269 : vector<4x8x128xf32>
    %c2_898 = arith.constant 2 : index
    %c8_899 = arith.constant 8 : index
    %1271 = memref.load %arg2[%c2_898, %c8_899] : memref<3x9xf32, #tpu.memory_space<smem>>
    %1272 = vector.broadcast %1271 : f32 to vector<4x8x128xf32>
    %1273 = arith.mulf %1272, %1262 : vector<4x8x128xf32>
    %1274 = arith.addf %1260, %1273 : vector<4x8x128xf32>
    %c1_900 = arith.constant 1 : index
    %c4_901 = arith.constant 4 : index
    %c0_902 = arith.constant 0 : index
    %c0_903 = arith.constant 0 : index
    %1275 = vector.load %arg1[%c1_900, %c4_901, %c0_902, %c0_903] : memref<9x9x9x128xf32, #tpu.memory_space<vmem>>, vector<1x4x8x128xf32>
    %1276 = vector.shape_cast %1275 : vector<1x4x8x128xf32> to vector<4x8x128xf32>
    %c0_904 = arith.constant 0 : index
    %c0_905 = arith.constant 0 : index
    %1277 = memref.load %arg2[%c0_904, %c0_905] : memref<3x9xf32, #tpu.memory_space<smem>>
    %1278 = vector.broadcast %1277 : f32 to vector<4x8x128xf32>
    %1279 = arith.mulf %1278, %1276 : vector<4x8x128xf32>
    %c1_906 = arith.constant 1 : index
    %c0_907 = arith.constant 0 : index
    %1280 = memref.load %arg2[%c1_906, %c0_907] : memref<3x9xf32, #tpu.memory_space<smem>>
    %1281 = vector.broadcast %1280 : f32 to vector<4x8x128xf32>
    %1282 = arith.mulf %1281, %1276 : vector<4x8x128xf32>
    %c2_908 = arith.constant 2 : index
    %c0_909 = arith.constant 0 : index
    %1283 = memref.load %arg2[%c2_908, %c0_909] : memref<3x9xf32, #tpu.memory_space<smem>>
    %1284 = vector.broadcast %1283 : f32 to vector<4x8x128xf32>
    %1285 = arith.mulf %1284, %1276 : vector<4x8x128xf32>
    %c2_910 = arith.constant 2 : index
    %c4_911 = arith.constant 4 : index
    %c0_912 = arith.constant 0 : index
    %c0_913 = arith.constant 0 : index
    %1286 = vector.load %arg1[%c2_910, %c4_911, %c0_912, %c0_913] : memref<9x9x9x128xf32, #tpu.memory_space<vmem>>, vector<1x4x8x128xf32>
    %1287 = vector.shape_cast %1286 : vector<1x4x8x128xf32> to vector<4x8x128xf32>
    %c0_914 = arith.constant 0 : index
    %c1_915 = arith.constant 1 : index
    %1288 = memref.load %arg2[%c0_914, %c1_915] : memref<3x9xf32, #tpu.memory_space<smem>>
    %1289 = vector.broadcast %1288 : f32 to vector<4x8x128xf32>
    %1290 = arith.mulf %1289, %1287 : vector<4x8x128xf32>
    %1291 = arith.addf %1279, %1290 : vector<4x8x128xf32>
    %c1_916 = arith.constant 1 : index
    %c1_917 = arith.constant 1 : index
    %1292 = memref.load %arg2[%c1_916, %c1_917] : memref<3x9xf32, #tpu.memory_space<smem>>
    %1293 = vector.broadcast %1292 : f32 to vector<4x8x128xf32>
    %1294 = arith.mulf %1293, %1287 : vector<4x8x128xf32>
    %1295 = arith.addf %1282, %1294 : vector<4x8x128xf32>
    %c2_918 = arith.constant 2 : index
    %c1_919 = arith.constant 1 : index
    %1296 = memref.load %arg2[%c2_918, %c1_919] : memref<3x9xf32, #tpu.memory_space<smem>>
    %1297 = vector.broadcast %1296 : f32 to vector<4x8x128xf32>
    %1298 = arith.mulf %1297, %1287 : vector<4x8x128xf32>
    %1299 = arith.addf %1285, %1298 : vector<4x8x128xf32>
    %c0_920 = arith.constant 0 : index
    %c4_921 = arith.constant 4 : index
    %c1_922 = arith.constant 1 : index
    %c0_923 = arith.constant 0 : index
    %1300 = vector.load %arg1[%c0_920, %c4_921, %c1_922, %c0_923] : memref<9x9x9x128xf32, #tpu.memory_space<vmem>>, vector<1x4x8x128xf32>
    %1301 = vector.shape_cast %1300 : vector<1x4x8x128xf32> to vector<4x8x128xf32>
    %c0_924 = arith.constant 0 : index
    %c2_925 = arith.constant 2 : index
    %1302 = memref.load %arg2[%c0_924, %c2_925] : memref<3x9xf32, #tpu.memory_space<smem>>
    %1303 = vector.broadcast %1302 : f32 to vector<4x8x128xf32>
    %1304 = arith.mulf %1303, %1301 : vector<4x8x128xf32>
    %1305 = arith.addf %1291, %1304 : vector<4x8x128xf32>
    %c1_926 = arith.constant 1 : index
    %c2_927 = arith.constant 2 : index
    %1306 = memref.load %arg2[%c1_926, %c2_927] : memref<3x9xf32, #tpu.memory_space<smem>>
    %1307 = vector.broadcast %1306 : f32 to vector<4x8x128xf32>
    %1308 = arith.mulf %1307, %1301 : vector<4x8x128xf32>
    %1309 = arith.addf %1295, %1308 : vector<4x8x128xf32>
    %c2_928 = arith.constant 2 : index
    %c2_929 = arith.constant 2 : index
    %1310 = memref.load %arg2[%c2_928, %c2_929] : memref<3x9xf32, #tpu.memory_space<smem>>
    %1311 = vector.broadcast %1310 : f32 to vector<4x8x128xf32>
    %1312 = arith.mulf %1311, %1301 : vector<4x8x128xf32>
    %1313 = arith.addf %1299, %1312 : vector<4x8x128xf32>
    %c4_930 = arith.constant 4 : index
    %c4_931 = arith.constant 4 : index
    %c0_932 = arith.constant 0 : index
    %c0_933 = arith.constant 0 : index
    %1314 = vector.load %arg1[%c4_930, %c4_931, %c0_932, %c0_933] : memref<9x9x9x128xf32, #tpu.memory_space<vmem>>, vector<1x4x8x128xf32>
    %1315 = vector.shape_cast %1314 : vector<1x4x8x128xf32> to vector<4x8x128xf32>
    %c0_934 = arith.constant 0 : index
    %c3_935 = arith.constant 3 : index
    %1316 = memref.load %arg2[%c0_934, %c3_935] : memref<3x9xf32, #tpu.memory_space<smem>>
    %1317 = vector.broadcast %1316 : f32 to vector<4x8x128xf32>
    %1318 = arith.mulf %1317, %1315 : vector<4x8x128xf32>
    %1319 = arith.addf %1305, %1318 : vector<4x8x128xf32>
    %c1_936 = arith.constant 1 : index
    %c3_937 = arith.constant 3 : index
    %1320 = memref.load %arg2[%c1_936, %c3_937] : memref<3x9xf32, #tpu.memory_space<smem>>
    %1321 = vector.broadcast %1320 : f32 to vector<4x8x128xf32>
    %1322 = arith.mulf %1321, %1315 : vector<4x8x128xf32>
    %1323 = arith.addf %1309, %1322 : vector<4x8x128xf32>
    %c2_938 = arith.constant 2 : index
    %c3_939 = arith.constant 3 : index
    %1324 = memref.load %arg2[%c2_938, %c3_939] : memref<3x9xf32, #tpu.memory_space<smem>>
    %1325 = vector.broadcast %1324 : f32 to vector<4x8x128xf32>
    %1326 = arith.mulf %1325, %1315 : vector<4x8x128xf32>
    %1327 = arith.addf %1313, %1326 : vector<4x8x128xf32>
    %c5_940 = arith.constant 5 : index
    %c4_941 = arith.constant 4 : index
    %c0_942 = arith.constant 0 : index
    %c0_943 = arith.constant 0 : index
    %1328 = vector.load %arg1[%c5_940, %c4_941, %c0_942, %c0_943] : memref<9x9x9x128xf32, #tpu.memory_space<vmem>>, vector<1x4x8x128xf32>
    %1329 = vector.shape_cast %1328 : vector<1x4x8x128xf32> to vector<4x8x128xf32>
    %c0_944 = arith.constant 0 : index
    %c4_945 = arith.constant 4 : index
    %1330 = memref.load %arg2[%c0_944, %c4_945] : memref<3x9xf32, #tpu.memory_space<smem>>
    %1331 = vector.broadcast %1330 : f32 to vector<4x8x128xf32>
    %1332 = arith.mulf %1331, %1329 : vector<4x8x128xf32>
    %1333 = arith.addf %1319, %1332 : vector<4x8x128xf32>
    %c1_946 = arith.constant 1 : index
    %c4_947 = arith.constant 4 : index
    %1334 = memref.load %arg2[%c1_946, %c4_947] : memref<3x9xf32, #tpu.memory_space<smem>>
    %1335 = vector.broadcast %1334 : f32 to vector<4x8x128xf32>
    %1336 = arith.mulf %1335, %1329 : vector<4x8x128xf32>
    %1337 = arith.addf %1323, %1336 : vector<4x8x128xf32>
    %c2_948 = arith.constant 2 : index
    %c4_949 = arith.constant 4 : index
    %1338 = memref.load %arg2[%c2_948, %c4_949] : memref<3x9xf32, #tpu.memory_space<smem>>
    %1339 = vector.broadcast %1338 : f32 to vector<4x8x128xf32>
    %1340 = arith.mulf %1339, %1329 : vector<4x8x128xf32>
    %1341 = arith.addf %1327, %1340 : vector<4x8x128xf32>
    %c3_950 = arith.constant 3 : index
    %c4_951 = arith.constant 4 : index
    %c1_952 = arith.constant 1 : index
    %c0_953 = arith.constant 0 : index
    %1342 = vector.load %arg1[%c3_950, %c4_951, %c1_952, %c0_953] : memref<9x9x9x128xf32, #tpu.memory_space<vmem>>, vector<1x4x8x128xf32>
    %1343 = vector.shape_cast %1342 : vector<1x4x8x128xf32> to vector<4x8x128xf32>
    %c0_954 = arith.constant 0 : index
    %c5_955 = arith.constant 5 : index
    %1344 = memref.load %arg2[%c0_954, %c5_955] : memref<3x9xf32, #tpu.memory_space<smem>>
    %1345 = vector.broadcast %1344 : f32 to vector<4x8x128xf32>
    %1346 = arith.mulf %1345, %1343 : vector<4x8x128xf32>
    %1347 = arith.addf %1333, %1346 : vector<4x8x128xf32>
    %c1_956 = arith.constant 1 : index
    %c5_957 = arith.constant 5 : index
    %1348 = memref.load %arg2[%c1_956, %c5_957] : memref<3x9xf32, #tpu.memory_space<smem>>
    %1349 = vector.broadcast %1348 : f32 to vector<4x8x128xf32>
    %1350 = arith.mulf %1349, %1343 : vector<4x8x128xf32>
    %1351 = arith.addf %1337, %1350 : vector<4x8x128xf32>
    %c2_958 = arith.constant 2 : index
    %c5_959 = arith.constant 5 : index
    %1352 = memref.load %arg2[%c2_958, %c5_959] : memref<3x9xf32, #tpu.memory_space<smem>>
    %1353 = vector.broadcast %1352 : f32 to vector<4x8x128xf32>
    %1354 = arith.mulf %1353, %1343 : vector<4x8x128xf32>
    %1355 = arith.addf %1341, %1354 : vector<4x8x128xf32>
    %c7_960 = arith.constant 7 : index
    %c4_961 = arith.constant 4 : index
    %c0_962 = arith.constant 0 : index
    %c0_963 = arith.constant 0 : index
    %1356 = vector.load %arg1[%c7_960, %c4_961, %c0_962, %c0_963] : memref<9x9x9x128xf32, #tpu.memory_space<vmem>>, vector<1x4x8x128xf32>
    %1357 = vector.shape_cast %1356 : vector<1x4x8x128xf32> to vector<4x8x128xf32>
    %c0_964 = arith.constant 0 : index
    %c6_965 = arith.constant 6 : index
    %1358 = memref.load %arg2[%c0_964, %c6_965] : memref<3x9xf32, #tpu.memory_space<smem>>
    %1359 = vector.broadcast %1358 : f32 to vector<4x8x128xf32>
    %1360 = arith.mulf %1359, %1357 : vector<4x8x128xf32>
    %1361 = arith.addf %1347, %1360 : vector<4x8x128xf32>
    %c1_966 = arith.constant 1 : index
    %c6_967 = arith.constant 6 : index
    %1362 = memref.load %arg2[%c1_966, %c6_967] : memref<3x9xf32, #tpu.memory_space<smem>>
    %1363 = vector.broadcast %1362 : f32 to vector<4x8x128xf32>
    %1364 = arith.mulf %1363, %1357 : vector<4x8x128xf32>
    %1365 = arith.addf %1351, %1364 : vector<4x8x128xf32>
    %c2_968 = arith.constant 2 : index
    %c6_969 = arith.constant 6 : index
    %1366 = memref.load %arg2[%c2_968, %c6_969] : memref<3x9xf32, #tpu.memory_space<smem>>
    %1367 = vector.broadcast %1366 : f32 to vector<4x8x128xf32>
    %1368 = arith.mulf %1367, %1357 : vector<4x8x128xf32>
    %1369 = arith.addf %1355, %1368 : vector<4x8x128xf32>
    %c8_970 = arith.constant 8 : index
    %c4_971 = arith.constant 4 : index
    %c0_972 = arith.constant 0 : index
    %c0_973 = arith.constant 0 : index
    %1370 = vector.load %arg1[%c8_970, %c4_971, %c0_972, %c0_973] : memref<9x9x9x128xf32, #tpu.memory_space<vmem>>, vector<1x4x8x128xf32>
    %1371 = vector.shape_cast %1370 : vector<1x4x8x128xf32> to vector<4x8x128xf32>
    %c0_974 = arith.constant 0 : index
    %c7_975 = arith.constant 7 : index
    %1372 = memref.load %arg2[%c0_974, %c7_975] : memref<3x9xf32, #tpu.memory_space<smem>>
    %1373 = vector.broadcast %1372 : f32 to vector<4x8x128xf32>
    %1374 = arith.mulf %1373, %1371 : vector<4x8x128xf32>
    %1375 = arith.addf %1361, %1374 : vector<4x8x128xf32>
    %c1_976 = arith.constant 1 : index
    %c7_977 = arith.constant 7 : index
    %1376 = memref.load %arg2[%c1_976, %c7_977] : memref<3x9xf32, #tpu.memory_space<smem>>
    %1377 = vector.broadcast %1376 : f32 to vector<4x8x128xf32>
    %1378 = arith.mulf %1377, %1371 : vector<4x8x128xf32>
    %1379 = arith.addf %1365, %1378 : vector<4x8x128xf32>
    %c2_978 = arith.constant 2 : index
    %c7_979 = arith.constant 7 : index
    %1380 = memref.load %arg2[%c2_978, %c7_979] : memref<3x9xf32, #tpu.memory_space<smem>>
    %1381 = vector.broadcast %1380 : f32 to vector<4x8x128xf32>
    %1382 = arith.mulf %1381, %1371 : vector<4x8x128xf32>
    %1383 = arith.addf %1369, %1382 : vector<4x8x128xf32>
    %c6_980 = arith.constant 6 : index
    %c4_981 = arith.constant 4 : index
    %c1_982 = arith.constant 1 : index
    %c0_983 = arith.constant 0 : index
    %1384 = vector.load %arg1[%c6_980, %c4_981, %c1_982, %c0_983] : memref<9x9x9x128xf32, #tpu.memory_space<vmem>>, vector<1x4x8x128xf32>
    %1385 = vector.shape_cast %1384 : vector<1x4x8x128xf32> to vector<4x8x128xf32>
    %c0_984 = arith.constant 0 : index
    %c8_985 = arith.constant 8 : index
    %1386 = memref.load %arg2[%c0_984, %c8_985] : memref<3x9xf32, #tpu.memory_space<smem>>
    %1387 = vector.broadcast %1386 : f32 to vector<4x8x128xf32>
    %1388 = arith.mulf %1387, %1385 : vector<4x8x128xf32>
    %1389 = arith.addf %1375, %1388 : vector<4x8x128xf32>
    %c1_986 = arith.constant 1 : index
    %c8_987 = arith.constant 8 : index
    %1390 = memref.load %arg2[%c1_986, %c8_987] : memref<3x9xf32, #tpu.memory_space<smem>>
    %1391 = vector.broadcast %1390 : f32 to vector<4x8x128xf32>
    %1392 = arith.mulf %1391, %1385 : vector<4x8x128xf32>
    %1393 = arith.addf %1379, %1392 : vector<4x8x128xf32>
    %c2_988 = arith.constant 2 : index
    %c8_989 = arith.constant 8 : index
    %1394 = memref.load %arg2[%c2_988, %c8_989] : memref<3x9xf32, #tpu.memory_space<smem>>
    %1395 = vector.broadcast %1394 : f32 to vector<4x8x128xf32>
    %1396 = arith.mulf %1395, %1385 : vector<4x8x128xf32>
    %1397 = arith.addf %1383, %1396 : vector<4x8x128xf32>
    %1398 = arith.maximumf %1266, %1389 : vector<4x8x128xf32>
    %1399 = arith.maximumf %1270, %1393 : vector<4x8x128xf32>
    %1400 = arith.maximumf %1274, %1397 : vector<4x8x128xf32>
    %c2_990 = arith.constant 2 : index
    %c4_991 = arith.constant 4 : index
    %c0_992 = arith.constant 0 : index
    %c0_993 = arith.constant 0 : index
    %1401 = vector.load %arg1[%c2_990, %c4_991, %c0_992, %c0_993] : memref<9x9x9x128xf32, #tpu.memory_space<vmem>>, vector<1x4x8x128xf32>
    %1402 = vector.shape_cast %1401 : vector<1x4x8x128xf32> to vector<4x8x128xf32>
    %c0_994 = arith.constant 0 : index
    %c0_995 = arith.constant 0 : index
    %1403 = memref.load %arg2[%c0_994, %c0_995] : memref<3x9xf32, #tpu.memory_space<smem>>
    %1404 = vector.broadcast %1403 : f32 to vector<4x8x128xf32>
    %1405 = arith.mulf %1404, %1402 : vector<4x8x128xf32>
    %c1_996 = arith.constant 1 : index
    %c0_997 = arith.constant 0 : index
    %1406 = memref.load %arg2[%c1_996, %c0_997] : memref<3x9xf32, #tpu.memory_space<smem>>
    %1407 = vector.broadcast %1406 : f32 to vector<4x8x128xf32>
    %1408 = arith.mulf %1407, %1402 : vector<4x8x128xf32>
    %c2_998 = arith.constant 2 : index
    %c0_999 = arith.constant 0 : index
    %1409 = memref.load %arg2[%c2_998, %c0_999] : memref<3x9xf32, #tpu.memory_space<smem>>
    %1410 = vector.broadcast %1409 : f32 to vector<4x8x128xf32>
    %1411 = arith.mulf %1410, %1402 : vector<4x8x128xf32>
    %c0_1000 = arith.constant 0 : index
    %c4_1001 = arith.constant 4 : index
    %c1_1002 = arith.constant 1 : index
    %c0_1003 = arith.constant 0 : index
    %1412 = vector.load %arg1[%c0_1000, %c4_1001, %c1_1002, %c0_1003] : memref<9x9x9x128xf32, #tpu.memory_space<vmem>>, vector<1x4x8x128xf32>
    %1413 = vector.shape_cast %1412 : vector<1x4x8x128xf32> to vector<4x8x128xf32>
    %c0_1004 = arith.constant 0 : index
    %c1_1005 = arith.constant 1 : index
    %1414 = memref.load %arg2[%c0_1004, %c1_1005] : memref<3x9xf32, #tpu.memory_space<smem>>
    %1415 = vector.broadcast %1414 : f32 to vector<4x8x128xf32>
    %1416 = arith.mulf %1415, %1413 : vector<4x8x128xf32>
    %1417 = arith.addf %1405, %1416 : vector<4x8x128xf32>
    %c1_1006 = arith.constant 1 : index
    %c1_1007 = arith.constant 1 : index
    %1418 = memref.load %arg2[%c1_1006, %c1_1007] : memref<3x9xf32, #tpu.memory_space<smem>>
    %1419 = vector.broadcast %1418 : f32 to vector<4x8x128xf32>
    %1420 = arith.mulf %1419, %1413 : vector<4x8x128xf32>
    %1421 = arith.addf %1408, %1420 : vector<4x8x128xf32>
    %c2_1008 = arith.constant 2 : index
    %c1_1009 = arith.constant 1 : index
    %1422 = memref.load %arg2[%c2_1008, %c1_1009] : memref<3x9xf32, #tpu.memory_space<smem>>
    %1423 = vector.broadcast %1422 : f32 to vector<4x8x128xf32>
    %1424 = arith.mulf %1423, %1413 : vector<4x8x128xf32>
    %1425 = arith.addf %1411, %1424 : vector<4x8x128xf32>
    %c1_1010 = arith.constant 1 : index
    %c4_1011 = arith.constant 4 : index
    %c1_1012 = arith.constant 1 : index
    %c0_1013 = arith.constant 0 : index
    %1426 = vector.load %arg1[%c1_1010, %c4_1011, %c1_1012, %c0_1013] : memref<9x9x9x128xf32, #tpu.memory_space<vmem>>, vector<1x4x8x128xf32>
    %1427 = vector.shape_cast %1426 : vector<1x4x8x128xf32> to vector<4x8x128xf32>
    %c0_1014 = arith.constant 0 : index
    %c2_1015 = arith.constant 2 : index
    %1428 = memref.load %arg2[%c0_1014, %c2_1015] : memref<3x9xf32, #tpu.memory_space<smem>>
    %1429 = vector.broadcast %1428 : f32 to vector<4x8x128xf32>
    %1430 = arith.mulf %1429, %1427 : vector<4x8x128xf32>
    %1431 = arith.addf %1417, %1430 : vector<4x8x128xf32>
    %c1_1016 = arith.constant 1 : index
    %c2_1017 = arith.constant 2 : index
    %1432 = memref.load %arg2[%c1_1016, %c2_1017] : memref<3x9xf32, #tpu.memory_space<smem>>
    %1433 = vector.broadcast %1432 : f32 to vector<4x8x128xf32>
    %1434 = arith.mulf %1433, %1427 : vector<4x8x128xf32>
    %1435 = arith.addf %1421, %1434 : vector<4x8x128xf32>
    %c2_1018 = arith.constant 2 : index
    %c2_1019 = arith.constant 2 : index
    %1436 = memref.load %arg2[%c2_1018, %c2_1019] : memref<3x9xf32, #tpu.memory_space<smem>>
    %1437 = vector.broadcast %1436 : f32 to vector<4x8x128xf32>
    %1438 = arith.mulf %1437, %1427 : vector<4x8x128xf32>
    %1439 = arith.addf %1425, %1438 : vector<4x8x128xf32>
    %c5_1020 = arith.constant 5 : index
    %c4_1021 = arith.constant 4 : index
    %c0_1022 = arith.constant 0 : index
    %c0_1023 = arith.constant 0 : index
    %1440 = vector.load %arg1[%c5_1020, %c4_1021, %c0_1022, %c0_1023] : memref<9x9x9x128xf32, #tpu.memory_space<vmem>>, vector<1x4x8x128xf32>
    %1441 = vector.shape_cast %1440 : vector<1x4x8x128xf32> to vector<4x8x128xf32>
    %c0_1024 = arith.constant 0 : index
    %c3_1025 = arith.constant 3 : index
    %1442 = memref.load %arg2[%c0_1024, %c3_1025] : memref<3x9xf32, #tpu.memory_space<smem>>
    %1443 = vector.broadcast %1442 : f32 to vector<4x8x128xf32>
    %1444 = arith.mulf %1443, %1441 : vector<4x8x128xf32>
    %1445 = arith.addf %1431, %1444 : vector<4x8x128xf32>
    %c1_1026 = arith.constant 1 : index
    %c3_1027 = arith.constant 3 : index
    %1446 = memref.load %arg2[%c1_1026, %c3_1027] : memref<3x9xf32, #tpu.memory_space<smem>>
    %1447 = vector.broadcast %1446 : f32 to vector<4x8x128xf32>
    %1448 = arith.mulf %1447, %1441 : vector<4x8x128xf32>
    %1449 = arith.addf %1435, %1448 : vector<4x8x128xf32>
    %c2_1028 = arith.constant 2 : index
    %c3_1029 = arith.constant 3 : index
    %1450 = memref.load %arg2[%c2_1028, %c3_1029] : memref<3x9xf32, #tpu.memory_space<smem>>
    %1451 = vector.broadcast %1450 : f32 to vector<4x8x128xf32>
    %1452 = arith.mulf %1451, %1441 : vector<4x8x128xf32>
    %1453 = arith.addf %1439, %1452 : vector<4x8x128xf32>
    %c3_1030 = arith.constant 3 : index
    %c4_1031 = arith.constant 4 : index
    %c1_1032 = arith.constant 1 : index
    %c0_1033 = arith.constant 0 : index
    %1454 = vector.load %arg1[%c3_1030, %c4_1031, %c1_1032, %c0_1033] : memref<9x9x9x128xf32, #tpu.memory_space<vmem>>, vector<1x4x8x128xf32>
    %1455 = vector.shape_cast %1454 : vector<1x4x8x128xf32> to vector<4x8x128xf32>
    %c0_1034 = arith.constant 0 : index
    %c4_1035 = arith.constant 4 : index
    %1456 = memref.load %arg2[%c0_1034, %c4_1035] : memref<3x9xf32, #tpu.memory_space<smem>>
    %1457 = vector.broadcast %1456 : f32 to vector<4x8x128xf32>
    %1458 = arith.mulf %1457, %1455 : vector<4x8x128xf32>
    %1459 = arith.addf %1445, %1458 : vector<4x8x128xf32>
    %c1_1036 = arith.constant 1 : index
    %c4_1037 = arith.constant 4 : index
    %1460 = memref.load %arg2[%c1_1036, %c4_1037] : memref<3x9xf32, #tpu.memory_space<smem>>
    %1461 = vector.broadcast %1460 : f32 to vector<4x8x128xf32>
    %1462 = arith.mulf %1461, %1455 : vector<4x8x128xf32>
    %1463 = arith.addf %1449, %1462 : vector<4x8x128xf32>
    %c2_1038 = arith.constant 2 : index
    %c4_1039 = arith.constant 4 : index
    %1464 = memref.load %arg2[%c2_1038, %c4_1039] : memref<3x9xf32, #tpu.memory_space<smem>>
    %1465 = vector.broadcast %1464 : f32 to vector<4x8x128xf32>
    %1466 = arith.mulf %1465, %1455 : vector<4x8x128xf32>
    %1467 = arith.addf %1453, %1466 : vector<4x8x128xf32>
    %c4_1040 = arith.constant 4 : index
    %c4_1041 = arith.constant 4 : index
    %c1_1042 = arith.constant 1 : index
    %c0_1043 = arith.constant 0 : index
    %1468 = vector.load %arg1[%c4_1040, %c4_1041, %c1_1042, %c0_1043] : memref<9x9x9x128xf32, #tpu.memory_space<vmem>>, vector<1x4x8x128xf32>
    %1469 = vector.shape_cast %1468 : vector<1x4x8x128xf32> to vector<4x8x128xf32>
    %c0_1044 = arith.constant 0 : index
    %c5_1045 = arith.constant 5 : index
    %1470 = memref.load %arg2[%c0_1044, %c5_1045] : memref<3x9xf32, #tpu.memory_space<smem>>
    %1471 = vector.broadcast %1470 : f32 to vector<4x8x128xf32>
    %1472 = arith.mulf %1471, %1469 : vector<4x8x128xf32>
    %1473 = arith.addf %1459, %1472 : vector<4x8x128xf32>
    %c1_1046 = arith.constant 1 : index
    %c5_1047 = arith.constant 5 : index
    %1474 = memref.load %arg2[%c1_1046, %c5_1047] : memref<3x9xf32, #tpu.memory_space<smem>>
    %1475 = vector.broadcast %1474 : f32 to vector<4x8x128xf32>
    %1476 = arith.mulf %1475, %1469 : vector<4x8x128xf32>
    %1477 = arith.addf %1463, %1476 : vector<4x8x128xf32>
    %c2_1048 = arith.constant 2 : index
    %c5_1049 = arith.constant 5 : index
    %1478 = memref.load %arg2[%c2_1048, %c5_1049] : memref<3x9xf32, #tpu.memory_space<smem>>
    %1479 = vector.broadcast %1478 : f32 to vector<4x8x128xf32>
    %1480 = arith.mulf %1479, %1469 : vector<4x8x128xf32>
    %1481 = arith.addf %1467, %1480 : vector<4x8x128xf32>
    %c8_1050 = arith.constant 8 : index
    %c4_1051 = arith.constant 4 : index
    %c0_1052 = arith.constant 0 : index
    %c0_1053 = arith.constant 0 : index
    %1482 = vector.load %arg1[%c8_1050, %c4_1051, %c0_1052, %c0_1053] : memref<9x9x9x128xf32, #tpu.memory_space<vmem>>, vector<1x4x8x128xf32>
    %1483 = vector.shape_cast %1482 : vector<1x4x8x128xf32> to vector<4x8x128xf32>
    %c0_1054 = arith.constant 0 : index
    %c6_1055 = arith.constant 6 : index
    %1484 = memref.load %arg2[%c0_1054, %c6_1055] : memref<3x9xf32, #tpu.memory_space<smem>>
    %1485 = vector.broadcast %1484 : f32 to vector<4x8x128xf32>
    %1486 = arith.mulf %1485, %1483 : vector<4x8x128xf32>
    %1487 = arith.addf %1473, %1486 : vector<4x8x128xf32>
    %c1_1056 = arith.constant 1 : index
    %c6_1057 = arith.constant 6 : index
    %1488 = memref.load %arg2[%c1_1056, %c6_1057] : memref<3x9xf32, #tpu.memory_space<smem>>
    %1489 = vector.broadcast %1488 : f32 to vector<4x8x128xf32>
    %1490 = arith.mulf %1489, %1483 : vector<4x8x128xf32>
    %1491 = arith.addf %1477, %1490 : vector<4x8x128xf32>
    %c2_1058 = arith.constant 2 : index
    %c6_1059 = arith.constant 6 : index
    %1492 = memref.load %arg2[%c2_1058, %c6_1059] : memref<3x9xf32, #tpu.memory_space<smem>>
    %1493 = vector.broadcast %1492 : f32 to vector<4x8x128xf32>
    %1494 = arith.mulf %1493, %1483 : vector<4x8x128xf32>
    %1495 = arith.addf %1481, %1494 : vector<4x8x128xf32>
    %c6_1060 = arith.constant 6 : index
    %c4_1061 = arith.constant 4 : index
    %c1_1062 = arith.constant 1 : index
    %c0_1063 = arith.constant 0 : index
    %1496 = vector.load %arg1[%c6_1060, %c4_1061, %c1_1062, %c0_1063] : memref<9x9x9x128xf32, #tpu.memory_space<vmem>>, vector<1x4x8x128xf32>
    %1497 = vector.shape_cast %1496 : vector<1x4x8x128xf32> to vector<4x8x128xf32>
    %c0_1064 = arith.constant 0 : index
    %c7_1065 = arith.constant 7 : index
    %1498 = memref.load %arg2[%c0_1064, %c7_1065] : memref<3x9xf32, #tpu.memory_space<smem>>
    %1499 = vector.broadcast %1498 : f32 to vector<4x8x128xf32>
    %1500 = arith.mulf %1499, %1497 : vector<4x8x128xf32>
    %1501 = arith.addf %1487, %1500 : vector<4x8x128xf32>
    %c1_1066 = arith.constant 1 : index
    %c7_1067 = arith.constant 7 : index
    %1502 = memref.load %arg2[%c1_1066, %c7_1067] : memref<3x9xf32, #tpu.memory_space<smem>>
    %1503 = vector.broadcast %1502 : f32 to vector<4x8x128xf32>
    %1504 = arith.mulf %1503, %1497 : vector<4x8x128xf32>
    %1505 = arith.addf %1491, %1504 : vector<4x8x128xf32>
    %c2_1068 = arith.constant 2 : index
    %c7_1069 = arith.constant 7 : index
    %1506 = memref.load %arg2[%c2_1068, %c7_1069] : memref<3x9xf32, #tpu.memory_space<smem>>
    %1507 = vector.broadcast %1506 : f32 to vector<4x8x128xf32>
    %1508 = arith.mulf %1507, %1497 : vector<4x8x128xf32>
    %1509 = arith.addf %1495, %1508 : vector<4x8x128xf32>
    %c7_1070 = arith.constant 7 : index
    %c4_1071 = arith.constant 4 : index
    %c1_1072 = arith.constant 1 : index
    %c0_1073 = arith.constant 0 : index
    %1510 = vector.load %arg1[%c7_1070, %c4_1071, %c1_1072, %c0_1073] : memref<9x9x9x128xf32, #tpu.memory_space<vmem>>, vector<1x4x8x128xf32>
    %1511 = vector.shape_cast %1510 : vector<1x4x8x128xf32> to vector<4x8x128xf32>
    %c0_1074 = arith.constant 0 : index
    %c8_1075 = arith.constant 8 : index
    %1512 = memref.load %arg2[%c0_1074, %c8_1075] : memref<3x9xf32, #tpu.memory_space<smem>>
    %1513 = vector.broadcast %1512 : f32 to vector<4x8x128xf32>
    %1514 = arith.mulf %1513, %1511 : vector<4x8x128xf32>
    %1515 = arith.addf %1501, %1514 : vector<4x8x128xf32>
    %c1_1076 = arith.constant 1 : index
    %c8_1077 = arith.constant 8 : index
    %1516 = memref.load %arg2[%c1_1076, %c8_1077] : memref<3x9xf32, #tpu.memory_space<smem>>
    %1517 = vector.broadcast %1516 : f32 to vector<4x8x128xf32>
    %1518 = arith.mulf %1517, %1511 : vector<4x8x128xf32>
    %1519 = arith.addf %1505, %1518 : vector<4x8x128xf32>
    %c2_1078 = arith.constant 2 : index
    %c8_1079 = arith.constant 8 : index
    %1520 = memref.load %arg2[%c2_1078, %c8_1079] : memref<3x9xf32, #tpu.memory_space<smem>>
    %1521 = vector.broadcast %1520 : f32 to vector<4x8x128xf32>
    %1522 = arith.mulf %1521, %1511 : vector<4x8x128xf32>
    %1523 = arith.addf %1509, %1522 : vector<4x8x128xf32>
    %1524 = arith.maximumf %1398, %1515 : vector<4x8x128xf32>
    %1525 = arith.maximumf %1399, %1519 : vector<4x8x128xf32>
    %1526 = arith.maximumf %1400, %1523 : vector<4x8x128xf32>
    %c3_1080 = arith.constant 3 : index
    %c4_1081 = arith.constant 4 : index
    %c0_1082 = arith.constant 0 : index
    %c0_1083 = arith.constant 0 : index
    %1527 = vector.load %arg1[%c3_1080, %c4_1081, %c0_1082, %c0_1083] : memref<9x9x9x128xf32, #tpu.memory_space<vmem>>, vector<1x4x8x128xf32>
    %1528 = vector.shape_cast %1527 : vector<1x4x8x128xf32> to vector<4x8x128xf32>
    %c0_1084 = arith.constant 0 : index
    %c0_1085 = arith.constant 0 : index
    %1529 = memref.load %arg2[%c0_1084, %c0_1085] : memref<3x9xf32, #tpu.memory_space<smem>>
    %1530 = vector.broadcast %1529 : f32 to vector<4x8x128xf32>
    %1531 = arith.mulf %1530, %1528 : vector<4x8x128xf32>
    %c1_1086 = arith.constant 1 : index
    %c0_1087 = arith.constant 0 : index
    %1532 = memref.load %arg2[%c1_1086, %c0_1087] : memref<3x9xf32, #tpu.memory_space<smem>>
    %1533 = vector.broadcast %1532 : f32 to vector<4x8x128xf32>
    %1534 = arith.mulf %1533, %1528 : vector<4x8x128xf32>
    %c2_1088 = arith.constant 2 : index
    %c0_1089 = arith.constant 0 : index
    %1535 = memref.load %arg2[%c2_1088, %c0_1089] : memref<3x9xf32, #tpu.memory_space<smem>>
    %1536 = vector.broadcast %1535 : f32 to vector<4x8x128xf32>
    %1537 = arith.mulf %1536, %1528 : vector<4x8x128xf32>
    %c4_1090 = arith.constant 4 : index
    %c4_1091 = arith.constant 4 : index
    %c0_1092 = arith.constant 0 : index
    %c0_1093 = arith.constant 0 : index
    %1538 = vector.load %arg1[%c4_1090, %c4_1091, %c0_1092, %c0_1093] : memref<9x9x9x128xf32, #tpu.memory_space<vmem>>, vector<1x4x8x128xf32>
    %1539 = vector.shape_cast %1538 : vector<1x4x8x128xf32> to vector<4x8x128xf32>
    %c0_1094 = arith.constant 0 : index
    %c1_1095 = arith.constant 1 : index
    %1540 = memref.load %arg2[%c0_1094, %c1_1095] : memref<3x9xf32, #tpu.memory_space<smem>>
    %1541 = vector.broadcast %1540 : f32 to vector<4x8x128xf32>
    %1542 = arith.mulf %1541, %1539 : vector<4x8x128xf32>
    %1543 = arith.addf %1531, %1542 : vector<4x8x128xf32>
    %c1_1096 = arith.constant 1 : index
    %c1_1097 = arith.constant 1 : index
    %1544 = memref.load %arg2[%c1_1096, %c1_1097] : memref<3x9xf32, #tpu.memory_space<smem>>
    %1545 = vector.broadcast %1544 : f32 to vector<4x8x128xf32>
    %1546 = arith.mulf %1545, %1539 : vector<4x8x128xf32>
    %1547 = arith.addf %1534, %1546 : vector<4x8x128xf32>
    %c2_1098 = arith.constant 2 : index
    %c1_1099 = arith.constant 1 : index
    %1548 = memref.load %arg2[%c2_1098, %c1_1099] : memref<3x9xf32, #tpu.memory_space<smem>>
    %1549 = vector.broadcast %1548 : f32 to vector<4x8x128xf32>
    %1550 = arith.mulf %1549, %1539 : vector<4x8x128xf32>
    %1551 = arith.addf %1537, %1550 : vector<4x8x128xf32>
    %c5_1100 = arith.constant 5 : index
    %c4_1101 = arith.constant 4 : index
    %c0_1102 = arith.constant 0 : index
    %c0_1103 = arith.constant 0 : index
    %1552 = vector.load %arg1[%c5_1100, %c4_1101, %c0_1102, %c0_1103] : memref<9x9x9x128xf32, #tpu.memory_space<vmem>>, vector<1x4x8x128xf32>
    %1553 = vector.shape_cast %1552 : vector<1x4x8x128xf32> to vector<4x8x128xf32>
    %c0_1104 = arith.constant 0 : index
    %c2_1105 = arith.constant 2 : index
    %1554 = memref.load %arg2[%c0_1104, %c2_1105] : memref<3x9xf32, #tpu.memory_space<smem>>
    %1555 = vector.broadcast %1554 : f32 to vector<4x8x128xf32>
    %1556 = arith.mulf %1555, %1553 : vector<4x8x128xf32>
    %1557 = arith.addf %1543, %1556 : vector<4x8x128xf32>
    %c1_1106 = arith.constant 1 : index
    %c2_1107 = arith.constant 2 : index
    %1558 = memref.load %arg2[%c1_1106, %c2_1107] : memref<3x9xf32, #tpu.memory_space<smem>>
    %1559 = vector.broadcast %1558 : f32 to vector<4x8x128xf32>
    %1560 = arith.mulf %1559, %1553 : vector<4x8x128xf32>
    %1561 = arith.addf %1547, %1560 : vector<4x8x128xf32>
    %c2_1108 = arith.constant 2 : index
    %c2_1109 = arith.constant 2 : index
    %1562 = memref.load %arg2[%c2_1108, %c2_1109] : memref<3x9xf32, #tpu.memory_space<smem>>
    %1563 = vector.broadcast %1562 : f32 to vector<4x8x128xf32>
    %1564 = arith.mulf %1563, %1553 : vector<4x8x128xf32>
    %1565 = arith.addf %1551, %1564 : vector<4x8x128xf32>
    %c6_1110 = arith.constant 6 : index
    %c4_1111 = arith.constant 4 : index
    %c0_1112 = arith.constant 0 : index
    %c0_1113 = arith.constant 0 : index
    %1566 = vector.load %arg1[%c6_1110, %c4_1111, %c0_1112, %c0_1113] : memref<9x9x9x128xf32, #tpu.memory_space<vmem>>, vector<1x4x8x128xf32>
    %1567 = vector.shape_cast %1566 : vector<1x4x8x128xf32> to vector<4x8x128xf32>
    %c0_1114 = arith.constant 0 : index
    %c3_1115 = arith.constant 3 : index
    %1568 = memref.load %arg2[%c0_1114, %c3_1115] : memref<3x9xf32, #tpu.memory_space<smem>>
    %1569 = vector.broadcast %1568 : f32 to vector<4x8x128xf32>
    %1570 = arith.mulf %1569, %1567 : vector<4x8x128xf32>
    %1571 = arith.addf %1557, %1570 : vector<4x8x128xf32>
    %c1_1116 = arith.constant 1 : index
    %c3_1117 = arith.constant 3 : index
    %1572 = memref.load %arg2[%c1_1116, %c3_1117] : memref<3x9xf32, #tpu.memory_space<smem>>
    %1573 = vector.broadcast %1572 : f32 to vector<4x8x128xf32>
    %1574 = arith.mulf %1573, %1567 : vector<4x8x128xf32>
    %1575 = arith.addf %1561, %1574 : vector<4x8x128xf32>
    %c2_1118 = arith.constant 2 : index
    %c3_1119 = arith.constant 3 : index
    %1576 = memref.load %arg2[%c2_1118, %c3_1119] : memref<3x9xf32, #tpu.memory_space<smem>>
    %1577 = vector.broadcast %1576 : f32 to vector<4x8x128xf32>
    %1578 = arith.mulf %1577, %1567 : vector<4x8x128xf32>
    %1579 = arith.addf %1565, %1578 : vector<4x8x128xf32>
    %c7_1120 = arith.constant 7 : index
    %c4_1121 = arith.constant 4 : index
    %c0_1122 = arith.constant 0 : index
    %c0_1123 = arith.constant 0 : index
    %1580 = vector.load %arg1[%c7_1120, %c4_1121, %c0_1122, %c0_1123] : memref<9x9x9x128xf32, #tpu.memory_space<vmem>>, vector<1x4x8x128xf32>
    %1581 = vector.shape_cast %1580 : vector<1x4x8x128xf32> to vector<4x8x128xf32>
    %c0_1124 = arith.constant 0 : index
    %c4_1125 = arith.constant 4 : index
    %1582 = memref.load %arg2[%c0_1124, %c4_1125] : memref<3x9xf32, #tpu.memory_space<smem>>
    %1583 = vector.broadcast %1582 : f32 to vector<4x8x128xf32>
    %1584 = arith.mulf %1583, %1581 : vector<4x8x128xf32>
    %1585 = arith.addf %1571, %1584 : vector<4x8x128xf32>
    %c1_1126 = arith.constant 1 : index
    %c4_1127 = arith.constant 4 : index
    %1586 = memref.load %arg2[%c1_1126, %c4_1127] : memref<3x9xf32, #tpu.memory_space<smem>>
    %1587 = vector.broadcast %1586 : f32 to vector<4x8x128xf32>
    %1588 = arith.mulf %1587, %1581 : vector<4x8x128xf32>
    %1589 = arith.addf %1575, %1588 : vector<4x8x128xf32>
    %c2_1128 = arith.constant 2 : index
    %c4_1129 = arith.constant 4 : index
    %1590 = memref.load %arg2[%c2_1128, %c4_1129] : memref<3x9xf32, #tpu.memory_space<smem>>
    %1591 = vector.broadcast %1590 : f32 to vector<4x8x128xf32>
    %1592 = arith.mulf %1591, %1581 : vector<4x8x128xf32>
    %1593 = arith.addf %1579, %1592 : vector<4x8x128xf32>
    %c8_1130 = arith.constant 8 : index
    %c4_1131 = arith.constant 4 : index
    %c0_1132 = arith.constant 0 : index
    %c0_1133 = arith.constant 0 : index
    %1594 = vector.load %arg1[%c8_1130, %c4_1131, %c0_1132, %c0_1133] : memref<9x9x9x128xf32, #tpu.memory_space<vmem>>, vector<1x4x8x128xf32>
    %1595 = vector.shape_cast %1594 : vector<1x4x8x128xf32> to vector<4x8x128xf32>
    %c0_1134 = arith.constant 0 : index
    %c5_1135 = arith.constant 5 : index
    %1596 = memref.load %arg2[%c0_1134, %c5_1135] : memref<3x9xf32, #tpu.memory_space<smem>>
    %1597 = vector.broadcast %1596 : f32 to vector<4x8x128xf32>
    %1598 = arith.mulf %1597, %1595 : vector<4x8x128xf32>
    %1599 = arith.addf %1585, %1598 : vector<4x8x128xf32>
    %c1_1136 = arith.constant 1 : index
    %c5_1137 = arith.constant 5 : index
    %1600 = memref.load %arg2[%c1_1136, %c5_1137] : memref<3x9xf32, #tpu.memory_space<smem>>
    %1601 = vector.broadcast %1600 : f32 to vector<4x8x128xf32>
    %1602 = arith.mulf %1601, %1595 : vector<4x8x128xf32>
    %1603 = arith.addf %1589, %1602 : vector<4x8x128xf32>
    %c2_1138 = arith.constant 2 : index
    %c5_1139 = arith.constant 5 : index
    %1604 = memref.load %arg2[%c2_1138, %c5_1139] : memref<3x9xf32, #tpu.memory_space<smem>>
    %1605 = vector.broadcast %1604 : f32 to vector<4x8x128xf32>
    %1606 = arith.mulf %1605, %1595 : vector<4x8x128xf32>
    %1607 = arith.addf %1593, %1606 : vector<4x8x128xf32>
    %c0_1140 = arith.constant 0 : index
    %c5_1141 = arith.constant 5 : index
    %c0_1142 = arith.constant 0 : index
    %c0_1143 = arith.constant 0 : index
    %1608 = vector.load %arg1[%c0_1140, %c5_1141, %c0_1142, %c0_1143] : memref<9x9x9x128xf32, #tpu.memory_space<vmem>>, vector<1x4x8x128xf32>
    %1609 = vector.shape_cast %1608 : vector<1x4x8x128xf32> to vector<4x8x128xf32>
    %c0_1144 = arith.constant 0 : index
    %c6_1145 = arith.constant 6 : index
    %1610 = memref.load %arg2[%c0_1144, %c6_1145] : memref<3x9xf32, #tpu.memory_space<smem>>
    %1611 = vector.broadcast %1610 : f32 to vector<4x8x128xf32>
    %1612 = arith.mulf %1611, %1609 : vector<4x8x128xf32>
    %1613 = arith.addf %1599, %1612 : vector<4x8x128xf32>
    %c1_1146 = arith.constant 1 : index
    %c6_1147 = arith.constant 6 : index
    %1614 = memref.load %arg2[%c1_1146, %c6_1147] : memref<3x9xf32, #tpu.memory_space<smem>>
    %1615 = vector.broadcast %1614 : f32 to vector<4x8x128xf32>
    %1616 = arith.mulf %1615, %1609 : vector<4x8x128xf32>
    %1617 = arith.addf %1603, %1616 : vector<4x8x128xf32>
    %c2_1148 = arith.constant 2 : index
    %c6_1149 = arith.constant 6 : index
    %1618 = memref.load %arg2[%c2_1148, %c6_1149] : memref<3x9xf32, #tpu.memory_space<smem>>
    %1619 = vector.broadcast %1618 : f32 to vector<4x8x128xf32>
    %1620 = arith.mulf %1619, %1609 : vector<4x8x128xf32>
    %1621 = arith.addf %1607, %1620 : vector<4x8x128xf32>
    %c1_1150 = arith.constant 1 : index
    %c5_1151 = arith.constant 5 : index
    %c0_1152 = arith.constant 0 : index
    %c0_1153 = arith.constant 0 : index
    %1622 = vector.load %arg1[%c1_1150, %c5_1151, %c0_1152, %c0_1153] : memref<9x9x9x128xf32, #tpu.memory_space<vmem>>, vector<1x4x8x128xf32>
    %1623 = vector.shape_cast %1622 : vector<1x4x8x128xf32> to vector<4x8x128xf32>
    %c0_1154 = arith.constant 0 : index
    %c7_1155 = arith.constant 7 : index
    %1624 = memref.load %arg2[%c0_1154, %c7_1155] : memref<3x9xf32, #tpu.memory_space<smem>>
    %1625 = vector.broadcast %1624 : f32 to vector<4x8x128xf32>
    %1626 = arith.mulf %1625, %1623 : vector<4x8x128xf32>
    %1627 = arith.addf %1613, %1626 : vector<4x8x128xf32>
    %c1_1156 = arith.constant 1 : index
    %c7_1157 = arith.constant 7 : index
    %1628 = memref.load %arg2[%c1_1156, %c7_1157] : memref<3x9xf32, #tpu.memory_space<smem>>
    %1629 = vector.broadcast %1628 : f32 to vector<4x8x128xf32>
    %1630 = arith.mulf %1629, %1623 : vector<4x8x128xf32>
    %1631 = arith.addf %1617, %1630 : vector<4x8x128xf32>
    %c2_1158 = arith.constant 2 : index
    %c7_1159 = arith.constant 7 : index
    %1632 = memref.load %arg2[%c2_1158, %c7_1159] : memref<3x9xf32, #tpu.memory_space<smem>>
    %1633 = vector.broadcast %1632 : f32 to vector<4x8x128xf32>
    %1634 = arith.mulf %1633, %1623 : vector<4x8x128xf32>
    %1635 = arith.addf %1621, %1634 : vector<4x8x128xf32>
    %c2_1160 = arith.constant 2 : index
    %c5_1161 = arith.constant 5 : index
    %c0_1162 = arith.constant 0 : index
    %c0_1163 = arith.constant 0 : index
    %1636 = vector.load %arg1[%c2_1160, %c5_1161, %c0_1162, %c0_1163] : memref<9x9x9x128xf32, #tpu.memory_space<vmem>>, vector<1x4x8x128xf32>
    %1637 = vector.shape_cast %1636 : vector<1x4x8x128xf32> to vector<4x8x128xf32>
    %c0_1164 = arith.constant 0 : index
    %c8_1165 = arith.constant 8 : index
    %1638 = memref.load %arg2[%c0_1164, %c8_1165] : memref<3x9xf32, #tpu.memory_space<smem>>
    %1639 = vector.broadcast %1638 : f32 to vector<4x8x128xf32>
    %1640 = arith.mulf %1639, %1637 : vector<4x8x128xf32>
    %1641 = arith.addf %1627, %1640 : vector<4x8x128xf32>
    %c1_1166 = arith.constant 1 : index
    %c8_1167 = arith.constant 8 : index
    %1642 = memref.load %arg2[%c1_1166, %c8_1167] : memref<3x9xf32, #tpu.memory_space<smem>>
    %1643 = vector.broadcast %1642 : f32 to vector<4x8x128xf32>
    %1644 = arith.mulf %1643, %1637 : vector<4x8x128xf32>
    %1645 = arith.addf %1631, %1644 : vector<4x8x128xf32>
    %c2_1168 = arith.constant 2 : index
    %c8_1169 = arith.constant 8 : index
    %1646 = memref.load %arg2[%c2_1168, %c8_1169] : memref<3x9xf32, #tpu.memory_space<smem>>
    %1647 = vector.broadcast %1646 : f32 to vector<4x8x128xf32>
    %1648 = arith.mulf %1647, %1637 : vector<4x8x128xf32>
    %1649 = arith.addf %1635, %1648 : vector<4x8x128xf32>
    %1650 = arith.maximumf %1524, %1641 : vector<4x8x128xf32>
    %1651 = arith.maximumf %1525, %1645 : vector<4x8x128xf32>
    %1652 = arith.maximumf %1526, %1649 : vector<4x8x128xf32>
    %c4_1170 = arith.constant 4 : index
    %c4_1171 = arith.constant 4 : index
    %c0_1172 = arith.constant 0 : index
    %c0_1173 = arith.constant 0 : index
    %1653 = vector.load %arg1[%c4_1170, %c4_1171, %c0_1172, %c0_1173] : memref<9x9x9x128xf32, #tpu.memory_space<vmem>>, vector<1x4x8x128xf32>
    %1654 = vector.shape_cast %1653 : vector<1x4x8x128xf32> to vector<4x8x128xf32>
    %c0_1174 = arith.constant 0 : index
    %c0_1175 = arith.constant 0 : index
    %1655 = memref.load %arg2[%c0_1174, %c0_1175] : memref<3x9xf32, #tpu.memory_space<smem>>
    %1656 = vector.broadcast %1655 : f32 to vector<4x8x128xf32>
    %1657 = arith.mulf %1656, %1654 : vector<4x8x128xf32>
    %c1_1176 = arith.constant 1 : index
    %c0_1177 = arith.constant 0 : index
    %1658 = memref.load %arg2[%c1_1176, %c0_1177] : memref<3x9xf32, #tpu.memory_space<smem>>
    %1659 = vector.broadcast %1658 : f32 to vector<4x8x128xf32>
    %1660 = arith.mulf %1659, %1654 : vector<4x8x128xf32>
    %c2_1178 = arith.constant 2 : index
    %c0_1179 = arith.constant 0 : index
    %1661 = memref.load %arg2[%c2_1178, %c0_1179] : memref<3x9xf32, #tpu.memory_space<smem>>
    %1662 = vector.broadcast %1661 : f32 to vector<4x8x128xf32>
    %1663 = arith.mulf %1662, %1654 : vector<4x8x128xf32>
    %c5_1180 = arith.constant 5 : index
    %c4_1181 = arith.constant 4 : index
    %c0_1182 = arith.constant 0 : index
    %c0_1183 = arith.constant 0 : index
    %1664 = vector.load %arg1[%c5_1180, %c4_1181, %c0_1182, %c0_1183] : memref<9x9x9x128xf32, #tpu.memory_space<vmem>>, vector<1x4x8x128xf32>
    %1665 = vector.shape_cast %1664 : vector<1x4x8x128xf32> to vector<4x8x128xf32>
    %c0_1184 = arith.constant 0 : index
    %c1_1185 = arith.constant 1 : index
    %1666 = memref.load %arg2[%c0_1184, %c1_1185] : memref<3x9xf32, #tpu.memory_space<smem>>
    %1667 = vector.broadcast %1666 : f32 to vector<4x8x128xf32>
    %1668 = arith.mulf %1667, %1665 : vector<4x8x128xf32>
    %1669 = arith.addf %1657, %1668 : vector<4x8x128xf32>
    %c1_1186 = arith.constant 1 : index
    %c1_1187 = arith.constant 1 : index
    %1670 = memref.load %arg2[%c1_1186, %c1_1187] : memref<3x9xf32, #tpu.memory_space<smem>>
    %1671 = vector.broadcast %1670 : f32 to vector<4x8x128xf32>
    %1672 = arith.mulf %1671, %1665 : vector<4x8x128xf32>
    %1673 = arith.addf %1660, %1672 : vector<4x8x128xf32>
    %c2_1188 = arith.constant 2 : index
    %c1_1189 = arith.constant 1 : index
    %1674 = memref.load %arg2[%c2_1188, %c1_1189] : memref<3x9xf32, #tpu.memory_space<smem>>
    %1675 = vector.broadcast %1674 : f32 to vector<4x8x128xf32>
    %1676 = arith.mulf %1675, %1665 : vector<4x8x128xf32>
    %1677 = arith.addf %1663, %1676 : vector<4x8x128xf32>
    %c3_1190 = arith.constant 3 : index
    %c4_1191 = arith.constant 4 : index
    %c1_1192 = arith.constant 1 : index
    %c0_1193 = arith.constant 0 : index
    %1678 = vector.load %arg1[%c3_1190, %c4_1191, %c1_1192, %c0_1193] : memref<9x9x9x128xf32, #tpu.memory_space<vmem>>, vector<1x4x8x128xf32>
    %1679 = vector.shape_cast %1678 : vector<1x4x8x128xf32> to vector<4x8x128xf32>
    %c0_1194 = arith.constant 0 : index
    %c2_1195 = arith.constant 2 : index
    %1680 = memref.load %arg2[%c0_1194, %c2_1195] : memref<3x9xf32, #tpu.memory_space<smem>>
    %1681 = vector.broadcast %1680 : f32 to vector<4x8x128xf32>
    %1682 = arith.mulf %1681, %1679 : vector<4x8x128xf32>
    %1683 = arith.addf %1669, %1682 : vector<4x8x128xf32>
    %c1_1196 = arith.constant 1 : index
    %c2_1197 = arith.constant 2 : index
    %1684 = memref.load %arg2[%c1_1196, %c2_1197] : memref<3x9xf32, #tpu.memory_space<smem>>
    %1685 = vector.broadcast %1684 : f32 to vector<4x8x128xf32>
    %1686 = arith.mulf %1685, %1679 : vector<4x8x128xf32>
    %1687 = arith.addf %1673, %1686 : vector<4x8x128xf32>
    %c2_1198 = arith.constant 2 : index
    %c2_1199 = arith.constant 2 : index
    %1688 = memref.load %arg2[%c2_1198, %c2_1199] : memref<3x9xf32, #tpu.memory_space<smem>>
    %1689 = vector.broadcast %1688 : f32 to vector<4x8x128xf32>
    %1690 = arith.mulf %1689, %1679 : vector<4x8x128xf32>
    %1691 = arith.addf %1677, %1690 : vector<4x8x128xf32>
    %c7_1200 = arith.constant 7 : index
    %c4_1201 = arith.constant 4 : index
    %c0_1202 = arith.constant 0 : index
    %c0_1203 = arith.constant 0 : index
    %1692 = vector.load %arg1[%c7_1200, %c4_1201, %c0_1202, %c0_1203] : memref<9x9x9x128xf32, #tpu.memory_space<vmem>>, vector<1x4x8x128xf32>
    %1693 = vector.shape_cast %1692 : vector<1x4x8x128xf32> to vector<4x8x128xf32>
    %c0_1204 = arith.constant 0 : index
    %c3_1205 = arith.constant 3 : index
    %1694 = memref.load %arg2[%c0_1204, %c3_1205] : memref<3x9xf32, #tpu.memory_space<smem>>
    %1695 = vector.broadcast %1694 : f32 to vector<4x8x128xf32>
    %1696 = arith.mulf %1695, %1693 : vector<4x8x128xf32>
    %1697 = arith.addf %1683, %1696 : vector<4x8x128xf32>
    %c1_1206 = arith.constant 1 : index
    %c3_1207 = arith.constant 3 : index
    %1698 = memref.load %arg2[%c1_1206, %c3_1207] : memref<3x9xf32, #tpu.memory_space<smem>>
    %1699 = vector.broadcast %1698 : f32 to vector<4x8x128xf32>
    %1700 = arith.mulf %1699, %1693 : vector<4x8x128xf32>
    %1701 = arith.addf %1687, %1700 : vector<4x8x128xf32>
    %c2_1208 = arith.constant 2 : index
    %c3_1209 = arith.constant 3 : index
    %1702 = memref.load %arg2[%c2_1208, %c3_1209] : memref<3x9xf32, #tpu.memory_space<smem>>
    %1703 = vector.broadcast %1702 : f32 to vector<4x8x128xf32>
    %1704 = arith.mulf %1703, %1693 : vector<4x8x128xf32>
    %1705 = arith.addf %1691, %1704 : vector<4x8x128xf32>
    %c8_1210 = arith.constant 8 : index
    %c4_1211 = arith.constant 4 : index
    %c0_1212 = arith.constant 0 : index
    %c0_1213 = arith.constant 0 : index
    %1706 = vector.load %arg1[%c8_1210, %c4_1211, %c0_1212, %c0_1213] : memref<9x9x9x128xf32, #tpu.memory_space<vmem>>, vector<1x4x8x128xf32>
    %1707 = vector.shape_cast %1706 : vector<1x4x8x128xf32> to vector<4x8x128xf32>
    %c0_1214 = arith.constant 0 : index
    %c4_1215 = arith.constant 4 : index
    %1708 = memref.load %arg2[%c0_1214, %c4_1215] : memref<3x9xf32, #tpu.memory_space<smem>>
    %1709 = vector.broadcast %1708 : f32 to vector<4x8x128xf32>
    %1710 = arith.mulf %1709, %1707 : vector<4x8x128xf32>
    %1711 = arith.addf %1697, %1710 : vector<4x8x128xf32>
    %c1_1216 = arith.constant 1 : index
    %c4_1217 = arith.constant 4 : index
    %1712 = memref.load %arg2[%c1_1216, %c4_1217] : memref<3x9xf32, #tpu.memory_space<smem>>
    %1713 = vector.broadcast %1712 : f32 to vector<4x8x128xf32>
    %1714 = arith.mulf %1713, %1707 : vector<4x8x128xf32>
    %1715 = arith.addf %1701, %1714 : vector<4x8x128xf32>
    %c2_1218 = arith.constant 2 : index
    %c4_1219 = arith.constant 4 : index
    %1716 = memref.load %arg2[%c2_1218, %c4_1219] : memref<3x9xf32, #tpu.memory_space<smem>>
    %1717 = vector.broadcast %1716 : f32 to vector<4x8x128xf32>
    %1718 = arith.mulf %1717, %1707 : vector<4x8x128xf32>
    %1719 = arith.addf %1705, %1718 : vector<4x8x128xf32>
    %c6_1220 = arith.constant 6 : index
    %c4_1221 = arith.constant 4 : index
    %c1_1222 = arith.constant 1 : index
    %c0_1223 = arith.constant 0 : index
    %1720 = vector.load %arg1[%c6_1220, %c4_1221, %c1_1222, %c0_1223] : memref<9x9x9x128xf32, #tpu.memory_space<vmem>>, vector<1x4x8x128xf32>
    %1721 = vector.shape_cast %1720 : vector<1x4x8x128xf32> to vector<4x8x128xf32>
    %c0_1224 = arith.constant 0 : index
    %c5_1225 = arith.constant 5 : index
    %1722 = memref.load %arg2[%c0_1224, %c5_1225] : memref<3x9xf32, #tpu.memory_space<smem>>
    %1723 = vector.broadcast %1722 : f32 to vector<4x8x128xf32>
    %1724 = arith.mulf %1723, %1721 : vector<4x8x128xf32>
    %1725 = arith.addf %1711, %1724 : vector<4x8x128xf32>
    %c1_1226 = arith.constant 1 : index
    %c5_1227 = arith.constant 5 : index
    %1726 = memref.load %arg2[%c1_1226, %c5_1227] : memref<3x9xf32, #tpu.memory_space<smem>>
    %1727 = vector.broadcast %1726 : f32 to vector<4x8x128xf32>
    %1728 = arith.mulf %1727, %1721 : vector<4x8x128xf32>
    %1729 = arith.addf %1715, %1728 : vector<4x8x128xf32>
    %c2_1228 = arith.constant 2 : index
    %c5_1229 = arith.constant 5 : index
    %1730 = memref.load %arg2[%c2_1228, %c5_1229] : memref<3x9xf32, #tpu.memory_space<smem>>
    %1731 = vector.broadcast %1730 : f32 to vector<4x8x128xf32>
    %1732 = arith.mulf %1731, %1721 : vector<4x8x128xf32>
    %1733 = arith.addf %1719, %1732 : vector<4x8x128xf32>
    %c1_1230 = arith.constant 1 : index
    %c5_1231 = arith.constant 5 : index
    %c0_1232 = arith.constant 0 : index
    %c0_1233 = arith.constant 0 : index
    %1734 = vector.load %arg1[%c1_1230, %c5_1231, %c0_1232, %c0_1233] : memref<9x9x9x128xf32, #tpu.memory_space<vmem>>, vector<1x4x8x128xf32>
    %1735 = vector.shape_cast %1734 : vector<1x4x8x128xf32> to vector<4x8x128xf32>
    %c0_1234 = arith.constant 0 : index
    %c6_1235 = arith.constant 6 : index
    %1736 = memref.load %arg2[%c0_1234, %c6_1235] : memref<3x9xf32, #tpu.memory_space<smem>>
    %1737 = vector.broadcast %1736 : f32 to vector<4x8x128xf32>
    %1738 = arith.mulf %1737, %1735 : vector<4x8x128xf32>
    %1739 = arith.addf %1725, %1738 : vector<4x8x128xf32>
    %c1_1236 = arith.constant 1 : index
    %c6_1237 = arith.constant 6 : index
    %1740 = memref.load %arg2[%c1_1236, %c6_1237] : memref<3x9xf32, #tpu.memory_space<smem>>
    %1741 = vector.broadcast %1740 : f32 to vector<4x8x128xf32>
    %1742 = arith.mulf %1741, %1735 : vector<4x8x128xf32>
    %1743 = arith.addf %1729, %1742 : vector<4x8x128xf32>
    %c2_1238 = arith.constant 2 : index
    %c6_1239 = arith.constant 6 : index
    %1744 = memref.load %arg2[%c2_1238, %c6_1239] : memref<3x9xf32, #tpu.memory_space<smem>>
    %1745 = vector.broadcast %1744 : f32 to vector<4x8x128xf32>
    %1746 = arith.mulf %1745, %1735 : vector<4x8x128xf32>
    %1747 = arith.addf %1733, %1746 : vector<4x8x128xf32>
    %c2_1240 = arith.constant 2 : index
    %c5_1241 = arith.constant 5 : index
    %c0_1242 = arith.constant 0 : index
    %c0_1243 = arith.constant 0 : index
    %1748 = vector.load %arg1[%c2_1240, %c5_1241, %c0_1242, %c0_1243] : memref<9x9x9x128xf32, #tpu.memory_space<vmem>>, vector<1x4x8x128xf32>
    %1749 = vector.shape_cast %1748 : vector<1x4x8x128xf32> to vector<4x8x128xf32>
    %c0_1244 = arith.constant 0 : index
    %c7_1245 = arith.constant 7 : index
    %1750 = memref.load %arg2[%c0_1244, %c7_1245] : memref<3x9xf32, #tpu.memory_space<smem>>
    %1751 = vector.broadcast %1750 : f32 to vector<4x8x128xf32>
    %1752 = arith.mulf %1751, %1749 : vector<4x8x128xf32>
    %1753 = arith.addf %1739, %1752 : vector<4x8x128xf32>
    %c1_1246 = arith.constant 1 : index
    %c7_1247 = arith.constant 7 : index
    %1754 = memref.load %arg2[%c1_1246, %c7_1247] : memref<3x9xf32, #tpu.memory_space<smem>>
    %1755 = vector.broadcast %1754 : f32 to vector<4x8x128xf32>
    %1756 = arith.mulf %1755, %1749 : vector<4x8x128xf32>
    %1757 = arith.addf %1743, %1756 : vector<4x8x128xf32>
    %c2_1248 = arith.constant 2 : index
    %c7_1249 = arith.constant 7 : index
    %1758 = memref.load %arg2[%c2_1248, %c7_1249] : memref<3x9xf32, #tpu.memory_space<smem>>
    %1759 = vector.broadcast %1758 : f32 to vector<4x8x128xf32>
    %1760 = arith.mulf %1759, %1749 : vector<4x8x128xf32>
    %1761 = arith.addf %1747, %1760 : vector<4x8x128xf32>
    %c0_1250 = arith.constant 0 : index
    %c5_1251 = arith.constant 5 : index
    %c1_1252 = arith.constant 1 : index
    %c0_1253 = arith.constant 0 : index
    %1762 = vector.load %arg1[%c0_1250, %c5_1251, %c1_1252, %c0_1253] : memref<9x9x9x128xf32, #tpu.memory_space<vmem>>, vector<1x4x8x128xf32>
    %1763 = vector.shape_cast %1762 : vector<1x4x8x128xf32> to vector<4x8x128xf32>
    %c0_1254 = arith.constant 0 : index
    %c8_1255 = arith.constant 8 : index
    %1764 = memref.load %arg2[%c0_1254, %c8_1255] : memref<3x9xf32, #tpu.memory_space<smem>>
    %1765 = vector.broadcast %1764 : f32 to vector<4x8x128xf32>
    %1766 = arith.mulf %1765, %1763 : vector<4x8x128xf32>
    %1767 = arith.addf %1753, %1766 : vector<4x8x128xf32>
    %c1_1256 = arith.constant 1 : index
    %c8_1257 = arith.constant 8 : index
    %1768 = memref.load %arg2[%c1_1256, %c8_1257] : memref<3x9xf32, #tpu.memory_space<smem>>
    %1769 = vector.broadcast %1768 : f32 to vector<4x8x128xf32>
    %1770 = arith.mulf %1769, %1763 : vector<4x8x128xf32>
    %1771 = arith.addf %1757, %1770 : vector<4x8x128xf32>
    %c2_1258 = arith.constant 2 : index
    %c8_1259 = arith.constant 8 : index
    %1772 = memref.load %arg2[%c2_1258, %c8_1259] : memref<3x9xf32, #tpu.memory_space<smem>>
    %1773 = vector.broadcast %1772 : f32 to vector<4x8x128xf32>
    %1774 = arith.mulf %1773, %1763 : vector<4x8x128xf32>
    %1775 = arith.addf %1761, %1774 : vector<4x8x128xf32>
    %1776 = arith.maximumf %1650, %1767 : vector<4x8x128xf32>
    %1777 = arith.maximumf %1651, %1771 : vector<4x8x128xf32>
    %1778 = arith.maximumf %1652, %1775 : vector<4x8x128xf32>
    %c5_1260 = arith.constant 5 : index
    %c4_1261 = arith.constant 4 : index
    %c0_1262 = arith.constant 0 : index
    %c0_1263 = arith.constant 0 : index
    %1779 = vector.load %arg1[%c5_1260, %c4_1261, %c0_1262, %c0_1263] : memref<9x9x9x128xf32, #tpu.memory_space<vmem>>, vector<1x4x8x128xf32>
    %1780 = vector.shape_cast %1779 : vector<1x4x8x128xf32> to vector<4x8x128xf32>
    %c0_1264 = arith.constant 0 : index
    %c0_1265 = arith.constant 0 : index
    %1781 = memref.load %arg2[%c0_1264, %c0_1265] : memref<3x9xf32, #tpu.memory_space<smem>>
    %1782 = vector.broadcast %1781 : f32 to vector<4x8x128xf32>
    %1783 = arith.mulf %1782, %1780 : vector<4x8x128xf32>
    %c1_1266 = arith.constant 1 : index
    %c0_1267 = arith.constant 0 : index
    %1784 = memref.load %arg2[%c1_1266, %c0_1267] : memref<3x9xf32, #tpu.memory_space<smem>>
    %1785 = vector.broadcast %1784 : f32 to vector<4x8x128xf32>
    %1786 = arith.mulf %1785, %1780 : vector<4x8x128xf32>
    %c2_1268 = arith.constant 2 : index
    %c0_1269 = arith.constant 0 : index
    %1787 = memref.load %arg2[%c2_1268, %c0_1269] : memref<3x9xf32, #tpu.memory_space<smem>>
    %1788 = vector.broadcast %1787 : f32 to vector<4x8x128xf32>
    %1789 = arith.mulf %1788, %1780 : vector<4x8x128xf32>
    %c3_1270 = arith.constant 3 : index
    %c4_1271 = arith.constant 4 : index
    %c1_1272 = arith.constant 1 : index
    %c0_1273 = arith.constant 0 : index
    %1790 = vector.load %arg1[%c3_1270, %c4_1271, %c1_1272, %c0_1273] : memref<9x9x9x128xf32, #tpu.memory_space<vmem>>, vector<1x4x8x128xf32>
    %1791 = vector.shape_cast %1790 : vector<1x4x8x128xf32> to vector<4x8x128xf32>
    %c0_1274 = arith.constant 0 : index
    %c1_1275 = arith.constant 1 : index
    %1792 = memref.load %arg2[%c0_1274, %c1_1275] : memref<3x9xf32, #tpu.memory_space<smem>>
    %1793 = vector.broadcast %1792 : f32 to vector<4x8x128xf32>
    %1794 = arith.mulf %1793, %1791 : vector<4x8x128xf32>
    %1795 = arith.addf %1783, %1794 : vector<4x8x128xf32>
    %c1_1276 = arith.constant 1 : index
    %c1_1277 = arith.constant 1 : index
    %1796 = memref.load %arg2[%c1_1276, %c1_1277] : memref<3x9xf32, #tpu.memory_space<smem>>
    %1797 = vector.broadcast %1796 : f32 to vector<4x8x128xf32>
    %1798 = arith.mulf %1797, %1791 : vector<4x8x128xf32>
    %1799 = arith.addf %1786, %1798 : vector<4x8x128xf32>
    %c2_1278 = arith.constant 2 : index
    %c1_1279 = arith.constant 1 : index
    %1800 = memref.load %arg2[%c2_1278, %c1_1279] : memref<3x9xf32, #tpu.memory_space<smem>>
    %1801 = vector.broadcast %1800 : f32 to vector<4x8x128xf32>
    %1802 = arith.mulf %1801, %1791 : vector<4x8x128xf32>
    %1803 = arith.addf %1789, %1802 : vector<4x8x128xf32>
    %c4_1280 = arith.constant 4 : index
    %c4_1281 = arith.constant 4 : index
    %c1_1282 = arith.constant 1 : index
    %c0_1283 = arith.constant 0 : index
    %1804 = vector.load %arg1[%c4_1280, %c4_1281, %c1_1282, %c0_1283] : memref<9x9x9x128xf32, #tpu.memory_space<vmem>>, vector<1x4x8x128xf32>
    %1805 = vector.shape_cast %1804 : vector<1x4x8x128xf32> to vector<4x8x128xf32>
    %c0_1284 = arith.constant 0 : index
    %c2_1285 = arith.constant 2 : index
    %1806 = memref.load %arg2[%c0_1284, %c2_1285] : memref<3x9xf32, #tpu.memory_space<smem>>
    %1807 = vector.broadcast %1806 : f32 to vector<4x8x128xf32>
    %1808 = arith.mulf %1807, %1805 : vector<4x8x128xf32>
    %1809 = arith.addf %1795, %1808 : vector<4x8x128xf32>
    %c1_1286 = arith.constant 1 : index
    %c2_1287 = arith.constant 2 : index
    %1810 = memref.load %arg2[%c1_1286, %c2_1287] : memref<3x9xf32, #tpu.memory_space<smem>>
    %1811 = vector.broadcast %1810 : f32 to vector<4x8x128xf32>
    %1812 = arith.mulf %1811, %1805 : vector<4x8x128xf32>
    %1813 = arith.addf %1799, %1812 : vector<4x8x128xf32>
    %c2_1288 = arith.constant 2 : index
    %c2_1289 = arith.constant 2 : index
    %1814 = memref.load %arg2[%c2_1288, %c2_1289] : memref<3x9xf32, #tpu.memory_space<smem>>
    %1815 = vector.broadcast %1814 : f32 to vector<4x8x128xf32>
    %1816 = arith.mulf %1815, %1805 : vector<4x8x128xf32>
    %1817 = arith.addf %1803, %1816 : vector<4x8x128xf32>
    %c8_1290 = arith.constant 8 : index
    %c4_1291 = arith.constant 4 : index
    %c0_1292 = arith.constant 0 : index
    %c0_1293 = arith.constant 0 : index
    %1818 = vector.load %arg1[%c8_1290, %c4_1291, %c0_1292, %c0_1293] : memref<9x9x9x128xf32, #tpu.memory_space<vmem>>, vector<1x4x8x128xf32>
    %1819 = vector.shape_cast %1818 : vector<1x4x8x128xf32> to vector<4x8x128xf32>
    %c0_1294 = arith.constant 0 : index
    %c3_1295 = arith.constant 3 : index
    %1820 = memref.load %arg2[%c0_1294, %c3_1295] : memref<3x9xf32, #tpu.memory_space<smem>>
    %1821 = vector.broadcast %1820 : f32 to vector<4x8x128xf32>
    %1822 = arith.mulf %1821, %1819 : vector<4x8x128xf32>
    %1823 = arith.addf %1809, %1822 : vector<4x8x128xf32>
    %c1_1296 = arith.constant 1 : index
    %c3_1297 = arith.constant 3 : index
    %1824 = memref.load %arg2[%c1_1296, %c3_1297] : memref<3x9xf32, #tpu.memory_space<smem>>
    %1825 = vector.broadcast %1824 : f32 to vector<4x8x128xf32>
    %1826 = arith.mulf %1825, %1819 : vector<4x8x128xf32>
    %1827 = arith.addf %1813, %1826 : vector<4x8x128xf32>
    %c2_1298 = arith.constant 2 : index
    %c3_1299 = arith.constant 3 : index
    %1828 = memref.load %arg2[%c2_1298, %c3_1299] : memref<3x9xf32, #tpu.memory_space<smem>>
    %1829 = vector.broadcast %1828 : f32 to vector<4x8x128xf32>
    %1830 = arith.mulf %1829, %1819 : vector<4x8x128xf32>
    %1831 = arith.addf %1817, %1830 : vector<4x8x128xf32>
    %c6_1300 = arith.constant 6 : index
    %c4_1301 = arith.constant 4 : index
    %c1_1302 = arith.constant 1 : index
    %c0_1303 = arith.constant 0 : index
    %1832 = vector.load %arg1[%c6_1300, %c4_1301, %c1_1302, %c0_1303] : memref<9x9x9x128xf32, #tpu.memory_space<vmem>>, vector<1x4x8x128xf32>
    %1833 = vector.shape_cast %1832 : vector<1x4x8x128xf32> to vector<4x8x128xf32>
    %c0_1304 = arith.constant 0 : index
    %c4_1305 = arith.constant 4 : index
    %1834 = memref.load %arg2[%c0_1304, %c4_1305] : memref<3x9xf32, #tpu.memory_space<smem>>
    %1835 = vector.broadcast %1834 : f32 to vector<4x8x128xf32>
    %1836 = arith.mulf %1835, %1833 : vector<4x8x128xf32>
    %1837 = arith.addf %1823, %1836 : vector<4x8x128xf32>
    %c1_1306 = arith.constant 1 : index
    %c4_1307 = arith.constant 4 : index
    %1838 = memref.load %arg2[%c1_1306, %c4_1307] : memref<3x9xf32, #tpu.memory_space<smem>>
    %1839 = vector.broadcast %1838 : f32 to vector<4x8x128xf32>
    %1840 = arith.mulf %1839, %1833 : vector<4x8x128xf32>
    %1841 = arith.addf %1827, %1840 : vector<4x8x128xf32>
    %c2_1308 = arith.constant 2 : index
    %c4_1309 = arith.constant 4 : index
    %1842 = memref.load %arg2[%c2_1308, %c4_1309] : memref<3x9xf32, #tpu.memory_space<smem>>
    %1843 = vector.broadcast %1842 : f32 to vector<4x8x128xf32>
    %1844 = arith.mulf %1843, %1833 : vector<4x8x128xf32>
    %1845 = arith.addf %1831, %1844 : vector<4x8x128xf32>
    %c7_1310 = arith.constant 7 : index
    %c4_1311 = arith.constant 4 : index
    %c1_1312 = arith.constant 1 : index
    %c0_1313 = arith.constant 0 : index
    %1846 = vector.load %arg1[%c7_1310, %c4_1311, %c1_1312, %c0_1313] : memref<9x9x9x128xf32, #tpu.memory_space<vmem>>, vector<1x4x8x128xf32>
    %1847 = vector.shape_cast %1846 : vector<1x4x8x128xf32> to vector<4x8x128xf32>
    %c0_1314 = arith.constant 0 : index
    %c5_1315 = arith.constant 5 : index
    %1848 = memref.load %arg2[%c0_1314, %c5_1315] : memref<3x9xf32, #tpu.memory_space<smem>>
    %1849 = vector.broadcast %1848 : f32 to vector<4x8x128xf32>
    %1850 = arith.mulf %1849, %1847 : vector<4x8x128xf32>
    %1851 = arith.addf %1837, %1850 : vector<4x8x128xf32>
    %c1_1316 = arith.constant 1 : index
    %c5_1317 = arith.constant 5 : index
    %1852 = memref.load %arg2[%c1_1316, %c5_1317] : memref<3x9xf32, #tpu.memory_space<smem>>
    %1853 = vector.broadcast %1852 : f32 to vector<4x8x128xf32>
    %1854 = arith.mulf %1853, %1847 : vector<4x8x128xf32>
    %1855 = arith.addf %1841, %1854 : vector<4x8x128xf32>
    %c2_1318 = arith.constant 2 : index
    %c5_1319 = arith.constant 5 : index
    %1856 = memref.load %arg2[%c2_1318, %c5_1319] : memref<3x9xf32, #tpu.memory_space<smem>>
    %1857 = vector.broadcast %1856 : f32 to vector<4x8x128xf32>
    %1858 = arith.mulf %1857, %1847 : vector<4x8x128xf32>
    %1859 = arith.addf %1845, %1858 : vector<4x8x128xf32>
    %c2_1320 = arith.constant 2 : index
    %c5_1321 = arith.constant 5 : index
    %c0_1322 = arith.constant 0 : index
    %c0_1323 = arith.constant 0 : index
    %1860 = vector.load %arg1[%c2_1320, %c5_1321, %c0_1322, %c0_1323] : memref<9x9x9x128xf32, #tpu.memory_space<vmem>>, vector<1x4x8x128xf32>
    %1861 = vector.shape_cast %1860 : vector<1x4x8x128xf32> to vector<4x8x128xf32>
    %c0_1324 = arith.constant 0 : index
    %c6_1325 = arith.constant 6 : index
    %1862 = memref.load %arg2[%c0_1324, %c6_1325] : memref<3x9xf32, #tpu.memory_space<smem>>
    %1863 = vector.broadcast %1862 : f32 to vector<4x8x128xf32>
    %1864 = arith.mulf %1863, %1861 : vector<4x8x128xf32>
    %1865 = arith.addf %1851, %1864 : vector<4x8x128xf32>
    %c1_1326 = arith.constant 1 : index
    %c6_1327 = arith.constant 6 : index
    %1866 = memref.load %arg2[%c1_1326, %c6_1327] : memref<3x9xf32, #tpu.memory_space<smem>>
    %1867 = vector.broadcast %1866 : f32 to vector<4x8x128xf32>
    %1868 = arith.mulf %1867, %1861 : vector<4x8x128xf32>
    %1869 = arith.addf %1855, %1868 : vector<4x8x128xf32>
    %c2_1328 = arith.constant 2 : index
    %c6_1329 = arith.constant 6 : index
    %1870 = memref.load %arg2[%c2_1328, %c6_1329] : memref<3x9xf32, #tpu.memory_space<smem>>
    %1871 = vector.broadcast %1870 : f32 to vector<4x8x128xf32>
    %1872 = arith.mulf %1871, %1861 : vector<4x8x128xf32>
    %1873 = arith.addf %1859, %1872 : vector<4x8x128xf32>
    %c0_1330 = arith.constant 0 : index
    %c5_1331 = arith.constant 5 : index
    %c1_1332 = arith.constant 1 : index
    %c0_1333 = arith.constant 0 : index
    %1874 = vector.load %arg1[%c0_1330, %c5_1331, %c1_1332, %c0_1333] : memref<9x9x9x128xf32, #tpu.memory_space<vmem>>, vector<1x4x8x128xf32>
    %1875 = vector.shape_cast %1874 : vector<1x4x8x128xf32> to vector<4x8x128xf32>
    %c0_1334 = arith.constant 0 : index
    %c7_1335 = arith.constant 7 : index
    %1876 = memref.load %arg2[%c0_1334, %c7_1335] : memref<3x9xf32, #tpu.memory_space<smem>>
    %1877 = vector.broadcast %1876 : f32 to vector<4x8x128xf32>
    %1878 = arith.mulf %1877, %1875 : vector<4x8x128xf32>
    %1879 = arith.addf %1865, %1878 : vector<4x8x128xf32>
    %c1_1336 = arith.constant 1 : index
    %c7_1337 = arith.constant 7 : index
    %1880 = memref.load %arg2[%c1_1336, %c7_1337] : memref<3x9xf32, #tpu.memory_space<smem>>
    %1881 = vector.broadcast %1880 : f32 to vector<4x8x128xf32>
    %1882 = arith.mulf %1881, %1875 : vector<4x8x128xf32>
    %1883 = arith.addf %1869, %1882 : vector<4x8x128xf32>
    %c2_1338 = arith.constant 2 : index
    %c7_1339 = arith.constant 7 : index
    %1884 = memref.load %arg2[%c2_1338, %c7_1339] : memref<3x9xf32, #tpu.memory_space<smem>>
    %1885 = vector.broadcast %1884 : f32 to vector<4x8x128xf32>
    %1886 = arith.mulf %1885, %1875 : vector<4x8x128xf32>
    %1887 = arith.addf %1873, %1886 : vector<4x8x128xf32>
    %c1_1340 = arith.constant 1 : index
    %c5_1341 = arith.constant 5 : index
    %c1_1342 = arith.constant 1 : index
    %c0_1343 = arith.constant 0 : index
    %1888 = vector.load %arg1[%c1_1340, %c5_1341, %c1_1342, %c0_1343] : memref<9x9x9x128xf32, #tpu.memory_space<vmem>>, vector<1x4x8x128xf32>
    %1889 = vector.shape_cast %1888 : vector<1x4x8x128xf32> to vector<4x8x128xf32>
    %c0_1344 = arith.constant 0 : index
    %c8_1345 = arith.constant 8 : index
    %1890 = memref.load %arg2[%c0_1344, %c8_1345] : memref<3x9xf32, #tpu.memory_space<smem>>
    %1891 = vector.broadcast %1890 : f32 to vector<4x8x128xf32>
    %1892 = arith.mulf %1891, %1889 : vector<4x8x128xf32>
    %1893 = arith.addf %1879, %1892 : vector<4x8x128xf32>
    %c1_1346 = arith.constant 1 : index
    %c8_1347 = arith.constant 8 : index
    %1894 = memref.load %arg2[%c1_1346, %c8_1347] : memref<3x9xf32, #tpu.memory_space<smem>>
    %1895 = vector.broadcast %1894 : f32 to vector<4x8x128xf32>
    %1896 = arith.mulf %1895, %1889 : vector<4x8x128xf32>
    %1897 = arith.addf %1883, %1896 : vector<4x8x128xf32>
    %c2_1348 = arith.constant 2 : index
    %c8_1349 = arith.constant 8 : index
    %1898 = memref.load %arg2[%c2_1348, %c8_1349] : memref<3x9xf32, #tpu.memory_space<smem>>
    %1899 = vector.broadcast %1898 : f32 to vector<4x8x128xf32>
    %1900 = arith.mulf %1899, %1889 : vector<4x8x128xf32>
    %1901 = arith.addf %1887, %1900 : vector<4x8x128xf32>
    %1902 = arith.maximumf %1776, %1893 : vector<4x8x128xf32>
    %1903 = arith.maximumf %1777, %1897 : vector<4x8x128xf32>
    %1904 = arith.maximumf %1778, %1901 : vector<4x8x128xf32>
    %c6_1350 = arith.constant 6 : index
    %c4_1351 = arith.constant 4 : index
    %c0_1352 = arith.constant 0 : index
    %c0_1353 = arith.constant 0 : index
    %1905 = vector.load %arg1[%c6_1350, %c4_1351, %c0_1352, %c0_1353] : memref<9x9x9x128xf32, #tpu.memory_space<vmem>>, vector<1x4x8x128xf32>
    %1906 = vector.shape_cast %1905 : vector<1x4x8x128xf32> to vector<4x8x128xf32>
    %c0_1354 = arith.constant 0 : index
    %c0_1355 = arith.constant 0 : index
    %1907 = memref.load %arg2[%c0_1354, %c0_1355] : memref<3x9xf32, #tpu.memory_space<smem>>
    %1908 = vector.broadcast %1907 : f32 to vector<4x8x128xf32>
    %1909 = arith.mulf %1908, %1906 : vector<4x8x128xf32>
    %c1_1356 = arith.constant 1 : index
    %c0_1357 = arith.constant 0 : index
    %1910 = memref.load %arg2[%c1_1356, %c0_1357] : memref<3x9xf32, #tpu.memory_space<smem>>
    %1911 = vector.broadcast %1910 : f32 to vector<4x8x128xf32>
    %1912 = arith.mulf %1911, %1906 : vector<4x8x128xf32>
    %c2_1358 = arith.constant 2 : index
    %c0_1359 = arith.constant 0 : index
    %1913 = memref.load %arg2[%c2_1358, %c0_1359] : memref<3x9xf32, #tpu.memory_space<smem>>
    %1914 = vector.broadcast %1913 : f32 to vector<4x8x128xf32>
    %1915 = arith.mulf %1914, %1906 : vector<4x8x128xf32>
    %c7_1360 = arith.constant 7 : index
    %c4_1361 = arith.constant 4 : index
    %c0_1362 = arith.constant 0 : index
    %c0_1363 = arith.constant 0 : index
    %1916 = vector.load %arg1[%c7_1360, %c4_1361, %c0_1362, %c0_1363] : memref<9x9x9x128xf32, #tpu.memory_space<vmem>>, vector<1x4x8x128xf32>
    %1917 = vector.shape_cast %1916 : vector<1x4x8x128xf32> to vector<4x8x128xf32>
    %c0_1364 = arith.constant 0 : index
    %c1_1365 = arith.constant 1 : index
    %1918 = memref.load %arg2[%c0_1364, %c1_1365] : memref<3x9xf32, #tpu.memory_space<smem>>
    %1919 = vector.broadcast %1918 : f32 to vector<4x8x128xf32>
    %1920 = arith.mulf %1919, %1917 : vector<4x8x128xf32>
    %1921 = arith.addf %1909, %1920 : vector<4x8x128xf32>
    %c1_1366 = arith.constant 1 : index
    %c1_1367 = arith.constant 1 : index
    %1922 = memref.load %arg2[%c1_1366, %c1_1367] : memref<3x9xf32, #tpu.memory_space<smem>>
    %1923 = vector.broadcast %1922 : f32 to vector<4x8x128xf32>
    %1924 = arith.mulf %1923, %1917 : vector<4x8x128xf32>
    %1925 = arith.addf %1912, %1924 : vector<4x8x128xf32>
    %c2_1368 = arith.constant 2 : index
    %c1_1369 = arith.constant 1 : index
    %1926 = memref.load %arg2[%c2_1368, %c1_1369] : memref<3x9xf32, #tpu.memory_space<smem>>
    %1927 = vector.broadcast %1926 : f32 to vector<4x8x128xf32>
    %1928 = arith.mulf %1927, %1917 : vector<4x8x128xf32>
    %1929 = arith.addf %1915, %1928 : vector<4x8x128xf32>
    %c8_1370 = arith.constant 8 : index
    %c4_1371 = arith.constant 4 : index
    %c0_1372 = arith.constant 0 : index
    %c0_1373 = arith.constant 0 : index
    %1930 = vector.load %arg1[%c8_1370, %c4_1371, %c0_1372, %c0_1373] : memref<9x9x9x128xf32, #tpu.memory_space<vmem>>, vector<1x4x8x128xf32>
    %1931 = vector.shape_cast %1930 : vector<1x4x8x128xf32> to vector<4x8x128xf32>
    %c0_1374 = arith.constant 0 : index
    %c2_1375 = arith.constant 2 : index
    %1932 = memref.load %arg2[%c0_1374, %c2_1375] : memref<3x9xf32, #tpu.memory_space<smem>>
    %1933 = vector.broadcast %1932 : f32 to vector<4x8x128xf32>
    %1934 = arith.mulf %1933, %1931 : vector<4x8x128xf32>
    %1935 = arith.addf %1921, %1934 : vector<4x8x128xf32>
    %c1_1376 = arith.constant 1 : index
    %c2_1377 = arith.constant 2 : index
    %1936 = memref.load %arg2[%c1_1376, %c2_1377] : memref<3x9xf32, #tpu.memory_space<smem>>
    %1937 = vector.broadcast %1936 : f32 to vector<4x8x128xf32>
    %1938 = arith.mulf %1937, %1931 : vector<4x8x128xf32>
    %1939 = arith.addf %1925, %1938 : vector<4x8x128xf32>
    %c2_1378 = arith.constant 2 : index
    %c2_1379 = arith.constant 2 : index
    %1940 = memref.load %arg2[%c2_1378, %c2_1379] : memref<3x9xf32, #tpu.memory_space<smem>>
    %1941 = vector.broadcast %1940 : f32 to vector<4x8x128xf32>
    %1942 = arith.mulf %1941, %1931 : vector<4x8x128xf32>
    %1943 = arith.addf %1929, %1942 : vector<4x8x128xf32>
    %c0_1380 = arith.constant 0 : index
    %c5_1381 = arith.constant 5 : index
    %c0_1382 = arith.constant 0 : index
    %c0_1383 = arith.constant 0 : index
    %1944 = vector.load %arg1[%c0_1380, %c5_1381, %c0_1382, %c0_1383] : memref<9x9x9x128xf32, #tpu.memory_space<vmem>>, vector<1x4x8x128xf32>
    %1945 = vector.shape_cast %1944 : vector<1x4x8x128xf32> to vector<4x8x128xf32>
    %c0_1384 = arith.constant 0 : index
    %c3_1385 = arith.constant 3 : index
    %1946 = memref.load %arg2[%c0_1384, %c3_1385] : memref<3x9xf32, #tpu.memory_space<smem>>
    %1947 = vector.broadcast %1946 : f32 to vector<4x8x128xf32>
    %1948 = arith.mulf %1947, %1945 : vector<4x8x128xf32>
    %1949 = arith.addf %1935, %1948 : vector<4x8x128xf32>
    %c1_1386 = arith.constant 1 : index
    %c3_1387 = arith.constant 3 : index
    %1950 = memref.load %arg2[%c1_1386, %c3_1387] : memref<3x9xf32, #tpu.memory_space<smem>>
    %1951 = vector.broadcast %1950 : f32 to vector<4x8x128xf32>
    %1952 = arith.mulf %1951, %1945 : vector<4x8x128xf32>
    %1953 = arith.addf %1939, %1952 : vector<4x8x128xf32>
    %c2_1388 = arith.constant 2 : index
    %c3_1389 = arith.constant 3 : index
    %1954 = memref.load %arg2[%c2_1388, %c3_1389] : memref<3x9xf32, #tpu.memory_space<smem>>
    %1955 = vector.broadcast %1954 : f32 to vector<4x8x128xf32>
    %1956 = arith.mulf %1955, %1945 : vector<4x8x128xf32>
    %1957 = arith.addf %1943, %1956 : vector<4x8x128xf32>
    %c1_1390 = arith.constant 1 : index
    %c5_1391 = arith.constant 5 : index
    %c0_1392 = arith.constant 0 : index
    %c0_1393 = arith.constant 0 : index
    %1958 = vector.load %arg1[%c1_1390, %c5_1391, %c0_1392, %c0_1393] : memref<9x9x9x128xf32, #tpu.memory_space<vmem>>, vector<1x4x8x128xf32>
    %1959 = vector.shape_cast %1958 : vector<1x4x8x128xf32> to vector<4x8x128xf32>
    %c0_1394 = arith.constant 0 : index
    %c4_1395 = arith.constant 4 : index
    %1960 = memref.load %arg2[%c0_1394, %c4_1395] : memref<3x9xf32, #tpu.memory_space<smem>>
    %1961 = vector.broadcast %1960 : f32 to vector<4x8x128xf32>
    %1962 = arith.mulf %1961, %1959 : vector<4x8x128xf32>
    %1963 = arith.addf %1949, %1962 : vector<4x8x128xf32>
    %c1_1396 = arith.constant 1 : index
    %c4_1397 = arith.constant 4 : index
    %1964 = memref.load %arg2[%c1_1396, %c4_1397] : memref<3x9xf32, #tpu.memory_space<smem>>
    %1965 = vector.broadcast %1964 : f32 to vector<4x8x128xf32>
    %1966 = arith.mulf %1965, %1959 : vector<4x8x128xf32>
    %1967 = arith.addf %1953, %1966 : vector<4x8x128xf32>
    %c2_1398 = arith.constant 2 : index
    %c4_1399 = arith.constant 4 : index
    %1968 = memref.load %arg2[%c2_1398, %c4_1399] : memref<3x9xf32, #tpu.memory_space<smem>>
    %1969 = vector.broadcast %1968 : f32 to vector<4x8x128xf32>
    %1970 = arith.mulf %1969, %1959 : vector<4x8x128xf32>
    %1971 = arith.addf %1957, %1970 : vector<4x8x128xf32>
    %c2_1400 = arith.constant 2 : index
    %c5_1401 = arith.constant 5 : index
    %c0_1402 = arith.constant 0 : index
    %c0_1403 = arith.constant 0 : index
    %1972 = vector.load %arg1[%c2_1400, %c5_1401, %c0_1402, %c0_1403] : memref<9x9x9x128xf32, #tpu.memory_space<vmem>>, vector<1x4x8x128xf32>
    %1973 = vector.shape_cast %1972 : vector<1x4x8x128xf32> to vector<4x8x128xf32>
    %c0_1404 = arith.constant 0 : index
    %c5_1405 = arith.constant 5 : index
    %1974 = memref.load %arg2[%c0_1404, %c5_1405] : memref<3x9xf32, #tpu.memory_space<smem>>
    %1975 = vector.broadcast %1974 : f32 to vector<4x8x128xf32>
    %1976 = arith.mulf %1975, %1973 : vector<4x8x128xf32>
    %1977 = arith.addf %1963, %1976 : vector<4x8x128xf32>
    %c1_1406 = arith.constant 1 : index
    %c5_1407 = arith.constant 5 : index
    %1978 = memref.load %arg2[%c1_1406, %c5_1407] : memref<3x9xf32, #tpu.memory_space<smem>>
    %1979 = vector.broadcast %1978 : f32 to vector<4x8x128xf32>
    %1980 = arith.mulf %1979, %1973 : vector<4x8x128xf32>
    %1981 = arith.addf %1967, %1980 : vector<4x8x128xf32>
    %c2_1408 = arith.constant 2 : index
    %c5_1409 = arith.constant 5 : index
    %1982 = memref.load %arg2[%c2_1408, %c5_1409] : memref<3x9xf32, #tpu.memory_space<smem>>
    %1983 = vector.broadcast %1982 : f32 to vector<4x8x128xf32>
    %1984 = arith.mulf %1983, %1973 : vector<4x8x128xf32>
    %1985 = arith.addf %1971, %1984 : vector<4x8x128xf32>
    %c3_1410 = arith.constant 3 : index
    %c5_1411 = arith.constant 5 : index
    %c0_1412 = arith.constant 0 : index
    %c0_1413 = arith.constant 0 : index
    %1986 = vector.load %arg1[%c3_1410, %c5_1411, %c0_1412, %c0_1413] : memref<9x9x9x128xf32, #tpu.memory_space<vmem>>, vector<1x4x8x128xf32>
    %1987 = vector.shape_cast %1986 : vector<1x4x8x128xf32> to vector<4x8x128xf32>
    %c0_1414 = arith.constant 0 : index
    %c6_1415 = arith.constant 6 : index
    %1988 = memref.load %arg2[%c0_1414, %c6_1415] : memref<3x9xf32, #tpu.memory_space<smem>>
    %1989 = vector.broadcast %1988 : f32 to vector<4x8x128xf32>
    %1990 = arith.mulf %1989, %1987 : vector<4x8x128xf32>
    %1991 = arith.addf %1977, %1990 : vector<4x8x128xf32>
    %c1_1416 = arith.constant 1 : index
    %c6_1417 = arith.constant 6 : index
    %1992 = memref.load %arg2[%c1_1416, %c6_1417] : memref<3x9xf32, #tpu.memory_space<smem>>
    %1993 = vector.broadcast %1992 : f32 to vector<4x8x128xf32>
    %1994 = arith.mulf %1993, %1987 : vector<4x8x128xf32>
    %1995 = arith.addf %1981, %1994 : vector<4x8x128xf32>
    %c2_1418 = arith.constant 2 : index
    %c6_1419 = arith.constant 6 : index
    %1996 = memref.load %arg2[%c2_1418, %c6_1419] : memref<3x9xf32, #tpu.memory_space<smem>>
    %1997 = vector.broadcast %1996 : f32 to vector<4x8x128xf32>
    %1998 = arith.mulf %1997, %1987 : vector<4x8x128xf32>
    %1999 = arith.addf %1985, %1998 : vector<4x8x128xf32>
    %c4_1420 = arith.constant 4 : index
    %c5_1421 = arith.constant 5 : index
    %c0_1422 = arith.constant 0 : index
    %c0_1423 = arith.constant 0 : index
    %2000 = vector.load %arg1[%c4_1420, %c5_1421, %c0_1422, %c0_1423] : memref<9x9x9x128xf32, #tpu.memory_space<vmem>>, vector<1x4x8x128xf32>
    %2001 = vector.shape_cast %2000 : vector<1x4x8x128xf32> to vector<4x8x128xf32>
    %c0_1424 = arith.constant 0 : index
    %c7_1425 = arith.constant 7 : index
    %2002 = memref.load %arg2[%c0_1424, %c7_1425] : memref<3x9xf32, #tpu.memory_space<smem>>
    %2003 = vector.broadcast %2002 : f32 to vector<4x8x128xf32>
    %2004 = arith.mulf %2003, %2001 : vector<4x8x128xf32>
    %2005 = arith.addf %1991, %2004 : vector<4x8x128xf32>
    %c1_1426 = arith.constant 1 : index
    %c7_1427 = arith.constant 7 : index
    %2006 = memref.load %arg2[%c1_1426, %c7_1427] : memref<3x9xf32, #tpu.memory_space<smem>>
    %2007 = vector.broadcast %2006 : f32 to vector<4x8x128xf32>
    %2008 = arith.mulf %2007, %2001 : vector<4x8x128xf32>
    %2009 = arith.addf %1995, %2008 : vector<4x8x128xf32>
    %c2_1428 = arith.constant 2 : index
    %c7_1429 = arith.constant 7 : index
    %2010 = memref.load %arg2[%c2_1428, %c7_1429] : memref<3x9xf32, #tpu.memory_space<smem>>
    %2011 = vector.broadcast %2010 : f32 to vector<4x8x128xf32>
    %2012 = arith.mulf %2011, %2001 : vector<4x8x128xf32>
    %2013 = arith.addf %1999, %2012 : vector<4x8x128xf32>
    %c5_1430 = arith.constant 5 : index
    %c5_1431 = arith.constant 5 : index
    %c0_1432 = arith.constant 0 : index
    %c0_1433 = arith.constant 0 : index
    %2014 = vector.load %arg1[%c5_1430, %c5_1431, %c0_1432, %c0_1433] : memref<9x9x9x128xf32, #tpu.memory_space<vmem>>, vector<1x4x8x128xf32>
    %2015 = vector.shape_cast %2014 : vector<1x4x8x128xf32> to vector<4x8x128xf32>
    %c0_1434 = arith.constant 0 : index
    %c8_1435 = arith.constant 8 : index
    %2016 = memref.load %arg2[%c0_1434, %c8_1435] : memref<3x9xf32, #tpu.memory_space<smem>>
    %2017 = vector.broadcast %2016 : f32 to vector<4x8x128xf32>
    %2018 = arith.mulf %2017, %2015 : vector<4x8x128xf32>
    %2019 = arith.addf %2005, %2018 : vector<4x8x128xf32>
    %c1_1436 = arith.constant 1 : index
    %c8_1437 = arith.constant 8 : index
    %2020 = memref.load %arg2[%c1_1436, %c8_1437] : memref<3x9xf32, #tpu.memory_space<smem>>
    %2021 = vector.broadcast %2020 : f32 to vector<4x8x128xf32>
    %2022 = arith.mulf %2021, %2015 : vector<4x8x128xf32>
    %2023 = arith.addf %2009, %2022 : vector<4x8x128xf32>
    %c2_1438 = arith.constant 2 : index
    %c8_1439 = arith.constant 8 : index
    %2024 = memref.load %arg2[%c2_1438, %c8_1439] : memref<3x9xf32, #tpu.memory_space<smem>>
    %2025 = vector.broadcast %2024 : f32 to vector<4x8x128xf32>
    %2026 = arith.mulf %2025, %2015 : vector<4x8x128xf32>
    %2027 = arith.addf %2013, %2026 : vector<4x8x128xf32>
    %2028 = arith.maximumf %1902, %2019 : vector<4x8x128xf32>
    %2029 = arith.maximumf %1903, %2023 : vector<4x8x128xf32>
    %2030 = arith.maximumf %1904, %2027 : vector<4x8x128xf32>
    %c7_1440 = arith.constant 7 : index
    %c4_1441 = arith.constant 4 : index
    %c0_1442 = arith.constant 0 : index
    %c0_1443 = arith.constant 0 : index
    %2031 = vector.load %arg1[%c7_1440, %c4_1441, %c0_1442, %c0_1443] : memref<9x9x9x128xf32, #tpu.memory_space<vmem>>, vector<1x4x8x128xf32>
    %2032 = vector.shape_cast %2031 : vector<1x4x8x128xf32> to vector<4x8x128xf32>
    %c0_1444 = arith.constant 0 : index
    %c0_1445 = arith.constant 0 : index
    %2033 = memref.load %arg2[%c0_1444, %c0_1445] : memref<3x9xf32, #tpu.memory_space<smem>>
    %2034 = vector.broadcast %2033 : f32 to vector<4x8x128xf32>
    %2035 = arith.mulf %2034, %2032 : vector<4x8x128xf32>
    %c1_1446 = arith.constant 1 : index
    %c0_1447 = arith.constant 0 : index
    %2036 = memref.load %arg2[%c1_1446, %c0_1447] : memref<3x9xf32, #tpu.memory_space<smem>>
    %2037 = vector.broadcast %2036 : f32 to vector<4x8x128xf32>
    %2038 = arith.mulf %2037, %2032 : vector<4x8x128xf32>
    %c2_1448 = arith.constant 2 : index
    %c0_1449 = arith.constant 0 : index
    %2039 = memref.load %arg2[%c2_1448, %c0_1449] : memref<3x9xf32, #tpu.memory_space<smem>>
    %2040 = vector.broadcast %2039 : f32 to vector<4x8x128xf32>
    %2041 = arith.mulf %2040, %2032 : vector<4x8x128xf32>
    %c8_1450 = arith.constant 8 : index
    %c4_1451 = arith.constant 4 : index
    %c0_1452 = arith.constant 0 : index
    %c0_1453 = arith.constant 0 : index
    %2042 = vector.load %arg1[%c8_1450, %c4_1451, %c0_1452, %c0_1453] : memref<9x9x9x128xf32, #tpu.memory_space<vmem>>, vector<1x4x8x128xf32>
    %2043 = vector.shape_cast %2042 : vector<1x4x8x128xf32> to vector<4x8x128xf32>
    %c0_1454 = arith.constant 0 : index
    %c1_1455 = arith.constant 1 : index
    %2044 = memref.load %arg2[%c0_1454, %c1_1455] : memref<3x9xf32, #tpu.memory_space<smem>>
    %2045 = vector.broadcast %2044 : f32 to vector<4x8x128xf32>
    %2046 = arith.mulf %2045, %2043 : vector<4x8x128xf32>
    %2047 = arith.addf %2035, %2046 : vector<4x8x128xf32>
    %c1_1456 = arith.constant 1 : index
    %c1_1457 = arith.constant 1 : index
    %2048 = memref.load %arg2[%c1_1456, %c1_1457] : memref<3x9xf32, #tpu.memory_space<smem>>
    %2049 = vector.broadcast %2048 : f32 to vector<4x8x128xf32>
    %2050 = arith.mulf %2049, %2043 : vector<4x8x128xf32>
    %2051 = arith.addf %2038, %2050 : vector<4x8x128xf32>
    %c2_1458 = arith.constant 2 : index
    %c1_1459 = arith.constant 1 : index
    %2052 = memref.load %arg2[%c2_1458, %c1_1459] : memref<3x9xf32, #tpu.memory_space<smem>>
    %2053 = vector.broadcast %2052 : f32 to vector<4x8x128xf32>
    %2054 = arith.mulf %2053, %2043 : vector<4x8x128xf32>
    %2055 = arith.addf %2041, %2054 : vector<4x8x128xf32>
    %c6_1460 = arith.constant 6 : index
    %c4_1461 = arith.constant 4 : index
    %c1_1462 = arith.constant 1 : index
    %c0_1463 = arith.constant 0 : index
    %2056 = vector.load %arg1[%c6_1460, %c4_1461, %c1_1462, %c0_1463] : memref<9x9x9x128xf32, #tpu.memory_space<vmem>>, vector<1x4x8x128xf32>
    %2057 = vector.shape_cast %2056 : vector<1x4x8x128xf32> to vector<4x8x128xf32>
    %c0_1464 = arith.constant 0 : index
    %c2_1465 = arith.constant 2 : index
    %2058 = memref.load %arg2[%c0_1464, %c2_1465] : memref<3x9xf32, #tpu.memory_space<smem>>
    %2059 = vector.broadcast %2058 : f32 to vector<4x8x128xf32>
    %2060 = arith.mulf %2059, %2057 : vector<4x8x128xf32>
    %2061 = arith.addf %2047, %2060 : vector<4x8x128xf32>
    %c1_1466 = arith.constant 1 : index
    %c2_1467 = arith.constant 2 : index
    %2062 = memref.load %arg2[%c1_1466, %c2_1467] : memref<3x9xf32, #tpu.memory_space<smem>>
    %2063 = vector.broadcast %2062 : f32 to vector<4x8x128xf32>
    %2064 = arith.mulf %2063, %2057 : vector<4x8x128xf32>
    %2065 = arith.addf %2051, %2064 : vector<4x8x128xf32>
    %c2_1468 = arith.constant 2 : index
    %c2_1469 = arith.constant 2 : index
    %2066 = memref.load %arg2[%c2_1468, %c2_1469] : memref<3x9xf32, #tpu.memory_space<smem>>
    %2067 = vector.broadcast %2066 : f32 to vector<4x8x128xf32>
    %2068 = arith.mulf %2067, %2057 : vector<4x8x128xf32>
    %2069 = arith.addf %2055, %2068 : vector<4x8x128xf32>
    %c1_1470 = arith.constant 1 : index
    %c5_1471 = arith.constant 5 : index
    %c0_1472 = arith.constant 0 : index
    %c0_1473 = arith.constant 0 : index
    %2070 = vector.load %arg1[%c1_1470, %c5_1471, %c0_1472, %c0_1473] : memref<9x9x9x128xf32, #tpu.memory_space<vmem>>, vector<1x4x8x128xf32>
    %2071 = vector.shape_cast %2070 : vector<1x4x8x128xf32> to vector<4x8x128xf32>
    %c0_1474 = arith.constant 0 : index
    %c3_1475 = arith.constant 3 : index
    %2072 = memref.load %arg2[%c0_1474, %c3_1475] : memref<3x9xf32, #tpu.memory_space<smem>>
    %2073 = vector.broadcast %2072 : f32 to vector<4x8x128xf32>
    %2074 = arith.mulf %2073, %2071 : vector<4x8x128xf32>
    %2075 = arith.addf %2061, %2074 : vector<4x8x128xf32>
    %c1_1476 = arith.constant 1 : index
    %c3_1477 = arith.constant 3 : index
    %2076 = memref.load %arg2[%c1_1476, %c3_1477] : memref<3x9xf32, #tpu.memory_space<smem>>
    %2077 = vector.broadcast %2076 : f32 to vector<4x8x128xf32>
    %2078 = arith.mulf %2077, %2071 : vector<4x8x128xf32>
    %2079 = arith.addf %2065, %2078 : vector<4x8x128xf32>
    %c2_1478 = arith.constant 2 : index
    %c3_1479 = arith.constant 3 : index
    %2080 = memref.load %arg2[%c2_1478, %c3_1479] : memref<3x9xf32, #tpu.memory_space<smem>>
    %2081 = vector.broadcast %2080 : f32 to vector<4x8x128xf32>
    %2082 = arith.mulf %2081, %2071 : vector<4x8x128xf32>
    %2083 = arith.addf %2069, %2082 : vector<4x8x128xf32>
    %c2_1480 = arith.constant 2 : index
    %c5_1481 = arith.constant 5 : index
    %c0_1482 = arith.constant 0 : index
    %c0_1483 = arith.constant 0 : index
    %2084 = vector.load %arg1[%c2_1480, %c5_1481, %c0_1482, %c0_1483] : memref<9x9x9x128xf32, #tpu.memory_space<vmem>>, vector<1x4x8x128xf32>
    %2085 = vector.shape_cast %2084 : vector<1x4x8x128xf32> to vector<4x8x128xf32>
    %c0_1484 = arith.constant 0 : index
    %c4_1485 = arith.constant 4 : index
    %2086 = memref.load %arg2[%c0_1484, %c4_1485] : memref<3x9xf32, #tpu.memory_space<smem>>
    %2087 = vector.broadcast %2086 : f32 to vector<4x8x128xf32>
    %2088 = arith.mulf %2087, %2085 : vector<4x8x128xf32>
    %2089 = arith.addf %2075, %2088 : vector<4x8x128xf32>
    %c1_1486 = arith.constant 1 : index
    %c4_1487 = arith.constant 4 : index
    %2090 = memref.load %arg2[%c1_1486, %c4_1487] : memref<3x9xf32, #tpu.memory_space<smem>>
    %2091 = vector.broadcast %2090 : f32 to vector<4x8x128xf32>
    %2092 = arith.mulf %2091, %2085 : vector<4x8x128xf32>
    %2093 = arith.addf %2079, %2092 : vector<4x8x128xf32>
    %c2_1488 = arith.constant 2 : index
    %c4_1489 = arith.constant 4 : index
    %2094 = memref.load %arg2[%c2_1488, %c4_1489] : memref<3x9xf32, #tpu.memory_space<smem>>
    %2095 = vector.broadcast %2094 : f32 to vector<4x8x128xf32>
    %2096 = arith.mulf %2095, %2085 : vector<4x8x128xf32>
    %2097 = arith.addf %2083, %2096 : vector<4x8x128xf32>
    %c0_1490 = arith.constant 0 : index
    %c5_1491 = arith.constant 5 : index
    %c1_1492 = arith.constant 1 : index
    %c0_1493 = arith.constant 0 : index
    %2098 = vector.load %arg1[%c0_1490, %c5_1491, %c1_1492, %c0_1493] : memref<9x9x9x128xf32, #tpu.memory_space<vmem>>, vector<1x4x8x128xf32>
    %2099 = vector.shape_cast %2098 : vector<1x4x8x128xf32> to vector<4x8x128xf32>
    %c0_1494 = arith.constant 0 : index
    %c5_1495 = arith.constant 5 : index
    %2100 = memref.load %arg2[%c0_1494, %c5_1495] : memref<3x9xf32, #tpu.memory_space<smem>>
    %2101 = vector.broadcast %2100 : f32 to vector<4x8x128xf32>
    %2102 = arith.mulf %2101, %2099 : vector<4x8x128xf32>
    %2103 = arith.addf %2089, %2102 : vector<4x8x128xf32>
    %c1_1496 = arith.constant 1 : index
    %c5_1497 = arith.constant 5 : index
    %2104 = memref.load %arg2[%c1_1496, %c5_1497] : memref<3x9xf32, #tpu.memory_space<smem>>
    %2105 = vector.broadcast %2104 : f32 to vector<4x8x128xf32>
    %2106 = arith.mulf %2105, %2099 : vector<4x8x128xf32>
    %2107 = arith.addf %2093, %2106 : vector<4x8x128xf32>
    %c2_1498 = arith.constant 2 : index
    %c5_1499 = arith.constant 5 : index
    %2108 = memref.load %arg2[%c2_1498, %c5_1499] : memref<3x9xf32, #tpu.memory_space<smem>>
    %2109 = vector.broadcast %2108 : f32 to vector<4x8x128xf32>
    %2110 = arith.mulf %2109, %2099 : vector<4x8x128xf32>
    %2111 = arith.addf %2097, %2110 : vector<4x8x128xf32>
    %c4_1500 = arith.constant 4 : index
    %c5_1501 = arith.constant 5 : index
    %c0_1502 = arith.constant 0 : index
    %c0_1503 = arith.constant 0 : index
    %2112 = vector.load %arg1[%c4_1500, %c5_1501, %c0_1502, %c0_1503] : memref<9x9x9x128xf32, #tpu.memory_space<vmem>>, vector<1x4x8x128xf32>
    %2113 = vector.shape_cast %2112 : vector<1x4x8x128xf32> to vector<4x8x128xf32>
    %c0_1504 = arith.constant 0 : index
    %c6_1505 = arith.constant 6 : index
    %2114 = memref.load %arg2[%c0_1504, %c6_1505] : memref<3x9xf32, #tpu.memory_space<smem>>
    %2115 = vector.broadcast %2114 : f32 to vector<4x8x128xf32>
    %2116 = arith.mulf %2115, %2113 : vector<4x8x128xf32>
    %2117 = arith.addf %2103, %2116 : vector<4x8x128xf32>
    %c1_1506 = arith.constant 1 : index
    %c6_1507 = arith.constant 6 : index
    %2118 = memref.load %arg2[%c1_1506, %c6_1507] : memref<3x9xf32, #tpu.memory_space<smem>>
    %2119 = vector.broadcast %2118 : f32 to vector<4x8x128xf32>
    %2120 = arith.mulf %2119, %2113 : vector<4x8x128xf32>
    %2121 = arith.addf %2107, %2120 : vector<4x8x128xf32>
    %c2_1508 = arith.constant 2 : index
    %c6_1509 = arith.constant 6 : index
    %2122 = memref.load %arg2[%c2_1508, %c6_1509] : memref<3x9xf32, #tpu.memory_space<smem>>
    %2123 = vector.broadcast %2122 : f32 to vector<4x8x128xf32>
    %2124 = arith.mulf %2123, %2113 : vector<4x8x128xf32>
    %2125 = arith.addf %2111, %2124 : vector<4x8x128xf32>
    %c5_1510 = arith.constant 5 : index
    %c5_1511 = arith.constant 5 : index
    %c0_1512 = arith.constant 0 : index
    %c0_1513 = arith.constant 0 : index
    %2126 = vector.load %arg1[%c5_1510, %c5_1511, %c0_1512, %c0_1513] : memref<9x9x9x128xf32, #tpu.memory_space<vmem>>, vector<1x4x8x128xf32>
    %2127 = vector.shape_cast %2126 : vector<1x4x8x128xf32> to vector<4x8x128xf32>
    %c0_1514 = arith.constant 0 : index
    %c7_1515 = arith.constant 7 : index
    %2128 = memref.load %arg2[%c0_1514, %c7_1515] : memref<3x9xf32, #tpu.memory_space<smem>>
    %2129 = vector.broadcast %2128 : f32 to vector<4x8x128xf32>
    %2130 = arith.mulf %2129, %2127 : vector<4x8x128xf32>
    %2131 = arith.addf %2117, %2130 : vector<4x8x128xf32>
    %c1_1516 = arith.constant 1 : index
    %c7_1517 = arith.constant 7 : index
    %2132 = memref.load %arg2[%c1_1516, %c7_1517] : memref<3x9xf32, #tpu.memory_space<smem>>
    %2133 = vector.broadcast %2132 : f32 to vector<4x8x128xf32>
    %2134 = arith.mulf %2133, %2127 : vector<4x8x128xf32>
    %2135 = arith.addf %2121, %2134 : vector<4x8x128xf32>
    %c2_1518 = arith.constant 2 : index
    %c7_1519 = arith.constant 7 : index
    %2136 = memref.load %arg2[%c2_1518, %c7_1519] : memref<3x9xf32, #tpu.memory_space<smem>>
    %2137 = vector.broadcast %2136 : f32 to vector<4x8x128xf32>
    %2138 = arith.mulf %2137, %2127 : vector<4x8x128xf32>
    %2139 = arith.addf %2125, %2138 : vector<4x8x128xf32>
    %c3_1520 = arith.constant 3 : index
    %c5_1521 = arith.constant 5 : index
    %c1_1522 = arith.constant 1 : index
    %c0_1523 = arith.constant 0 : index
    %2140 = vector.load %arg1[%c3_1520, %c5_1521, %c1_1522, %c0_1523] : memref<9x9x9x128xf32, #tpu.memory_space<vmem>>, vector<1x4x8x128xf32>
    %2141 = vector.shape_cast %2140 : vector<1x4x8x128xf32> to vector<4x8x128xf32>
    %c0_1524 = arith.constant 0 : index
    %c8_1525 = arith.constant 8 : index
    %2142 = memref.load %arg2[%c0_1524, %c8_1525] : memref<3x9xf32, #tpu.memory_space<smem>>
    %2143 = vector.broadcast %2142 : f32 to vector<4x8x128xf32>
    %2144 = arith.mulf %2143, %2141 : vector<4x8x128xf32>
    %2145 = arith.addf %2131, %2144 : vector<4x8x128xf32>
    %c1_1526 = arith.constant 1 : index
    %c8_1527 = arith.constant 8 : index
    %2146 = memref.load %arg2[%c1_1526, %c8_1527] : memref<3x9xf32, #tpu.memory_space<smem>>
    %2147 = vector.broadcast %2146 : f32 to vector<4x8x128xf32>
    %2148 = arith.mulf %2147, %2141 : vector<4x8x128xf32>
    %2149 = arith.addf %2135, %2148 : vector<4x8x128xf32>
    %c2_1528 = arith.constant 2 : index
    %c8_1529 = arith.constant 8 : index
    %2150 = memref.load %arg2[%c2_1528, %c8_1529] : memref<3x9xf32, #tpu.memory_space<smem>>
    %2151 = vector.broadcast %2150 : f32 to vector<4x8x128xf32>
    %2152 = arith.mulf %2151, %2141 : vector<4x8x128xf32>
    %2153 = arith.addf %2139, %2152 : vector<4x8x128xf32>
    %2154 = arith.maximumf %2028, %2145 : vector<4x8x128xf32>
    %2155 = arith.maximumf %2029, %2149 : vector<4x8x128xf32>
    %2156 = arith.maximumf %2030, %2153 : vector<4x8x128xf32>
    %c8_1530 = arith.constant 8 : index
    %c4_1531 = arith.constant 4 : index
    %c0_1532 = arith.constant 0 : index
    %c0_1533 = arith.constant 0 : index
    %2157 = vector.load %arg1[%c8_1530, %c4_1531, %c0_1532, %c0_1533] : memref<9x9x9x128xf32, #tpu.memory_space<vmem>>, vector<1x4x8x128xf32>
    %2158 = vector.shape_cast %2157 : vector<1x4x8x128xf32> to vector<4x8x128xf32>
    %c0_1534 = arith.constant 0 : index
    %c0_1535 = arith.constant 0 : index
    %2159 = memref.load %arg2[%c0_1534, %c0_1535] : memref<3x9xf32, #tpu.memory_space<smem>>
    %2160 = vector.broadcast %2159 : f32 to vector<4x8x128xf32>
    %2161 = arith.mulf %2160, %2158 : vector<4x8x128xf32>
    %c1_1536 = arith.constant 1 : index
    %c0_1537 = arith.constant 0 : index
    %2162 = memref.load %arg2[%c1_1536, %c0_1537] : memref<3x9xf32, #tpu.memory_space<smem>>
    %2163 = vector.broadcast %2162 : f32 to vector<4x8x128xf32>
    %2164 = arith.mulf %2163, %2158 : vector<4x8x128xf32>
    %c2_1538 = arith.constant 2 : index
    %c0_1539 = arith.constant 0 : index
    %2165 = memref.load %arg2[%c2_1538, %c0_1539] : memref<3x9xf32, #tpu.memory_space<smem>>
    %2166 = vector.broadcast %2165 : f32 to vector<4x8x128xf32>
    %2167 = arith.mulf %2166, %2158 : vector<4x8x128xf32>
    %c6_1540 = arith.constant 6 : index
    %c4_1541 = arith.constant 4 : index
    %c1_1542 = arith.constant 1 : index
    %c0_1543 = arith.constant 0 : index
    %2168 = vector.load %arg1[%c6_1540, %c4_1541, %c1_1542, %c0_1543] : memref<9x9x9x128xf32, #tpu.memory_space<vmem>>, vector<1x4x8x128xf32>
    %2169 = vector.shape_cast %2168 : vector<1x4x8x128xf32> to vector<4x8x128xf32>
    %c0_1544 = arith.constant 0 : index
    %c1_1545 = arith.constant 1 : index
    %2170 = memref.load %arg2[%c0_1544, %c1_1545] : memref<3x9xf32, #tpu.memory_space<smem>>
    %2171 = vector.broadcast %2170 : f32 to vector<4x8x128xf32>
    %2172 = arith.mulf %2171, %2169 : vector<4x8x128xf32>
    %2173 = arith.addf %2161, %2172 : vector<4x8x128xf32>
    %c1_1546 = arith.constant 1 : index
    %c1_1547 = arith.constant 1 : index
    %2174 = memref.load %arg2[%c1_1546, %c1_1547] : memref<3x9xf32, #tpu.memory_space<smem>>
    %2175 = vector.broadcast %2174 : f32 to vector<4x8x128xf32>
    %2176 = arith.mulf %2175, %2169 : vector<4x8x128xf32>
    %2177 = arith.addf %2164, %2176 : vector<4x8x128xf32>
    %c2_1548 = arith.constant 2 : index
    %c1_1549 = arith.constant 1 : index
    %2178 = memref.load %arg2[%c2_1548, %c1_1549] : memref<3x9xf32, #tpu.memory_space<smem>>
    %2179 = vector.broadcast %2178 : f32 to vector<4x8x128xf32>
    %2180 = arith.mulf %2179, %2169 : vector<4x8x128xf32>
    %2181 = arith.addf %2167, %2180 : vector<4x8x128xf32>
    %c7_1550 = arith.constant 7 : index
    %c4_1551 = arith.constant 4 : index
    %c1_1552 = arith.constant 1 : index
    %c0_1553 = arith.constant 0 : index
    %2182 = vector.load %arg1[%c7_1550, %c4_1551, %c1_1552, %c0_1553] : memref<9x9x9x128xf32, #tpu.memory_space<vmem>>, vector<1x4x8x128xf32>
    %2183 = vector.shape_cast %2182 : vector<1x4x8x128xf32> to vector<4x8x128xf32>
    %c0_1554 = arith.constant 0 : index
    %c2_1555 = arith.constant 2 : index
    %2184 = memref.load %arg2[%c0_1554, %c2_1555] : memref<3x9xf32, #tpu.memory_space<smem>>
    %2185 = vector.broadcast %2184 : f32 to vector<4x8x128xf32>
    %2186 = arith.mulf %2185, %2183 : vector<4x8x128xf32>
    %2187 = arith.addf %2173, %2186 : vector<4x8x128xf32>
    %c1_1556 = arith.constant 1 : index
    %c2_1557 = arith.constant 2 : index
    %2188 = memref.load %arg2[%c1_1556, %c2_1557] : memref<3x9xf32, #tpu.memory_space<smem>>
    %2189 = vector.broadcast %2188 : f32 to vector<4x8x128xf32>
    %2190 = arith.mulf %2189, %2183 : vector<4x8x128xf32>
    %2191 = arith.addf %2177, %2190 : vector<4x8x128xf32>
    %c2_1558 = arith.constant 2 : index
    %c2_1559 = arith.constant 2 : index
    %2192 = memref.load %arg2[%c2_1558, %c2_1559] : memref<3x9xf32, #tpu.memory_space<smem>>
    %2193 = vector.broadcast %2192 : f32 to vector<4x8x128xf32>
    %2194 = arith.mulf %2193, %2183 : vector<4x8x128xf32>
    %2195 = arith.addf %2181, %2194 : vector<4x8x128xf32>
    %c2_1560 = arith.constant 2 : index
    %c5_1561 = arith.constant 5 : index
    %c0_1562 = arith.constant 0 : index
    %c0_1563 = arith.constant 0 : index
    %2196 = vector.load %arg1[%c2_1560, %c5_1561, %c0_1562, %c0_1563] : memref<9x9x9x128xf32, #tpu.memory_space<vmem>>, vector<1x4x8x128xf32>
    %2197 = vector.shape_cast %2196 : vector<1x4x8x128xf32> to vector<4x8x128xf32>
    %c0_1564 = arith.constant 0 : index
    %c3_1565 = arith.constant 3 : index
    %2198 = memref.load %arg2[%c0_1564, %c3_1565] : memref<3x9xf32, #tpu.memory_space<smem>>
    %2199 = vector.broadcast %2198 : f32 to vector<4x8x128xf32>
    %2200 = arith.mulf %2199, %2197 : vector<4x8x128xf32>
    %2201 = arith.addf %2187, %2200 : vector<4x8x128xf32>
    %c1_1566 = arith.constant 1 : index
    %c3_1567 = arith.constant 3 : index
    %2202 = memref.load %arg2[%c1_1566, %c3_1567] : memref<3x9xf32, #tpu.memory_space<smem>>
    %2203 = vector.broadcast %2202 : f32 to vector<4x8x128xf32>
    %2204 = arith.mulf %2203, %2197 : vector<4x8x128xf32>
    %2205 = arith.addf %2191, %2204 : vector<4x8x128xf32>
    %c2_1568 = arith.constant 2 : index
    %c3_1569 = arith.constant 3 : index
    %2206 = memref.load %arg2[%c2_1568, %c3_1569] : memref<3x9xf32, #tpu.memory_space<smem>>
    %2207 = vector.broadcast %2206 : f32 to vector<4x8x128xf32>
    %2208 = arith.mulf %2207, %2197 : vector<4x8x128xf32>
    %2209 = arith.addf %2195, %2208 : vector<4x8x128xf32>
    %c0_1570 = arith.constant 0 : index
    %c5_1571 = arith.constant 5 : index
    %c1_1572 = arith.constant 1 : index
    %c0_1573 = arith.constant 0 : index
    %2210 = vector.load %arg1[%c0_1570, %c5_1571, %c1_1572, %c0_1573] : memref<9x9x9x128xf32, #tpu.memory_space<vmem>>, vector<1x4x8x128xf32>
    %2211 = vector.shape_cast %2210 : vector<1x4x8x128xf32> to vector<4x8x128xf32>
    %c0_1574 = arith.constant 0 : index
    %c4_1575 = arith.constant 4 : index
    %2212 = memref.load %arg2[%c0_1574, %c4_1575] : memref<3x9xf32, #tpu.memory_space<smem>>
    %2213 = vector.broadcast %2212 : f32 to vector<4x8x128xf32>
    %2214 = arith.mulf %2213, %2211 : vector<4x8x128xf32>
    %2215 = arith.addf %2201, %2214 : vector<4x8x128xf32>
    %c1_1576 = arith.constant 1 : index
    %c4_1577 = arith.constant 4 : index
    %2216 = memref.load %arg2[%c1_1576, %c4_1577] : memref<3x9xf32, #tpu.memory_space<smem>>
    %2217 = vector.broadcast %2216 : f32 to vector<4x8x128xf32>
    %2218 = arith.mulf %2217, %2211 : vector<4x8x128xf32>
    %2219 = arith.addf %2205, %2218 : vector<4x8x128xf32>
    %c2_1578 = arith.constant 2 : index
    %c4_1579 = arith.constant 4 : index
    %2220 = memref.load %arg2[%c2_1578, %c4_1579] : memref<3x9xf32, #tpu.memory_space<smem>>
    %2221 = vector.broadcast %2220 : f32 to vector<4x8x128xf32>
    %2222 = arith.mulf %2221, %2211 : vector<4x8x128xf32>
    %2223 = arith.addf %2209, %2222 : vector<4x8x128xf32>
    %c1_1580 = arith.constant 1 : index
    %c5_1581 = arith.constant 5 : index
    %c1_1582 = arith.constant 1 : index
    %c0_1583 = arith.constant 0 : index
    %2224 = vector.load %arg1[%c1_1580, %c5_1581, %c1_1582, %c0_1583] : memref<9x9x9x128xf32, #tpu.memory_space<vmem>>, vector<1x4x8x128xf32>
    %2225 = vector.shape_cast %2224 : vector<1x4x8x128xf32> to vector<4x8x128xf32>
    %c0_1584 = arith.constant 0 : index
    %c5_1585 = arith.constant 5 : index
    %2226 = memref.load %arg2[%c0_1584, %c5_1585] : memref<3x9xf32, #tpu.memory_space<smem>>
    %2227 = vector.broadcast %2226 : f32 to vector<4x8x128xf32>
    %2228 = arith.mulf %2227, %2225 : vector<4x8x128xf32>
    %2229 = arith.addf %2215, %2228 : vector<4x8x128xf32>
    %c1_1586 = arith.constant 1 : index
    %c5_1587 = arith.constant 5 : index
    %2230 = memref.load %arg2[%c1_1586, %c5_1587] : memref<3x9xf32, #tpu.memory_space<smem>>
    %2231 = vector.broadcast %2230 : f32 to vector<4x8x128xf32>
    %2232 = arith.mulf %2231, %2225 : vector<4x8x128xf32>
    %2233 = arith.addf %2219, %2232 : vector<4x8x128xf32>
    %c2_1588 = arith.constant 2 : index
    %c5_1589 = arith.constant 5 : index
    %2234 = memref.load %arg2[%c2_1588, %c5_1589] : memref<3x9xf32, #tpu.memory_space<smem>>
    %2235 = vector.broadcast %2234 : f32 to vector<4x8x128xf32>
    %2236 = arith.mulf %2235, %2225 : vector<4x8x128xf32>
    %2237 = arith.addf %2223, %2236 : vector<4x8x128xf32>
    %c5_1590 = arith.constant 5 : index
    %c5_1591 = arith.constant 5 : index
    %c0_1592 = arith.constant 0 : index
    %c0_1593 = arith.constant 0 : index
    %2238 = vector.load %arg1[%c5_1590, %c5_1591, %c0_1592, %c0_1593] : memref<9x9x9x128xf32, #tpu.memory_space<vmem>>, vector<1x4x8x128xf32>
    %2239 = vector.shape_cast %2238 : vector<1x4x8x128xf32> to vector<4x8x128xf32>
    %c0_1594 = arith.constant 0 : index
    %c6_1595 = arith.constant 6 : index
    %2240 = memref.load %arg2[%c0_1594, %c6_1595] : memref<3x9xf32, #tpu.memory_space<smem>>
    %2241 = vector.broadcast %2240 : f32 to vector<4x8x128xf32>
    %2242 = arith.mulf %2241, %2239 : vector<4x8x128xf32>
    %2243 = arith.addf %2229, %2242 : vector<4x8x128xf32>
    %c1_1596 = arith.constant 1 : index
    %c6_1597 = arith.constant 6 : index
    %2244 = memref.load %arg2[%c1_1596, %c6_1597] : memref<3x9xf32, #tpu.memory_space<smem>>
    %2245 = vector.broadcast %2244 : f32 to vector<4x8x128xf32>
    %2246 = arith.mulf %2245, %2239 : vector<4x8x128xf32>
    %2247 = arith.addf %2233, %2246 : vector<4x8x128xf32>
    %c2_1598 = arith.constant 2 : index
    %c6_1599 = arith.constant 6 : index
    %2248 = memref.load %arg2[%c2_1598, %c6_1599] : memref<3x9xf32, #tpu.memory_space<smem>>
    %2249 = vector.broadcast %2248 : f32 to vector<4x8x128xf32>
    %2250 = arith.mulf %2249, %2239 : vector<4x8x128xf32>
    %2251 = arith.addf %2237, %2250 : vector<4x8x128xf32>
    %c3_1600 = arith.constant 3 : index
    %c5_1601 = arith.constant 5 : index
    %c1_1602 = arith.constant 1 : index
    %c0_1603 = arith.constant 0 : index
    %2252 = vector.load %arg1[%c3_1600, %c5_1601, %c1_1602, %c0_1603] : memref<9x9x9x128xf32, #tpu.memory_space<vmem>>, vector<1x4x8x128xf32>
    %2253 = vector.shape_cast %2252 : vector<1x4x8x128xf32> to vector<4x8x128xf32>
    %c0_1604 = arith.constant 0 : index
    %c7_1605 = arith.constant 7 : index
    %2254 = memref.load %arg2[%c0_1604, %c7_1605] : memref<3x9xf32, #tpu.memory_space<smem>>
    %2255 = vector.broadcast %2254 : f32 to vector<4x8x128xf32>
    %2256 = arith.mulf %2255, %2253 : vector<4x8x128xf32>
    %2257 = arith.addf %2243, %2256 : vector<4x8x128xf32>
    %c1_1606 = arith.constant 1 : index
    %c7_1607 = arith.constant 7 : index
    %2258 = memref.load %arg2[%c1_1606, %c7_1607] : memref<3x9xf32, #tpu.memory_space<smem>>
    %2259 = vector.broadcast %2258 : f32 to vector<4x8x128xf32>
    %2260 = arith.mulf %2259, %2253 : vector<4x8x128xf32>
    %2261 = arith.addf %2247, %2260 : vector<4x8x128xf32>
    %c2_1608 = arith.constant 2 : index
    %c7_1609 = arith.constant 7 : index
    %2262 = memref.load %arg2[%c2_1608, %c7_1609] : memref<3x9xf32, #tpu.memory_space<smem>>
    %2263 = vector.broadcast %2262 : f32 to vector<4x8x128xf32>
    %2264 = arith.mulf %2263, %2253 : vector<4x8x128xf32>
    %2265 = arith.addf %2251, %2264 : vector<4x8x128xf32>
    %c4_1610 = arith.constant 4 : index
    %c5_1611 = arith.constant 5 : index
    %c1_1612 = arith.constant 1 : index
    %c0_1613 = arith.constant 0 : index
    %2266 = vector.load %arg1[%c4_1610, %c5_1611, %c1_1612, %c0_1613] : memref<9x9x9x128xf32, #tpu.memory_space<vmem>>, vector<1x4x8x128xf32>
    %2267 = vector.shape_cast %2266 : vector<1x4x8x128xf32> to vector<4x8x128xf32>
    %c0_1614 = arith.constant 0 : index
    %c8_1615 = arith.constant 8 : index
    %2268 = memref.load %arg2[%c0_1614, %c8_1615] : memref<3x9xf32, #tpu.memory_space<smem>>
    %2269 = vector.broadcast %2268 : f32 to vector<4x8x128xf32>
    %2270 = arith.mulf %2269, %2267 : vector<4x8x128xf32>
    %2271 = arith.addf %2257, %2270 : vector<4x8x128xf32>
    %c1_1616 = arith.constant 1 : index
    %c8_1617 = arith.constant 8 : index
    %2272 = memref.load %arg2[%c1_1616, %c8_1617] : memref<3x9xf32, #tpu.memory_space<smem>>
    %2273 = vector.broadcast %2272 : f32 to vector<4x8x128xf32>
    %2274 = arith.mulf %2273, %2267 : vector<4x8x128xf32>
    %2275 = arith.addf %2261, %2274 : vector<4x8x128xf32>
    %c2_1618 = arith.constant 2 : index
    %c8_1619 = arith.constant 8 : index
    %2276 = memref.load %arg2[%c2_1618, %c8_1619] : memref<3x9xf32, #tpu.memory_space<smem>>
    %2277 = vector.broadcast %2276 : f32 to vector<4x8x128xf32>
    %2278 = arith.mulf %2277, %2267 : vector<4x8x128xf32>
    %2279 = arith.addf %2265, %2278 : vector<4x8x128xf32>
    %2280 = arith.maximumf %2154, %2271 : vector<4x8x128xf32>
    %2281 = arith.maximumf %2155, %2275 : vector<4x8x128xf32>
    %2282 = arith.maximumf %2156, %2279 : vector<4x8x128xf32>
    %c0_1620 = arith.constant 0 : index
    %2283 = memref.load %arg3[%c0_1620] : memref<3xf32, #tpu.memory_space<smem>>
    %2284 = vector.broadcast %2283 : f32 to vector<4x8x128xf32>
    %2285 = arith.addf %2280, %2284 : vector<4x8x128xf32>
    %cst_1621 = arith.constant 0.000000e+00 : f32
    %2286 = vector.broadcast %cst_1621 : f32 to vector<4x8x128xf32>
    %2287 = arith.maximumf %2285, %2286 : vector<4x8x128xf32>
    %2288 = vector.shape_cast %2287 : vector<4x8x128xf32> to vector<32x128xf32>
    %c32 = arith.constant 32 : index
    %c0_1622 = arith.constant 0 : index
    %2289 = vector.load %arg7[%c32, %c0_1622] : memref<192x128xf32, #tpu.memory_space<vmem>>, vector<32x128xf32>
    tpu.vector_store %arg7[%c32, %c0_1622], %2288 {strides = array<i32>} : memref<192x128xf32, #tpu.memory_space<vmem>>, vector<32x128xf32>,
    %c1_1623 = arith.constant 1 : index
    %2290 = memref.load %arg3[%c1_1623] : memref<3xf32, #tpu.memory_space<smem>>
    %2291 = vector.broadcast %2290 : f32 to vector<4x8x128xf32>
    %2292 = arith.addf %2281, %2291 : vector<4x8x128xf32>
    %cst_1624 = arith.constant 0.000000e+00 : f32
    %2293 = vector.broadcast %cst_1624 : f32 to vector<4x8x128xf32>
    %2294 = arith.maximumf %2292, %2293 : vector<4x8x128xf32>
    %2295 = vector.shape_cast %2294 : vector<4x8x128xf32> to vector<32x128xf32>
    %c96 = arith.constant 96 : index
    %c0_1625 = arith.constant 0 : index
    %2296 = vector.load %arg7[%c96, %c0_1625] : memref<192x128xf32, #tpu.memory_space<vmem>>, vector<32x128xf32>
    tpu.vector_store %arg7[%c96, %c0_1625], %2295 {strides = array<i32>} : memref<192x128xf32, #tpu.memory_space<vmem>>, vector<32x128xf32>,
    %c2_1626 = arith.constant 2 : index
    %2297 = memref.load %arg3[%c2_1626] : memref<3xf32, #tpu.memory_space<smem>>
    %2298 = vector.broadcast %2297 : f32 to vector<4x8x128xf32>
    %2299 = arith.addf %2282, %2298 : vector<4x8x128xf32>
    %cst_1627 = arith.constant 0.000000e+00 : f32
    %2300 = vector.broadcast %cst_1627 : f32 to vector<4x8x128xf32>
    %2301 = arith.maximumf %2299, %2300 : vector<4x8x128xf32>
    %2302 = vector.shape_cast %2301 : vector<4x8x128xf32> to vector<32x128xf32>
    %c160 = arith.constant 160 : index
    %c0_1628 = arith.constant 0 : index
    %2303 = vector.load %arg7[%c160, %c0_1628] : memref<192x128xf32, #tpu.memory_space<vmem>>, vector<32x128xf32>
    tpu.vector_store %arg7[%c160, %c0_1628], %2302 {strides = array<i32>} : memref<192x128xf32, #tpu.memory_space<vmem>>, vector<32x128xf32>,
    %c0_1629 = arith.constant 0 : index
    %c0_1630 = arith.constant 0 : index
    %2304 = vector.load %arg4[%c0_1629, %c0_1630] : memref<10x192xf32, #tpu.memory_space<vmem>>, vector<10x192xf32>
    %c0_1631 = arith.constant 0 : index
    %c0_1632 = arith.constant 0 : index
    %2305 = vector.load %arg7[%c0_1631, %c0_1632] : memref<192x128xf32, #tpu.memory_space<vmem>>, vector<192x128xf32>
    %cst_1633 = arith.constant dense<0.000000e+00> : vector<10x128xf32>
    %2306 = tpu.matmul %2304, %2305, %cst_1633 {dimension_numbers = #tpu.dot_dimension_numbers<[1], [0], [0], [1], [0, 0, 1, 1], [], []>} : vector<10x192xf32>, vector<192x128xf32>, vector<10x128xf32> -> vector<10x128xf32>
    %c0_1634 = arith.constant 0 : index
    %c0_1635 = arith.constant 0 : index
    %2307 = vector.load %arg5[%c0_1634, %c0_1635] : memref<10x1xf32, #tpu.memory_space<vmem>>, vector<10x1xf32>
    %2308 = vector.broadcast %2307 : vector<10x1xf32> to vector<10x128xf32>
    %2309 = arith.addf %2306, %2308 : vector<10x128xf32>
    %cst_1636 = arith.constant dense<0xFF800000> : vector<128xf32>
    %2310 = vector.multi_reduction <maximumf>, %2309, %cst_1636 [0] : vector<10x128xf32> to vector<128xf32>
    %2311 = vector.shape_cast %2310 : vector<128xf32> to vector<1x128xf32>
    %2312 = vector.broadcast %2311 : vector<1x128xf32> to vector<10x128xf32>
    %2313 = arith.subf %2309, %2312 : vector<10x128xf32>
    %2314 = math.exp %2313 : vector<10x128xf32>
    %cst_1637 = arith.constant dense<0.000000e+00> : vector<128xf32>
    %2315 = vector.multi_reduction <add>, %2314, %cst_1637 [0] : vector<10x128xf32> to vector<128xf32>
    %2316 = vector.shape_cast %2315 : vector<128xf32> to vector<1x128xf32>
    %2317 = math.log %2316 : vector<1x128xf32>
    %2318 = vector.broadcast %2317 : vector<1x128xf32> to vector<10x128xf32>
    %2319 = arith.subf %2313, %2318 : vector<10x128xf32>
    %c0_1638 = arith.constant 0 : index
    %c0_1639 = arith.constant 0 : index
    %2320 = vector.load %arg6[%c0_1638, %c0_1639] : memref<10x128xf32, #tpu.memory_space<vmem>>, vector<10x128xf32>
    tpu.vector_store %arg6[%c0_1638, %c0_1639], %2319 {strides = array<i32>} : memref<10x128xf32, #tpu.memory_space<vmem>>, vector<10x128xf32>,
    return
  }
  func.func @transform_0(%arg0: i32) -> (i32, i32, i32, i32) {
    %c0_i32 = arith.constant 0 : i32
    %c0_i32_0 = arith.constant 0 : i32
    %c0_i32_1 = arith.constant 0 : i32
    %c0_i32_2 = arith.constant 0 : i32
    return %c0_i32, %c0_i32_0, %c0_i32_1, %arg0 : i32, i32, i32, i32
  }
  func.func @transform_1(%arg0: i32) -> (i32, i32) {
    %c0_i32 = arith.constant 0 : i32
    %c0_i32_0 = arith.constant 0 : i32
    %c0_i32_1 = arith.constant 0 : i32
    return %c0_i32, %c0_i32_0 : i32, i32
  }
  func.func @transform_2(%arg0: i32) -> i32 {
    %c0_i32 = arith.constant 0 : i32
    %c0_i32_0 = arith.constant 0 : i32
    return %c0_i32 : i32
  }
  func.func @transform_3(%arg0: i32) -> (i32, i32) {
    %c0_i32 = arith.constant 0 : i32
    %c0_i32_0 = arith.constant 0 : i32
    %c0_i32_1 = arith.constant 0 : i32
    return %c0_i32, %c0_i32_0 : i32, i32
  }
  func.func @transform_4(%arg0: i32) -> (i32, i32) {
    %c0_i32 = arith.constant 0 : i32
    %c0_i32_0 = arith.constant 0 : i32
    %c0_i32_1 = arith.constant 0 : i32
    return %c0_i32, %c0_i32_0 : i32, i32
  }
  func.func @transform_5(%arg0: i32) -> (i32, i32) {
    %c0_i32 = arith.constant 0 : i32
    %c0_i32_0 = arith.constant 0 : i32
    return %c0_i32, %arg0 : i32, i32
  }
}

</mosaic_0001>

<llo_original>
// kernel: squeeze.1
$region0: #{squeeze.1}
  %s0 = inlined_call_operand.vmem [shape: f32[2,1,27,27], index: 0, kind: input, shape index: {}]
  %s1 = inlined_call_operand.vmem [shape: f32[2,9,3,9,3], index: 1, kind: output, shape index: {}]
  $region1: #{squeeze.1} parent=0
    #allocation0 [shape = 'u8[110592]{0}', space=vmem, size = 0x1b000, scoped, tag = 'scoped mem for input reshape']
    %s3 = sshllo.u32 0, 2
    %s4 = smul.addr 2, 26
    %s5 = scalar_lea.vmem %s0, %s4
    %v6 = vld [vmem:[%s5] sm:%s3]
    %s7 = scalar_lea.vmem [#allocation0], 208
    %8 = vst [vmem:[%s7] sm:%s3] %v6
    %s9 = smul.addr 2, 25
    %s10 = scalar_lea.vmem %s0, %s9
    %v11 = vld [vmem:[%s10] sm:%s3]
    %s12 = scalar_lea.vmem [#allocation0], 200
    %13 = vst [vmem:[%s12] sm:%s3] %v11
    %s14 = smul.addr 2, 24
    %s15 = scalar_lea.vmem %s0, %s14
    %v16 = vld [vmem:[%s15] sm:%s3]
    %s17 = scalar_lea.vmem [#allocation0], 192
    %18 = vst [vmem:[%s17] sm:%s3] %v16
    %s19 = smul.addr 2, 23
    %s20 = scalar_lea.vmem %s0, %s19
    %v21 = vld [vmem:[%s20] sm:%s3]
    %s22 = scalar_lea.vmem [#allocation0], 184
    %23 = vst [vmem:[%s22] sm:%s3] %v21
    %s24 = smul.addr 2, 22
    %s25 = scalar_lea.vmem %s0, %s24
    %v26 = vld [vmem:[%s25] sm:%s3]
    %s27 = scalar_lea.vmem [#allocation0], 176
    %28 = vst [vmem:[%s27] sm:%s3] %v26
    %s29 = smul.addr 2, 21
    %s30 = scalar_lea.vmem %s0, %s29
    %v31 = vld [vmem:[%s30] sm:%s3]
    %s32 = scalar_lea.vmem [#allocation0], 168
    %33 = vst [vmem:[%s32] sm:%s3] %v31
    %s34 = smul.addr 2, 20
    %s35 = scalar_lea.vmem %s0, %s34
    %v36 = vld [vmem:[%s35] sm:%s3]
    %s37 = scalar_lea.vmem [#allocation0], 160
    %38 = vst [vmem:[%s37] sm:%s3] %v36
    %s39 = smul.addr 2, 19
    %s40 = scalar_lea.vmem %s0, %s39
    %v41 = vld [vmem:[%s40] sm:%s3]
    %s42 = scalar_lea.vmem [#allocation0], 152
    %43 = vst [vmem:[%s42] sm:%s3] %v41
    %s44 = smul.addr 2, 18
    %s45 = scalar_lea.vmem %s0, %s44
    %v46 = vld [vmem:[%s45] sm:%s3]
    %s47 = scalar_lea.vmem [#allocation0], 144
    %48 = vst [vmem:[%s47] sm:%s3] %v46
    %s49 = smul.addr 2, 17
    %s50 = scalar_lea.vmem %s0, %s49
    %v51 = vld [vmem:[%s50] sm:%s3]
    %s52 = scalar_lea.vmem [#allocation0], 136
    %53 = vst [vmem:[%s52] sm:%s3] %v51
    %s54 = smul.addr 2, 16
    %s55 = scalar_lea.vmem %s0, %s54
    %v56 = vld [vmem:[%s55] sm:%s3]
    %s57 = scalar_lea.vmem [#allocation0], 128
    %58 = vst [vmem:[%s57] sm:%s3] %v56
    %s59 = smul.addr 2, 15
    %s60 = scalar_lea.vmem %s0, %s59
    %v61 = vld [vmem:[%s60] sm:%s3]
    %s62 = scalar_lea.vmem [#allocation0], 120
    %63 = vst [vmem:[%s62] sm:%s3] %v61
    %s64 = smul.addr 2, 14
    %s65 = scalar_lea.vmem %s0, %s64
    %v66 = vld [vmem:[%s65] sm:%s3]
    %s67 = scalar_lea.vmem [#allocation0], 112
    %68 = vst [vmem:[%s67] sm:%s3] %v66
    %s69 = smul.addr 2, 13
    %s70 = scalar_lea.vmem %s0, %s69
    %v71 = vld [vmem:[%s70] sm:%s3]
    %s72 = scalar_lea.vmem [#allocation0], 104
    %73 = vst [vmem:[%s72] sm:%s3] %v71
    %s74 = smul.addr 2, 12
    %s75 = scalar_lea.vmem %s0, %s74
    %v76 = vld [vmem:[%s75] sm:%s3]
    %s77 = scalar_lea.vmem [#allocation0], 96
    %78 = vst [vmem:[%s77] sm:%s3] %v76
    %s79 = smul.addr 2, 11
    %s80 = scalar_lea.vmem %s0, %s79
    %v81 = vld [vmem:[%s80] sm:%s3]
    %s82 = scalar_lea.vmem [#allocation0], 88
    %83 = vst [vmem:[%s82] sm:%s3] %v81
    %s84 = smul.addr 2, 10
    %s85 = scalar_lea.vmem %s0, %s84
    %v86 = vld [vmem:[%s85] sm:%s3]
    %s87 = scalar_lea.vmem [#allocation0], 80
    %88 = vst [vmem:[%s87] sm:%s3] %v86
    %s89 = smul.addr 2, 9
    %s90 = scalar_lea.vmem %s0, %s89
    %v91 = vld [vmem:[%s90] sm:%s3]
    %s92 = scalar_lea.vmem [#allocation0], 72
    %93 = vst [vmem:[%s92] sm:%s3] %v91
    %s94 = smul.addr 2, 8
    %s95 = scalar_lea.vmem %s0, %s94
    %v96 = vld [vmem:[%s95] sm:%s3]
    %s97 = scalar_lea.vmem [#allocation0], 64
    %98 = vst [vmem:[%s97] sm:%s3] %v96
    %s99 = smul.addr 2, 7
    %s100 = scalar_lea.vmem %s0, %s99
    %v101 = vld [vmem:[%s100] sm:%s3]
    %s102 = scalar_lea.vmem [#allocation0], 56
    %103 = vst [vmem:[%s102] sm:%s3] %v101
    %s104 = smul.addr 2, 6
    %s105 = scalar_lea.vmem %s0, %s104
    %v106 = vld [vmem:[%s105] sm:%s3]
    %s107 = scalar_lea.vmem [#allocation0], 48
    %108 = vst [vmem:[%s107] sm:%s3] %v106
    %s109 = smul.addr 2, 5
    %s110 = scalar_lea.vmem %s0, %s109
    %v111 = vld [vmem:[%s110] sm:%s3]
    %s112 = scalar_lea.vmem [#allocation0], 40
    %113 = vst [vmem:[%s112] sm:%s3] %v111
    %s114 = smul.addr 2, 4
    %s115 = scalar_lea.vmem %s0, %s114
    %v116 = vld [vmem:[%s115] sm:%s3]
    %s117 = scalar_lea.vmem [#allocation0], 32
    %118 = vst [vmem:[%s117] sm:%s3] %v116
    %s119 = smul.addr 2, 3
    %s120 = scalar_lea.vmem %s0, %s119
    %v121 = vld [vmem:[%s120] sm:%s3]
    %s122 = scalar_lea.vmem [#allocation0], 24
    %123 = vst [vmem:[%s122] sm:%s3] %v121
    %s124 = smul.addr 2, 2
    %s125 = scalar_lea.vmem %s0, %s124
    %v126 = vld [vmem:[%s125] sm:%s3]
    %s127 = scalar_lea.vmem [#allocation0], 16
    %128 = vst [vmem:[%s127] sm:%s3] %v126
    %s129 = scalar_lea.vmem %s0, 2
    %v130 = vld [vmem:[%s129] sm:%s3]
    %s131 = scalar_lea.vmem [#allocation0], 8
    %132 = vst [vmem:[%s131] sm:%s3] %v130
    %v133 = vld [vmem:[%s0] sm:%s3]
    %134 = vst [vmem:[#allocation0] sm:%s3] %v133
    %v135 = vld [vmem:[#allocation0] sm:$0x3]
    %vm136 = vcmask 23552
    %137 = vst.msk [vmem:[%s1] ss:$16 sm:$0x3] %vm136, %v135
    %s138 = scalar_lea.vmem [#allocation0], 8
    %v139 = vld [vmem:[%s138] sm:$0x3]
    %vm140 = vcmask 23552
    %s141 = scalar_lea.vmem %s1, 32
    %142 = vst.msk [vmem:[%s141] ss:$16 sm:$0x3] %vm140, %v139
    %s143 = scalar_lea.vmem [#allocation0], 16
    %v144 = vld [vmem:[%s143] sm:$0x3]
    %vm145 = vcmask 23552
    %s146 = scalar_lea.vmem %s1, 64
    %147 = vst.msk [vmem:[%s146] ss:$16 sm:$0x3] %vm145, %v144
    %s148 = scalar_lea.vmem [#allocation0], 24
    %v149 = vld [vmem:[%s148] sm:$0x3]
    %vm150 = vcmask 23552
    %s151 = scalar_lea.vmem %s1, 96
    %152 = vst.msk [vmem:[%s151] ss:$16 sm:$0x3] %vm150, %v149
    %s153 = scalar_lea.vmem [#allocation0], 32
    %v154 = vld [vmem:[%s153] sm:$0x3]
    %vm155 = vcmask 23552
    %s156 = scalar_lea.vmem %s1, 128
    %157 = vst.msk [vmem:[%s156] ss:$16 sm:$0x3] %vm155, %v154
    %s158 = scalar_lea.vmem [#allocation0], 40
    %v159 = vld [vmem:[%s158] sm:$0x3]
    %vm160 = vcmask 23552
    %s161 = scalar_lea.vmem %s1, 160
    %162 = vst.msk [vmem:[%s161] ss:$16 sm:$0x3] %vm160, %v159
    %s163 = scalar_lea.vmem [#allocation0], 48
    %v164 = vld [vmem:[%s163] sm:$0x3]
    %vm165 = vcmask 23552
    %s166 = scalar_lea.vmem %s1, 192
    %167 = vst.msk [vmem:[%s166] ss:$16 sm:$0x3] %vm165, %v164
    %s168 = scalar_lea.vmem [#allocation0], 56
    %v169 = vld [vmem:[%s168] sm:$0x3]
    %vm170 = vcmask 23552
    %s171 = scalar_lea.vmem %s1, 224
    %172 = vst.msk [vmem:[%s171] ss:$16 sm:$0x3] %vm170, %v169
    %s173 = scalar_lea.vmem [#allocation0], 64
    %v174 = vld [vmem:[%s173] sm:$0x3]
    %vm175 = vcmask 23552
    %s176 = scalar_lea.vmem %s1, 256
    %177 = vst.msk [vmem:[%s176] ss:$16 sm:$0x3] %vm175, %v174
    %s178 = scalar_lea.vmem [#allocation0], 72
    %v179 = vld [vmem:[%s178] sm:$0x3]
    %vm180 = vcmask 23552
    %s181 = scalar_lea.vmem %s1, 288
    %182 = vst.msk [vmem:[%s181] ss:$16 sm:$0x3] %vm180, %v179
    %s183 = scalar_lea.vmem [#allocation0], 80
    %v184 = vld [vmem:[%s183] sm:$0x3]
    %vm185 = vcmask 23552
    %s186 = scalar_lea.vmem %s1, 320
    %187 = vst.msk [vmem:[%s186] ss:$16 sm:$0x3] %vm185, %v184
    %s188 = scalar_lea.vmem [#allocation0], 88
    %v189 = vld [vmem:[%s188] sm:$0x3]
    %vm190 = vcmask 23552
    %s191 = scalar_lea.vmem %s1, 352
    %192 = vst.msk [vmem:[%s191] ss:$16 sm:$0x3] %vm190, %v189
    %s193 = scalar_lea.vmem [#allocation0], 96
    %v194 = vld [vmem:[%s193] sm:$0x3]
    %vm195 = vcmask 23552
    %s196 = scalar_lea.vmem %s1, 384
    %197 = vst.msk [vmem:[%s196] ss:$16 sm:$0x3] %vm195, %v194
    %s198 = scalar_lea.vmem [#allocation0], 104
    %v199 = vld [vmem:[%s198] sm:$0x3]
    %vm200 = vcmask 23552
    %s201 = scalar_lea.vmem %s1, 416
    %202 = vst.msk [vmem:[%s201] ss:$16 sm:$0x3] %vm200, %v199
    %s203 = scalar_lea.vmem [#allocation0], 112
    %v204 = vld [vmem:[%s203] sm:$0x3]
    %vm205 = vcmask 23552
    %s206 = scalar_lea.vmem %s1, 448
    %207 = vst.msk [vmem:[%s206] ss:$16 sm:$0x3] %vm205, %v204
    %s208 = scalar_lea.vmem [#allocation0], 120
    %v209 = vld [vmem:[%s208] sm:$0x3]
    %vm210 = vcmask 23552
    %s211 = scalar_lea.vmem %s1, 480
    %212 = vst.msk [vmem:[%s211] ss:$16 sm:$0x3] %vm210, %v209
    %s213 = scalar_lea.vmem [#allocation0], 128
    %v214 = vld [vmem:[%s213] sm:$0x3]
    %vm215 = vcmask 23552
    %s216 = scalar_lea.vmem %s1, 512
    %217 = vst.msk [vmem:[%s216] ss:$16 sm:$0x3] %vm215, %v214
    %s218 = scalar_lea.vmem [#allocation0], 136
    %v219 = vld [vmem:[%s218] sm:$0x3]
    %vm220 = vcmask 23552
    %s221 = scalar_lea.vmem %s1, 544
    %222 = vst.msk [vmem:[%s221] ss:$16 sm:$0x3] %vm220, %v219
    %s223 = scalar_lea.vmem [#allocation0], 144
    %v224 = vld [vmem:[%s223] sm:$0x3]
    %vm225 = vcmask 23552
    %s226 = scalar_lea.vmem %s1, 576
    %227 = vst.msk [vmem:[%s226] ss:$16 sm:$0x3] %vm225, %v224
    %s228 = scalar_lea.vmem [#allocation0], 152
    %v229 = vld [vmem:[%s228] sm:$0x3]
    %vm230 = vcmask 23552
    %s231 = scalar_lea.vmem %s1, 608
    %232 = vst.msk [vmem:[%s231] ss:$16 sm:$0x3] %vm230, %v229
    %s233 = scalar_lea.vmem [#allocation0], 160
    %v234 = vld [vmem:[%s233] sm:$0x3]
    %vm235 = vcmask 23552
    %s236 = scalar_lea.vmem %s1, 640
    %237 = vst.msk [vmem:[%s236] ss:$16 sm:$0x3] %vm235, %v234
    %s238 = scalar_lea.vmem [#allocation0], 168
    %v239 = vld [vmem:[%s238] sm:$0x3]
    %vm240 = vcmask 23552
    %s241 = scalar_lea.vmem %s1, 672
    %242 = vst.msk [vmem:[%s241] ss:$16 sm:$0x3] %vm240, %v239
    %s243 = scalar_lea.vmem [#allocation0], 176
    %v244 = vld [vmem:[%s243] sm:$0x3]
    %vm245 = vcmask 23552
    %s246 = scalar_lea.vmem %s1, 704
    %247 = vst.msk [vmem:[%s246] ss:$16 sm:$0x3] %vm245, %v244
    %s248 = scalar_lea.vmem [#allocation0], 184
    %v249 = vld [vmem:[%s248] sm:$0x3]
    %vm250 = vcmask 23552
    %s251 = scalar_lea.vmem %s1, 736
    %252 = vst.msk [vmem:[%s251] ss:$16 sm:$0x3] %vm250, %v249
    %s253 = scalar_lea.vmem [#allocation0], 192
    %v254 = vld [vmem:[%s253] sm:$0x3]
    %vm255 = vcmask 23552
    %s256 = scalar_lea.vmem %s1, 768
    %257 = vst.msk [vmem:[%s256] ss:$16 sm:$0x3] %vm255, %v254
    %s258 = scalar_lea.vmem [#allocation0], 200
    %v259 = vld [vmem:[%s258] sm:$0x3]
    %vm260 = vcmask 23552
    %s261 = scalar_lea.vmem %s1, 800
    %262 = vst.msk [vmem:[%s261] ss:$16 sm:$0x3] %vm260, %v259
    %s263 = scalar_lea.vmem [#allocation0], 208
    %v264 = vld [vmem:[%s263] sm:$0x3]
    %vm265 = vcmask 23552
    %s266 = scalar_lea.vmem %s1, 832
    %267 = vst.msk [vmem:[%s266] ss:$16 sm:$0x3] %vm265, %v264
    %v268 = vld.sshfl [vmem:[#allocation0] sm:$0xff pattern:$0x99999810]
    %s269 = scalar_lea.vmem [#allocation0], 16
    %v270 = vld.sshfl [vmem:[%s269] sm:$0xff pattern:$0x98100000]
    %vm271 = vcmask 1047556
    %v272 = vsel %vm271, %v270, %v268
    %273 = vrot.lane.b32.xlu0 %v272, 125
    %v274 = vpop.permute.xlu0 %273
    %vm275 = vcmask 23552
    %s276 = scalar_lea.vmem %s1, 1
    %277 = vst.msk [vmem:[%s276] ss:$16 sm:$0x3] %vm275, %v274
    %s278 = scalar_lea.vmem %s1, 1
    %279 = vst.msk [vmem:[%s278] ss:$16 sm:$0xc] %vm275, %v274
    %s280 = scalar_lea.vmem %s1, 1
    %281 = vst.msk [vmem:[%s280] ss:$16 sm:$0x30] %vm275, %v274
    %s282 = scalar_lea.vmem %s1, 1
    %283 = vst.msk [vmem:[%s282] ss:$16 sm:$0xc0] %vm275, %v274
    %s284 = scalar_lea.vmem [#allocation0], 32
    %v285 = vld.sshfl [vmem:[%s284] sm:$0xff pattern:$0x99999810]
    %s286 = scalar_lea.vmem [#allocation0], 48
    %v287 = vld.sshfl [vmem:[%s286] sm:$0xff pattern:$0x98100000]
    %vm288 = vcmask 1047556
    %v289 = vsel %vm288, %v287, %v285
    %290 = vrot.lane.b32.xlu0 %v289, 125
    %v291 = vpop.permute.xlu0 %290
    %vm292 = vcmask 23552
    %s293 = scalar_lea.vmem %s1, 129
    %294 = vst.msk [vmem:[%s293] ss:$16 sm:$0x3] %vm292, %v291
    %s295 = scalar_lea.vmem %s1, 129
    %296 = vst.msk [vmem:[%s295] ss:$16 sm:$0xc] %vm292, %v291
    %s297 = scalar_lea.vmem %s1, 129
    %298 = vst.msk [vmem:[%s297] ss:$16 sm:$0x30] %vm292, %v291
    %s299 = scalar_lea.vmem %s1, 129
    %300 = vst.msk [vmem:[%s299] ss:$16 sm:$0xc0] %vm292, %v291
    %s301 = scalar_lea.vmem [#allocation0], 64
    %v302 = vld.sshfl [vmem:[%s301] sm:$0xff pattern:$0x99999810]
    %s303 = scalar_lea.vmem [#allocation0], 80
    %v304 = vld.sshfl [vmem:[%s303] sm:$0xff pattern:$0x98100000]
    %vm305 = vcmask 1047556
    %v306 = vsel %vm305, %v304, %v302
    %307 = vrot.lane.b32.xlu0 %v306, 125
    %v308 = vpop.permute.xlu0 %307
    %vm309 = vcmask 23552
    %s310 = scalar_lea.vmem %s1, 257
    %311 = vst.msk [vmem:[%s310] ss:$16 sm:$0x3] %vm309, %v308
    %s312 = scalar_lea.vmem %s1, 257
    %313 = vst.msk [vmem:[%s312] ss:$16 sm:$0xc] %vm309, %v308
    %s314 = scalar_lea.vmem %s1, 257
    %315 = vst.msk [vmem:[%s314] ss:$16 sm:$0x30] %vm309, %v308
    %s316 = scalar_lea.vmem %s1, 257
    %317 = vst.msk [vmem:[%s316] ss:$16 sm:$0xc0] %vm309, %v308
    %s318 = scalar_lea.vmem [#allocation0], 96
    %v319 = vld.sshfl [vmem:[%s318] sm:$0xff pattern:$0x99999810]
    %s320 = scalar_lea.vmem [#allocation0], 112
    %v321 = vld.sshfl [vmem:[%s320] sm:$0xff pattern:$0x98100000]
    %vm322 = vcmask 1047556
    %v323 = vsel %vm322, %v321, %v319
    %324 = vrot.lane.b32.xlu0 %v323, 125
    %v325 = vpop.permute.xlu0 %324
    %vm326 = vcmask 23552
    %s327 = scalar_lea.vmem %s1, 385
    %328 = vst.msk [vmem:[%s327] ss:$16 sm:$0x3] %vm326, %v325
    %s329 = scalar_lea.vmem %s1, 385
    %330 = vst.msk [vmem:[%s329] ss:$16 sm:$0xc] %vm326, %v325
    %s331 = scalar_lea.vmem %s1, 385
    %332 = vst.msk [vmem:[%s331] ss:$16 sm:$0x30] %vm326, %v325
    %s333 = scalar_lea.vmem %s1, 385
    %334 = vst.msk [vmem:[%s333] ss:$16 sm:$0xc0] %vm326, %v325
    %s335 = scalar_lea.vmem [#allocation0], 128
    %v336 = vld.sshfl [vmem:[%s335] sm:$0xff pattern:$0x99999810]
    %s337 = scalar_lea.vmem [#allocation0], 144
    %v338 = vld.sshfl [vmem:[%s337] sm:$0xff pattern:$0x98100000]
    %vm339 = vcmask 1047556
    %v340 = vsel %vm339, %v338, %v336
    %341 = vrot.lane.b32.xlu0 %v340, 125
    %v342 = vpop.permute.xlu0 %341
    %vm343 = vcmask 23552
    %s344 = scalar_lea.vmem %s1, 513
    %345 = vst.msk [vmem:[%s344] ss:$16 sm:$0x3] %vm343, %v342
    %s346 = scalar_lea.vmem %s1, 513
    %347 = vst.msk [vmem:[%s346] ss:$16 sm:$0xc] %vm343, %v342
    %s348 = scalar_lea.vmem %s1, 513
    %349 = vst.msk [vmem:[%s348] ss:$16 sm:$0x30] %vm343, %v342
    %s350 = scalar_lea.vmem %s1, 513
    %351 = vst.msk [vmem:[%s350] ss:$16 sm:$0xc0] %vm343, %v342
    %s352 = scalar_lea.vmem [#allocation0], 160
    %v353 = vld.sshfl [vmem:[%s352] sm:$0xff pattern:$0x99999810]
    %s354 = scalar_lea.vmem [#allocation0], 176
    %v355 = vld.sshfl [vmem:[%s354] sm:$0xff pattern:$0x98100000]
    %vm356 = vcmask 1047556
    %v357 = vsel %vm356, %v355, %v353
    %358 = vrot.lane.b32.xlu0 %v357, 125
    %v359 = vpop.permute.xlu0 %358
    %vm360 = vcmask 23552
    %s361 = scalar_lea.vmem %s1, 641
    %362 = vst.msk [vmem:[%s361] ss:$16 sm:$0x3] %vm360, %v359
    %s363 = scalar_lea.vmem %s1, 641
    %364 = vst.msk [vmem:[%s363] ss:$16 sm:$0xc] %vm360, %v359
    %s365 = scalar_lea.vmem %s1, 641
    %366 = vst.msk [vmem:[%s365] ss:$16 sm:$0x30] %vm360, %v359
    %s367 = scalar_lea.vmem %s1, 641
    %368 = vst.msk [vmem:[%s367] ss:$16 sm:$0xc0] %vm360, %v359
    %s369 = scalar_lea.vmem [#allocation0], 192
    %v370 = vld.sshfl [vmem:[%s369] sm:$0xff pattern:$0x99999810]
    %s371 = scalar_lea.vmem [#allocation0], 204
    %v372 = vld [vmem:[%s371] sm:$0x30]
    %vm373 = vcmask 1045508
    %v374 = vsel %vm373, %v372, %v370
    %375 = vrot.lane.b32.xlu0 %v374, 125
    %v376 = vpop.permute.xlu0 %375
    %vm377 = vcmask 23552
    %s378 = scalar_lea.vmem %s1, 769
    %379 = vst.msk [vmem:[%s378] ss:$16 sm:$0x3] %vm377, %v376
    %s380 = scalar_lea.vmem %s1, 769
    %381 = vst.msk [vmem:[%s380] ss:$16 sm:$0xc] %vm377, %v376
    %s382 = scalar_lea.vmem %s1, 769
    %383 = vst.msk [vmem:[%s382] ss:$16 sm:$0x30] %vm377, %v376
    %v384 = vld.sshfl [vmem:[#allocation0] sm:$0xff pattern:$0x99999810]
    %s385 = scalar_lea.vmem [#allocation0], 16
    %v386 = vld.sshfl [vmem:[%s385] sm:$0xff pattern:$0x98100000]
    %vm387 = vcmask 1047556
    %v388 = vsel %vm387, %v386, %v384
    %389 = vrot.lane.b32.xlu0 %v388, 122
    %v390 = vpop.permute.xlu0 %389
    %vm391 = vcmask 23552
    %s392 = scalar_lea.vmem %s1, 2
    %393 = vst.msk [vmem:[%s392] ss:$16 sm:$0x3] %vm391, %v390
    %s394 = scalar_lea.vmem %s1, 2
    %395 = vst.msk [vmem:[%s394] ss:$16 sm:$0xc] %vm391, %v390
    %s396 = scalar_lea.vmem %s1, 2
    %397 = vst.msk [vmem:[%s396] ss:$16 sm:$0x30] %vm391, %v390
    %s398 = scalar_lea.vmem %s1, 2
    %399 = vst.msk [vmem:[%s398] ss:$16 sm:$0xc0] %vm391, %v390
    %s400 = scalar_lea.vmem [#allocation0], 32
    %v401 = vld.sshfl [vmem:[%s400] sm:$0xff pattern:$0x99999810]
    %s402 = scalar_lea.vmem [#allocation0], 48
    %v403 = vld.sshfl [vmem:[%s402] sm:$0xff pattern:$0x98100000]
    %vm404 = vcmask 1047556
    %v405 = vsel %vm404, %v403, %v401
    %406 = vrot.lane.b32.xlu0 %v405, 122
    %v407 = vpop.permute.xlu0 %406
    %vm408 = vcmask 23552
    %s409 = scalar_lea.vmem %s1, 130
    %410 = vst.msk [vmem:[%s409] ss:$16 sm:$0x3] %vm408, %v407
    %s411 = scalar_lea.vmem %s1, 130
    %412 = vst.msk [vmem:[%s411] ss:$16 sm:$0xc] %vm408, %v407
    %s413 = scalar_lea.vmem %s1, 130
    %414 = vst.msk [vmem:[%s413] ss:$16 sm:$0x30] %vm408, %v407
    %s415 = scalar_lea.vmem %s1, 130
    %416 = vst.msk [vmem:[%s415] ss:$16 sm:$0xc0] %vm408, %v407
    %s417 = scalar_lea.vmem [#allocation0], 64
    %v418 = vld.sshfl [vmem:[%s417] sm:$0xff pattern:$0x99999810]
    %s419 = scalar_lea.vmem [#allocation0], 80
    %v420 = vld.sshfl [vmem:[%s419] sm:$0xff pattern:$0x98100000]
    %vm421 = vcmask 1047556
    %v422 = vsel %vm421, %v420, %v418
    %423 = vrot.lane.b32.xlu0 %v422, 122
    %v424 = vpop.permute.xlu0 %423
    %vm425 = vcmask 23552
    %s426 = scalar_lea.vmem %s1, 258
    %427 = vst.msk [vmem:[%s426] ss:$16 sm:$0x3] %vm425, %v424
    %s428 = scalar_lea.vmem %s1, 258
    %429 = vst.msk [vmem:[%s428] ss:$16 sm:$0xc] %vm425, %v424
    %s430 = scalar_lea.vmem %s1, 258
    %431 = vst.msk [vmem:[%s430] ss:$16 sm:$0x30] %vm425, %v424
    %s432 = scalar_lea.vmem %s1, 258
    %433 = vst.msk [vmem:[%s432] ss:$16 sm:$0xc0] %vm425, %v424
    %s434 = scalar_lea.vmem [#allocation0], 96
    %v435 = vld.sshfl [vmem:[%s434] sm:$0xff pattern:$0x99999810]
    %s436 = scalar_lea.vmem [#allocation0], 112
    %v437 = vld.sshfl [vmem:[%s436] sm:$0xff pattern:$0x98100000]
    %vm438 = vcmask 1047556
    %v439 = vsel %vm438, %v437, %v435
    %440 = vrot.lane.b32.xlu0 %v439, 122
    %v441 = vpop.permute.xlu0 %440
    %vm442 = vcmask 23552
    %s443 = scalar_lea.vmem %s1, 386
    %444 = vst.msk [vmem:[%s443] ss:$16 sm:$0x3] %vm442, %v441
    %s445 = scalar_lea.vmem %s1, 386
    %446 = vst.msk [vmem:[%s445] ss:$16 sm:$0xc] %vm442, %v441
    %s447 = scalar_lea.vmem %s1, 386
    %448 = vst.msk [vmem:[%s447] ss:$16 sm:$0x30] %vm442, %v441
    %s449 = scalar_lea.vmem %s1, 386
    %450 = vst.msk [vmem:[%s449] ss:$16 sm:$0xc0] %vm442, %v441
    %s451 = scalar_lea.vmem [#allocation0], 128
    %v452 = vld.sshfl [vmem:[%s451] sm:$0xff pattern:$0x99999810]
    %s453 = scalar_lea.vmem [#allocation0], 144
    %v454 = vld.sshfl [vmem:[%s453] sm:$0xff pattern:$0x98100000]
    %vm455 = vcmask 1047556
    %v456 = vsel %vm455, %v454, %v452
    %457 = vrot.lane.b32.xlu0 %v456, 122
    %v458 = vpop.permute.xlu0 %457
    %vm459 = vcmask 23552
    %s460 = scalar_lea.vmem %s1, 514
    %461 = vst.msk [vmem:[%s460] ss:$16 sm:$0x3] %vm459, %v458
    %s462 = scalar_lea.vmem %s1, 514
    %463 = vst.msk [vmem:[%s462] ss:$16 sm:$0xc] %vm459, %v458
    %s464 = scalar_lea.vmem %s1, 514
    %465 = vst.msk [vmem:[%s464] ss:$16 sm:$0x30] %vm459, %v458
    %s466 = scalar_lea.vmem %s1, 514
    %467 = vst.msk [vmem:[%s466] ss:$16 sm:$0xc0] %vm459, %v458
    %s468 = scalar_lea.vmem [#allocation0], 160
    %v469 = vld.sshfl [vmem:[%s468] sm:$0xff pattern:$0x99999810]
    %s470 = scalar_lea.vmem [#allocation0], 176
    %v471 = vld.sshfl [vmem:[%s470] sm:$0xff pattern:$0x98100000]
    %vm472 = vcmask 1047556
    %v473 = vsel %vm472, %v471, %v469
    %474 = vrot.lane.b32.xlu0 %v473, 122
    %v475 = vpop.permute.xlu0 %474
    %vm476 = vcmask 23552
    %s477 = scalar_lea.vmem %s1, 642
    %478 = vst.msk [vmem:[%s477] ss:$16 sm:$0x3] %vm476, %v475
    %s479 = scalar_lea.vmem %s1, 642
    %480 = vst.msk [vmem:[%s479] ss:$16 sm:$0xc] %vm476, %v475
    %s481 = scalar_lea.vmem %s1, 642
    %482 = vst.msk [vmem:[%s481] ss:$16 sm:$0x30] %vm476, %v475
    %s483 = scalar_lea.vmem %s1, 642
    %484 = vst.msk [vmem:[%s483] ss:$16 sm:$0xc0] %vm476, %v475
    %s485 = scalar_lea.vmem [#allocation0], 192
    %v486 = vld.sshfl [vmem:[%s485] sm:$0xff pattern:$0x99999810]
    %s487 = scalar_lea.vmem [#allocation0], 204
    %v488 = vld [vmem:[%s487] sm:$0x30]
    %vm489 = vcmask 1045508
    %v490 = vsel %vm489, %v488, %v486
    %491 = vrot.lane.b32.xlu0 %v490, 122
    %v492 = vpop.permute.xlu0 %491
    %vm493 = vcmask 23552
    %s494 = scalar_lea.vmem %s1, 770
    %495 = vst.msk [vmem:[%s494] ss:$16 sm:$0x3] %vm493, %v492
    %s496 = scalar_lea.vmem %s1, 770
    %497 = vst.msk [vmem:[%s496] ss:$16 sm:$0xc] %vm493, %v492
    %s498 = scalar_lea.vmem %s1, 770
    %499 = vst.msk [vmem:[%s498] ss:$16 sm:$0x30] %vm493, %v492
    %v500 = vld.sshfl [vmem:[#allocation0] sm:$0xff pattern:$0x99999810]
    %s501 = scalar_lea.vmem [#allocation0], 16
    %v502 = vld.sshfl [vmem:[%s501] sm:$0xff pattern:$0x98100000]
    %vm503 = vcmask 1047556
    %v504 = vsel %vm503, %v502, %v500
    %505 = vrot.lane.b32.xlu0 %v504, 119
    %v506 = vpop.permute.xlu0 %505
    %vm507 = vcmask 23552
    %s508 = scalar_lea.vmem %s1, 3
    %509 = vst.msk [vmem:[%s508] ss:$16 sm:$0x3] %vm507, %v506
    %s510 = scalar_lea.vmem %s1, 3
    %511 = vst.msk [vmem:[%s510] ss:$16 sm:$0xc] %vm507, %v506
    %s512 = scalar_lea.vmem %s1, 3
    %513 = vst.msk [vmem:[%s512] ss:$16 sm:$0x30] %vm507, %v506
    %s514 = scalar_lea.vmem %s1, 3
    %515 = vst.msk [vmem:[%s514] ss:$16 sm:$0xc0] %vm507, %v506
    %s516 = scalar_lea.vmem [#allocation0], 32
    %v517 = vld.sshfl [vmem:[%s516] sm:$0xff pattern:$0x99999810]
    %s518 = scalar_lea.vmem [#allocation0], 48
    %v519 = vld.sshfl [vmem:[%s518] sm:$0xff pattern:$0x98100000]
    %vm520 = vcmask 1047556
    %v521 = vsel %vm520, %v519, %v517
    %522 = vrot.lane.b32.xlu0 %v521, 119
    %v523 = vpop.permute.xlu0 %522
    %vm524 = vcmask 23552
    %s525 = scalar_lea.vmem %s1, 131
    %526 = vst.msk [vmem:[%s525] ss:$16 sm:$0x3] %vm524, %v523
    %s527 = scalar_lea.vmem %s1, 131
    %528 = vst.msk [vmem:[%s527] ss:$16 sm:$0xc] %vm524, %v523
    %s529 = scalar_lea.vmem %s1, 131
    %530 = vst.msk [vmem:[%s529] ss:$16 sm:$0x30] %vm524, %v523
    %s531 = scalar_lea.vmem %s1, 131
    %532 = vst.msk [vmem:[%s531] ss:$16 sm:$0xc0] %vm524, %v523
    %s533 = scalar_lea.vmem [#allocation0], 64
    %v534 = vld.sshfl [vmem:[%s533] sm:$0xff pattern:$0x99999810]
    %s535 = scalar_lea.vmem [#allocation0], 80
    %v536 = vld.sshfl [vmem:[%s535] sm:$0xff pattern:$0x98100000]
    %vm537 = vcmask 1047556
    %v538 = vsel %vm537, %v536, %v534
    %539 = vrot.lane.b32.xlu0 %v538, 119
    %v540 = vpop.permute.xlu0 %539
    %vm541 = vcmask 23552
    %s542 = scalar_lea.vmem %s1, 259
    %543 = vst.msk [vmem:[%s542] ss:$16 sm:$0x3] %vm541, %v540
    %s544 = scalar_lea.vmem %s1, 259
    %545 = vst.msk [vmem:[%s544] ss:$16 sm:$0xc] %vm541, %v540
    %s546 = scalar_lea.vmem %s1, 259
    %547 = vst.msk [vmem:[%s546] ss:$16 sm:$0x30] %vm541, %v540
    %s548 = scalar_lea.vmem %s1, 259
    %549 = vst.msk [vmem:[%s548] ss:$16 sm:$0xc0] %vm541, %v540
    %s550 = scalar_lea.vmem [#allocation0], 96
    %v551 = vld.sshfl [vmem:[%s550] sm:$0xff pattern:$0x99999810]
    %s552 = scalar_lea.vmem [#allocation0], 112
    %v553 = vld.sshfl [vmem:[%s552] sm:$0xff pattern:$0x98100000]
    %vm554 = vcmask 1047556
    %v555 = vsel %vm554, %v553, %v551
    %556 = vrot.lane.b32.xlu0 %v555, 119
    %v557 = vpop.permute.xlu0 %556
    %vm558 = vcmask 23552
    %s559 = scalar_lea.vmem %s1, 387
    %560 = vst.msk [vmem:[%s559] ss:$16 sm:$0x3] %vm558, %v557
    %s561 = scalar_lea.vmem %s1, 387
    %562 = vst.msk [vmem:[%s561] ss:$16 sm:$0xc] %vm558, %v557
    %s563 = scalar_lea.vmem %s1, 387
    %564 = vst.msk [vmem:[%s563] ss:$16 sm:$0x30] %vm558, %v557
    %s565 = scalar_lea.vmem %s1, 387
    %566 = vst.msk [vmem:[%s565] ss:$16 sm:$0xc0] %vm558, %v557
    %s567 = scalar_lea.vmem [#allocation0], 128
    %v568 = vld.sshfl [vmem:[%s567] sm:$0xff pattern:$0x99999810]
    %s569 = scalar_lea.vmem [#allocation0], 144
    %v570 = vld.sshfl [vmem:[%s569] sm:$0xff pattern:$0x98100000]
    %vm571 = vcmask 1047556
    %v572 = vsel %vm571, %v570, %v568
    %573 = vrot.lane.b32.xlu0 %v572, 119
    %v574 = vpop.permute.xlu0 %573
    %vm575 = vcmask 23552
    %s576 = scalar_lea.vmem %s1, 515
    %577 = vst.msk [vmem:[%s576] ss:$16 sm:$0x3] %vm575, %v574
    %s578 = scalar_lea.vmem %s1, 515
    %579 = vst.msk [vmem:[%s578] ss:$16 sm:$0xc] %vm575, %v574
    %s580 = scalar_lea.vmem %s1, 515
    %581 = vst.msk [vmem:[%s580] ss:$16 sm:$0x30] %vm575, %v574
    %s582 = scalar_lea.vmem %s1, 515
    %583 = vst.msk [vmem:[%s582] ss:$16 sm:$0xc0] %vm575, %v574
    %s584 = scalar_lea.vmem [#allocation0], 160
    %v585 = vld.sshfl [vmem:[%s584] sm:$0xff pattern:$0x99999810]
    %s586 = scalar_lea.vmem [#allocation0], 176
    %v587 = vld.sshfl [vmem:[%s586] sm:$0xff pattern:$0x98100000]
    %vm588 = vcmask 1047556
    %v589 = vsel %vm588, %v587, %v585
    %590 = vrot.lane.b32.xlu0 %v589, 119
    %v591 = vpop.permute.xlu0 %590
    %vm592 = vcmask 23552
    %s593 = scalar_lea.vmem %s1, 643
    %594 = vst.msk [vmem:[%s593] ss:$16 sm:$0x3] %vm592, %v591
    %s595 = scalar_lea.vmem %s1, 643
    %596 = vst.msk [vmem:[%s595] ss:$16 sm:$0xc] %vm592, %v591
    %s597 = scalar_lea.vmem %s1, 643
    %598 = vst.msk [vmem:[%s597] ss:$16 sm:$0x30] %vm592, %v591
    %s599 = scalar_lea.vmem %s1, 643
    %600 = vst.msk [vmem:[%s599] ss:$16 sm:$0xc0] %vm592, %v591
    %s601 = scalar_lea.vmem [#allocation0], 192
    %v602 = vld.sshfl [vmem:[%s601] sm:$0xff pattern:$0x99999810]
    %s603 = scalar_lea.vmem [#allocation0], 204
    %v604 = vld [vmem:[%s603] sm:$0x30]
    %vm605 = vcmask 1045508
    %v606 = vsel %vm605, %v604, %v602
    %607 = vrot.lane.b32.xlu0 %v606, 119
    %v608 = vpop.permute.xlu0 %607
    %vm609 = vcmask 23552
    %s610 = scalar_lea.vmem %s1, 771
    %611 = vst.msk [vmem:[%s610] ss:$16 sm:$0x3] %vm609, %v608
    %s612 = scalar_lea.vmem %s1, 771
    %613 = vst.msk [vmem:[%s612] ss:$16 sm:$0xc] %vm609, %v608
    %s614 = scalar_lea.vmem %s1, 771
    %615 = vst.msk [vmem:[%s614] ss:$16 sm:$0x30] %vm609, %v608
    %v616 = vld.sshfl [vmem:[#allocation0] sm:$0xff pattern:$0x99999810]
    %s617 = scalar_lea.vmem [#allocation0], 16
    %v618 = vld.sshfl [vmem:[%s617] sm:$0xff pattern:$0x98100000]
    %vm619 = vcmask 1047556
    %v620 = vsel %vm619, %v618, %v616
    %621 = vrot.lane.b32.xlu0 %v620, 116
    %v622 = vpop.permute.xlu0 %621
    %vm623 = vcmask 23552
    %s624 = scalar_lea.vmem %s1, 4
    %625 = vst.msk [vmem:[%s624] ss:$16 sm:$0x3] %vm623, %v622
    %s626 = scalar_lea.vmem %s1, 4
    %627 = vst.msk [vmem:[%s626] ss:$16 sm:$0xc] %vm623, %v622
    %s628 = scalar_lea.vmem %s1, 4
    %629 = vst.msk [vmem:[%s628] ss:$16 sm:$0x30] %vm623, %v622
    %s630 = scalar_lea.vmem %s1, 4
    %631 = vst.msk [vmem:[%s630] ss:$16 sm:$0xc0] %vm623, %v622
    %s632 = scalar_lea.vmem [#allocation0], 32
    %v633 = vld.sshfl [vmem:[%s632] sm:$0xff pattern:$0x99999810]
    %s634 = scalar_lea.vmem [#allocation0], 48
    %v635 = vld.sshfl [vmem:[%s634] sm:$0xff pattern:$0x98100000]
    %vm636 = vcmask 1047556
    %v637 = vsel %vm636, %v635, %v633
    %638 = vrot.lane.b32.xlu0 %v637, 116
    %v639 = vpop.permute.xlu0 %638
    %vm640 = vcmask 23552
    %s641 = scalar_lea.vmem %s1, 132
    %642 = vst.msk [vmem:[%s641] ss:$16 sm:$0x3] %vm640, %v639
    %s643 = scalar_lea.vmem %s1, 132
    %644 = vst.msk [vmem:[%s643] ss:$16 sm:$0xc] %vm640, %v639
    %s645 = scalar_lea.vmem %s1, 132
    %646 = vst.msk [vmem:[%s645] ss:$16 sm:$0x30] %vm640, %v639
    %s647 = scalar_lea.vmem %s1, 132
    %648 = vst.msk [vmem:[%s647] ss:$16 sm:$0xc0] %vm640, %v639
    %s649 = scalar_lea.vmem [#allocation0], 64
    %v650 = vld.sshfl [vmem:[%s649] sm:$0xff pattern:$0x99999810]
    %s651 = scalar_lea.vmem [#allocation0], 80
    %v652 = vld.sshfl [vmem:[%s651] sm:$0xff pattern:$0x98100000]
    %vm653 = vcmask 1047556
    %v654 = vsel %vm653, %v652, %v650
    %655 = vrot.lane.b32.xlu0 %v654, 116
    %v656 = vpop.permute.xlu0 %655
    %vm657 = vcmask 23552
    %s658 = scalar_lea.vmem %s1, 260
    %659 = vst.msk [vmem:[%s658] ss:$16 sm:$0x3] %vm657, %v656
    %s660 = scalar_lea.vmem %s1, 260
    %661 = vst.msk [vmem:[%s660] ss:$16 sm:$0xc] %vm657, %v656
    %s662 = scalar_lea.vmem %s1, 260
    %663 = vst.msk [vmem:[%s662] ss:$16 sm:$0x30] %vm657, %v656
    %s664 = scalar_lea.vmem %s1, 260
    %665 = vst.msk [vmem:[%s664] ss:$16 sm:$0xc0] %vm657, %v656
    %s666 = scalar_lea.vmem [#allocation0], 96
    %v667 = vld.sshfl [vmem:[%s666] sm:$0xff pattern:$0x99999810]
    %s668 = scalar_lea.vmem [#allocation0], 112
    %v669 = vld.sshfl [vmem:[%s668] sm:$0xff pattern:$0x98100000]
    %vm670 = vcmask 1047556
    %v671 = vsel %vm670, %v669, %v667
    %672 = vrot.lane.b32.xlu0 %v671, 116
    %v673 = vpop.permute.xlu0 %672
    %vm674 = vcmask 23552
    %s675 = scalar_lea.vmem %s1, 388
    %676 = vst.msk [vmem:[%s675] ss:$16 sm:$0x3] %vm674, %v673
    %s677 = scalar_lea.vmem %s1, 388
    %678 = vst.msk [vmem:[%s677] ss:$16 sm:$0xc] %vm674, %v673
    %s679 = scalar_lea.vmem %s1, 388
    %680 = vst.msk [vmem:[%s679] ss:$16 sm:$0x30] %vm674, %v673
    %s681 = scalar_lea.vmem %s1, 388
    %682 = vst.msk [vmem:[%s681] ss:$16 sm:$0xc0] %vm674, %v673
    %s683 = scalar_lea.vmem [#allocation0], 128
    %v684 = vld.sshfl [vmem:[%s683] sm:$0xff pattern:$0x99999810]
    %s685 = scalar_lea.vmem [#allocation0], 144
    %v686 = vld.sshfl [vmem:[%s685] sm:$0xff pattern:$0x98100000]
    %vm687 = vcmask 1047556
    %v688 = vsel %vm687, %v686, %v684
    %689 = vrot.lane.b32.xlu0 %v688, 116
    %v690 = vpop.permute.xlu0 %689
    %vm691 = vcmask 23552
    %s692 = scalar_lea.vmem %s1, 516
    %693 = vst.msk [vmem:[%s692] ss:$16 sm:$0x3] %vm691, %v690
    %s694 = scalar_lea.vmem %s1, 516
    %695 = vst.msk [vmem:[%s694] ss:$16 sm:$0xc] %vm691, %v690
    %s696 = scalar_lea.vmem %s1, 516
    %697 = vst.msk [vmem:[%s696] ss:$16 sm:$0x30] %vm691, %v690
    %s698 = scalar_lea.vmem %s1, 516
    %699 = vst.msk [vmem:[%s698] ss:$16 sm:$0xc0] %vm691, %v690
    %s700 = scalar_lea.vmem [#allocation0], 160
    %v701 = vld.sshfl [vmem:[%s700] sm:$0xff pattern:$0x99999810]
    %s702 = scalar_lea.vmem [#allocation0], 176
    %v703 = vld.sshfl [vmem:[%s702] sm:$0xff pattern:$0x98100000]
    %vm704 = vcmask 1047556
    %v705 = vsel %vm704, %v703, %v701
    %706 = vrot.lane.b32.xlu0 %v705, 116
    %v707 = vpop.permute.xlu0 %706
    %vm708 = vcmask 23552
    %s709 = scalar_lea.vmem %s1, 644
    %710 = vst.msk [vmem:[%s709] ss:$16 sm:$0x3] %vm708, %v707
    %s711 = scalar_lea.vmem %s1, 644
    %712 = vst.msk [vmem:[%s711] ss:$16 sm:$0xc] %vm708, %v707
    %s713 = scalar_lea.vmem %s1, 644
    %714 = vst.msk [vmem:[%s713] ss:$16 sm:$0x30] %vm708, %v707
    %s715 = scalar_lea.vmem %s1, 644
    %716 = vst.msk [vmem:[%s715] ss:$16 sm:$0xc0] %vm708, %v707
    %s717 = scalar_lea.vmem [#allocation0], 192
    %v718 = vld.sshfl [vmem:[%s717] sm:$0xff pattern:$0x99999810]
    %s719 = scalar_lea.vmem [#allocation0], 204
    %v720 = vld [vmem:[%s719] sm:$0x30]
    %vm721 = vcmask 1045508
    %v722 = vsel %vm721, %v720, %v718
    %723 = vrot.lane.b32.xlu0 %v722, 116
    %v724 = vpop.permute.xlu0 %723
    %vm725 = vcmask 23552
    %s726 = scalar_lea.vmem %s1, 772
    %727 = vst.msk [vmem:[%s726] ss:$16 sm:$0x3] %vm725, %v724
    %s728 = scalar_lea.vmem %s1, 772
    %729 = vst.msk [vmem:[%s728] ss:$16 sm:$0xc] %vm725, %v724
    %s730 = scalar_lea.vmem %s1, 772
    %731 = vst.msk [vmem:[%s730] ss:$16 sm:$0x30] %vm725, %v724
    %v732 = vld.sshfl [vmem:[#allocation0] sm:$0xff pattern:$0x99999810]
    %s733 = scalar_lea.vmem [#allocation0], 16
    %v734 = vld.sshfl [vmem:[%s733] sm:$0xff pattern:$0x98100000]
    %vm735 = vcmask 1047556
    %v736 = vsel %vm735, %v734, %v732
    %737 = vrot.lane.b32.xlu0 %v736, 113
    %v738 = vpop.permute.xlu0 %737
    %vm739 = vcmask 23552
    %s740 = scalar_lea.vmem %s1, 5
    %741 = vst.msk [vmem:[%s740] ss:$16 sm:$0x3] %vm739, %v738
    %s742 = scalar_lea.vmem %s1, 5
    %743 = vst.msk [vmem:[%s742] ss:$16 sm:$0xc] %vm739, %v738
    %s744 = scalar_lea.vmem %s1, 5
    %745 = vst.msk [vmem:[%s744] ss:$16 sm:$0x30] %vm739, %v738
    %s746 = scalar_lea.vmem %s1, 5
    %747 = vst.msk [vmem:[%s746] ss:$16 sm:$0xc0] %vm739, %v738
    %s748 = scalar_lea.vmem [#allocation0], 32
    %v749 = vld.sshfl [vmem:[%s748] sm:$0xff pattern:$0x99999810]
    %s750 = scalar_lea.vmem [#allocation0], 48
    %v751 = vld.sshfl [vmem:[%s750] sm:$0xff pattern:$0x98100000]
    %vm752 = vcmask 1047556
    %v753 = vsel %vm752, %v751, %v749
    %754 = vrot.lane.b32.xlu0 %v753, 113
    %v755 = vpop.permute.xlu0 %754
    %vm756 = vcmask 23552
    %s757 = scalar_lea.vmem %s1, 133
    %758 = vst.msk [vmem:[%s757] ss:$16 sm:$0x3] %vm756, %v755
    %s759 = scalar_lea.vmem %s1, 133
    %760 = vst.msk [vmem:[%s759] ss:$16 sm:$0xc] %vm756, %v755
    %s761 = scalar_lea.vmem %s1, 133
    %762 = vst.msk [vmem:[%s761] ss:$16 sm:$0x30] %vm756, %v755
    %s763 = scalar_lea.vmem %s1, 133
    %764 = vst.msk [vmem:[%s763] ss:$16 sm:$0xc0] %vm756, %v755
    %s765 = scalar_lea.vmem [#allocation0], 64
    %v766 = vld.sshfl [vmem:[%s765] sm:$0xff pattern:$0x99999810]
    %s767 = scalar_lea.vmem [#allocation0], 80
    %v768 = vld.sshfl [vmem:[%s767] sm:$0xff pattern:$0x98100000]
    %vm769 = vcmask 1047556
    %v770 = vsel %vm769, %v768, %v766
    %771 = vrot.lane.b32.xlu0 %v770, 113
    %v772 = vpop.permute.xlu0 %771
    %vm773 = vcmask 23552
    %s774 = scalar_lea.vmem %s1, 261
    %775 = vst.msk [vmem:[%s774] ss:$16 sm:$0x3] %vm773, %v772
    %s776 = scalar_lea.vmem %s1, 261
    %777 = vst.msk [vmem:[%s776] ss:$16 sm:$0xc] %vm773, %v772
    %s778 = scalar_lea.vmem %s1, 261
    %779 = vst.msk [vmem:[%s778] ss:$16 sm:$0x30] %vm773, %v772
    %s780 = scalar_lea.vmem %s1, 261
    %781 = vst.msk [vmem:[%s780] ss:$16 sm:$0xc0] %vm773, %v772
    %s782 = scalar_lea.vmem [#allocation0], 96
    %v783 = vld.sshfl [vmem:[%s782] sm:$0xff pattern:$0x99999810]
    %s784 = scalar_lea.vmem [#allocation0], 112
    %v785 = vld.sshfl [vmem:[%s784] sm:$0xff pattern:$0x98100000]
    %vm786 = vcmask 1047556
    %v787 = vsel %vm786, %v785, %v783
    %788 = vrot.lane.b32.xlu0 %v787, 113
    %v789 = vpop.permute.xlu0 %788
    %vm790 = vcmask 23552
    %s791 = scalar_lea.vmem %s1, 389
    %792 = vst.msk [vmem:[%s791] ss:$16 sm:$0x3] %vm790, %v789
    %s793 = scalar_lea.vmem %s1, 389
    %794 = vst.msk [vmem:[%s793] ss:$16 sm:$0xc] %vm790, %v789
    %s795 = scalar_lea.vmem %s1, 389
    %796 = vst.msk [vmem:[%s795] ss:$16 sm:$0x30] %vm790, %v789
    %s797 = scalar_lea.vmem %s1, 389
    %798 = vst.msk [vmem:[%s797] ss:$16 sm:$0xc0] %vm790, %v789
    %s799 = scalar_lea.vmem [#allocation0], 128
    %v800 = vld.sshfl [vmem:[%s799] sm:$0xff pattern:$0x99999810]
    %s801 = scalar_lea.vmem [#allocation0], 144
    %v802 = vld.sshfl [vmem:[%s801] sm:$0xff pattern:$0x98100000]
    %vm803 = vcmask 1047556
    %v804 = vsel %vm803, %v802, %v800
    %805 = vrot.lane.b32.xlu0 %v804, 113
    %v806 = vpop.permute.xlu0 %805
    %vm807 = vcmask 23552
    %s808 = scalar_lea.vmem %s1, 517
    %809 = vst.msk [vmem:[%s808] ss:$16 sm:$0x3] %vm807, %v806
    %s810 = scalar_lea.vmem %s1, 517
    %811 = vst.msk [vmem:[%s810] ss:$16 sm:$0xc] %vm807, %v806
    %s812 = scalar_lea.vmem %s1, 517
    %813 = vst.msk [vmem:[%s812] ss:$16 sm:$0x30] %vm807, %v806
    %s814 = scalar_lea.vmem %s1, 517
    %815 = vst.msk [vmem:[%s814] ss:$16 sm:$0xc0] %vm807, %v806
    %s816 = scalar_lea.vmem [#allocation0], 160
    %v817 = vld.sshfl [vmem:[%s816] sm:$0xff pattern:$0x99999810]
    %s818 = scalar_lea.vmem [#allocation0], 176
    %v819 = vld.sshfl [vmem:[%s818] sm:$0xff pattern:$0x98100000]
    %vm820 = vcmask 1047556
    %v821 = vsel %vm820, %v819, %v817
    %822 = vrot.lane.b32.xlu0 %v821, 113
    %v823 = vpop.permute.xlu0 %822
    %vm824 = vcmask 23552
    %s825 = scalar_lea.vmem %s1, 645
    %826 = vst.msk [vmem:[%s825] ss:$16 sm:$0x3] %vm824, %v823
    %s827 = scalar_lea.vmem %s1, 645
    %828 = vst.msk [vmem:[%s827] ss:$16 sm:$0xc] %vm824, %v823
    %s829 = scalar_lea.vmem %s1, 645
    %830 = vst.msk [vmem:[%s829] ss:$16 sm:$0x30] %vm824, %v823
    %s831 = scalar_lea.vmem %s1, 645
    %832 = vst.msk [vmem:[%s831] ss:$16 sm:$0xc0] %vm824, %v823
    %s833 = scalar_lea.vmem [#allocation0], 192
    %v834 = vld.sshfl [vmem:[%s833] sm:$0xff pattern:$0x99999810]
    %s835 = scalar_lea.vmem [#allocation0], 204
    %v836 = vld [vmem:[%s835] sm:$0x30]
    %vm837 = vcmask 1045508
    %v838 = vsel %vm837, %v836, %v834
    %839 = vrot.lane.b32.xlu0 %v838, 113
    %v840 = vpop.permute.xlu0 %839
    %vm841 = vcmask 23552
    %s842 = scalar_lea.vmem %s1, 773
    %843 = vst.msk [vmem:[%s842] ss:$16 sm:$0x3] %vm841, %v840
    %s844 = scalar_lea.vmem %s1, 773
    %845 = vst.msk [vmem:[%s844] ss:$16 sm:$0xc] %vm841, %v840
    %s846 = scalar_lea.vmem %s1, 773
    %847 = vst.msk [vmem:[%s846] ss:$16 sm:$0x30] %vm841, %v840
    %v848 = vld.sshfl [vmem:[#allocation0] sm:$0xff pattern:$0x99999810]
    %s849 = scalar_lea.vmem [#allocation0], 16
    %v850 = vld.sshfl [vmem:[%s849] sm:$0xff pattern:$0x98100000]
    %vm851 = vcmask 1047556
    %v852 = vsel %vm851, %v850, %v848
    %853 = vrot.lane.b32.xlu0 %v852, 110
    %v854 = vpop.permute.xlu0 %853
    %vm855 = vcmask 23552
    %s856 = scalar_lea.vmem %s1, 6
    %857 = vst.msk [vmem:[%s856] ss:$16 sm:$0x3] %vm855, %v854
    %s858 = scalar_lea.vmem %s1, 6
    %859 = vst.msk [vmem:[%s858] ss:$16 sm:$0xc] %vm855, %v854
    %s860 = scalar_lea.vmem %s1, 6
    %861 = vst.msk [vmem:[%s860] ss:$16 sm:$0x30] %vm855, %v854
    %s862 = scalar_lea.vmem %s1, 6
    %863 = vst.msk [vmem:[%s862] ss:$16 sm:$0xc0] %vm855, %v854
    %s864 = scalar_lea.vmem [#allocation0], 32
    %v865 = vld.sshfl [vmem:[%s864] sm:$0xff pattern:$0x99999810]
    %s866 = scalar_lea.vmem [#allocation0], 48
    %v867 = vld.sshfl [vmem:[%s866] sm:$0xff pattern:$0x98100000]
    %vm868 = vcmask 1047556
    %v869 = vsel %vm868, %v867, %v865
    %870 = vrot.lane.b32.xlu0 %v869, 110
    %v871 = vpop.permute.xlu0 %870
    %vm872 = vcmask 23552
    %s873 = scalar_lea.vmem %s1, 134
    %874 = vst.msk [vmem:[%s873] ss:$16 sm:$0x3] %vm872, %v871
    %s875 = scalar_lea.vmem %s1, 134
    %876 = vst.msk [vmem:[%s875] ss:$16 sm:$0xc] %vm872, %v871
    %s877 = scalar_lea.vmem %s1, 134
    %878 = vst.msk [vmem:[%s877] ss:$16 sm:$0x30] %vm872, %v871
    %s879 = scalar_lea.vmem %s1, 134
    %880 = vst.msk [vmem:[%s879] ss:$16 sm:$0xc0] %vm872, %v871
    %s881 = scalar_lea.vmem [#allocation0], 64
    %v882 = vld.sshfl [vmem:[%s881] sm:$0xff pattern:$0x99999810]
    %s883 = scalar_lea.vmem [#allocation0], 80
    %v884 = vld.sshfl [vmem:[%s883] sm:$0xff pattern:$0x98100000]
    %vm885 = vcmask 1047556
    %v886 = vsel %vm885, %v884, %v882
    %887 = vrot.lane.b32.xlu0 %v886, 110
    %v888 = vpop.permute.xlu0 %887
    %vm889 = vcmask 23552
    %s890 = scalar_lea.vmem %s1, 262
    %891 = vst.msk [vmem:[%s890] ss:$16 sm:$0x3] %vm889, %v888
    %s892 = scalar_lea.vmem %s1, 262
    %893 = vst.msk [vmem:[%s892] ss:$16 sm:$0xc] %vm889, %v888
    %s894 = scalar_lea.vmem %s1, 262
    %895 = vst.msk [vmem:[%s894] ss:$16 sm:$0x30] %vm889, %v888
    %s896 = scalar_lea.vmem %s1, 262
    %897 = vst.msk [vmem:[%s896] ss:$16 sm:$0xc0] %vm889, %v888
    %s898 = scalar_lea.vmem [#allocation0], 96
    %v899 = vld.sshfl [vmem:[%s898] sm:$0xff pattern:$0x99999810]
    %s900 = scalar_lea.vmem [#allocation0], 112
    %v901 = vld.sshfl [vmem:[%s900] sm:$0xff pattern:$0x98100000]
    %vm902 = vcmask 1047556
    %v903 = vsel %vm902, %v901, %v899
    %904 = vrot.lane.b32.xlu0 %v903, 110
    %v905 = vpop.permute.xlu0 %904
    %vm906 = vcmask 23552
    %s907 = scalar_lea.vmem %s1, 390
    %908 = vst.msk [vmem:[%s907] ss:$16 sm:$0x3] %vm906, %v905
    %s909 = scalar_lea.vmem %s1, 390
    %910 = vst.msk [vmem:[%s909] ss:$16 sm:$0xc] %vm906, %v905
    %s911 = scalar_lea.vmem %s1, 390
    %912 = vst.msk [vmem:[%s911] ss:$16 sm:$0x30] %vm906, %v905
    %s913 = scalar_lea.vmem %s1, 390
    %914 = vst.msk [vmem:[%s913] ss:$16 sm:$0xc0] %vm906, %v905
    %s915 = scalar_lea.vmem [#allocation0], 128
    %v916 = vld.sshfl [vmem:[%s915] sm:$0xff pattern:$0x99999810]
    %s917 = scalar_lea.vmem [#allocation0], 144
    %v918 = vld.sshfl [vmem:[%s917] sm:$0xff pattern:$0x98100000]
    %vm919 = vcmask 1047556
    %v920 = vsel %vm919, %v918, %v916
    %921 = vrot.lane.b32.xlu0 %v920, 110
    %v922 = vpop.permute.xlu0 %921
    %vm923 = vcmask 23552
    %s924 = scalar_lea.vmem %s1, 518
    %925 = vst.msk [vmem:[%s924] ss:$16 sm:$0x3] %vm923, %v922
    %s926 = scalar_lea.vmem %s1, 518
    %927 = vst.msk [vmem:[%s926] ss:$16 sm:$0xc] %vm923, %v922
    %s928 = scalar_lea.vmem %s1, 518
    %929 = vst.msk [vmem:[%s928] ss:$16 sm:$0x30] %vm923, %v922
    %s930 = scalar_lea.vmem %s1, 518
    %931 = vst.msk [vmem:[%s930] ss:$16 sm:$0xc0] %vm923, %v922
    %s932 = scalar_lea.vmem [#allocation0], 160
    %v933 = vld.sshfl [vmem:[%s932] sm:$0xff pattern:$0x99999810]
    %s934 = scalar_lea.vmem [#allocation0], 176
    %v935 = vld.sshfl [vmem:[%s934] sm:$0xff pattern:$0x98100000]
    %vm936 = vcmask 1047556
    %v937 = vsel %vm936, %v935, %v933
    %938 = vrot.lane.b32.xlu0 %v937, 110
    %v939 = vpop.permute.xlu0 %938
    %vm940 = vcmask 23552
    %s941 = scalar_lea.vmem %s1, 646
    %942 = vst.msk [vmem:[%s941] ss:$16 sm:$0x3] %vm940, %v939
    %s943 = scalar_lea.vmem %s1, 646
    %944 = vst.msk [vmem:[%s943] ss:$16 sm:$0xc] %vm940, %v939
    %s945 = scalar_lea.vmem %s1, 646
    %946 = vst.msk [vmem:[%s945] ss:$16 sm:$0x30] %vm940, %v939
    %s947 = scalar_lea.vmem %s1, 646
    %948 = vst.msk [vmem:[%s947] ss:$16 sm:$0xc0] %vm940, %v939
    %s949 = scalar_lea.vmem [#allocation0], 192
    %v950 = vld.sshfl [vmem:[%s949] sm:$0xff pattern:$0x99999810]
    %s951 = scalar_lea.vmem [#allocation0], 204
    %v952 = vld [vmem:[%s951] sm:$0x30]
    %vm953 = vcmask 1045508
    %v954 = vsel %vm953, %v952, %v950
    %955 = vrot.lane.b32.xlu0 %v954, 110
    %v956 = vpop.permute.xlu0 %955
    %vm957 = vcmask 23552
    %s958 = scalar_lea.vmem %s1, 774
    %959 = vst.msk [vmem:[%s958] ss:$16 sm:$0x3] %vm957, %v956
    %s960 = scalar_lea.vmem %s1, 774
    %961 = vst.msk [vmem:[%s960] ss:$16 sm:$0xc] %vm957, %v956
    %s962 = scalar_lea.vmem %s1, 774
    %963 = vst.msk [vmem:[%s962] ss:$16 sm:$0x30] %vm957, %v956
    %v964 = vld.sshfl [vmem:[#allocation0] sm:$0xff pattern:$0x99999810]
    %s965 = scalar_lea.vmem [#allocation0], 16
    %v966 = vld.sshfl [vmem:[%s965] sm:$0xff pattern:$0x98100000]
    %vm967 = vcmask 1047556
    %v968 = vsel %vm967, %v966, %v964
    %969 = vrot.lane.b32.xlu0 %v968, 107
    %v970 = vpop.permute.xlu0 %969
    %vm971 = vcmask 23552
    %s972 = scalar_lea.vmem %s1, 7
    %973 = vst.msk [vmem:[%s972] ss:$16 sm:$0x3] %vm971, %v970
    %s974 = scalar_lea.vmem %s1, 7
    %975 = vst.msk [vmem:[%s974] ss:$16 sm:$0xc] %vm971, %v970
    %s976 = scalar_lea.vmem %s1, 7
    %977 = vst.msk [vmem:[%s976] ss:$16 sm:$0x30] %vm971, %v970
    %s978 = scalar_lea.vmem %s1, 7
    %979 = vst.msk [vmem:[%s978] ss:$16 sm:$0xc0] %vm971, %v970
    %s980 = scalar_lea.vmem [#allocation0], 32
    %v981 = vld.sshfl [vmem:[%s980] sm:$0xff pattern:$0x99999810]
    %s982 = scalar_lea.vmem [#allocation0], 48
    %v983 = vld.sshfl [vmem:[%s982] sm:$0xff pattern:$0x98100000]
    %vm984 = vcmask 1047556
    %v985 = vsel %vm984, %v983, %v981
    %986 = vrot.lane.b32.xlu0 %v985, 107
    %v987 = vpop.permute.xlu0 %986
    %vm988 = vcmask 23552
    %s989 = scalar_lea.vmem %s1, 135
    %990 = vst.msk [vmem:[%s989] ss:$16 sm:$0x3] %vm988, %v987
    %s991 = scalar_lea.vmem %s1, 135
    %992 = vst.msk [vmem:[%s991] ss:$16 sm:$0xc] %vm988, %v987
    %s993 = scalar_lea.vmem %s1, 135
    %994 = vst.msk [vmem:[%s993] ss:$16 sm:$0x30] %vm988, %v987
    %s995 = scalar_lea.vmem %s1, 135
    %996 = vst.msk [vmem:[%s995] ss:$16 sm:$0xc0] %vm988, %v987
    %s997 = scalar_lea.vmem [#allocation0], 64
    %v998 = vld.sshfl [vmem:[%s997] sm:$0xff pattern:$0x99999810]
    %s999 = scalar_lea.vmem [#allocation0], 80
    %v1000 = vld.sshfl [vmem:[%s999] sm:$0xff pattern:$0x98100000]
    %vm1001 = vcmask 1047556
    %v1002 = vsel %vm1001, %v1000, %v998
    %1003 = vrot.lane.b32.xlu0 %v1002, 107
    %v1004 = vpop.permute.xlu0 %1003
    %vm1005 = vcmask 23552
    %s1006 = scalar_lea.vmem %s1, 263
    %1007 = vst.msk [vmem:[%s1006] ss:$16 sm:$0x3] %vm1005, %v1004
    %s1008 = scalar_lea.vmem %s1, 263
    %1009 = vst.msk [vmem:[%s1008] ss:$16 sm:$0xc] %vm1005, %v1004
    %s1010 = scalar_lea.vmem %s1, 263
    %1011 = vst.msk [vmem:[%s1010] ss:$16 sm:$0x30] %vm1005, %v1004
    %s1012 = scalar_lea.vmem %s1, 263
    %1013 = vst.msk [vmem:[%s1012] ss:$16 sm:$0xc0] %vm1005, %v1004
    %s1014 = scalar_lea.vmem [#allocation0], 96
    %v1015 = vld.sshfl [vmem:[%s1014] sm:$0xff pattern:$0x99999810]
    %s1016 = scalar_lea.vmem [#allocation0], 112
    %v1017 = vld.sshfl [vmem:[%s1016] sm:$0xff pattern:$0x98100000]
    %vm1018 = vcmask 1047556
    %v1019 = vsel %vm1018, %v1017, %v1015
    %1020 = vrot.lane.b32.xlu0 %v1019, 107
    %v1021 = vpop.permute.xlu0 %1020
    %vm1022 = vcmask 23552
    %s1023 = scalar_lea.vmem %s1, 391
    %1024 = vst.msk [vmem:[%s1023] ss:$16 sm:$0x3] %vm1022, %v1021
    %s1025 = scalar_lea.vmem %s1, 391
    %1026 = vst.msk [vmem:[%s1025] ss:$16 sm:$0xc] %vm1022, %v1021
    %s1027 = scalar_lea.vmem %s1, 391
    %1028 = vst.msk [vmem:[%s1027] ss:$16 sm:$0x30] %vm1022, %v1021
    %s1029 = scalar_lea.vmem %s1, 391
    %1030 = vst.msk [vmem:[%s1029] ss:$16 sm:$0xc0] %vm1022, %v1021
    %s1031 = scalar_lea.vmem [#allocation0], 128
    %v1032 = vld.sshfl [vmem:[%s1031] sm:$0xff pattern:$0x99999810]
    %s1033 = scalar_lea.vmem [#allocation0], 144
    %v1034 = vld.sshfl [vmem:[%s1033] sm:$0xff pattern:$0x98100000]
    %vm1035 = vcmask 1047556
    %v1036 = vsel %vm1035, %v1034, %v1032
    %1037 = vrot.lane.b32.xlu0 %v1036, 107
    %v1038 = vpop.permute.xlu0 %1037
    %vm1039 = vcmask 23552
    %s1040 = scalar_lea.vmem %s1, 519
    %1041 = vst.msk [vmem:[%s1040] ss:$16 sm:$0x3] %vm1039, %v1038
    %s1042 = scalar_lea.vmem %s1, 519
    %1043 = vst.msk [vmem:[%s1042] ss:$16 sm:$0xc] %vm1039, %v1038
    %s1044 = scalar_lea.vmem %s1, 519
    %1045 = vst.msk [vmem:[%s1044] ss:$16 sm:$0x30] %vm1039, %v1038
    %s1046 = scalar_lea.vmem %s1, 519
    %1047 = vst.msk [vmem:[%s1046] ss:$16 sm:$0xc0] %vm1039, %v1038
    %s1048 = scalar_lea.vmem [#allocation0], 160
    %v1049 = vld.sshfl [vmem:[%s1048] sm:$0xff pattern:$0x99999810]
    %s1050 = scalar_lea.vmem [#allocation0], 176
    %v1051 = vld.sshfl [vmem:[%s1050] sm:$0xff pattern:$0x98100000]
    %vm1052 = vcmask 1047556
    %v1053 = vsel %vm1052, %v1051, %v1049
    %1054 = vrot.lane.b32.xlu0 %v1053, 107
    %v1055 = vpop.permute.xlu0 %1054
    %vm1056 = vcmask 23552
    %s1057 = scalar_lea.vmem %s1, 647
    %1058 = vst.msk [vmem:[%s1057] ss:$16 sm:$0x3] %vm1056, %v1055
    %s1059 = scalar_lea.vmem %s1, 647
    %1060 = vst.msk [vmem:[%s1059] ss:$16 sm:$0xc] %vm1056, %v1055
    %s1061 = scalar_lea.vmem %s1, 647
    %1062 = vst.msk [vmem:[%s1061] ss:$16 sm:$0x30] %vm1056, %v1055
    %s1063 = scalar_lea.vmem %s1, 647
    %1064 = vst.msk [vmem:[%s1063] ss:$16 sm:$0xc0] %vm1056, %v1055
    %s1065 = scalar_lea.vmem [#allocation0], 192
    %v1066 = vld.sshfl [vmem:[%s1065] sm:$0xff pattern:$0x99999810]
    %s1067 = scalar_lea.vmem [#allocation0], 204
    %v1068 = vld [vmem:[%s1067] sm:$0x30]
    %vm1069 = vcmask 1045508
    %v1070 = vsel %vm1069, %v1068, %v1066
    %1071 = vrot.lane.b32.xlu0 %v1070, 107
    %v1072 = vpop.permute.xlu0 %1071
    %vm1073 = vcmask 23552
    %s1074 = scalar_lea.vmem %s1, 775
    %1075 = vst.msk [vmem:[%s1074] ss:$16 sm:$0x3] %vm1073, %v1072
    %s1076 = scalar_lea.vmem %s1, 775
    %1077 = vst.msk [vmem:[%s1076] ss:$16 sm:$0xc] %vm1073, %v1072
    %s1078 = scalar_lea.vmem %s1, 775
    %1079 = vst.msk [vmem:[%s1078] ss:$16 sm:$0x30] %vm1073, %v1072
    %v1080 = vld.sshfl [vmem:[#allocation0] sm:$0xff pattern:$0x99999810]
    %s1081 = scalar_lea.vmem [#allocation0], 16
    %v1082 = vld.sshfl [vmem:[%s1081] sm:$0xff pattern:$0x98100000]
    %vm1083 = vcmask 1047556
    %v1084 = vsel %vm1083, %v1082, %v1080
    %1085 = vrot.lane.b32.xlu0 %v1084, 104
    %v1086 = vpop.permute.xlu0 %1085
    %vm1087 = vcmask 23552
    %s1088 = scalar_lea.vmem %s1, 8
    %1089 = vst.msk [vmem:[%s1088] ss:$16 sm:$0x3] %vm1087, %v1086
    %s1090 = scalar_lea.vmem %s1, 8
    %1091 = vst.msk [vmem:[%s1090] ss:$16 sm:$0xc] %vm1087, %v1086
    %s1092 = scalar_lea.vmem %s1, 8
    %1093 = vst.msk [vmem:[%s1092] ss:$16 sm:$0x30] %vm1087, %v1086
    %s1094 = scalar_lea.vmem %s1, 8
    %1095 = vst.msk [vmem:[%s1094] ss:$16 sm:$0xc0] %vm1087, %v1086
    %s1096 = scalar_lea.vmem [#allocation0], 32
    %v1097 = vld.sshfl [vmem:[%s1096] sm:$0xff pattern:$0x99999810]
    %s1098 = scalar_lea.vmem [#allocation0], 48
    %v1099 = vld.sshfl [vmem:[%s1098] sm:$0xff pattern:$0x98100000]
    %vm1100 = vcmask 1047556
    %v1101 = vsel %vm1100, %v1099, %v1097
    %1102 = vrot.lane.b32.xlu0 %v1101, 104
    %v1103 = vpop.permute.xlu0 %1102
    %vm1104 = vcmask 23552
    %s1105 = scalar_lea.vmem %s1, 136
    %1106 = vst.msk [vmem:[%s1105] ss:$16 sm:$0x3] %vm1104, %v1103
    %s1107 = scalar_lea.vmem %s1, 136
    %1108 = vst.msk [vmem:[%s1107] ss:$16 sm:$0xc] %vm1104, %v1103
    %s1109 = scalar_lea.vmem %s1, 136
    %1110 = vst.msk [vmem:[%s1109] ss:$16 sm:$0x30] %vm1104, %v1103
    %s1111 = scalar_lea.vmem %s1, 136
    %1112 = vst.msk [vmem:[%s1111] ss:$16 sm:$0xc0] %vm1104, %v1103
    %s1113 = scalar_lea.vmem [#allocation0], 64
    %v1114 = vld.sshfl [vmem:[%s1113] sm:$0xff pattern:$0x99999810]
    %s1115 = scalar_lea.vmem [#allocation0], 80
    %v1116 = vld.sshfl [vmem:[%s1115] sm:$0xff pattern:$0x98100000]
    %vm1117 = vcmask 1047556
    %v1118 = vsel %vm1117, %v1116, %v1114
    %1119 = vrot.lane.b32.xlu0 %v1118, 104
    %v1120 = vpop.permute.xlu0 %1119
    %vm1121 = vcmask 23552
    %s1122 = scalar_lea.vmem %s1, 264
    %1123 = vst.msk [vmem:[%s1122] ss:$16 sm:$0x3] %vm1121, %v1120
    %s1124 = scalar_lea.vmem %s1, 264
    %1125 = vst.msk [vmem:[%s1124] ss:$16 sm:$0xc] %vm1121, %v1120
    %s1126 = scalar_lea.vmem %s1, 264
    %1127 = vst.msk [vmem:[%s1126] ss:$16 sm:$0x30] %vm1121, %v1120
    %s1128 = scalar_lea.vmem %s1, 264
    %1129 = vst.msk [vmem:[%s1128] ss:$16 sm:$0xc0] %vm1121, %v1120
    %s1130 = scalar_lea.vmem [#allocation0], 96
    %v1131 = vld.sshfl [vmem:[%s1130] sm:$0xff pattern:$0x99999810]
    %s1132 = scalar_lea.vmem [#allocation0], 112
    %v1133 = vld.sshfl [vmem:[%s1132] sm:$0xff pattern:$0x98100000]
    %vm1134 = vcmask 1047556
    %v1135 = vsel %vm1134, %v1133, %v1131
    %1136 = vrot.lane.b32.xlu0 %v1135, 104
    %v1137 = vpop.permute.xlu0 %1136
    %vm1138 = vcmask 23552
    %s1139 = scalar_lea.vmem %s1, 392
    %1140 = vst.msk [vmem:[%s1139] ss:$16 sm:$0x3] %vm1138, %v1137
    %s1141 = scalar_lea.vmem %s1, 392
    %1142 = vst.msk [vmem:[%s1141] ss:$16 sm:$0xc] %vm1138, %v1137
    %s1143 = scalar_lea.vmem %s1, 392
    %1144 = vst.msk [vmem:[%s1143] ss:$16 sm:$0x30] %vm1138, %v1137
    %s1145 = scalar_lea.vmem %s1, 392
    %1146 = vst.msk [vmem:[%s1145] ss:$16 sm:$0xc0] %vm1138, %v1137
    %s1147 = scalar_lea.vmem [#allocation0], 128
    %v1148 = vld.sshfl [vmem:[%s1147] sm:$0xff pattern:$0x99999810]
    %s1149 = scalar_lea.vmem [#allocation0], 144
    %v1150 = vld.sshfl [vmem:[%s1149] sm:$0xff pattern:$0x98100000]
    %vm1151 = vcmask 1047556
    %v1152 = vsel %vm1151, %v1150, %v1148
    %1153 = vrot.lane.b32.xlu0 %v1152, 104
    %v1154 = vpop.permute.xlu0 %1153
    %vm1155 = vcmask 23552
    %s1156 = scalar_lea.vmem %s1, 520
    %1157 = vst.msk [vmem:[%s1156] ss:$16 sm:$0x3] %vm1155, %v1154
    %s1158 = scalar_lea.vmem %s1, 520
    %1159 = vst.msk [vmem:[%s1158] ss:$16 sm:$0xc] %vm1155, %v1154
    %s1160 = scalar_lea.vmem %s1, 520
    %1161 = vst.msk [vmem:[%s1160] ss:$16 sm:$0x30] %vm1155, %v1154
    %s1162 = scalar_lea.vmem %s1, 520
    %1163 = vst.msk [vmem:[%s1162] ss:$16 sm:$0xc0] %vm1155, %v1154
    %s1164 = scalar_lea.vmem [#allocation0], 160
    %v1165 = vld.sshfl [vmem:[%s1164] sm:$0xff pattern:$0x99999810]
    %s1166 = scalar_lea.vmem [#allocation0], 176
    %v1167 = vld.sshfl [vmem:[%s1166] sm:$0xff pattern:$0x98100000]
    %vm1168 = vcmask 1047556
    %v1169 = vsel %vm1168, %v1167, %v1165
    %1170 = vrot.lane.b32.xlu0 %v1169, 104
    %v1171 = vpop.permute.xlu0 %1170
    %vm1172 = vcmask 23552
    %s1173 = scalar_lea.vmem %s1, 648
    %1174 = vst.msk [vmem:[%s1173] ss:$16 sm:$0x3] %vm1172, %v1171
    %s1175 = scalar_lea.vmem %s1, 648
    %1176 = vst.msk [vmem:[%s1175] ss:$16 sm:$0xc] %vm1172, %v1171
    %s1177 = scalar_lea.vmem %s1, 648
    %1178 = vst.msk [vmem:[%s1177] ss:$16 sm:$0x30] %vm1172, %v1171
    %s1179 = scalar_lea.vmem %s1, 648
    %1180 = vst.msk [vmem:[%s1179] ss:$16 sm:$0xc0] %vm1172, %v1171
    %s1181 = scalar_lea.vmem [#allocation0], 192
    %v1182 = vld.sshfl [vmem:[%s1181] sm:$0xff pattern:$0x99999810]
    %s1183 = scalar_lea.vmem [#allocation0], 204
    %v1184 = vld [vmem:[%s1183] sm:$0x30]
    %vm1185 = vcmask 1045508
    %v1186 = vsel %vm1185, %v1184, %v1182
    %1187 = vrot.lane.b32.xlu0 %v1186, 104
    %v1188 = vpop.permute.xlu0 %1187
    %vm1189 = vcmask 23552
    %s1190 = scalar_lea.vmem %s1, 776
    %1191 = vst.msk [vmem:[%s1190] ss:$16 sm:$0x3] %vm1189, %v1188
    %s1192 = scalar_lea.vmem %s1, 776
    %1193 = vst.msk [vmem:[%s1192] ss:$16 sm:$0xc] %vm1189, %v1188
    %s1194 = scalar_lea.vmem %s1, 776
    %1195 = vst.msk [vmem:[%s1194] ss:$16 sm:$0x30] %vm1189, %v1188

// kernel: _convnet_forward_impl.1
$region0: #{_convnet_forward_impl.1}
  #allocation0 [shape = 'u32[]', space=smem, size = 0x4, offset = 0x4, fixed_abs, tag = 'smem constant byte address 0x4 - core index']
  #allocation1 [shape = 'u32[144,128]{1,0:T(1,128)}', space=vmem, size = 0x12000, scoped, tag = 'internal scratch']
  #allocation2 [shape = 'f32[192,128]{1,0:T(8,128)}', space=vmem, size = 0x18000, scoped, tag = 'scratch operand']
  %s0 = inlined_call_operand.vmem [shape: f32[9,9,9,128], index: 0, kind: input, shape index: {}]
  %s1 = inlined_call_operand.vmem [shape: f32[3,9], index: 1, kind: input, shape index: {}]
  %s2 = inlined_call_operand.vmem [shape: f32[3], index: 2, kind: input, shape index: {}]
  %s3 = inlined_call_operand.vmem [shape: f32[10,192], index: 3, kind: input, shape index: {}]
  %s4 = inlined_call_operand.vmem [shape: f32[10,1], index: 4, kind: input, shape index: {}]
  %s5 = inlined_call_operand.vmem [shape: f32[10,128], index: 5, kind: output, shape index: {}]
  %s6 = sld [smem:[#allocation0]]
  $region38: #{_convnet_forward_impl.1} parent=0
    _
  %s8 = ssub.s32 1, %s6
  %s9 = scalar_select 0, %s8, %s6
  $region1: #{_convnet_forward_impl.1} parent=0
    #allocation3 [shape = 'u8[2048]{0}', space=smem, size = 0x800, scoped, tag = 'input window, operand 1, single buffered']
    #allocation4 [shape = 's32[1]{0}', space=sflag, size = 0x4, scoped, tag = 'scoped memory for _convnet_forward_impl.1']
    #allocation5 [shape = 'u8[512]{0}', space=smem, size = 0x200, scoped, tag = 'input window, operand 2, single buffered']
    #allocation6 [shape = 's32[1]{0}', space=sflag, size = 0x4, scoped, tag = 'scoped memory for _convnet_forward_impl.1']
    %10 = vsyncpa [#allocation4], 0
    %11 = vsyncpa [#allocation6], 0
    // Predicated region
    $region2: #{_convnet_forward_impl.1} parent=1 // pred_check
      _
    $region3: #{_convnet_forward_impl.1} parent=1 // pred_check_branch
      %13 = sbr.rel (0) target = $region5
    $region4: #{_convnet_forward_impl.1} parent=1 // pred_region
      _
    $region5: #{_convnet_forward_impl.1} parent=1 // pred_fallthru
      _
    // Predicated region
    $region6: #{_convnet_forward_impl.1} parent=1 // pred_check
      _
    $region7: #{_convnet_forward_impl.1} parent=1 // pred_check_branch
      %15 = sbr.rel (0) target = $region9
    $region8: #{_convnet_forward_impl.1} parent=1 // pred_region
      %s17 = ssub.s32 64, 64
      %18 = vsyncadd [#allocation4], %s17
      %s20 = sshll.u32 %s1, 4
      %s21 = int_to_ptr.vmem [resolvable:$true] %s20
      %23 = dma.vmem_to_smem %s21, 64, [#allocation3], [#allocation4]
    $region9: #{_convnet_forward_impl.1} parent=1 // pred_fallthru
      _
    // Predicated region
    $region10: #{_convnet_forward_impl.1} parent=1 // pred_check
      _
    $region11: #{_convnet_forward_impl.1} parent=1 // pred_check_branch
      %25 = sbr.rel (0) target = $region13
    $region12: #{_convnet_forward_impl.1} parent=1 // pred_region
      %s27 = ssub.s32 16, 16
      %28 = vsyncadd [#allocation6], %s27
      %s30 = sshll.u32 %s2, 4
      %s31 = int_to_ptr.vmem [resolvable:$true] %s30
      %33 = dma.vmem_to_smem %s31, 16, [#allocation5], [#allocation6]
    $region13: #{_convnet_forward_impl.1} parent=1 // pred_fallthru
      _
    // Predicated region
    $region14: #{_convnet_forward_impl.1} parent=1 // pred_check
      _
    $region15: #{_convnet_forward_impl.1} parent=1 // pred_check_branch
      %35 = sbr.rel (0) target = $region17
    $region16: #{_convnet_forward_impl.1} parent=1 // pred_region
      _
    $region17: #{_convnet_forward_impl.1} parent=1 // pred_fallthru
      _
    // Predicated region
    $region18: #{_convnet_forward_impl.1} parent=1 // pred_check
      _
    $region19: #{_convnet_forward_impl.1} parent=1 // pred_check_branch
      %37 = sbr.rel (0) target = $region21
    $region20: #{_convnet_forward_impl.1} parent=1 // pred_region
      _
    $region21: #{_convnet_forward_impl.1} parent=1 // pred_fallthru
      _
    // Predicated region
    $region22: #{_convnet_forward_impl.1} parent=1 // pred_check
      _
    $region23: #{_convnet_forward_impl.1} parent=1 // pred_check_branch
      %39 = sbr.rel (0) target = $region25
    $region24: #{_convnet_forward_impl.1} parent=1 // pred_region
      %40 = dma.done [#allocation4], 64
    $region25: #{_convnet_forward_impl.1} parent=1 // pred_fallthru
      _
    // Predicated region
    $region26: #{_convnet_forward_impl.1} parent=1 // pred_check
      _
    $region27: #{_convnet_forward_impl.1} parent=1 // pred_check_branch
      %42 = sbr.rel (0) target = $region29
    $region28: #{_convnet_forward_impl.1} parent=1 // pred_region
      %43 = dma.done [#allocation6], 16
    $region29: #{_convnet_forward_impl.1} parent=1 // pred_fallthru
      _
    %44 = sfence
    %v45 = vld [vmem:[%s0] sm:$0xff]
    %v46 = vld [vmem:[%s0 + $0x10] sm:$0xff]
    %v47 = vld [vmem:[%s0 + $0x20] sm:$0xff]
    %v48 = vld [vmem:[%s0 + $0x30] sm:$0xff]
    %s49 = sld [smem:[#allocation3]]
    %v50 = vstv %s49
    %v51 = vmul.f32 %v50, %v45
    %v52 = vmul.f32 %v50, %v46
    %v53 = vmul.f32 %v50, %v47
    %v54 = vmul.f32 %v50, %v48
    %s55 = sld [smem:[#allocation3 + $0x80]]
    %v56 = vstv %s55
    %v57 = vmul.f32 %v56, %v45
    %v58 = vmul.f32 %v56, %v46
    %v59 = vmul.f32 %v56, %v47
    %v60 = vmul.f32 %v56, %v48
    %s61 = sld [smem:[#allocation3 + $0x100]]
    %v62 = vstv %s61
    %v63 = vmul.f32 %v62, %v45
    %v64 = vmul.f32 %v62, %v46
    %v65 = vmul.f32 %v62, %v47
    %v66 = vmul.f32 %v62, %v48
    %s67 = scalar_lea.vmem %s0, 144
    %v68 = vld [vmem:[%s67] sm:$0xff]
    %v69 = vld [vmem:[%s67 + $0x10] sm:$0xff]
    %v70 = vld [vmem:[%s67 + $0x20] sm:$0xff]
    %v71 = vld [vmem:[%s67 + $0x30] sm:$0xff]
    %s72 = sld [smem:[#allocation3 + $0x1]]
    %v73 = vstv %s72
    %v74 = vmul.f32 %v73, %v68
    %v75 = vmul.f32 %v73, %v69
    %v76 = vmul.f32 %v73, %v70
    %v77 = vmul.f32 %v73, %v71
    %v78 = vadd.f32 %v51, %v74
    %v79 = vadd.f32 %v52, %v75
    %v80 = vadd.f32 %v53, %v76
    %v81 = vadd.f32 %v54, %v77
    %s82 = sld [smem:[#allocation3 + $0x81]]
    %v83 = vstv %s82
    %v84 = vmul.f32 %v83, %v68
    %v85 = vmul.f32 %v83, %v69
    %v86 = vmul.f32 %v83, %v70
    %v87 = vmul.f32 %v83, %v71
    %v88 = vadd.f32 %v57, %v84
    %v89 = vadd.f32 %v58, %v85
    %v90 = vadd.f32 %v59, %v86
    %v91 = vadd.f32 %v60, %v87
    %s92 = sld [smem:[#allocation3 + $0x101]]
    %v93 = vstv %s92
    %v94 = vmul.f32 %v93, %v68
    %v95 = vmul.f32 %v93, %v69
    %v96 = vmul.f32 %v93, %v70
    %v97 = vmul.f32 %v93, %v71
    %v98 = vadd.f32 %v63, %v94
    %v99 = vadd.f32 %v64, %v95
    %v100 = vadd.f32 %v65, %v96
    %v101 = vadd.f32 %v66, %v97
    %s102 = scalar_lea.vmem %s0, 288
    %v103 = vld [vmem:[%s102] sm:$0xff]
    %v104 = vld [vmem:[%s102 + $0x10] sm:$0xff]
    %v105 = vld [vmem:[%s102 + $0x20] sm:$0xff]
    %v106 = vld [vmem:[%s102 + $0x30] sm:$0xff]
    %s107 = sld [smem:[#allocation3 + $0x2]]
    %v108 = vstv %s107
    %v109 = vmul.f32 %v108, %v103
    %v110 = vmul.f32 %v108, %v104
    %v111 = vmul.f32 %v108, %v105
    %v112 = vmul.f32 %v108, %v106
    %v113 = vadd.f32 %v78, %v109
    %v114 = vadd.f32 %v79, %v110
    %v115 = vadd.f32 %v80, %v111
    %v116 = vadd.f32 %v81, %v112
    %s117 = sld [smem:[#allocation3 + $0x82]]
    %v118 = vstv %s117
    %v119 = vmul.f32 %v118, %v103
    %v120 = vmul.f32 %v118, %v104
    %v121 = vmul.f32 %v118, %v105
    %v122 = vmul.f32 %v118, %v106
    %v123 = vadd.f32 %v88, %v119
    %v124 = vadd.f32 %v89, %v120
    %v125 = vadd.f32 %v90, %v121
    %v126 = vadd.f32 %v91, %v122
    %s127 = sld [smem:[#allocation3 + $0x102]]
    %v128 = vstv %s127
    %v129 = vmul.f32 %v128, %v103
    %v130 = vmul.f32 %v128, %v104
    %v131 = vmul.f32 %v128, %v105
    %v132 = vmul.f32 %v128, %v106
    %v133 = vadd.f32 %v98, %v129
    %v134 = vadd.f32 %v99, %v130
    %v135 = vadd.f32 %v100, %v131
    %v136 = vadd.f32 %v101, %v132
    %s137 = scalar_lea.vmem %s0, 432
    %v138 = vld [vmem:[%s137] sm:$0xff]
    %v139 = vld [vmem:[%s137 + $0x10] sm:$0xff]
    %v140 = vld [vmem:[%s137 + $0x20] sm:$0xff]
    %v141 = vld [vmem:[%s137 + $0x30] sm:$0xff]
    %s142 = sld [smem:[#allocation3 + $0x3]]
    %v143 = vstv %s142
    %v144 = vmul.f32 %v143, %v138
    %v145 = vmul.f32 %v143, %v139
    %v146 = vmul.f32 %v143, %v140
    %v147 = vmul.f32 %v143, %v141
    %v148 = vadd.f32 %v113, %v144
    %v149 = vadd.f32 %v114, %v145
    %v150 = vadd.f32 %v115, %v146
    %v151 = vadd.f32 %v116, %v147
    %s152 = sld [smem:[#allocation3 + $0x83]]
    %v153 = vstv %s152
    %v154 = vmul.f32 %v153, %v138
    %v155 = vmul.f32 %v153, %v139
    %v156 = vmul.f32 %v153, %v140
    %v157 = vmul.f32 %v153, %v141
    %v158 = vadd.f32 %v123, %v154
    %v159 = vadd.f32 %v124, %v155
    %v160 = vadd.f32 %v125, %v156
    %v161 = vadd.f32 %v126, %v157
    %s162 = sld [smem:[#allocation3 + $0x103]]
    %v163 = vstv %s162
    %v164 = vmul.f32 %v163, %v138
    %v165 = vmul.f32 %v163, %v139
    %v166 = vmul.f32 %v163, %v140
    %v167 = vmul.f32 %v163, %v141
    %v168 = vadd.f32 %v133, %v164
    %v169 = vadd.f32 %v134, %v165
    %v170 = vadd.f32 %v135, %v166
    %v171 = vadd.f32 %v136, %v167
    %s172 = scalar_lea.vmem %s0, 576
    %v173 = vld [vmem:[%s172] sm:$0xff]
    %v174 = vld [vmem:[%s172 + $0x10] sm:$0xff]
    %v175 = vld [vmem:[%s172 + $0x20] sm:$0xff]
    %v176 = vld [vmem:[%s172 + $0x30] sm:$0xff]
    %s177 = sld [smem:[#allocation3 + $0x4]]
    %v178 = vstv %s177
    %v179 = vmul.f32 %v178, %v173
    %v180 = vmul.f32 %v178, %v174
    %v181 = vmul.f32 %v178, %v175
    %v182 = vmul.f32 %v178, %v176
    %v183 = vadd.f32 %v148, %v179
    %v184 = vadd.f32 %v149, %v180
    %v185 = vadd.f32 %v150, %v181
    %v186 = vadd.f32 %v151, %v182
    %s187 = sld [smem:[#allocation3 + $0x84]]
    %v188 = vstv %s187
    %v189 = vmul.f32 %v188, %v173
    %v190 = vmul.f32 %v188, %v174
    %v191 = vmul.f32 %v188, %v175
    %v192 = vmul.f32 %v188, %v176
    %v193 = vadd.f32 %v158, %v189
    %v194 = vadd.f32 %v159, %v190
    %v195 = vadd.f32 %v160, %v191
    %v196 = vadd.f32 %v161, %v192
    %s197 = sld [smem:[#allocation3 + $0x104]]
    %v198 = vstv %s197
    %v199 = vmul.f32 %v198, %v173
    %v200 = vmul.f32 %v198, %v174
    %v201 = vmul.f32 %v198, %v175
    %v202 = vmul.f32 %v198, %v176
    %v203 = vadd.f32 %v168, %v199
    %v204 = vadd.f32 %v169, %v200
    %v205 = vadd.f32 %v170, %v201
    %v206 = vadd.f32 %v171, %v202
    %s207 = scalar_lea.vmem %s0, 720
    %v208 = vld [vmem:[%s207] sm:$0xff]
    %v209 = vld [vmem:[%s207 + $0x10] sm:$0xff]
    %v210 = vld [vmem:[%s207 + $0x20] sm:$0xff]
    %v211 = vld [vmem:[%s207 + $0x30] sm:$0xff]
    %s212 = sld [smem:[#allocation3 + $0x5]]
    %v213 = vstv %s212
    %v214 = vmul.f32 %v213, %v208
    %v215 = vmul.f32 %v213, %v209
    %v216 = vmul.f32 %v213, %v210
    %v217 = vmul.f32 %v213, %v211
    %v218 = vadd.f32 %v183, %v214
    %v219 = vadd.f32 %v184, %v215
    %v220 = vadd.f32 %v185, %v216
    %v221 = vadd.f32 %v186, %v217
    %s222 = sld [smem:[#allocation3 + $0x85]]
    %v223 = vstv %s222
    %v224 = vmul.f32 %v223, %v208
    %v225 = vmul.f32 %v223, %v209
    %v226 = vmul.f32 %v223, %v210
    %v227 = vmul.f32 %v223, %v211
    %v228 = vadd.f32 %v193, %v224
    %v229 = vadd.f32 %v194, %v225
    %v230 = vadd.f32 %v195, %v226
    %v231 = vadd.f32 %v196, %v227
    %s232 = sld [smem:[#allocation3 + $0x105]]
    %v233 = vstv %s232
    %v234 = vmul.f32 %v233, %v208
    %v235 = vmul.f32 %v233, %v209
    %v236 = vmul.f32 %v233, %v210
    %v237 = vmul.f32 %v233, %v211
    %v238 = vadd.f32 %v203, %v234
    %v239 = vadd.f32 %v204, %v235
    %v240 = vadd.f32 %v205, %v236
    %v241 = vadd.f32 %v206, %v237
    %s242 = scalar_lea.vmem %s0, 864
    %v243 = vld [vmem:[%s242] sm:$0xff]
    %v244 = vld [vmem:[%s242 + $0x10] sm:$0xff]
    %v245 = vld [vmem:[%s242 + $0x20] sm:$0xff]
    %v246 = vld [vmem:[%s242 + $0x30] sm:$0xff]
    %s247 = sld [smem:[#allocation3 + $0x6]]
    %v248 = vstv %s247
    %v249 = vmul.f32 %v248, %v243
    %v250 = vmul.f32 %v248, %v244
    %v251 = vmul.f32 %v248, %v245
    %v252 = vmul.f32 %v248, %v246
    %v253 = vadd.f32 %v218, %v249
    %v254 = vadd.f32 %v219, %v250
    %v255 = vadd.f32 %v220, %v251
    %v256 = vadd.f32 %v221, %v252
    %s257 = sld [smem:[#allocation3 + $0x86]]
    %v258 = vstv %s257
    %v259 = vmul.f32 %v258, %v243
    %v260 = vmul.f32 %v258, %v244
    %v261 = vmul.f32 %v258, %v245
    %v262 = vmul.f32 %v258, %v246
    %v263 = vadd.f32 %v228, %v259
    %v264 = vadd.f32 %v229, %v260
    %v265 = vadd.f32 %v230, %v261
    %v266 = vadd.f32 %v231, %v262
    %s267 = sld [smem:[#allocation3 + $0x106]]
    %v268 = vstv %s267
    %v269 = vmul.f32 %v268, %v243
    %v270 = vmul.f32 %v268, %v244
    %v271 = vmul.f32 %v268, %v245
    %v272 = vmul.f32 %v268, %v246
    %v273 = vadd.f32 %v238, %v269
    %v274 = vadd.f32 %v239, %v270
    %v275 = vadd.f32 %v240, %v271
    %v276 = vadd.f32 %v241, %v272
    %s277 = scalar_lea.vmem %s0, 1008
    %v278 = vld [vmem:[%s277] sm:$0xff]
    %v279 = vld [vmem:[%s277 + $0x10] sm:$0xff]
    %v280 = vld [vmem:[%s277 + $0x20] sm:$0xff]
    %v281 = vld [vmem:[%s277 + $0x30] sm:$0xff]
    %s282 = sld [smem:[#allocation3 + $0x7]]
    %v283 = vstv %s282
    %v284 = vmul.f32 %v283, %v278
    %v285 = vmul.f32 %v283, %v279
    %v286 = vmul.f32 %v283, %v280
    %v287 = vmul.f32 %v283, %v281
    %v288 = vadd.f32 %v253, %v284
    %v289 = vadd.f32 %v254, %v285
    %v290 = vadd.f32 %v255, %v286
    %v291 = vadd.f32 %v256, %v287
    %s292 = sld [smem:[#allocation3 + $0x87]]
    %v293 = vstv %s292
    %v294 = vmul.f32 %v293, %v278
    %v295 = vmul.f32 %v293, %v279
    %v296 = vmul.f32 %v293, %v280
    %v297 = vmul.f32 %v293, %v281
    %v298 = vadd.f32 %v263, %v294
    %v299 = vadd.f32 %v264, %v295
    %v300 = vadd.f32 %v265, %v296
    %v301 = vadd.f32 %v266, %v297
    %s302 = sld [smem:[#allocation3 + $0x107]]
    %v303 = vstv %s302
    %v304 = vmul.f32 %v303, %v278
    %v305 = vmul.f32 %v303, %v279
    %v306 = vmul.f32 %v303, %v280
    %v307 = vmul.f32 %v303, %v281
    %v308 = vadd.f32 %v273, %v304
    %v309 = vadd.f32 %v274, %v305
    %v310 = vadd.f32 %v275, %v306
    %v311 = vadd.f32 %v276, %v307
    %s312 = scalar_lea.vmem %s0, 1152
    %v313 = vld [vmem:[%s312] sm:$0xff]
    %v314 = vld [vmem:[%s312 + $0x10] sm:$0xff]
    %v315 = vld [vmem:[%s312 + $0x20] sm:$0xff]
    %v316 = vld [vmem:[%s312 + $0x30] sm:$0xff]
    %s317 = sld [smem:[#allocation3 + $0x8]]
    %v318 = vstv %s317
    %v319 = vmul.f32 %v318, %v313
    %v320 = vmul.f32 %v318, %v314
    %v321 = vmul.f32 %v318, %v315
    %v322 = vmul.f32 %v318, %v316
    %v323 = vadd.f32 %v288, %v319
    %v324 = vadd.f32 %v289, %v320
    %v325 = vadd.f32 %v290, %v321
    %v326 = vadd.f32 %v291, %v322
    %s327 = sld [smem:[#allocation3 + $0x88]]
    %v328 = vstv %s327
    %v329 = vmul.f32 %v328, %v313
    %v330 = vmul.f32 %v328, %v314
    %v331 = vmul.f32 %v328, %v315
    %v332 = vmul.f32 %v328, %v316
    %v333 = vadd.f32 %v298, %v329
    %v334 = vadd.f32 %v299, %v330
    %v335 = vadd.f32 %v300, %v331
    %v336 = vadd.f32 %v301, %v332
    %s337 = sld [smem:[#allocation3 + $0x108]]
    %v338 = vstv %s337
    %v339 = vmul.f32 %v338, %v313
    %v340 = vmul.f32 %v338, %v314
    %v341 = vmul.f32 %v338, %v315
    %v342 = vmul.f32 %v338, %v316
    %v343 = vadd.f32 %v308, %v339
    %v344 = vadd.f32 %v309, %v340
    %v345 = vadd.f32 %v310, %v341
    %v346 = vadd.f32 %v311, %v342
    %v347 = vmul.f32 %v50, %v68
    %v348 = vmul.f32 %v50, %v69
    %v349 = vmul.f32 %v50, %v70
    %v350 = vmul.f32 %v50, %v71
    %v351 = vmul.f32 %v56, %v68
    %v352 = vmul.f32 %v56, %v69
    %v353 = vmul.f32 %v56, %v70
    %v354 = vmul.f32 %v56, %v71
    %v355 = vmul.f32 %v62, %v68
    %v356 = vmul.f32 %v62, %v69
    %v357 = vmul.f32 %v62, %v70
    %v358 = vmul.f32 %v62, %v71
    %v359 = vmul.f32 %v73, %v103
    %v360 = vmul.f32 %v73, %v104
    %v361 = vmul.f32 %v73, %v105
    %v362 = vmul.f32 %v73, %v106
    %v363 = vadd.f32 %v347, %v359
    %v364 = vadd.f32 %v348, %v360
    %v365 = vadd.f32 %v349, %v361
    %v366 = vadd.f32 %v350, %v362
    %v367 = vmul.f32 %v83, %v103
    %v368 = vmul.f32 %v83, %v104
    %v369 = vmul.f32 %v83, %v105
    %v370 = vmul.f32 %v83, %v106
    %v371 = vadd.f32 %v351, %v367
    %v372 = vadd.f32 %v352, %v368
    %v373 = vadd.f32 %v353, %v369
    %v374 = vadd.f32 %v354, %v370
    %v375 = vmul.f32 %v93, %v103
    %v376 = vmul.f32 %v93, %v104
    %v377 = vmul.f32 %v93, %v105
    %v378 = vmul.f32 %v93, %v106
    %v379 = vadd.f32 %v355, %v375
    %v380 = vadd.f32 %v356, %v376
    %v381 = vadd.f32 %v357, %v377
    %v382 = vadd.f32 %v358, %v378
    %v383 = vld [vmem:[%s0 + $0x1] sm:$0xff]
    %v384 = vld [vmem:[%s0 + $0x11] sm:$0xff]
    %v385 = vld [vmem:[%s0 + $0x21] sm:$0xff]
    %v386 = vld [vmem:[%s0 + $0x31] sm:$0xff]
    %v387 = vmul.f32 %v108, %v383
    %v388 = vmul.f32 %v108, %v384
    %v389 = vmul.f32 %v108, %v385
    %v390 = vmul.f32 %v108, %v386
    %v391 = vadd.f32 %v363, %v387
    %v392 = vadd.f32 %v364, %v388
    %v393 = vadd.f32 %v365, %v389
    %v394 = vadd.f32 %v366, %v390
    %v395 = vmul.f32 %v118, %v383
    %v396 = vmul.f32 %v118, %v384
    %v397 = vmul.f32 %v118, %v385
    %v398 = vmul.f32 %v118, %v386
    %v399 = vadd.f32 %v371, %v395
    %v400 = vadd.f32 %v372, %v396
    %v401 = vadd.f32 %v373, %v397
    %v402 = vadd.f32 %v374, %v398
    %v403 = vmul.f32 %v128, %v383
    %v404 = vmul.f32 %v128, %v384
    %v405 = vmul.f32 %v128, %v385
    %v406 = vmul.f32 %v128, %v386
    %v407 = vadd.f32 %v379, %v403
    %v408 = vadd.f32 %v380, %v404
    %v409 = vadd.f32 %v381, %v405
    %v410 = vadd.f32 %v382, %v406
    %v411 = vmul.f32 %v143, %v173
    %v412 = vmul.f32 %v143, %v174
    %v413 = vmul.f32 %v143, %v175
    %v414 = vmul.f32 %v143, %v176
    %v415 = vadd.f32 %v391, %v411
    %v416 = vadd.f32 %v392, %v412
    %v417 = vadd.f32 %v393, %v413
    %v418 = vadd.f32 %v394, %v414
    %v419 = vmul.f32 %v153, %v173
    %v420 = vmul.f32 %v153, %v174
    %v421 = vmul.f32 %v153, %v175
    %v422 = vmul.f32 %v153, %v176
    %v423 = vadd.f32 %v399, %v419
    %v424 = vadd.f32 %v400, %v420
    %v425 = vadd.f32 %v401, %v421
    %v426 = vadd.f32 %v402, %v422
    %v427 = vmul.f32 %v163, %v173
    %v428 = vmul.f32 %v163, %v174
    %v429 = vmul.f32 %v163, %v175
    %v430 = vmul.f32 %v163, %v176
    %v431 = vadd.f32 %v407, %v427
    %v432 = vadd.f32 %v408, %v428
    %v433 = vadd.f32 %v409, %v429
    %v434 = vadd.f32 %v410, %v430
    %v435 = vmul.f32 %v178, %v208
    %v436 = vmul.f32 %v178, %v209
    %v437 = vmul.f32 %v178, %v210
    %v438 = vmul.f32 %v178, %v211
    %v439 = vadd.f32 %v415, %v435
    %v440 = vadd.f32 %v416, %v436
    %v441 = vadd.f32 %v417, %v437
    %v442 = vadd.f32 %v418, %v438
    %v443 = vmul.f32 %v188, %v208
    %v444 = vmul.f32 %v188, %v209
    %v445 = vmul.f32 %v188, %v210
    %v446 = vmul.f32 %v188, %v211
    %v447 = vadd.f32 %v423, %v443
    %v448 = vadd.f32 %v424, %v444
    %v449 = vadd.f32 %v425, %v445
    %v450 = vadd.f32 %v426, %v446
    %v451 = vmul.f32 %v198, %v208
    %v452 = vmul.f32 %v198, %v209
    %v453 = vmul.f32 %v198, %v210
    %v454 = vmul.f32 %v198, %v211
    %v455 = vadd.f32 %v431, %v451
    %v456 = vadd.f32 %v432, %v452
    %v457 = vadd.f32 %v433, %v453
    %v458 = vadd.f32 %v434, %v454
    %v459 = vld [vmem:[%s137 + $0x1] sm:$0xff]
    %v460 = vld [vmem:[%s137 + $0x11] sm:$0xff]
    %v461 = vld [vmem:[%s137 + $0x21] sm:$0xff]
    %v462 = vld [vmem:[%s137 + $0x31] sm:$0xff]
    %v463 = vmul.f32 %v213, %v459
    %v464 = vmul.f32 %v213, %v460
    %v465 = vmul.f32 %v213, %v461
    %v466 = vmul.f32 %v213, %v462
    %v467 = vadd.f32 %v439, %v463
    %v468 = vadd.f32 %v440, %v464
    %v469 = vadd.f32 %v441, %v465
    %v470 = vadd.f32 %v442, %v466
    %v471 = vmul.f32 %v223, %v459
    %v472 = vmul.f32 %v223, %v460
    %v473 = vmul.f32 %v223, %v461
    %v474 = vmul.f32 %v223, %v462
    %v475 = vadd.f32 %v447, %v471
    %v476 = vadd.f32 %v448, %v472
    %v477 = vadd.f32 %v449, %v473
    %v478 = vadd.f32 %v450, %v474
    %v479 = vmul.f32 %v233, %v459
    %v480 = vmul.f32 %v233, %v460
    %v481 = vmul.f32 %v233, %v461
    %v482 = vmul.f32 %v233, %v462
    %v483 = vadd.f32 %v455, %v479
    %v484 = vadd.f32 %v456, %v480
    %v485 = vadd.f32 %v457, %v481
    %v486 = vadd.f32 %v458, %v482
    %v487 = vmul.f32 %v248, %v278
    %v488 = vmul.f32 %v248, %v279
    %v489 = vmul.f32 %v248, %v280
    %v490 = vmul.f32 %v248, %v281
    %v491 = vadd.f32 %v467, %v487
    %v492 = vadd.f32 %v468, %v488
    %v493 = vadd.f32 %v469, %v489
    %v494 = vadd.f32 %v470, %v490
    %v495 = vmul.f32 %v258, %v278
    %v496 = vmul.f32 %v258, %v279
    %v497 = vmul.f32 %v258, %v280
    %v498 = vmul.f32 %v258, %v281
    %v499 = vadd.f32 %v475, %v495
    %v500 = vadd.f32 %v476, %v496
    %v501 = vadd.f32 %v477, %v497
    %v502 = vadd.f32 %v478, %v498
    %v503 = vmul.f32 %v268, %v278
    %v504 = vmul.f32 %v268, %v279
    %v505 = vmul.f32 %v268, %v280
    %v506 = vmul.f32 %v268, %v281
    %v507 = vadd.f32 %v483, %v503
    %v508 = vadd.f32 %v484, %v504
    %v509 = vadd.f32 %v485, %v505
    %v510 = vadd.f32 %v486, %v506
    %v511 = vmul.f32 %v283, %v313
    %v512 = vmul.f32 %v283, %v314
    %v513 = vmul.f32 %v283, %v315
    %v514 = vmul.f32 %v283, %v316
    %v515 = vadd.f32 %v491, %v511
    %v516 = vadd.f32 %v492, %v512
    %v517 = vadd.f32 %v493, %v513
    %v518 = vadd.f32 %v494, %v514
    %v519 = vmul.f32 %v293, %v313
    %v520 = vmul.f32 %v293, %v314
    %v521 = vmul.f32 %v293, %v315
    %v522 = vmul.f32 %v293, %v316
    %v523 = vadd.f32 %v499, %v519
    %v524 = vadd.f32 %v500, %v520
    %v525 = vadd.f32 %v501, %v521
    %v526 = vadd.f32 %v502, %v522
    %v527 = vmul.f32 %v303, %v313
    %v528 = vmul.f32 %v303, %v314
    %v529 = vmul.f32 %v303, %v315
    %v530 = vmul.f32 %v303, %v316
    %v531 = vadd.f32 %v507, %v527
    %v532 = vadd.f32 %v508, %v528
    %v533 = vadd.f32 %v509, %v529
    %v534 = vadd.f32 %v510, %v530
    %v535 = vld [vmem:[%s242 + $0x1] sm:$0xff]
    %v536 = vld [vmem:[%s242 + $0x11] sm:$0xff]
    %v537 = vld [vmem:[%s242 + $0x21] sm:$0xff]
    %v538 = vld [vmem:[%s242 + $0x31] sm:$0xff]
    %v539 = vmul.f32 %v318, %v535
    %v540 = vmul.f32 %v318, %v536
    %v541 = vmul.f32 %v318, %v537
    %v542 = vmul.f32 %v318, %v538
    %v543 = vadd.f32 %v515, %v539
    %v544 = vadd.f32 %v516, %v540
    %v545 = vadd.f32 %v517, %v541
    %v546 = vadd.f32 %v518, %v542
    %v547 = vmul.f32 %v328, %v535
    %v548 = vmul.f32 %v328, %v536
    %v549 = vmul.f32 %v328, %v537
    %v550 = vmul.f32 %v328, %v538
    %v551 = vadd.f32 %v523, %v547
    %v552 = vadd.f32 %v524, %v548
    %v553 = vadd.f32 %v525, %v549
    %v554 = vadd.f32 %v526, %v550
    %v555 = vmul.f32 %v338, %v535
    %v556 = vmul.f32 %v338, %v536
    %v557 = vmul.f32 %v338, %v537
    %v558 = vmul.f32 %v338, %v538
    %v559 = vadd.f32 %v531, %v555
    %v560 = vadd.f32 %v532, %v556
    %v561 = vadd.f32 %v533, %v557
    %v562 = vadd.f32 %v534, %v558
    %v563 = vmax.f32 %v323, %v543
    %v564 = vmax.f32 %v324, %v544
    %v565 = vmax.f32 %v325, %v545
    %v566 = vmax.f32 %v326, %v546
    %v567 = vmax.f32 %v333, %v551
    %v568 = vmax.f32 %v334, %v552
    %v569 = vmax.f32 %v335, %v553
    %v570 = vmax.f32 %v336, %v554
    %v571 = vmax.f32 %v343, %v559
    %v572 = vmax.f32 %v344, %v560
    %v573 = vmax.f32 %v345, %v561
    %v574 = vmax.f32 %v346, %v562
    %v575 = vmul.f32 %v50, %v103
    %v576 = vmul.f32 %v50, %v104
    %v577 = vmul.f32 %v50, %v105
    %v578 = vmul.f32 %v50, %v106
    %v579 = vmul.f32 %v56, %v103
    %v580 = vmul.f32 %v56, %v104
    %v581 = vmul.f32 %v56, %v105
    %v582 = vmul.f32 %v56, %v106
    %v583 = vmul.f32 %v62, %v103
    %v584 = vmul.f32 %v62, %v104
    %v585 = vmul.f32 %v62, %v105
    %v586 = vmul.f32 %v62, %v106
    %v587 = vmul.f32 %v73, %v383
    %v588 = vmul.f32 %v73, %v384
    %v589 = vmul.f32 %v73, %v385
    %v590 = vmul.f32 %v73, %v386
    %v591 = vadd.f32 %v575, %v587
    %v592 = vadd.f32 %v576, %v588
    %v593 = vadd.f32 %v577, %v589
    %v594 = vadd.f32 %v578, %v590
    %v595 = vmul.f32 %v83, %v383
    %v596 = vmul.f32 %v83, %v384
    %v597 = vmul.f32 %v83, %v385
    %v598 = vmul.f32 %v83, %v386
    %v599 = vadd.f32 %v579, %v595
    %v600 = vadd.f32 %v580, %v596
    %v601 = vadd.f32 %v581, %v597
    %v602 = vadd.f32 %v582, %v598
    %v603 = vmul.f32 %v93, %v383
    %v604 = vmul.f32 %v93, %v384
    %v605 = vmul.f32 %v93, %v385
    %v606 = vmul.f32 %v93, %v386
    %v607 = vadd.f32 %v583, %v603
    %v608 = vadd.f32 %v584, %v604
    %v609 = vadd.f32 %v585, %v605
    %v610 = vadd.f32 %v586, %v606
    %v611 = vld [vmem:[%s67 + $0x1] sm:$0xff]
    %v612 = vld [vmem:[%s67 + $0x11] sm:$0xff]
    %v613 = vld [vmem:[%s67 + $0x21] sm:$0xff]
    %v614 = vld [vmem:[%s67 + $0x31] sm:$0xff]
    %v615 = vmul.f32 %v108, %v611
    %v616 = vmul.f32 %v108, %v612
    %v617 = vmul.f32 %v108, %v613
    %v618 = vmul.f32 %v108, %v614
    %v619 = vadd.f32 %v591, %v615
    %v620 = vadd.f32 %v592, %v616
    %v621 = vadd.f32 %v593, %v617
    %v622 = vadd.f32 %v594, %v618
    %v623 = vmul.f32 %v118, %v611
    %v624 = vmul.f32 %v118, %v612
    %v625 = vmul.f32 %v118, %v613
    %v626 = vmul.f32 %v118, %v614
    %v627 = vadd.f32 %v599, %v623
    %v628 = vadd.f32 %v600, %v624
    %v629 = vadd.f32 %v601, %v625
    %v630 = vadd.f32 %v602, %v626
    %v631 = vmul.f32 %v128, %v611
    %v632 = vmul.f32 %v128, %v612
    %v633 = vmul.f32 %v128, %v613
    %v634 = vmul.f32 %v128, %v614
    %v635 = vadd.f32 %v607, %v631
    %v636 = vadd.f32 %v608, %v632
    %v637 = vadd.f32 %v609, %v633
    %v638 = vadd.f32 %v610, %v634
    %v639 = vmul.f32 %v143, %v208
    %v640 = vmul.f32 %v143, %v209
    %v641 = vmul.f32 %v143, %v210
    %v642 = vmul.f32 %v143, %v211
    %v643 = vadd.f32 %v619, %v639
    %v644 = vadd.f32 %v620, %v640
    %v645 = vadd.f32 %v621, %v641
    %v646 = vadd.f32 %v622, %v642
    %v647 = vmul.f32 %v153, %v208
    %v648 = vmul.f32 %v153, %v209
    %v649 = vmul.f32 %v153, %v210
    %v650 = vmul.f32 %v153, %v211
    %v651 = vadd.f32 %v627, %v647
    %v652 = vadd.f32 %v628, %v648
    %v653 = vadd.f32 %v629, %v649
    %v654 = vadd.f32 %v630, %v650
    %v655 = vmul.f32 %v163, %v208
    %v656 = vmul.f32 %v163, %v209
    %v657 = vmul.f32 %v163, %v210
    %v658 = vmul.f32 %v163, %v211
    %v659 = vadd.f32 %v635, %v655
    %v660 = vadd.f32 %v636, %v656
    %v661 = vadd.f32 %v637, %v657
    %v662 = vadd.f32 %v638, %v658
    %v663 = vmul.f32 %v178, %v459
    %v664 = vmul.f32 %v178, %v460
    %v665 = vmul.f32 %v178, %v461
    %v666 = vmul.f32 %v178, %v462
    %v667 = vadd.f32 %v643, %v663
    %v668 = vadd.f32 %v644, %v664
    %v669 = vadd.f32 %v645, %v665
    %v670 = vadd.f32 %v646, %v666
    %v671 = vmul.f32 %v188, %v459
    %v672 = vmul.f32 %v188, %v460
    %v673 = vmul.f32 %v188, %v461
    %v674 = vmul.f32 %v188, %v462
    %v675 = vadd.f32 %v651, %v671
    %v676 = vadd.f32 %v652, %v672
    %v677 = vadd.f32 %v653, %v673
    %v678 = vadd.f32 %v654, %v674
    %v679 = vmul.f32 %v198, %v459
    %v680 = vmul.f32 %v198, %v460
    %v681 = vmul.f32 %v198, %v461
    %v682 = vmul.f32 %v198, %v462
    %v683 = vadd.f32 %v659, %v679
    %v684 = vadd.f32 %v660, %v680
    %v685 = vadd.f32 %v661, %v681
    %v686 = vadd.f32 %v662, %v682
    %v687 = vld [vmem:[%s172 + $0x1] sm:$0xff]
    %v688 = vld [vmem:[%s172 + $0x11] sm:$0xff]
    %v689 = vld [vmem:[%s172 + $0x21] sm:$0xff]
    %v690 = vld [vmem:[%s172 + $0x31] sm:$0xff]
    %v691 = vmul.f32 %v213, %v687
    %v692 = vmul.f32 %v213, %v688
    %v693 = vmul.f32 %v213, %v689
    %v694 = vmul.f32 %v213, %v690
    %v695 = vadd.f32 %v667, %v691
    %v696 = vadd.f32 %v668, %v692
    %v697 = vadd.f32 %v669, %v693
    %v698 = vadd.f32 %v670, %v694
    %v699 = vmul.f32 %v223, %v687
    %v700 = vmul.f32 %v223, %v688
    %v701 = vmul.f32 %v223, %v689
    %v702 = vmul.f32 %v223, %v690
    %v703 = vadd.f32 %v675, %v699
    %v704 = vadd.f32 %v676, %v700
    %v705 = vadd.f32 %v677, %v701
    %v706 = vadd.f32 %v678, %v702
    %v707 = vmul.f32 %v233, %v687
    %v708 = vmul.f32 %v233, %v688
    %v709 = vmul.f32 %v233, %v689
    %v710 = vmul.f32 %v233, %v690
    %v711 = vadd.f32 %v683, %v707
    %v712 = vadd.f32 %v684, %v708
    %v713 = vadd.f32 %v685, %v709
    %v714 = vadd.f32 %v686, %v710
    %v715 = vmul.f32 %v248, %v313
    %v716 = vmul.f32 %v248, %v314
    %v717 = vmul.f32 %v248, %v315
    %v718 = vmul.f32 %v248, %v316
    %v719 = vadd.f32 %v695, %v715
    %v720 = vadd.f32 %v696, %v716
    %v721 = vadd.f32 %v697, %v717
    %v722 = vadd.f32 %v698, %v718
    %v723 = vmul.f32 %v258, %v313
    %v724 = vmul.f32 %v258, %v314
    %v725 = vmul.f32 %v258, %v315
    %v726 = vmul.f32 %v258, %v316
    %v727 = vadd.f32 %v703, %v723
    %v728 = vadd.f32 %v704, %v724
    %v729 = vadd.f32 %v705, %v725
    %v730 = vadd.f32 %v706, %v726
    %v731 = vmul.f32 %v268, %v313
    %v732 = vmul.f32 %v268, %v314
    %v733 = vmul.f32 %v268, %v315
    %v734 = vmul.f32 %v268, %v316
    %v735 = vadd.f32 %v711, %v731
    %v736 = vadd.f32 %v712, %v732
    %v737 = vadd.f32 %v713, %v733
    %v738 = vadd.f32 %v714, %v734
    %v739 = vmul.f32 %v283, %v535
    %v740 = vmul.f32 %v283, %v536
    %v741 = vmul.f32 %v283, %v537
    %v742 = vmul.f32 %v283, %v538
    %v743 = vadd.f32 %v719, %v739
    %v744 = vadd.f32 %v720, %v740
    %v745 = vadd.f32 %v721, %v741
    %v746 = vadd.f32 %v722, %v742
    %v747 = vmul.f32 %v293, %v535
    %v748 = vmul.f32 %v293, %v536
    %v749 = vmul.f32 %v293, %v537
    %v750 = vmul.f32 %v293, %v538
    %v751 = vadd.f32 %v727, %v747
    %v752 = vadd.f32 %v728, %v748
    %v753 = vadd.f32 %v729, %v749
    %v754 = vadd.f32 %v730, %v750
    %v755 = vmul.f32 %v303, %v535
    %v756 = vmul.f32 %v303, %v536
    %v757 = vmul.f32 %v303, %v537
    %v758 = vmul.f32 %v303, %v538
    %v759 = vadd.f32 %v735, %v755
    %v760 = vadd.f32 %v736, %v756
    %v761 = vadd.f32 %v737, %v757
    %v762 = vadd.f32 %v738, %v758
    %v763 = vld [vmem:[%s277 + $0x1] sm:$0xff]
    %v764 = vld [vmem:[%s277 + $0x11] sm:$0xff]
    %v765 = vld [vmem:[%s277 + $0x21] sm:$0xff]
    %v766 = vld [vmem:[%s277 + $0x31] sm:$0xff]
    %v767 = vmul.f32 %v318, %v763
    %v768 = vmul.f32 %v318, %v764
    %v769 = vmul.f32 %v318, %v765
    %v770 = vmul.f32 %v318, %v766
    %v771 = vadd.f32 %v743, %v767
    %v772 = vadd.f32 %v744, %v768
    %v773 = vadd.f32 %v745, %v769
    %v774 = vadd.f32 %v746, %v770
    %v775 = vmul.f32 %v328, %v763
    %v776 = vmul.f32 %v328, %v764
    %v777 = vmul.f32 %v328, %v765
    %v778 = vmul.f32 %v328, %v766
    %v779 = vadd.f32 %v751, %v775
    %v780 = vadd.f32 %v752, %v776
    %v781 = vadd.f32 %v753, %v777
    %v782 = vadd.f32 %v754, %v778
    %v783 = vmul.f32 %v338, %v763
    %v784 = vmul.f32 %v338, %v764
    %v785 = vmul.f32 %v338, %v765
    %v786 = vmul.f32 %v338, %v766
    %v787 = vadd.f32 %v759, %v783
    %v788 = vadd.f32 %v760, %v784
    %v789 = vadd.f32 %v761, %v785
    %v790 = vadd.f32 %v762, %v786
    %v791 = vmax.f32 %v563, %v771
    %v792 = vmax.f32 %v564, %v772
    %v793 = vmax.f32 %v565, %v773
    %v794 = vmax.f32 %v566, %v774
    %v795 = vmax.f32 %v567, %v779
    %v796 = vmax.f32 %v568, %v780
    %v797 = vmax.f32 %v569, %v781
    %v798 = vmax.f32 %v570, %v782
    %v799 = vmax.f32 %v571, %v787
    %v800 = vmax.f32 %v572, %v788
    %v801 = vmax.f32 %v573, %v789
    %v802 = vmax.f32 %v574, %v790
    %v803 = vmul.f32 %v50, %v138
    %v804 = vmul.f32 %v50, %v139
    %v805 = vmul.f32 %v50, %v140
    %v806 = vmul.f32 %v50, %v141
    %v807 = vmul.f32 %v56, %v138
    %v808 = vmul.f32 %v56, %v139
    %v809 = vmul.f32 %v56, %v140
    %v810 = vmul.f32 %v56, %v141
    %v811 = vmul.f32 %v62, %v138
    %v812 = vmul.f32 %v62, %v139
    %v813 = vmul.f32 %v62, %v140
    %v814 = vmul.f32 %v62, %v141
    %v815 = vmul.f32 %v73, %v173
    %v816 = vmul.f32 %v73, %v174
    %v817 = vmul.f32 %v73, %v175
    %v818 = vmul.f32 %v73, %v176
    %v819 = vadd.f32 %v803, %v815
    %v820 = vadd.f32 %v804, %v816
    %v821 = vadd.f32 %v805, %v817
    %v822 = vadd.f32 %v806, %v818
    %v823 = vmul.f32 %v83, %v173
    %v824 = vmul.f32 %v83, %v174
    %v825 = vmul.f32 %v83, %v175
    %v826 = vmul.f32 %v83, %v176
    %v827 = vadd.f32 %v807, %v823
    %v828 = vadd.f32 %v808, %v824
    %v829 = vadd.f32 %v809, %v825
    %v830 = vadd.f32 %v810, %v826
    %v831 = vmul.f32 %v93, %v173
    %v832 = vmul.f32 %v93, %v174
    %v833 = vmul.f32 %v93, %v175
    %v834 = vmul.f32 %v93, %v176
    %v835 = vadd.f32 %v811, %v831
    %v836 = vadd.f32 %v812, %v832
    %v837 = vadd.f32 %v813, %v833
    %v838 = vadd.f32 %v814, %v834
    %v839 = vmul.f32 %v108, %v208
    %v840 = vmul.f32 %v108, %v209
    %v841 = vmul.f32 %v108, %v210
    %v842 = vmul.f32 %v108, %v211
    %v843 = vadd.f32 %v819, %v839
    %v844 = vadd.f32 %v820, %v840
    %v845 = vadd.f32 %v821, %v841
    %v846 = vadd.f32 %v822, %v842
    %v847 = vmul.f32 %v118, %v208
    %v848 = vmul.f32 %v118, %v209
    %v849 = vmul.f32 %v118, %v210
    %v850 = vmul.f32 %v118, %v211
    %v851 = vadd.f32 %v827, %v847
    %v852 = vadd.f32 %v828, %v848
    %v853 = vadd.f32 %v829, %v849
    %v854 = vadd.f32 %v830, %v850
    %v855 = vmul.f32 %v128, %v208
    %v856 = vmul.f32 %v128, %v209
    %v857 = vmul.f32 %v128, %v210
    %v858 = vmul.f32 %v128, %v211
    %v859 = vadd.f32 %v835, %v855
    %v860 = vadd.f32 %v836, %v856
    %v861 = vadd.f32 %v837, %v857
    %v862 = vadd.f32 %v838, %v858
    %v863 = vmul.f32 %v143, %v243
    %v864 = vmul.f32 %v143, %v244
    %v865 = vmul.f32 %v143, %v245
    %v866 = vmul.f32 %v143, %v246
    %v867 = vadd.f32 %v843, %v863
    %v868 = vadd.f32 %v844, %v864
    %v869 = vadd.f32 %v845, %v865
    %v870 = vadd.f32 %v846, %v866
    %v871 = vmul.f32 %v153, %v243
    %v872 = vmul.f32 %v153, %v244
    %v873 = vmul.f32 %v153, %v245
    %v874 = vmul.f32 %v153, %v246
    %v875 = vadd.f32 %v851, %v871
    %v876 = vadd.f32 %v852, %v872
    %v877 = vadd.f32 %v853, %v873
    %v878 = vadd.f32 %v854, %v874
    %v879 = vmul.f32 %v163, %v243
    %v880 = vmul.f32 %v163, %v244
    %v881 = vmul.f32 %v163, %v245
    %v882 = vmul.f32 %v163, %v246
    %v883 = vadd.f32 %v859, %v879
    %v884 = vadd.f32 %v860, %v880
    %v885 = vadd.f32 %v861, %v881
    %v886 = vadd.f32 %v862, %v882
    %v887 = vmul.f32 %v178, %v278
    %v888 = vmul.f32 %v178, %v279
    %v889 = vmul.f32 %v178, %v280
    %v890 = vmul.f32 %v178, %v281
    %v891 = vadd.f32 %v867, %v887
    %v892 = vadd.f32 %v868, %v888
    %v893 = vadd.f32 %v869, %v889
    %v894 = vadd.f32 %v870, %v890
    %v895 = vmul.f32 %v188, %v278
    %v896 = vmul.f32 %v188, %v279
    %v897 = vmul.f32 %v188, %v280
    %v898 = vmul.f32 %v188, %v281
    %v899 = vadd.f32 %v875, %v895
    %v900 = vadd.f32 %v876, %v896
    %v901 = vadd.f32 %v877, %v897
    %v902 = vadd.f32 %v878, %v898
    %v903 = vmul.f32 %v198, %v278
    %v904 = vmul.f32 %v198, %v279
    %v905 = vmul.f32 %v198, %v280
    %v906 = vmul.f32 %v198, %v281
    %v907 = vadd.f32 %v883, %v903
    %v908 = vadd.f32 %v884, %v904
    %v909 = vadd.f32 %v885, %v905
    %v910 = vadd.f32 %v886, %v906
    %v911 = vmul.f32 %v213, %v313
    %v912 = vmul.f32 %v213, %v314
    %v913 = vmul.f32 %v213, %v315
    %v914 = vmul.f32 %v213, %v316
    %v915 = vadd.f32 %v891, %v911
    %v916 = vadd.f32 %v892, %v912
    %v917 = vadd.f32 %v893, %v913
    %v918 = vadd.f32 %v894, %v914
    %v919 = vmul.f32 %v223, %v313
    %v920 = vmul.f32 %v223, %v314
    %v921 = vmul.f32 %v223, %v315
    %v922 = vmul.f32 %v223, %v316
    %v923 = vadd.f32 %v899, %v919
    %v924 = vadd.f32 %v900, %v920
    %v925 = vadd.f32 %v901, %v921
    %v926 = vadd.f32 %v902, %v922
    %v927 = vmul.f32 %v233, %v313
    %v928 = vmul.f32 %v233, %v314
    %v929 = vmul.f32 %v233, %v315
    %v930 = vmul.f32 %v233, %v316
    %v931 = vadd.f32 %v907, %v927
    %v932 = vadd.f32 %v908, %v928
    %v933 = vadd.f32 %v909, %v929
    %v934 = vadd.f32 %v910, %v930
    %s935 = scalar_lea.vmem %s0, 16
    %v936 = vld [vmem:[%s935] sm:$0xff]
    %v937 = vld [vmem:[%s935 + $0x10] sm:$0xff]
    %v938 = vld [vmem:[%s935 + $0x20] sm:$0xff]
    %v939 = vld [vmem:[%s935 + $0x30] sm:$0xff]
    %v940 = vmul.f32 %v248, %v936
    %v941 = vmul.f32 %v248, %v937
    %v942 = vmul.f32 %v248, %v938
    %v943 = vmul.f32 %v248, %v939
    %v944 = vadd.f32 %v915, %v940
    %v945 = vadd.f32 %v916, %v941
    %v946 = vadd.f32 %v917, %v942
    %v947 = vadd.f32 %v918, %v943
    %v948 = vmul.f32 %v258, %v936
    %v949 = vmul.f32 %v258, %v937
    %v950 = vmul.f32 %v258, %v938
    %v951 = vmul.f32 %v258, %v939
    %v952 = vadd.f32 %v923, %v948
    %v953 = vadd.f32 %v924, %v949
    %v954 = vadd.f32 %v925, %v950
    %v955 = vadd.f32 %v926, %v951
    %v956 = vmul.f32 %v268, %v936
    %v957 = vmul.f32 %v268, %v937
    %v958 = vmul.f32 %v268, %v938
    %v959 = vmul.f32 %v268, %v939
    %v960 = vadd.f32 %v931, %v956
    %v961 = vadd.f32 %v932, %v957
    %v962 = vadd.f32 %v933, %v958
    %v963 = vadd.f32 %v934, %v959
    %s964 = scalar_lea.vmem %s0, 160
    %v965 = vld [vmem:[%s964] sm:$0xff]
    %v966 = vld [vmem:[%s964 + $0x10] sm:$0xff]
    %v967 = vld [vmem:[%s964 + $0x20] sm:$0xff]
    %v968 = vld [vmem:[%s964 + $0x30] sm:$0xff]
    %v969 = vmul.f32 %v283, %v965
    %v970 = vmul.f32 %v283, %v966
    %v971 = vmul.f32 %v283, %v967
    %v972 = vmul.f32 %v283, %v968
    %v973 = vadd.f32 %v944, %v969
    %v974 = vadd.f32 %v945, %v970
    %v975 = vadd.f32 %v946, %v971
    %v976 = vadd.f32 %v947, %v972
    %v977 = vmul.f32 %v293, %v965
    %v978 = vmul.f32 %v293, %v966
    %v979 = vmul.f32 %v293, %v967
    %v980 = vmul.f32 %v293, %v968
    %v981 = vadd.f32 %v952, %v977
    %v982 = vadd.f32 %v953, %v978
    %v983 = vadd.f32 %v954, %v979
    %v984 = vadd.f32 %v955, %v980
    %v985 = vmul.f32 %v303, %v965
    %v986 = vmul.f32 %v303, %v966
    %v987 = vmul.f32 %v303, %v967
    %v988 = vmul.f32 %v303, %v968
    %v989 = vadd.f32 %v960, %v985
    %v990 = vadd.f32 %v961, %v986
    %v991 = vadd.f32 %v962, %v987
    %v992 = vadd.f32 %v963, %v988
    %s993 = scalar_lea.vmem %s0, 304
    %v994 = vld [vmem:[%s993] sm:$0xff]
    %v995 = vld [vmem:[%s993 + $0x10] sm:$0xff]
    %v996 = vld [vmem:[%s993 + $0x20] sm:$0xff]
    %v997 = vld [vmem:[%s993 + $0x30] sm:$0xff]
    %v998 = vmul.f32 %v318, %v994
    %v999 = vmul.f32 %v318, %v995
    %v1000 = vmul.f32 %v318, %v996
    %v1001 = vmul.f32 %v318, %v997
    %v1002 = vadd.f32 %v973, %v998
    %v1003 = vadd.f32 %v974, %v999
    %v1004 = vadd.f32 %v975, %v1000
    %v1005 = vadd.f32 %v976, %v1001
    %v1006 = vmul.f32 %v328, %v994
    %v1007 = vmul.f32 %v328, %v995
    %v1008 = vmul.f32 %v328, %v996
    %v1009 = vmul.f32 %v328, %v997
    %v1010 = vadd.f32 %v981, %v1006
    %v1011 = vadd.f32 %v982, %v1007
    %v1012 = vadd.f32 %v983, %v1008
    %v1013 = vadd.f32 %v984, %v1009
    %v1014 = vmul.f32 %v338, %v994
    %v1015 = vmul.f32 %v338, %v995
    %v1016 = vmul.f32 %v338, %v996
    %v1017 = vmul.f32 %v338, %v997
    %v1018 = vadd.f32 %v989, %v1014
    %v1019 = vadd.f32 %v990, %v1015
    %v1020 = vadd.f32 %v991, %v1016
    %v1021 = vadd.f32 %v992, %v1017
    %v1022 = vmax.f32 %v791, %v1002
    %v1023 = vmax.f32 %v792, %v1003
    %v1024 = vmax.f32 %v793, %v1004
    %v1025 = vmax.f32 %v794, %v1005
    %v1026 = vmax.f32 %v795, %v1010
    %v1027 = vmax.f32 %v796, %v1011
    %v1028 = vmax.f32 %v797, %v1012
    %v1029 = vmax.f32 %v798, %v1013
    %v1030 = vmax.f32 %v799, %v1018
    %v1031 = vmax.f32 %v800, %v1019
    %v1032 = vmax.f32 %v801, %v1020
    %v1033 = vmax.f32 %v802, %v1021
    %v1034 = vmul.f32 %v50, %v173
    %v1035 = vmul.f32 %v50, %v174
    %v1036 = vmul.f32 %v50, %v175
    %v1037 = vmul.f32 %v50, %v176
    %v1038 = vmul.f32 %v56, %v173
    %v1039 = vmul.f32 %v56, %v174
    %v1040 = vmul.f32 %v56, %v175
    %v1041 = vmul.f32 %v56, %v176
    %v1042 = vmul.f32 %v62, %v173
    %v1043 = vmul.f32 %v62, %v174
    %v1044 = vmul.f32 %v62, %v175
    %v1045 = vmul.f32 %v62, %v176
    %v1046 = vmul.f32 %v73, %v208
    %v1047 = vmul.f32 %v73, %v209
    %v1048 = vmul.f32 %v73, %v210
    %v1049 = vmul.f32 %v73, %v211
    %v1050 = vadd.f32 %v1034, %v1046
    %v1051 = vadd.f32 %v1035, %v1047
    %v1052 = vadd.f32 %v1036, %v1048
    %v1053 = vadd.f32 %v1037, %v1049
    %v1054 = vmul.f32 %v83, %v208
    %v1055 = vmul.f32 %v83, %v209
    %v1056 = vmul.f32 %v83, %v210
    %v1057 = vmul.f32 %v83, %v211
    %v1058 = vadd.f32 %v1038, %v1054
    %v1059 = vadd.f32 %v1039, %v1055
    %v1060 = vadd.f32 %v1040, %v1056
    %v1061 = vadd.f32 %v1041, %v1057
    %v1062 = vmul.f32 %v93, %v208
    %v1063 = vmul.f32 %v93, %v209
    %v1064 = vmul.f32 %v93, %v210
    %v1065 = vmul.f32 %v93, %v211
    %v1066 = vadd.f32 %v1042, %v1062
    %v1067 = vadd.f32 %v1043, %v1063
    %v1068 = vadd.f32 %v1044, %v1064
    %v1069 = vadd.f32 %v1045, %v1065
    %v1070 = vmul.f32 %v108, %v459
    %v1071 = vmul.f32 %v108, %v460
    %v1072 = vmul.f32 %v108, %v461
    %v1073 = vmul.f32 %v108, %v462
    %v1074 = vadd.f32 %v1050, %v1070
    %v1075 = vadd.f32 %v1051, %v1071
    %v1076 = vadd.f32 %v1052, %v1072
    %v1077 = vadd.f32 %v1053, %v1073
    %v1078 = vmul.f32 %v118, %v459
    %v1079 = vmul.f32 %v118, %v460
    %v1080 = vmul.f32 %v118, %v461
    %v1081 = vmul.f32 %v118, %v462
    %v1082 = vadd.f32 %v1058, %v1078
    %v1083 = vadd.f32 %v1059, %v1079
    %v1084 = vadd.f32 %v1060, %v1080
    %v1085 = vadd.f32 %v1061, %v1081
    %v1086 = vmul.f32 %v128, %v459
    %v1087 = vmul.f32 %v128, %v460
    %v1088 = vmul.f32 %v128, %v461
    %v1089 = vmul.f32 %v128, %v462
    %v1090 = vadd.f32 %v1066, %v1086
    %v1091 = vadd.f32 %v1067, %v1087
    %v1092 = vadd.f32 %v1068, %v1088
    %v1093 = vadd.f32 %v1069, %v1089
    %v1094 = vmul.f32 %v143, %v278
    %v1095 = vmul.f32 %v143, %v279
    %v1096 = vmul.f32 %v143, %v280
    %v1097 = vmul.f32 %v143, %v281
    %v1098 = vadd.f32 %v1074, %v1094
    %v1099 = vadd.f32 %v1075, %v1095
    %v1100 = vadd.f32 %v1076, %v1096
    %v1101 = vadd.f32 %v1077, %v1097
    %v1102 = vmul.f32 %v153, %v278
    %v1103 = vmul.f32 %v153, %v279
    %v1104 = vmul.f32 %v153, %v280
    %v1105 = vmul.f32 %v153, %v281
    %v1106 = vadd.f32 %v1082, %v1102
    %v1107 = vadd.f32 %v1083, %v1103
    %v1108 = vadd.f32 %v1084, %v1104
    %v1109 = vadd.f32 %v1085, %v1105
    %v1110 = vmul.f32 %v163, %v278
    %v1111 = vmul.f32 %v163, %v279
    %v1112 = vmul.f32 %v163, %v280
    %v1113 = vmul.f32 %v163, %v281
    %v1114 = vadd.f32 %v1090, %v1110
    %v1115 = vadd.f32 %v1091, %v1111
    %v1116 = vadd.f32 %v1092, %v1112
    %v1117 = vadd.f32 %v1093, %v1113
    %v1118 = vmul.f32 %v178, %v313
    %v1119 = vmul.f32 %v178, %v314
    %v1120 = vmul.f32 %v178, %v315
    %v1121 = vmul.f32 %v178, %v316
    %v1122 = vadd.f32 %v1098, %v1118
    %v1123 = vadd.f32 %v1099, %v1119
    %v1124 = vadd.f32 %v1100, %v1120
    %v1125 = vadd.f32 %v1101, %v1121
    %v1126 = vmul.f32 %v188, %v313
    %v1127 = vmul.f32 %v188, %v314
    %v1128 = vmul.f32 %v188, %v315
    %v1129 = vmul.f32 %v188, %v316
    %v1130 = vadd.f32 %v1106, %v1126
    %v1131 = vadd.f32 %v1107, %v1127
    %v1132 = vadd.f32 %v1108, %v1128
    %v1133 = vadd.f32 %v1109, %v1129
    %v1134 = vmul.f32 %v198, %v313
    %v1135 = vmul.f32 %v198, %v314
    %v1136 = vmul.f32 %v198, %v315
    %v1137 = vmul.f32 %v198, %v316
    %v1138 = vadd.f32 %v1114, %v1134
    %v1139 = vadd.f32 %v1115, %v1135
    %v1140 = vadd.f32 %v1116, %v1136
    %v1141 = vadd.f32 %v1117, %v1137
    %v1142 = vmul.f32 %v213, %v535
    %v1143 = vmul.f32 %v213, %v536
    %v1144 = vmul.f32 %v213, %v537
    %v1145 = vmul.f32 %v213, %v538
    %v1146 = vadd.f32 %v1122, %v1142
    %v1147 = vadd.f32 %v1123, %v1143
    %v1148 = vadd.f32 %v1124, %v1144
    %v1149 = vadd.f32 %v1125, %v1145
    %v1150 = vmul.f32 %v223, %v535
    %v1151 = vmul.f32 %v223, %v536
    %v1152 = vmul.f32 %v223, %v537
    %v1153 = vmul.f32 %v223, %v538
    %v1154 = vadd.f32 %v1130, %v1150
    %v1155 = vadd.f32 %v1131, %v1151
    %v1156 = vadd.f32 %v1132, %v1152
    %v1157 = vadd.f32 %v1133, %v1153
    %v1158 = vmul.f32 %v233, %v535
    %v1159 = vmul.f32 %v233, %v536
    %v1160 = vmul.f32 %v233, %v537
    %v1161 = vmul.f32 %v233, %v538
    %v1162 = vadd.f32 %v1138, %v1158
    %v1163 = vadd.f32 %v1139, %v1159
    %v1164 = vadd.f32 %v1140, %v1160
    %v1165 = vadd.f32 %v1141, %v1161
    %v1166 = vmul.f32 %v248, %v965
    %v1167 = vmul.f32 %v248, %v966
    %v1168 = vmul.f32 %v248, %v967
    %v1169 = vmul.f32 %v248, %v968
    %v1170 = vadd.f32 %v1146, %v1166
    %v1171 = vadd.f32 %v1147, %v1167
    %v1172 = vadd.f32 %v1148, %v1168
    %v1173 = vadd.f32 %v1149, %v1169
    %v1174 = vmul.f32 %v258, %v965
    %v1175 = vmul.f32 %v258, %v966
    %v1176 = vmul.f32 %v258, %v967
    %v1177 = vmul.f32 %v258, %v968
    %v1178 = vadd.f32 %v1154, %v1174
    %v1179 = vadd.f32 %v1155, %v1175
    %v1180 = vadd.f32 %v1156, %v1176
    %v1181 = vadd.f32 %v1157, %v1177
    %v1182 = vmul.f32 %v268, %v965
    %v1183 = vmul.f32 %v268, %v966
    %v1184 = vmul.f32 %v268, %v967
    %v1185 = vmul.f32 %v268, %v968
    %v1186 = vadd.f32 %v1162, %v1182
    %v1187 = vadd.f32 %v1163, %v1183
    %v1188 = vadd.f32 %v1164, %v1184
    %v1189 = vadd.f32 %v1165, %v1185
    %v1190 = vmul.f32 %v283, %v994
    %v1191 = vmul.f32 %v283, %v995
    %v1192 = vmul.f32 %v283, %v996
    %v1193 = vmul.f32 %v283, %v997
    %v1194 = vadd.f32 %v1170, %v1190
    %v1195 = vadd.f32 %v1171, %v1191
    %v1196 = vadd.f32 %v1172, %v1192
    %v1197 = vadd.f32 %v1173, %v1193
    %v1198 = vmul.f32 %v293, %v994
    %v1199 = vmul.f32 %v293, %v995
    %v1200 = vmul.f32 %v293, %v996
    %v1201 = vmul.f32 %v293, %v997
    %v1202 = vadd.f32 %v1178, %v1198
    %v1203 = vadd.f32 %v1179, %v1199
    %v1204 = vadd.f32 %v1180, %v1200
    %v1205 = vadd.f32 %v1181, %v1201
    %v1206 = vmul.f32 %v303, %v994
    %v1207 = vmul.f32 %v303, %v995
    %v1208 = vmul.f32 %v303, %v996
    %v1209 = vmul.f32 %v303, %v997
    %v1210 = vadd.f32 %v1186, %v1206
    %v1211 = vadd.f32 %v1187, %v1207
    %v1212 = vadd.f32 %v1188, %v1208
    %v1213 = vadd.f32 %v1189, %v1209
    %v1214 = vld [vmem:[%s935 + $0x1] sm:$0xff]
    %v1215 = vld [vmem:[%s935 + $0x11] sm:$0xff]
    %v1216 = vld [vmem:[%s935 + $0x21] sm:$0xff]
    %v1217 = vld [vmem:[%s935 + $0x31] sm:$0xff]
    %v1218 = vmul.f32 %v318, %v1214
    %v1219 = vmul.f32 %v318, %v1215
    %v1220 = vmul.f32 %v318, %v1216
    %v1221 = vmul.f32 %v318, %v1217
    %v1222 = vadd.f32 %v1194, %v1218
    %v1223 = vadd.f32 %v1195, %v1219
    %v1224 = vadd.f32 %v1196, %v1220
    %v1225 = vadd.f32 %v1197, %v1221
    %v1226 = vmul.f32 %v328, %v1214
    %v1227 = vmul.f32 %v328, %v1215
    %v1228 = vmul.f32 %v328, %v1216
    %v1229 = vmul.f32 %v328, %v1217
    %v1230 = vadd.f32 %v1202, %v1226
    %v1231 = vadd.f32 %v1203, %v1227
    %v1232 = vadd.f32 %v1204, %v1228
    %v1233 = vadd.f32 %v1205, %v1229
    %v1234 = vmul.f32 %v338, %v1214
    %v1235 = vmul.f32 %v338, %v1215
    %v1236 = vmul.f32 %v338, %v1216
    %v1237 = vmul.f32 %v338, %v1217
    %v1238 = vadd.f32 %v1210, %v1234
    %v1239 = vadd.f32 %v1211, %v1235
    %v1240 = vadd.f32 %v1212, %v1236
    %v1241 = vadd.f32 %v1213, %v1237
    %v1242 = vmax.f32 %v1022, %v1222
    %v1243 = vmax.f32 %v1023, %v1223
    %v1244 = vmax.f32 %v1024, %v1224
    %v1245 = vmax.f32 %v1025, %v1225
    %v1246 = vmax.f32 %v1026, %v1230
    %v1247 = vmax.f32 %v1027, %v1231
    %v1248 = vmax.f32 %v1028, %v1232
    %v1249 = vmax.f32 %v1029, %v1233
    %v1250 = vmax.f32 %v1030, %v1238
    %v1251 = vmax.f32 %v1031, %v1239
    %v1252 = vmax.f32 %v1032, %v1240
    %v1253 = vmax.f32 %v1033, %v1241
    %v1254 = vmul.f32 %v50, %v208
    %v1255 = vmul.f32 %v50, %v209
    %v1256 = vmul.f32 %v50, %v210
    %v1257 = vmul.f32 %v50, %v211
    %v1258 = vmul.f32 %v56, %v208
    %v1259 = vmul.f32 %v56, %v209
    %v1260 = vmul.f32 %v56, %v210
    %v1261 = vmul.f32 %v56, %v211
    %v1262 = vmul.f32 %v62, %v208
    %v1263 = vmul.f32 %v62, %v209
    %v1264 = vmul.f32 %v62, %v210
    %v1265 = vmul.f32 %v62, %v211
    %v1266 = vmul.f32 %v73, %v459
    %v1267 = vmul.f32 %v73, %v460
    %v1268 = vmul.f32 %v73, %v461
    %v1269 = vmul.f32 %v73, %v462
    %v1270 = vadd.f32 %v1254, %v1266
    %v1271 = vadd.f32 %v1255, %v1267
    %v1272 = vadd.f32 %v1256, %v1268
    %v1273 = vadd.f32 %v1257, %v1269
    %v1274 = vmul.f32 %v83, %v459
    %v1275 = vmul.f32 %v83, %v460
    %v1276 = vmul.f32 %v83, %v461
    %v1277 = vmul.f32 %v83, %v462
    %v1278 = vadd.f32 %v1258, %v1274
    %v1279 = vadd.f32 %v1259, %v1275
    %v1280 = vadd.f32 %v1260, %v1276
    %v1281 = vadd.f32 %v1261, %v1277
    %v1282 = vmul.f32 %v93, %v459
    %v1283 = vmul.f32 %v93, %v460
    %v1284 = vmul.f32 %v93, %v461
    %v1285 = vmul.f32 %v93, %v462
    %v1286 = vadd.f32 %v1262, %v1282
    %v1287 = vadd.f32 %v1263, %v1283
    %v1288 = vadd.f32 %v1264, %v1284
    %v1289 = vadd.f32 %v1265, %v1285
    %v1290 = vmul.f32 %v108, %v687
    %v1291 = vmul.f32 %v108, %v688
    %v1292 = vmul.f32 %v108, %v689
    %v1293 = vmul.f32 %v108, %v690
    %v1294 = vadd.f32 %v1270, %v1290
    %v1295 = vadd.f32 %v1271, %v1291
    %v1296 = vadd.f32 %v1272, %v1292
    %v1297 = vadd.f32 %v1273, %v1293
    %v1298 = vmul.f32 %v118, %v687
    %v1299 = vmul.f32 %v118, %v688
    %v1300 = vmul.f32 %v118, %v689
    %v1301 = vmul.f32 %v118, %v690
    %v1302 = vadd.f32 %v1278, %v1298
    %v1303 = vadd.f32 %v1279, %v1299
    %v1304 = vadd.f32 %v1280, %v1300
    %v1305 = vadd.f32 %v1281, %v1301
    %v1306 = vmul.f32 %v128, %v687
    %v1307 = vmul.f32 %v128, %v688
    %v1308 = vmul.f32 %v128, %v689
    %v1309 = vmul.f32 %v128, %v690
    %v1310 = vadd.f32 %v1286, %v1306
    %v1311 = vadd.f32 %v1287, %v1307
    %v1312 = vadd.f32 %v1288, %v1308
    %v1313 = vadd.f32 %v1289, %v1309
    %v1314 = vmul.f32 %v143, %v313
    %v1315 = vmul.f32 %v143, %v314
    %v1316 = vmul.f32 %v143, %v315
    %v1317 = vmul.f32 %v143, %v316
    %v1318 = vadd.f32 %v1294, %v1314
    %v1319 = vadd.f32 %v1295, %v1315
    %v1320 = vadd.f32 %v1296, %v1316
    %v1321 = vadd.f32 %v1297, %v1317
    %v1322 = vmul.f32 %v153, %v313
    %v1323 = vmul.f32 %v153, %v314
    %v1324 = vmul.f32 %v153, %v315
    %v1325 = vmul.f32 %v153, %v316
    %v1326 = vadd.f32 %v1302, %v1322
    %v1327 = vadd.f32 %v1303, %v1323
    %v1328 = vadd.f32 %v1304, %v1324
    %v1329 = vadd.f32 %v1305, %v1325
    %v1330 = vmul.f32 %v163, %v313
    %v1331 = vmul.f32 %v163, %v314
    %v1332 = vmul.f32 %v163, %v315
    %v1333 = vmul.f32 %v163, %v316
    %v1334 = vadd.f32 %v1310, %v1330
    %v1335 = vadd.f32 %v1311, %v1331
    %v1336 = vadd.f32 %v1312, %v1332
    %v1337 = vadd.f32 %v1313, %v1333
    %v1338 = vmul.f32 %v178, %v535
    %v1339 = vmul.f32 %v178, %v536
    %v1340 = vmul.f32 %v178, %v537
    %v1341 = vmul.f32 %v178, %v538
    %v1342 = vadd.f32 %v1318, %v1338
    %v1343 = vadd.f32 %v1319, %v1339
    %v1344 = vadd.f32 %v1320, %v1340
    %v1345 = vadd.f32 %v1321, %v1341
    %v1346 = vmul.f32 %v188, %v535
    %v1347 = vmul.f32 %v188, %v536
    %v1348 = vmul.f32 %v188, %v537
    %v1349 = vmul.f32 %v188, %v538
    %v1350 = vadd.f32 %v1326, %v1346
    %v1351 = vadd.f32 %v1327, %v1347
    %v1352 = vadd.f32 %v1328, %v1348
    %v1353 = vadd.f32 %v1329, %v1349
    %v1354 = vmul.f32 %v198, %v535
    %v1355 = vmul.f32 %v198, %v536
    %v1356 = vmul.f32 %v198, %v537
    %v1357 = vmul.f32 %v198, %v538
    %v1358 = vadd.f32 %v1334, %v1354
    %v1359 = vadd.f32 %v1335, %v1355
    %v1360 = vadd.f32 %v1336, %v1356
    %v1361 = vadd.f32 %v1337, %v1357
    %v1362 = vmul.f32 %v213, %v763
    %v1363 = vmul.f32 %v213, %v764
    %v1364 = vmul.f32 %v213, %v765
    %v1365 = vmul.f32 %v213, %v766
    %v1366 = vadd.f32 %v1342, %v1362
    %v1367 = vadd.f32 %v1343, %v1363
    %v1368 = vadd.f32 %v1344, %v1364
    %v1369 = vadd.f32 %v1345, %v1365
    %v1370 = vmul.f32 %v223, %v763
    %v1371 = vmul.f32 %v223, %v764
    %v1372 = vmul.f32 %v223, %v765
    %v1373 = vmul.f32 %v223, %v766
    %v1374 = vadd.f32 %v1350, %v1370
    %v1375 = vadd.f32 %v1351, %v1371
    %v1376 = vadd.f32 %v1352, %v1372
    %v1377 = vadd.f32 %v1353, %v1373
    %v1378 = vmul.f32 %v233, %v763
    %v1379 = vmul.f32 %v233, %v764
    %v1380 = vmul.f32 %v233, %v765
    %v1381 = vmul.f32 %v233, %v766
    %v1382 = vadd.f32 %v1358, %v1378
    %v1383 = vadd.f32 %v1359, %v1379
    %v1384 = vadd.f32 %v1360, %v1380
    %v1385 = vadd.f32 %v1361, %v1381
    %v1386 = vmul.f32 %v248, %v994
    %v1387 = vmul.f32 %v248, %v995
    %v1388 = vmul.f32 %v248, %v996
    %v1389 = vmul.f32 %v248, %v997
    %v1390 = vadd.f32 %v1366, %v1386
    %v1391 = vadd.f32 %v1367, %v1387
    %v1392 = vadd.f32 %v1368, %v1388
    %v1393 = vadd.f32 %v1369, %v1389
    %v1394 = vmul.f32 %v258, %v994
    %v1395 = vmul.f32 %v258, %v995
    %v1396 = vmul.f32 %v258, %v996
    %v1397 = vmul.f32 %v258, %v997
    %v1398 = vadd.f32 %v1374, %v1394
    %v1399 = vadd.f32 %v1375, %v1395
    %v1400 = vadd.f32 %v1376, %v1396
    %v1401 = vadd.f32 %v1377, %v1397
    %v1402 = vmul.f32 %v268, %v994
    %v1403 = vmul.f32 %v268, %v995
    %v1404 = vmul.f32 %v268, %v996
    %v1405 = vmul.f32 %v268, %v997
    %v1406 = vadd.f32 %v1382, %v1402
    %v1407 = vadd.f32 %v1383, %v1403
    %v1408 = vadd.f32 %v1384, %v1404
    %v1409 = vadd.f32 %v1385, %v1405
    %v1410 = vmul.f32 %v283, %v1214
    %v1411 = vmul.f32 %v283, %v1215
    %v1412 = vmul.f32 %v283, %v1216
    %v1413 = vmul.f32 %v283, %v1217
    %v1414 = vadd.f32 %v1390, %v1410
    %v1415 = vadd.f32 %v1391, %v1411
    %v1416 = vadd.f32 %v1392, %v1412
    %v1417 = vadd.f32 %v1393, %v1413
    %v1418 = vmul.f32 %v293, %v1214
    %v1419 = vmul.f32 %v293, %v1215
    %v1420 = vmul.f32 %v293, %v1216
    %v1421 = vmul.f32 %v293, %v1217
    %v1422 = vadd.f32 %v1398, %v1418
    %v1423 = vadd.f32 %v1399, %v1419
    %v1424 = vadd.f32 %v1400, %v1420
    %v1425 = vadd.f32 %v1401, %v1421
    %v1426 = vmul.f32 %v303, %v1214
    %v1427 = vmul.f32 %v303, %v1215
    %v1428 = vmul.f32 %v303, %v1216
    %v1429 = vmul.f32 %v303, %v1217
    %v1430 = vadd.f32 %v1406, %v1426
    %v1431 = vadd.f32 %v1407, %v1427
    %v1432 = vadd.f32 %v1408, %v1428
    %v1433 = vadd.f32 %v1409, %v1429
    %v1434 = vld [vmem:[%s964 + $0x1] sm:$0xff]
    %v1435 = vld [vmem:[%s964 + $0x11] sm:$0xff]
    %v1436 = vld [vmem:[%s964 + $0x21] sm:$0xff]
    %v1437 = vld [vmem:[%s964 + $0x31] sm:$0xff]
    %v1438 = vmul.f32 %v318, %v1434
    %v1439 = vmul.f32 %v318, %v1435
    %v1440 = vmul.f32 %v318, %v1436
    %v1441 = vmul.f32 %v318, %v1437
    %v1442 = vadd.f32 %v1414, %v1438
    %v1443 = vadd.f32 %v1415, %v1439
    %v1444 = vadd.f32 %v1416, %v1440
    %v1445 = vadd.f32 %v1417, %v1441
    %v1446 = vmul.f32 %v328, %v1434
    %v1447 = vmul.f32 %v328, %v1435
    %v1448 = vmul.f32 %v328, %v1436
    %v1449 = vmul.f32 %v328, %v1437
    %v1450 = vadd.f32 %v1422, %v1446
    %v1451 = vadd.f32 %v1423, %v1447
    %v1452 = vadd.f32 %v1424, %v1448
    %v1453 = vadd.f32 %v1425, %v1449
    %v1454 = vmul.f32 %v338, %v1434
    %v1455 = vmul.f32 %v338, %v1435
    %v1456 = vmul.f32 %v338, %v1436
    %v1457 = vmul.f32 %v338, %v1437
    %v1458 = vadd.f32 %v1430, %v1454
    %v1459 = vadd.f32 %v1431, %v1455
    %v1460 = vadd.f32 %v1432, %v1456
    %v1461 = vadd.f32 %v1433, %v1457
    %v1462 = vmax.f32 %v1242, %v1442
    %v1463 = vmax.f32 %v1243, %v1443
    %v1464 = vmax.f32 %v1244, %v1444
    %v1465 = vmax.f32 %v1245, %v1445
    %v1466 = vmax.f32 %v1246, %v1450
    %v1467 = vmax.f32 %v1247, %v1451
    %v1468 = vmax.f32 %v1248, %v1452
    %v1469 = vmax.f32 %v1249, %v1453
    %v1470 = vmax.f32 %v1250, %v1458
    %v1471 = vmax.f32 %v1251, %v1459
    %v1472 = vmax.f32 %v1252, %v1460
    %v1473 = vmax.f32 %v1253, %v1461
    %v1474 = vmul.f32 %v50, %v243
    %v1475 = vmul.f32 %v50, %v244
    %v1476 = vmul.f32 %v50, %v245
    %v1477 = vmul.f32 %v50, %v246
    %v1478 = vmul.f32 %v56, %v243
    %v1479 = vmul.f32 %v56, %v244
    %v1480 = vmul.f32 %v56, %v245
    %v1481 = vmul.f32 %v56, %v246
    %v1482 = vmul.f32 %v62, %v243
    %v1483 = vmul.f32 %v62, %v244
    %v1484 = vmul.f32 %v62, %v245
    %v1485 = vmul.f32 %v62, %v246
    %v1486 = vmul.f32 %v73, %v278
    %v1487 = vmul.f32 %v73, %v279
    %v1488 = vmul.f32 %v73, %v280
    %v1489 = vmul.f32 %v73, %v281
    %v1490 = vadd.f32 %v1474, %v1486
    %v1491 = vadd.f32 %v1475, %v1487
    %v1492 = vadd.f32 %v1476, %v1488
    %v1493 = vadd.f32 %v1477, %v1489
    %v1494 = vmul.f32 %v83, %v278
    %v1495 = vmul.f32 %v83, %v279
    %v1496 = vmul.f32 %v83, %v280
    %v1497 = vmul.f32 %v83, %v281
    %v1498 = vadd.f32 %v1478, %v1494
    %v1499 = vadd.f32 %v1479, %v1495
    %v1500 = vadd.f32 %v1480, %v1496
    %v1501 = vadd.f32 %v1481, %v1497
    %v1502 = vmul.f32 %v93, %v278
    %v1503 = vmul.f32 %v93, %v279
    %v1504 = vmul.f32 %v93, %v280
    %v1505 = vmul.f32 %v93, %v281
    %v1506 = vadd.f32 %v1482, %v1502
    %v1507 = vadd.f32 %v1483, %v1503
    %v1508 = vadd.f32 %v1484, %v1504
    %v1509 = vadd.f32 %v1485, %v1505
    %v1510 = vmul.f32 %v108, %v313
    %v1511 = vmul.f32 %v108, %v314
    %v1512 = vmul.f32 %v108, %v315
    %v1513 = vmul.f32 %v108, %v316
    %v1514 = vadd.f32 %v1490, %v1510
    %v1515 = vadd.f32 %v1491, %v1511
    %v1516 = vadd.f32 %v1492, %v1512
    %v1517 = vadd.f32 %v1493, %v1513
    %v1518 = vmul.f32 %v118, %v313
    %v1519 = vmul.f32 %v118, %v314
    %v1520 = vmul.f32 %v118, %v315
    %v1521 = vmul.f32 %v118, %v316
    %v1522 = vadd.f32 %v1498, %v1518
    %v1523 = vadd.f32 %v1499, %v1519
    %v1524 = vadd.f32 %v1500, %v1520
    %v1525 = vadd.f32 %v1501, %v1521
    %v1526 = vmul.f32 %v128, %v313
    %v1527 = vmul.f32 %v128, %v314
    %v1528 = vmul.f32 %v128, %v315
    %v1529 = vmul.f32 %v128, %v316
    %v1530 = vadd.f32 %v1506, %v1526
    %v1531 = vadd.f32 %v1507, %v1527
    %v1532 = vadd.f32 %v1508, %v1528
    %v1533 = vadd.f32 %v1509, %v1529
    %v1534 = vmul.f32 %v143, %v936
    %v1535 = vmul.f32 %v143, %v937
    %v1536 = vmul.f32 %v143, %v938
    %v1537 = vmul.f32 %v143, %v939
    %v1538 = vadd.f32 %v1514, %v1534
    %v1539 = vadd.f32 %v1515, %v1535
    %v1540 = vadd.f32 %v1516, %v1536
    %v1541 = vadd.f32 %v1517, %v1537
    %v1542 = vmul.f32 %v153, %v936
    %v1543 = vmul.f32 %v153, %v937
    %v1544 = vmul.f32 %v153, %v938
    %v1545 = vmul.f32 %v153, %v939
    %v1546 = vadd.f32 %v1522, %v1542
    %v1547 = vadd.f32 %v1523, %v1543
    %v1548 = vadd.f32 %v1524, %v1544
    %v1549 = vadd.f32 %v1525, %v1545
    %v1550 = vmul.f32 %v163, %v936
    %v1551 = vmul.f32 %v163, %v937
    %v1552 = vmul.f32 %v163, %v938
    %v1553 = vmul.f32 %v163, %v939
    %v1554 = vadd.f32 %v1530, %v1550
    %v1555 = vadd.f32 %v1531, %v1551
    %v1556 = vadd.f32 %v1532, %v1552
    %v1557 = vadd.f32 %v1533, %v1553
    %v1558 = vmul.f32 %v178, %v965
    %v1559 = vmul.f32 %v178, %v966
    %v1560 = vmul.f32 %v178, %v967
    %v1561 = vmul.f32 %v178, %v968
    %v1562 = vadd.f32 %v1538, %v1558
    %v1563 = vadd.f32 %v1539, %v1559
    %v1564 = vadd.f32 %v1540, %v1560
    %v1565 = vadd.f32 %v1541, %v1561
    %v1566 = vmul.f32 %v188, %v965
    %v1567 = vmul.f32 %v188, %v966
    %v1568 = vmul.f32 %v188, %v967
    %v1569 = vmul.f32 %v188, %v968
    %v1570 = vadd.f32 %v1546, %v1566
    %v1571 = vadd.f32 %v1547, %v1567
    %v1572 = vadd.f32 %v1548, %v1568
    %v1573 = vadd.f32 %v1549, %v1569
    %v1574 = vmul.f32 %v198, %v965
    %v1575 = vmul.f32 %v198, %v966
    %v1576 = vmul.f32 %v198, %v967
    %v1577 = vmul.f32 %v198, %v968
    %v1578 = vadd.f32 %v1554, %v1574
    %v1579 = vadd.f32 %v1555, %v1575
    %v1580 = vadd.f32 %v1556, %v1576
    %v1581 = vadd.f32 %v1557, %v1577
    %v1582 = vmul.f32 %v213, %v994
    %v1583 = vmul.f32 %v213, %v995
    %v1584 = vmul.f32 %v213, %v996
    %v1585 = vmul.f32 %v213, %v997
    %v1586 = vadd.f32 %v1562, %v1582
    %v1587 = vadd.f32 %v1563, %v1583
    %v1588 = vadd.f32 %v1564, %v1584
    %v1589 = vadd.f32 %v1565, %v1585
    %v1590 = vmul.f32 %v223, %v994
    %v1591 = vmul.f32 %v223, %v995
    %v1592 = vmul.f32 %v223, %v996
    %v1593 = vmul.f32 %v223, %v997
    %v1594 = vadd.f32 %v1570, %v1590
    %v1595 = vadd.f32 %v1571, %v1591
    %v1596 = vadd.f32 %v1572, %v1592
    %v1597 = vadd.f32 %v1573, %v1593
    %v1598 = vmul.f32 %v233, %v994
    %v1599 = vmul.f32 %v233, %v995
    %v1600 = vmul.f32 %v233, %v996
    %v1601 = vmul.f32 %v233, %v997
    %v1602 = vadd.f32 %v1578, %v1598
    %v1603 = vadd.f32 %v1579, %v1599
    %v1604 = vadd.f32 %v1580, %v1600
    %v1605 = vadd.f32 %v1581, %v1601
    %s1606 = scalar_lea.vmem %s0, 448
    %v1607 = vld [vmem:[%s1606] sm:$0xff]
    %v1608 = vld [vmem:[%s1606 + $0x10] sm:$0xff]
    %v1609 = vld [vmem:[%s1606 + $0x20] sm:$0xff]
    %v1610 = vld [vmem:[%s1606 + $0x30] sm:$0xff]
    %v1611 = vmul.f32 %v248, %v1607
    %v1612 = vmul.f32 %v248, %v1608
    %v1613 = vmul.f32 %v248, %v1609
    %v1614 = vmul.f32 %v248, %v1610
    %v1615 = vadd.f32 %v1586, %v1611
    %v1616 = vadd.f32 %v1587, %v1612
    %v1617 = vadd.f32 %v1588, %v1613
    %v1618 = vadd.f32 %v1589, %v1614
    %v1619 = vmul.f32 %v258, %v1607
    %v1620 = vmul.f32 %v258, %v1608
    %v1621 = vmul.f32 %v258, %v1609
    %v1622 = vmul.f32 %v258, %v1610
    %v1623 = vadd.f32 %v1594, %v1619
    %v1624 = vadd.f32 %v1595, %v1620
    %v1625 = vadd.f32 %v1596, %v1621
    %v1626 = vadd.f32 %v1597, %v1622
    %v1627 = vmul.f32 %v268, %v1607
    %v1628 = vmul.f32 %v268, %v1608
    %v1629 = vmul.f32 %v268, %v1609
    %v1630 = vmul.f32 %v268, %v1610
    %v1631 = vadd.f32 %v1602, %v1627
    %v1632 = vadd.f32 %v1603, %v1628
    %v1633 = vadd.f32 %v1604, %v1629
    %v1634 = vadd.f32 %v1605, %v1630
    %s1635 = scalar_lea.vmem %s0, 592
    %v1636 = vld [vmem:[%s1635] sm:$0xff]
    %v1637 = vld [vmem:[%s1635 + $0x10] sm:$0xff]
    %v1638 = vld [vmem:[%s1635 + $0x20] sm:$0xff]
    %v1639 = vld [vmem:[%s1635 + $0x30] sm:$0xff]
    %v1640 = vmul.f32 %v283, %v1636
    %v1641 = vmul.f32 %v283, %v1637
    %v1642 = vmul.f32 %v283, %v1638
    %v1643 = vmul.f32 %v283, %v1639
    %v1644 = vadd.f32 %v1615, %v1640
    %v1645 = vadd.f32 %v1616, %v1641
    %v1646 = vadd.f32 %v1617, %v1642
    %v1647 = vadd.f32 %v1618, %v1643
    %v1648 = vmul.f32 %v293, %v1636
    %v1649 = vmul.f32 %v293, %v1637
    %v1650 = vmul.f32 %v293, %v1638
    %v1651 = vmul.f32 %v293, %v1639
    %v1652 = vadd.f32 %v1623, %v1648
    %v1653 = vadd.f32 %v1624, %v1649
    %v1654 = vadd.f32 %v1625, %v1650
    %v1655 = vadd.f32 %v1626, %v1651
    %v1656 = vmul.f32 %v303, %v1636
    %v1657 = vmul.f32 %v303, %v1637
    %v1658 = vmul.f32 %v303, %v1638
    %v1659 = vmul.f32 %v303, %v1639
    %v1660 = vadd.f32 %v1631, %v1656
    %v1661 = vadd.f32 %v1632, %v1657
    %v1662 = vadd.f32 %v1633, %v1658
    %v1663 = vadd.f32 %v1634, %v1659
    %s1664 = scalar_lea.vmem %s0, 736
    %v1665 = vld [vmem:[%s1664] sm:$0xff]
    %v1666 = vld [vmem:[%s1664 + $0x10] sm:$0xff]
    %v1667 = vld [vmem:[%s1664 + $0x20] sm:$0xff]
    %v1668 = vld [vmem:[%s1664 + $0x30] sm:$0xff]
    %v1669 = vmul.f32 %v318, %v1665
    %v1670 = vmul.f32 %v318, %v1666
    %v1671 = vmul.f32 %v318, %v1667
    %v1672 = vmul.f32 %v318, %v1668
    %v1673 = vadd.f32 %v1644, %v1669
    %v1674 = vadd.f32 %v1645, %v1670
    %v1675 = vadd.f32 %v1646, %v1671
    %v1676 = vadd.f32 %v1647, %v1672
    %v1677 = vmul.f32 %v328, %v1665
    %v1678 = vmul.f32 %v328, %v1666
    %v1679 = vmul.f32 %v328, %v1667
    %v1680 = vmul.f32 %v328, %v1668
    %v1681 = vadd.f32 %v1652, %v1677
    %v1682 = vadd.f32 %v1653, %v1678
    %v1683 = vadd.f32 %v1654, %v1679
    %v1684 = vadd.f32 %v1655, %v1680
    %v1685 = vmul.f32 %v338, %v1665
    %v1686 = vmul.f32 %v338, %v1666
    %v1687 = vmul.f32 %v338, %v1667
    %v1688 = vmul.f32 %v338, %v1668
    %v1689 = vadd.f32 %v1660, %v1685
    %v1690 = vadd.f32 %v1661, %v1686
    %v1691 = vadd.f32 %v1662, %v1687
    %v1692 = vadd.f32 %v1663, %v1688
    %v1693 = vmax.f32 %v1462, %v1673
    %v1694 = vmax.f32 %v1463, %v1674
    %v1695 = vmax.f32 %v1464, %v1675
    %v1696 = vmax.f32 %v1465, %v1676
    %v1697 = vmax.f32 %v1466, %v1681
    %v1698 = vmax.f32 %v1467, %v1682
    %v1699 = vmax.f32 %v1468, %v1683
    %v1700 = vmax.f32 %v1469, %v1684
    %v1701 = vmax.f32 %v1470, %v1689
    %v1702 = vmax.f32 %v1471, %v1690
    %v1703 = vmax.f32 %v1472, %v1691
    %v1704 = vmax.f32 %v1473, %v1692
    %v1705 = vmul.f32 %v50, %v278
    %v1706 = vmul.f32 %v50, %v279
    %v1707 = vmul.f32 %v50, %v280
    %v1708 = vmul.f32 %v50, %v281
    %v1709 = vmul.f32 %v56, %v278
    %v1710 = vmul.f32 %v56, %v279
    %v1711 = vmul.f32 %v56, %v280
    %v1712 = vmul.f32 %v56, %v281
    %v1713 = vmul.f32 %v62, %v278
    %v1714 = vmul.f32 %v62, %v279
    %v1715 = vmul.f32 %v62, %v280
    %v1716 = vmul.f32 %v62, %v281
    %v1717 = vmul.f32 %v73, %v313
    %v1718 = vmul.f32 %v73, %v314
    %v1719 = vmul.f32 %v73, %v315
    %v1720 = vmul.f32 %v73, %v316
    %v1721 = vadd.f32 %v1705, %v1717
    %v1722 = vadd.f32 %v1706, %v1718
    %v1723 = vadd.f32 %v1707, %v1719
    %v1724 = vadd.f32 %v1708, %v1720
    %v1725 = vmul.f32 %v83, %v313
    %v1726 = vmul.f32 %v83, %v314
    %v1727 = vmul.f32 %v83, %v315
    %v1728 = vmul.f32 %v83, %v316
    %v1729 = vadd.f32 %v1709, %v1725
    %v1730 = vadd.f32 %v1710, %v1726
    %v1731 = vadd.f32 %v1711, %v1727
    %v1732 = vadd.f32 %v1712, %v1728
    %v1733 = vmul.f32 %v93, %v313
    %v1734 = vmul.f32 %v93, %v314
    %v1735 = vmul.f32 %v93, %v315
    %v1736 = vmul.f32 %v93, %v316
    %v1737 = vadd.f32 %v1713, %v1733
    %v1738 = vadd.f32 %v1714, %v1734
    %v1739 = vadd.f32 %v1715, %v1735
    %v1740 = vadd.f32 %v1716, %v1736
    %v1741 = vmul.f32 %v108, %v535
    %v1742 = vmul.f32 %v108, %v536
    %v1743 = vmul.f32 %v108, %v537
    %v1744 = vmul.f32 %v108, %v538
    %v1745 = vadd.f32 %v1721, %v1741
    %v1746 = vadd.f32 %v1722, %v1742
    %v1747 = vadd.f32 %v1723, %v1743
    %v1748 = vadd.f32 %v1724, %v1744
    %v1749 = vmul.f32 %v118, %v535
    %v1750 = vmul.f32 %v118, %v536
    %v1751 = vmul.f32 %v118, %v537
    %v1752 = vmul.f32 %v118, %v538
    %v1753 = vadd.f32 %v1729, %v1749
    %v1754 = vadd.f32 %v1730, %v1750
    %v1755 = vadd.f32 %v1731, %v1751
    %v1756 = vadd.f32 %v1732, %v1752
    %v1757 = vmul.f32 %v128, %v535
    %v1758 = vmul.f32 %v128, %v536
    %v1759 = vmul.f32 %v128, %v537
    %v1760 = vmul.f32 %v128, %v538
    %v1761 = vadd.f32 %v1737, %v1757
    %v1762 = vadd.f32 %v1738, %v1758
    %v1763 = vadd.f32 %v1739, %v1759
    %v1764 = vadd.f32 %v1740, %v1760
    %v1765 = vmul.f32 %v143, %v965
    %v1766 = vmul.f32 %v143, %v966
    %v1767 = vmul.f32 %v143, %v967
    %v1768 = vmul.f32 %v143, %v968
    %v1769 = vadd.f32 %v1745, %v1765
    %v1770 = vadd.f32 %v1746, %v1766
    %v1771 = vadd.f32 %v1747, %v1767
    %v1772 = vadd.f32 %v1748, %v1768
    %v1773 = vmul.f32 %v153, %v965
    %v1774 = vmul.f32 %v153, %v966
    %v1775 = vmul.f32 %v153, %v967
    %v1776 = vmul.f32 %v153, %v968
    %v1777 = vadd.f32 %v1753, %v1773
    %v1778 = vadd.f32 %v1754, %v1774
    %v1779 = vadd.f32 %v1755, %v1775
    %v1780 = vadd.f32 %v1756, %v1776
    %v1781 = vmul.f32 %v163, %v965
    %v1782 = vmul.f32 %v163, %v966
    %v1783 = vmul.f32 %v163, %v967
    %v1784 = vmul.f32 %v163, %v968
    %v1785 = vadd.f32 %v1761, %v1781
    %v1786 = vadd.f32 %v1762, %v1782
    %v1787 = vadd.f32 %v1763, %v1783
    %v1788 = vadd.f32 %v1764, %v1784
    %v1789 = vmul.f32 %v178, %v994
    %v1790 = vmul.f32 %v178, %v995
    %v1791 = vmul.f32 %v178, %v996
    %v1792 = vmul.f32 %v178, %v997
    %v1793 = vadd.f32 %v1769, %v1789
    %v1794 = vadd.f32 %v1770, %v1790
    %v1795 = vadd.f32 %v1771, %v1791
    %v1796 = vadd.f32 %v1772, %v1792
    %v1797 = vmul.f32 %v188, %v994
    %v1798 = vmul.f32 %v188, %v995
    %v1799 = vmul.f32 %v188, %v996
    %v1800 = vmul.f32 %v188, %v997
    %v1801 = vadd.f32 %v1777, %v1797
    %v1802 = vadd.f32 %v1778, %v1798
    %v1803 = vadd.f32 %v1779, %v1799
    %v1804 = vadd.f32 %v1780, %v1800
    %v1805 = vmul.f32 %v198, %v994
    %v1806 = vmul.f32 %v198, %v995
    %v1807 = vmul.f32 %v198, %v996
    %v1808 = vmul.f32 %v198, %v997
    %v1809 = vadd.f32 %v1785, %v1805
    %v1810 = vadd.f32 %v1786, %v1806
    %v1811 = vadd.f32 %v1787, %v1807
    %v1812 = vadd.f32 %v1788, %v1808
    %v1813 = vmul.f32 %v213, %v1214
    %v1814 = vmul.f32 %v213, %v1215
    %v1815 = vmul.f32 %v213, %v1216
    %v1816 = vmul.f32 %v213, %v1217
    %v1817 = vadd.f32 %v1793, %v1813
    %v1818 = vadd.f32 %v1794, %v1814
    %v1819 = vadd.f32 %v1795, %v1815
    %v1820 = vadd.f32 %v1796, %v1816
    %v1821 = vmul.f32 %v223, %v1214
    %v1822 = vmul.f32 %v223, %v1215
    %v1823 = vmul.f32 %v223, %v1216
    %v1824 = vmul.f32 %v223, %v1217
    %v1825 = vadd.f32 %v1801, %v1821
    %v1826 = vadd.f32 %v1802, %v1822
    %v1827 = vadd.f32 %v1803, %v1823
    %v1828 = vadd.f32 %v1804, %v1824
    %v1829 = vmul.f32 %v233, %v1214
    %v1830 = vmul.f32 %v233, %v1215
    %v1831 = vmul.f32 %v233, %v1216
    %v1832 = vmul.f32 %v233, %v1217
    %v1833 = vadd.f32 %v1809, %v1829
    %v1834 = vadd.f32 %v1810, %v1830
    %v1835 = vadd.f32 %v1811, %v1831
    %v1836 = vadd.f32 %v1812, %v1832
    %v1837 = vmul.f32 %v248, %v1636
    %v1838 = vmul.f32 %v248, %v1637
    %v1839 = vmul.f32 %v248, %v1638
    %v1840 = vmul.f32 %v248, %v1639
    %v1841 = vadd.f32 %v1817, %v1837
    %v1842 = vadd.f32 %v1818, %v1838
    %v1843 = vadd.f32 %v1819, %v1839
    %v1844 = vadd.f32 %v1820, %v1840
    %v1845 = vmul.f32 %v258, %v1636
    %v1846 = vmul.f32 %v258, %v1637
    %v1847 = vmul.f32 %v258, %v1638
    %v1848 = vmul.f32 %v258, %v1639
    %v1849 = vadd.f32 %v1825, %v1845
    %v1850 = vadd.f32 %v1826, %v1846
    %v1851 = vadd.f32 %v1827, %v1847
    %v1852 = vadd.f32 %v1828, %v1848
    %v1853 = vmul.f32 %v268, %v1636
    %v1854 = vmul.f32 %v268, %v1637
    %v1855 = vmul.f32 %v268, %v1638
    %v1856 = vmul.f32 %v268, %v1639
    %v1857 = vadd.f32 %v1833, %v1853
    %v1858 = vadd.f32 %v1834, %v1854
    %v1859 = vadd.f32 %v1835, %v1855
    %v1860 = vadd.f32 %v1836, %v1856
    %v1861 = vmul.f32 %v283, %v1665
    %v1862 = vmul.f32 %v283, %v1666
    %v1863 = vmul.f32 %v283, %v1667
    %v1864 = vmul.f32 %v283, %v1668
    %v1865 = vadd.f32 %v1841, %v1861
    %v1866 = vadd.f32 %v1842, %v1862
    %v1867 = vadd.f32 %v1843, %v1863
    %v1868 = vadd.f32 %v1844, %v1864
    %v1869 = vmul.f32 %v293, %v1665
    %v1870 = vmul.f32 %v293, %v1666
    %v1871 = vmul.f32 %v293, %v1667
    %v1872 = vmul.f32 %v293, %v1668
    %v1873 = vadd.f32 %v1849, %v1869
    %v1874 = vadd.f32 %v1850, %v1870
    %v1875 = vadd.f32 %v1851, %v1871
    %v1876 = vadd.f32 %v1852, %v1872
    %v1877 = vmul.f32 %v303, %v1665
    %v1878 = vmul.f32 %v303, %v1666
    %v1879 = vmul.f32 %v303, %v1667
    %v1880 = vmul.f32 %v303, %v1668
    %v1881 = vadd.f32 %v1857, %v1877
    %v1882 = vadd.f32 %v1858, %v1878
    %v1883 = vadd.f32 %v1859, %v1879
    %v1884 = vadd.f32 %v1860, %v1880
    %v1885 = vld [vmem:[%s1606 + $0x1] sm:$0xff]
    %v1886 = vld [vmem:[%s1606 + $0x11] sm:$0xff]
    %v1887 = vld [vmem:[%s1606 + $0x21] sm:$0xff]
    %v1888 = vld [vmem:[%s1606 + $0x31] sm:$0xff]
    %v1889 = vmul.f32 %v318, %v1885
    %v1890 = vmul.f32 %v318, %v1886
    %v1891 = vmul.f32 %v318, %v1887
    %v1892 = vmul.f32 %v318, %v1888
    %v1893 = vadd.f32 %v1865, %v1889
    %v1894 = vadd.f32 %v1866, %v1890
    %v1895 = vadd.f32 %v1867, %v1891
    %v1896 = vadd.f32 %v1868, %v1892
    %v1897 = vmul.f32 %v328, %v1885
    %v1898 = vmul.f32 %v328, %v1886
    %v1899 = vmul.f32 %v328, %v1887
    %v1900 = vmul.f32 %v328, %v1888
    %v1901 = vadd.f32 %v1873, %v1897
    %v1902 = vadd.f32 %v1874, %v1898
    %v1903 = vadd.f32 %v1875, %v1899
    %v1904 = vadd.f32 %v1876, %v1900
    %v1905 = vmul.f32 %v338, %v1885
    %v1906 = vmul.f32 %v338, %v1886
    %v1907 = vmul.f32 %v338, %v1887
    %v1908 = vmul.f32 %v338, %v1888
    %v1909 = vadd.f32 %v1881, %v1905
    %v1910 = vadd.f32 %v1882, %v1906
    %v1911 = vadd.f32 %v1883, %v1907
    %v1912 = vadd.f32 %v1884, %v1908
    %v1913 = vmax.f32 %v1693, %v1893
    %v1914 = vmax.f32 %v1694, %v1894
    %v1915 = vmax.f32 %v1695, %v1895
    %v1916 = vmax.f32 %v1696, %v1896
    %v1917 = vmax.f32 %v1697, %v1901
    %v1918 = vmax.f32 %v1698, %v1902
    %v1919 = vmax.f32 %v1699, %v1903
    %v1920 = vmax.f32 %v1700, %v1904
    %v1921 = vmax.f32 %v1701, %v1909
    %v1922 = vmax.f32 %v1702, %v1910
    %v1923 = vmax.f32 %v1703, %v1911
    %v1924 = vmax.f32 %v1704, %v1912
    %v1925 = vmul.f32 %v50, %v313
    %v1926 = vmul.f32 %v50, %v314
    %v1927 = vmul.f32 %v50, %v315
    %v1928 = vmul.f32 %v50, %v316
    %v1929 = vmul.f32 %v56, %v313
    %v1930 = vmul.f32 %v56, %v314
    %v1931 = vmul.f32 %v56, %v315
    %v1932 = vmul.f32 %v56, %v316
    %v1933 = vmul.f32 %v62, %v313
    %v1934 = vmul.f32 %v62, %v314
    %v1935 = vmul.f32 %v62, %v315
    %v1936 = vmul.f32 %v62, %v316
    %v1937 = vmul.f32 %v73, %v535
    %v1938 = vmul.f32 %v73, %v536
    %v1939 = vmul.f32 %v73, %v537
    %v1940 = vmul.f32 %v73, %v538
    %v1941 = vadd.f32 %v1925, %v1937
    %v1942 = vadd.f32 %v1926, %v1938
    %v1943 = vadd.f32 %v1927, %v1939
    %v1944 = vadd.f32 %v1928, %v1940
    %v1945 = vmul.f32 %v83, %v535
    %v1946 = vmul.f32 %v83, %v536
    %v1947 = vmul.f32 %v83, %v537
    %v1948 = vmul.f32 %v83, %v538
    %v1949 = vadd.f32 %v1929, %v1945
    %v1950 = vadd.f32 %v1930, %v1946
    %v1951 = vadd.f32 %v1931, %v1947
    %v1952 = vadd.f32 %v1932, %v1948
    %v1953 = vmul.f32 %v93, %v535
    %v1954 = vmul.f32 %v93, %v536
    %v1955 = vmul.f32 %v93, %v537
    %v1956 = vmul.f32 %v93, %v538
    %v1957 = vadd.f32 %v1933, %v1953
    %v1958 = vadd.f32 %v1934, %v1954
    %v1959 = vadd.f32 %v1935, %v1955
    %v1960 = vadd.f32 %v1936, %v1956
    %v1961 = vmul.f32 %v108, %v763
    %v1962 = vmul.f32 %v108, %v764
    %v1963 = vmul.f32 %v108, %v765
    %v1964 = vmul.f32 %v108, %v766
    %v1965 = vadd.f32 %v1941, %v1961
    %v1966 = vadd.f32 %v1942, %v1962
    %v1967 = vadd.f32 %v1943, %v1963
    %v1968 = vadd.f32 %v1944, %v1964
    %v1969 = vmul.f32 %v118, %v763
    %v1970 = vmul.f32 %v118, %v764
    %v1971 = vmul.f32 %v118, %v765
    %v1972 = vmul.f32 %v118, %v766
    %v1973 = vadd.f32 %v1949, %v1969
    %v1974 = vadd.f32 %v1950, %v1970
    %v1975 = vadd.f32 %v1951, %v1971
    %v1976 = vadd.f32 %v1952, %v1972
    %v1977 = vmul.f32 %v128, %v763
    %v1978 = vmul.f32 %v128, %v764
    %v1979 = vmul.f32 %v128, %v765
    %v1980 = vmul.f32 %v128, %v766
    %v1981 = vadd.f32 %v1957, %v1977
    %v1982 = vadd.f32 %v1958, %v1978
    %v1983 = vadd.f32 %v1959, %v1979
    %v1984 = vadd.f32 %v1960, %v1980
    %v1985 = vmul.f32 %v143, %v994
    %v1986 = vmul.f32 %v143, %v995
    %v1987 = vmul.f32 %v143, %v996
    %v1988 = vmul.f32 %v143, %v997
    %v1989 = vadd.f32 %v1965, %v1985
    %v1990 = vadd.f32 %v1966, %v1986
    %v1991 = vadd.f32 %v1967, %v1987
    %v1992 = vadd.f32 %v1968, %v1988
    %v1993 = vmul.f32 %v153, %v994
    %v1994 = vmul.f32 %v153, %v995
    %v1995 = vmul.f32 %v153, %v996
    %v1996 = vmul.f32 %v153, %v997
    %v1997 = vadd.f32 %v1973, %v1993
    %v1998 = vadd.f32 %v1974, %v1994
    %v1999 = vadd.f32 %v1975, %v1995
    %v2000 = vadd.f32 %v1976, %v1996
    %v2001 = vmul.f32 %v163, %v994
    %v2002 = vmul.f32 %v163, %v995
    %v2003 = vmul.f32 %v163, %v996
    %v2004 = vmul.f32 %v163, %v997
    %v2005 = vadd.f32 %v1981, %v2001
    %v2006 = vadd.f32 %v1982, %v2002
    %v2007 = vadd.f32 %v1983, %v2003
    %v2008 = vadd.f32 %v1984, %v2004
    %v2009 = vmul.f32 %v178, %v1214
    %v2010 = vmul.f32 %v178, %v1215
    %v2011 = vmul.f32 %v178, %v1216
    %v2012 = vmul.f32 %v178, %v1217
    %v2013 = vadd.f32 %v1989, %v2009
    %v2014 = vadd.f32 %v1990, %v2010
    %v2015 = vadd.f32 %v1991, %v2011
    %v2016 = vadd.f32 %v1992, %v2012
    %v2017 = vmul.f32 %v188, %v1214
    %v2018 = vmul.f32 %v188, %v1215
    %v2019 = vmul.f32 %v188, %v1216
    %v2020 = vmul.f32 %v188, %v1217
    %v2021 = vadd.f32 %v1997, %v2017
    %v2022 = vadd.f32 %v1998, %v2018
    %v2023 = vadd.f32 %v1999, %v2019
    %v2024 = vadd.f32 %v2000, %v2020
    %v2025 = vmul.f32 %v198, %v1214
    %v2026 = vmul.f32 %v198, %v1215
    %v2027 = vmul.f32 %v198, %v1216
    %v2028 = vmul.f32 %v198, %v1217
    %v2029 = vadd.f32 %v2005, %v2025
    %v2030 = vadd.f32 %v2006, %v2026
    %v2031 = vadd.f32 %v2007, %v2027
    %v2032 = vadd.f32 %v2008, %v2028
    %v2033 = vmul.f32 %v213, %v1434
    %v2034 = vmul.f32 %v213, %v1435
    %v2035 = vmul.f32 %v213, %v1436
    %v2036 = vmul.f32 %v213, %v1437
    %v2037 = vadd.f32 %v2013, %v2033
    %v2038 = vadd.f32 %v2014, %v2034
    %v2039 = vadd.f32 %v2015, %v2035
    %v2040 = vadd.f32 %v2016, %v2036
    %v2041 = vmul.f32 %v223, %v1434
    %v2042 = vmul.f32 %v223, %v1435
    %v2043 = vmul.f32 %v223, %v1436
    %v2044 = vmul.f32 %v223, %v1437
    %v2045 = vadd.f32 %v2021, %v2041
    %v2046 = vadd.f32 %v2022, %v2042
    %v2047 = vadd.f32 %v2023, %v2043
    %v2048 = vadd.f32 %v2024, %v2044
    %v2049 = vmul.f32 %v233, %v1434
    %v2050 = vmul.f32 %v233, %v1435
    %v2051 = vmul.f32 %v233, %v1436
    %v2052 = vmul.f32 %v233, %v1437
    %v2053 = vadd.f32 %v2029, %v2049
    %v2054 = vadd.f32 %v2030, %v2050
    %v2055 = vadd.f32 %v2031, %v2051
    %v2056 = vadd.f32 %v2032, %v2052
    %v2057 = vmul.f32 %v248, %v1665
    %v2058 = vmul.f32 %v248, %v1666
    %v2059 = vmul.f32 %v248, %v1667
    %v2060 = vmul.f32 %v248, %v1668
    %v2061 = vadd.f32 %v2037, %v2057
    %v2062 = vadd.f32 %v2038, %v2058
    %v2063 = vadd.f32 %v2039, %v2059
    %v2064 = vadd.f32 %v2040, %v2060
    %v2065 = vmul.f32 %v258, %v1665
    %v2066 = vmul.f32 %v258, %v1666
    %v2067 = vmul.f32 %v258, %v1667
    %v2068 = vmul.f32 %v258, %v1668
    %v2069 = vadd.f32 %v2045, %v2065
    %v2070 = vadd.f32 %v2046, %v2066
    %v2071 = vadd.f32 %v2047, %v2067
    %v2072 = vadd.f32 %v2048, %v2068
    %v2073 = vmul.f32 %v268, %v1665
    %v2074 = vmul.f32 %v268, %v1666
    %v2075 = vmul.f32 %v268, %v1667
    %v2076 = vmul.f32 %v268, %v1668
    %v2077 = vadd.f32 %v2053, %v2073
    %v2078 = vadd.f32 %v2054, %v2074
    %v2079 = vadd.f32 %v2055, %v2075
    %v2080 = vadd.f32 %v2056, %v2076
    %v2081 = vmul.f32 %v283, %v1885
    %v2082 = vmul.f32 %v283, %v1886
    %v2083 = vmul.f32 %v283, %v1887
    %v2084 = vmul.f32 %v283, %v1888
    %v2085 = vadd.f32 %v2061, %v2081
    %v2086 = vadd.f32 %v2062, %v2082
    %v2087 = vadd.f32 %v2063, %v2083
    %v2088 = vadd.f32 %v2064, %v2084
    %v2089 = vmul.f32 %v293, %v1885
    %v2090 = vmul.f32 %v293, %v1886
    %v2091 = vmul.f32 %v293, %v1887
    %v2092 = vmul.f32 %v293, %v1888
    %v2093 = vadd.f32 %v2069, %v2089
    %v2094 = vadd.f32 %v2070, %v2090
    %v2095 = vadd.f32 %v2071, %v2091
    %v2096 = vadd.f32 %v2072, %v2092
    %v2097 = vmul.f32 %v303, %v1885
    %v2098 = vmul.f32 %v303, %v1886
    %v2099 = vmul.f32 %v303, %v1887
    %v2100 = vmul.f32 %v303, %v1888
    %v2101 = vadd.f32 %v2077, %v2097
    %v2102 = vadd.f32 %v2078, %v2098
    %v2103 = vadd.f32 %v2079, %v2099
    %v2104 = vadd.f32 %v2080, %v2100
    %v2105 = vld [vmem:[%s1635 + $0x1] sm:$0xff]
    %v2106 = vld [vmem:[%s1635 + $0x11] sm:$0xff]
    %v2107 = vld [vmem:[%s1635 + $0x21] sm:$0xff]
    %v2108 = vld [vmem:[%s1635 + $0x31] sm:$0xff]
    %v2109 = vmul.f32 %v318, %v2105
    %v2110 = vmul.f32 %v318, %v2106
    %v2111 = vmul.f32 %v318, %v2107
    %v2112 = vmul.f32 %v318, %v2108
    %v2113 = vadd.f32 %v2085, %v2109
    %v2114 = vadd.f32 %v2086, %v2110
    %v2115 = vadd.f32 %v2087, %v2111
    %v2116 = vadd.f32 %v2088, %v2112
    %v2117 = vmul.f32 %v328, %v2105
    %v2118 = vmul.f32 %v328, %v2106
    %v2119 = vmul.f32 %v328, %v2107
    %v2120 = vmul.f32 %v328, %v2108
    %v2121 = vadd.f32 %v2093, %v2117
    %v2122 = vadd.f32 %v2094, %v2118
    %v2123 = vadd.f32 %v2095, %v2119
    %v2124 = vadd.f32 %v2096, %v2120
    %v2125 = vmul.f32 %v338, %v2105
    %v2126 = vmul.f32 %v338, %v2106
    %v2127 = vmul.f32 %v338, %v2107
    %v2128 = vmul.f32 %v338, %v2108
    %v2129 = vadd.f32 %v2101, %v2125
    %v2130 = vadd.f32 %v2102, %v2126
    %v2131 = vadd.f32 %v2103, %v2127
    %v2132 = vadd.f32 %v2104, %v2128
    %v2133 = vmax.f32 %v1913, %v2113
    %v2134 = vmax.f32 %v1914, %v2114
    %v2135 = vmax.f32 %v1915, %v2115
    %v2136 = vmax.f32 %v1916, %v2116
    %v2137 = vmax.f32 %v1917, %v2121
    %v2138 = vmax.f32 %v1918, %v2122
    %v2139 = vmax.f32 %v1919, %v2123
    %v2140 = vmax.f32 %v1920, %v2124
    %v2141 = vmax.f32 %v1921, %v2129
    %v2142 = vmax.f32 %v1922, %v2130
    %v2143 = vmax.f32 %v1923, %v2131
    %v2144 = vmax.f32 %v1924, %v2132
    %s2145 = sld [smem:[#allocation5]]
    %v2146 = vstv %s2145
    %v2147 = vadd.f32 %v2133, %v2146
    %v2148 = vadd.f32 %v2134, %v2146
    %v2149 = vadd.f32 %v2135, %v2146
    %v2150 = vadd.f32 %v2136, %v2146
    %v2151 = vmax.f32 %v2147, 0.0
    %v2152 = vmax.f32 %v2148, 0.0
    %v2153 = vmax.f32 %v2149, 0.0
    %v2154 = vmax.f32 %v2150, 0.0
    %2155 = vst [vmem:[#allocation2] sm:$0xff] %v2151
    %2156 = vst [vmem:[#allocation2 + $0x8] sm:$0xff] %v2152
    %2157 = vst [vmem:[#allocation2 + $0x10] sm:$0xff] %v2153
    %2158 = vst [vmem:[#allocation2 + $0x18] sm:$0xff] %v2154
    %s2159 = sld [smem:[#allocation5 + $0x1]]
    %v2160 = vstv %s2159
    %v2161 = vadd.f32 %v2137, %v2160
    %v2162 = vadd.f32 %v2138, %v2160
    %v2163 = vadd.f32 %v2139, %v2160
    %v2164 = vadd.f32 %v2140, %v2160
    %v2165 = vmax.f32 %v2161, 0.0
    %v2166 = vmax.f32 %v2162, 0.0
    %v2167 = vmax.f32 %v2163, 0.0
    %v2168 = vmax.f32 %v2164, 0.0
    %2169 = vst [vmem:[#allocation2 + $0x40] sm:$0xff] %v2165
    %2170 = vst [vmem:[#allocation2 + $0x48] sm:$0xff] %v2166
    %2171 = vst [vmem:[#allocation2 + $0x50] sm:$0xff] %v2167
    %2172 = vst [vmem:[#allocation2 + $0x58] sm:$0xff] %v2168
    %s2173 = sld [smem:[#allocation5 + $0x2]]
    %v2174 = vstv %s2173
    %v2175 = vadd.f32 %v2141, %v2174
    %v2176 = vadd.f32 %v2142, %v2174
    %v2177 = vadd.f32 %v2143, %v2174
    %v2178 = vadd.f32 %v2144, %v2174
    %v2179 = vmax.f32 %v2175, 0.0
    %v2180 = vmax.f32 %v2176, 0.0
    %v2181 = vmax.f32 %v2177, 0.0
    %v2182 = vmax.f32 %v2178, 0.0
    %2183 = vst [vmem:[#allocation2 + $0x80] sm:$0xff] %v2179
    %2184 = vst [vmem:[#allocation2 + $0x88] sm:$0xff] %v2180
    %2185 = vst [vmem:[#allocation2 + $0x90] sm:$0xff] %v2181
    %2186 = vst [vmem:[#allocation2 + $0x98] sm:$0xff] %v2182
    %s2187 = scalar_lea.vmem %s0, 64
    %v2188 = vld [vmem:[%s2187] sm:$0xff]
    %v2189 = vld [vmem:[%s2187 + $0x10] sm:$0xff]
    %v2190 = vld [vmem:[%s2187 + $0x20] sm:$0xff]
    %v2191 = vld [vmem:[%s2187 + $0x30] sm:$0xff]
    %s2192 = sld [smem:[#allocation3]]
    %v2193 = vstv %s2192
    %v2194 = vmul.f32 %v2193, %v2188
    %v2195 = vmul.f32 %v2193, %v2189
    %v2196 = vmul.f32 %v2193, %v2190
    %v2197 = vmul.f32 %v2193, %v2191
    %s2198 = sld [smem:[#allocation3 + $0x80]]
    %v2199 = vstv %s2198
    %v2200 = vmul.f32 %v2199, %v2188
    %v2201 = vmul.f32 %v2199, %v2189
    %v2202 = vmul.f32 %v2199, %v2190
    %v2203 = vmul.f32 %v2199, %v2191
    %s2204 = sld [smem:[#allocation3 + $0x100]]
    %v2205 = vstv %s2204
    %v2206 = vmul.f32 %v2205, %v2188
    %v2207 = vmul.f32 %v2205, %v2189
    %v2208 = vmul.f32 %v2205, %v2190
    %v2209 = vmul.f32 %v2205, %v2191
    %s2210 = scalar_lea.vmem %s0, 208
    %v2211 = vld [vmem:[%s2210] sm:$0xff]
    %v2212 = vld [vmem:[%s2210 + $0x10] sm:$0xff]
    %v2213 = vld [vmem:[%s2210 + $0x20] sm:$0xff]
    %v2214 = vld [vmem:[%s2210 + $0x30] sm:$0xff]
    %s2215 = sld [smem:[#allocation3 + $0x1]]
    %v2216 = vstv %s2215
    %v2217 = vmul.f32 %v2216, %v2211
    %v2218 = vmul.f32 %v2216, %v2212
    %v2219 = vmul.f32 %v2216, %v2213
    %v2220 = vmul.f32 %v2216, %v2214
    %v2221 = vadd.f32 %v2194, %v2217
    %v2222 = vadd.f32 %v2195, %v2218
    %v2223 = vadd.f32 %v2196, %v2219
    %v2224 = vadd.f32 %v2197, %v2220
    %s2225 = sld [smem:[#allocation3 + $0x81]]
    %v2226 = vstv %s2225
    %v2227 = vmul.f32 %v2226, %v2211
    %v2228 = vmul.f32 %v2226, %v2212
    %v2229 = vmul.f32 %v2226, %v2213
    %v2230 = vmul.f32 %v2226, %v2214
    %v2231 = vadd.f32 %v2200, %v2227
    %v2232 = vadd.f32 %v2201, %v2228
    %v2233 = vadd.f32 %v2202, %v2229
    %v2234 = vadd.f32 %v2203, %v2230
    %s2235 = sld [smem:[#allocation3 + $0x101]]
    %v2236 = vstv %s2235
    %v2237 = vmul.f32 %v2236, %v2211
    %v2238 = vmul.f32 %v2236, %v2212
    %v2239 = vmul.f32 %v2236, %v2213
    %v2240 = vmul.f32 %v2236, %v2214
    %v2241 = vadd.f32 %v2206, %v2237
    %v2242 = vadd.f32 %v2207, %v2238
    %v2243 = vadd.f32 %v2208, %v2239
    %v2244 = vadd.f32 %v2209, %v2240
    %s2245 = scalar_lea.vmem %s0, 352
    %v2246 = vld [vmem:[%s2245] sm:$0xff]
    %v2247 = vld [vmem:[%s2245 + $0x10] sm:$0xff]
    %v2248 = vld [vmem:[%s2245 + $0x20] sm:$0xff]
    %v2249 = vld [vmem:[%s2245 + $0x30] sm:$0xff]
    %s2250 = sld [smem:[#allocation3 + $0x2]]
    %v2251 = vstv %s2250
    %v2252 = vmul.f32 %v2251, %v2246
    %v2253 = vmul.f32 %v2251, %v2247
    %v2254 = vmul.f32 %v2251, %v2248
    %v2255 = vmul.f32 %v2251, %v2249
    %v2256 = vadd.f32 %v2221, %v2252
    %v2257 = vadd.f32 %v2222, %v2253
    %v2258 = vadd.f32 %v2223, %v2254
    %v2259 = vadd.f32 %v2224, %v2255
    %s2260 = sld [smem:[#allocation3 + $0x82]]
    %v2261 = vstv %s2260
    %v2262 = vmul.f32 %v2261, %v2246
    %v2263 = vmul.f32 %v2261, %v2247
    %v2264 = vmul.f32 %v2261, %v2248
    %v2265 = vmul.f32 %v2261, %v2249
    %v2266 = vadd.f32 %v2231, %v2262
    %v2267 = vadd.f32 %v2232, %v2263
    %v2268 = vadd.f32 %v2233, %v2264
    %v2269 = vadd.f32 %v2234, %v2265
    %s2270 = sld [smem:[#allocation3 + $0x102]]
    %v2271 = vstv %s2270
    %v2272 = vmul.f32 %v2271, %v2246
    %v2273 = vmul.f32 %v2271, %v2247
    %v2274 = vmul.f32 %v2271, %v2248
    %v2275 = vmul.f32 %v2271, %v2249
    %v2276 = vadd.f32 %v2241, %v2272
    %v2277 = vadd.f32 %v2242, %v2273
    %v2278 = vadd.f32 %v2243, %v2274
    %v2279 = vadd.f32 %v2244, %v2275
    %s2280 = scalar_lea.vmem %s0, 496
    %v2281 = vld [vmem:[%s2280] sm:$0xff]
    %v2282 = vld [vmem:[%s2280 + $0x10] sm:$0xff]
    %v2283 = vld [vmem:[%s2280 + $0x20] sm:$0xff]
    %v2284 = vld [vmem:[%s2280 + $0x30] sm:$0xff]
    %s2285 = sld [smem:[#allocation3 + $0x3]]
    %v2286 = vstv %s2285
    %v2287 = vmul.f32 %v2286, %v2281
    %v2288 = vmul.f32 %v2286, %v2282
    %v2289 = vmul.f32 %v2286, %v2283
    %v2290 = vmul.f32 %v2286, %v2284
    %v2291 = vadd.f32 %v2256, %v2287
    %v2292 = vadd.f32 %v2257, %v2288
    %v2293 = vadd.f32 %v2258, %v2289
    %v2294 = vadd.f32 %v2259, %v2290
    %s2295 = sld [smem:[#allocation3 + $0x83]]
    %v2296 = vstv %s2295
    %v2297 = vmul.f32 %v2296, %v2281
    %v2298 = vmul.f32 %v2296, %v2282
    %v2299 = vmul.f32 %v2296, %v2283
    %v2300 = vmul.f32 %v2296, %v2284
    %v2301 = vadd.f32 %v2266, %v2297
    %v2302 = vadd.f32 %v2267, %v2298
    %v2303 = vadd.f32 %v2268, %v2299
    %v2304 = vadd.f32 %v2269, %v2300
    %s2305 = sld [smem:[#allocation3 + $0x103]]
    %v2306 = vstv %s2305
    %v2307 = vmul.f32 %v2306, %v2281
    %v2308 = vmul.f32 %v2306, %v2282
    %v2309 = vmul.f32 %v2306, %v2283
    %v2310 = vmul.f32 %v2306, %v2284
    %v2311 = vadd.f32 %v2276, %v2307
    %v2312 = vadd.f32 %v2277, %v2308
    %v2313 = vadd.f32 %v2278, %v2309
    %v2314 = vadd.f32 %v2279, %v2310
    %s2315 = scalar_lea.vmem %s0, 640
    %v2316 = vld [vmem:[%s2315] sm:$0xff]
    %v2317 = vld [vmem:[%s2315 + $0x10] sm:$0xff]
    %v2318 = vld [vmem:[%s2315 + $0x20] sm:$0xff]
    %v2319 = vld [vmem:[%s2315 + $0x30] sm:$0xff]
    %s2320 = sld [smem:[#allocation3 + $0x4]]
    %v2321 = vstv %s2320
    %v2322 = vmul.f32 %v2321, %v2316
    %v2323 = vmul.f32 %v2321, %v2317
    %v2324 = vmul.f32 %v2321, %v2318
    %v2325 = vmul.f32 %v2321, %v2319
    %v2326 = vadd.f32 %v2291, %v2322
    %v2327 = vadd.f32 %v2292, %v2323
    %v2328 = vadd.f32 %v2293, %v2324
    %v2329 = vadd.f32 %v2294, %v2325
    %s2330 = sld [smem:[#allocation3 + $0x84]]
    %v2331 = vstv %s2330
    %v2332 = vmul.f32 %v2331, %v2316
    %v2333 = vmul.f32 %v2331, %v2317
    %v2334 = vmul.f32 %v2331, %v2318
    %v2335 = vmul.f32 %v2331, %v2319
    %v2336 = vadd.f32 %v2301, %v2332
    %v2337 = vadd.f32 %v2302, %v2333
    %v2338 = vadd.f32 %v2303, %v2334
    %v2339 = vadd.f32 %v2304, %v2335
    %s2340 = sld [smem:[#allocation3 + $0x104]]
    %v2341 = vstv %s2340
    %v2342 = vmul.f32 %v2341, %v2316
    %v2343 = vmul.f32 %v2341, %v2317
    %v2344 = vmul.f32 %v2341, %v2318
    %v2345 = vmul.f32 %v2341, %v2319
    %v2346 = vadd.f32 %v2311, %v2342
    %v2347 = vadd.f32 %v2312, %v2343
    %v2348 = vadd.f32 %v2313, %v2344
    %v2349 = vadd.f32 %v2314, %v2345
    %s2350 = scalar_lea.vmem %s0, 784
    %v2351 = vld [vmem:[%s2350] sm:$0xff]
    %v2352 = vld [vmem:[%s2350 + $0x10] sm:$0xff]
    %v2353 = vld [vmem:[%s2350 + $0x20] sm:$0xff]
    %v2354 = vld [vmem:[%s2350 + $0x30] sm:$0xff]
    %s2355 = sld [smem:[#allocation3 + $0x5]]
    %v2356 = vstv %s2355
    %v2357 = vmul.f32 %v2356, %v2351
    %v2358 = vmul.f32 %v2356, %v2352
    %v2359 = vmul.f32 %v2356, %v2353
    %v2360 = vmul.f32 %v2356, %v2354
    %v2361 = vadd.f32 %v2326, %v2357
    %v2362 = vadd.f32 %v2327, %v2358
    %v2363 = vadd.f32 %v2328, %v2359
    %v2364 = vadd.f32 %v2329, %v2360
    %s2365 = sld [smem:[#allocation3 + $0x85]]
    %v2366 = vstv %s2365
    %v2367 = vmul.f32 %v2366, %v2351
    %v2368 = vmul.f32 %v2366, %v2352
    %v2369 = vmul.f32 %v2366, %v2353
    %v2370 = vmul.f32 %v2366, %v2354
    %v2371 = vadd.f32 %v2336, %v2367
    %v2372 = vadd.f32 %v2337, %v2368
    %v2373 = vadd.f32 %v2338, %v2369
    %v2374 = vadd.f32 %v2339, %v2370
    %s2375 = sld [smem:[#allocation3 + $0x105]]
    %v2376 = vstv %s2375
    %v2377 = vmul.f32 %v2376, %v2351
    %v2378 = vmul.f32 %v2376, %v2352
    %v2379 = vmul.f32 %v2376, %v2353
    %v2380 = vmul.f32 %v2376, %v2354
    %v2381 = vadd.f32 %v2346, %v2377
    %v2382 = vadd.f32 %v2347, %v2378
    %v2383 = vadd.f32 %v2348, %v2379
    %v2384 = vadd.f32 %v2349, %v2380
    %s2385 = scalar_lea.vmem %s0, 928
    %v2386 = vld [vmem:[%s2385] sm:$0xff]
    %v2387 = vld [vmem:[%s2385 + $0x10] sm:$0xff]
    %v2388 = vld [vmem:[%s2385 + $0x20] sm:$0xff]
    %v2389 = vld [vmem:[%s2385 + $0x30] sm:$0xff]
    %s2390 = sld [smem:[#allocation3 + $0x6]]
    %v2391 = vstv %s2390
    %v2392 = vmul.f32 %v2391, %v2386
    %v2393 = vmul.f32 %v2391, %v2387
    %v2394 = vmul.f32 %v2391, %v2388
    %v2395 = vmul.f32 %v2391, %v2389
    %v2396 = vadd.f32 %v2361, %v2392
    %v2397 = vadd.f32 %v2362, %v2393
    %v2398 = vadd.f32 %v2363, %v2394
    %v2399 = vadd.f32 %v2364, %v2395
    %s2400 = sld [smem:[#allocation3 + $0x86]]
    %v2401 = vstv %s2400
    %v2402 = vmul.f32 %v2401, %v2386
    %v2403 = vmul.f32 %v2401, %v2387
    %v2404 = vmul.f32 %v2401, %v2388
    %v2405 = vmul.f32 %v2401, %v2389
    %v2406 = vadd.f32 %v2371, %v2402
    %v2407 = vadd.f32 %v2372, %v2403
    %v2408 = vadd.f32 %v2373, %v2404
    %v2409 = vadd.f32 %v2374, %v2405
    %s2410 = sld [smem:[#allocation3 + $0x106]]
    %v2411 = vstv %s2410
    %v2412 = vmul.f32 %v2411, %v2386
    %v2413 = vmul.f32 %v2411, %v2387
    %v2414 = vmul.f32 %v2411, %v2388
    %v2415 = vmul.f32 %v2411, %v2389
    %v2416 = vadd.f32 %v2381, %v2412
    %v2417 = vadd.f32 %v2382, %v2413
    %v2418 = vadd.f32 %v2383, %v2414
    %v2419 = vadd.f32 %v2384, %v2415
    %s2420 = scalar_lea.vmem %s0, 1072
    %v2421 = vld [vmem:[%s2420] sm:$0xff]
    %v2422 = vld [vmem:[%s2420 + $0x10] sm:$0xff]
    %v2423 = vld [vmem:[%s2420 + $0x20] sm:$0xff]
    %v2424 = vld [vmem:[%s2420 + $0x30] sm:$0xff]
    %s2425 = sld [smem:[#allocation3 + $0x7]]
    %v2426 = vstv %s2425
    %v2427 = vmul.f32 %v2426, %v2421
    %v2428 = vmul.f32 %v2426, %v2422
    %v2429 = vmul.f32 %v2426, %v2423
    %v2430 = vmul.f32 %v2426, %v2424
    %v2431 = vadd.f32 %v2396, %v2427
    %v2432 = vadd.f32 %v2397, %v2428
    %v2433 = vadd.f32 %v2398, %v2429
    %v2434 = vadd.f32 %v2399, %v2430
    %s2435 = sld [smem:[#allocation3 + $0x87]]
    %v2436 = vstv %s2435
    %v2437 = vmul.f32 %v2436, %v2421
    %v2438 = vmul.f32 %v2436, %v2422
    %v2439 = vmul.f32 %v2436, %v2423
    %v2440 = vmul.f32 %v2436, %v2424
    %v2441 = vadd.f32 %v2406, %v2437
    %v2442 = vadd.f32 %v2407, %v2438
    %v2443 = vadd.f32 %v2408, %v2439
    %v2444 = vadd.f32 %v2409, %v2440
    %s2445 = sld [smem:[#allocation3 + $0x107]]
    %v2446 = vstv %s2445
    %v2447 = vmul.f32 %v2446, %v2421
    %v2448 = vmul.f32 %v2446, %v2422
    %v2449 = vmul.f32 %v2446, %v2423
    %v2450 = vmul.f32 %v2446, %v2424
    %v2451 = vadd.f32 %v2416, %v2447
    %v2452 = vadd.f32 %v2417, %v2448
    %v2453 = vadd.f32 %v2418, %v2449
    %v2454 = vadd.f32 %v2419, %v2450
    %s2455 = scalar_lea.vmem %s0, 1216
    %v2456 = vld [vmem:[%s2455] sm:$0xff]
    %v2457 = vld [vmem:[%s2455 + $0x10] sm:$0xff]
    %v2458 = vld [vmem:[%s2455 + $0x20] sm:$0xff]
    %v2459 = vld [vmem:[%s2455 + $0x30] sm:$0xff]
    %s2460 = sld [smem:[#allocation3 + $0x8]]
    %v2461 = vstv %s2460
    %v2462 = vmul.f32 %v2461, %v2456
    %v2463 = vmul.f32 %v2461, %v2457
    %v2464 = vmul.f32 %v2461, %v2458
    %v2465 = vmul.f32 %v2461, %v2459
    %v2466 = vadd.f32 %v2431, %v2462
    %v2467 = vadd.f32 %v2432, %v2463
    %v2468 = vadd.f32 %v2433, %v2464
    %v2469 = vadd.f32 %v2434, %v2465
    %s2470 = sld [smem:[#allocation3 + $0x88]]
    %v2471 = vstv %s2470
    %v2472 = vmul.f32 %v2471, %v2456
    %v2473 = vmul.f32 %v2471, %v2457
    %v2474 = vmul.f32 %v2471, %v2458
    %v2475 = vmul.f32 %v2471, %v2459
    %v2476 = vadd.f32 %v2441, %v2472
    %v2477 = vadd.f32 %v2442, %v2473
    %v2478 = vadd.f32 %v2443, %v2474
    %v2479 = vadd.f32 %v2444, %v2475
    %s2480 = sld [smem:[#allocation3 + $0x108]]
    %v2481 = vstv %s2480
    %v2482 = vmul.f32 %v2481, %v2456
    %v2483 = vmul.f32 %v2481, %v2457
    %v2484 = vmul.f32 %v2481, %v2458
    %v2485 = vmul.f32 %v2481, %v2459
    %v2486 = vadd.f32 %v2451, %v2482
    %v2487 = vadd.f32 %v2452, %v2483
    %v2488 = vadd.f32 %v2453, %v2484
    %v2489 = vadd.f32 %v2454, %v2485
    %v2490 = vmul.f32 %v2193, %v2211
    %v2491 = vmul.f32 %v2193, %v2212
    %v2492 = vmul.f32 %v2193, %v2213
    %v2493 = vmul.f32 %v2193, %v2214
    %v2494 = vmul.f32 %v2199, %v2211
    %v2495 = vmul.f32 %v2199, %v2212
    %v2496 = vmul.f32 %v2199, %v2213
    %v2497 = vmul.f32 %v2199, %v2214
    %v2498 = vmul.f32 %v2205, %v2211
    %v2499 = vmul.f32 %v2205, %v2212
    %v2500 = vmul.f32 %v2205, %v2213
    %v2501 = vmul.f32 %v2205, %v2214
    %v2502 = vmul.f32 %v2216, %v2246
    %v2503 = vmul.f32 %v2216, %v2247
    %v2504 = vmul.f32 %v2216, %v2248
    %v2505 = vmul.f32 %v2216, %v2249
    %v2506 = vadd.f32 %v2490, %v2502
    %v2507 = vadd.f32 %v2491, %v2503
    %v2508 = vadd.f32 %v2492, %v2504
    %v2509 = vadd.f32 %v2493, %v2505
    %v2510 = vmul.f32 %v2226, %v2246
    %v2511 = vmul.f32 %v2226, %v2247
    %v2512 = vmul.f32 %v2226, %v2248
    %v2513 = vmul.f32 %v2226, %v2249
    %v2514 = vadd.f32 %v2494, %v2510
    %v2515 = vadd.f32 %v2495, %v2511
    %v2516 = vadd.f32 %v2496, %v2512
    %v2517 = vadd.f32 %v2497, %v2513
    %v2518 = vmul.f32 %v2236, %v2246
    %v2519 = vmul.f32 %v2236, %v2247
    %v2520 = vmul.f32 %v2236, %v2248
    %v2521 = vmul.f32 %v2236, %v2249
    %v2522 = vadd.f32 %v2498, %v2518
    %v2523 = vadd.f32 %v2499, %v2519
    %v2524 = vadd.f32 %v2500, %v2520
    %v2525 = vadd.f32 %v2501, %v2521
    %v2526 = vld [vmem:[%s2187 + $0x1] sm:$0xff]
    %v2527 = vld [vmem:[%s2187 + $0x11] sm:$0xff]
    %v2528 = vld [vmem:[%s2187 + $0x21] sm:$0xff]
    %v2529 = vld [vmem:[%s2187 + $0x31] sm:$0xff]
    %v2530 = vmul.f32 %v2251, %v2526
    %v2531 = vmul.f32 %v2251, %v2527
    %v2532 = vmul.f32 %v2251, %v2528
    %v2533 = vmul.f32 %v2251, %v2529
    %v2534 = vadd.f32 %v2506, %v2530
    %v2535 = vadd.f32 %v2507, %v2531
    %v2536 = vadd.f32 %v2508, %v2532
    %v2537 = vadd.f32 %v2509, %v2533
    %v2538 = vmul.f32 %v2261, %v2526
    %v2539 = vmul.f32 %v2261, %v2527
    %v2540 = vmul.f32 %v2261, %v2528
    %v2541 = vmul.f32 %v2261, %v2529
    %v2542 = vadd.f32 %v2514, %v2538
    %v2543 = vadd.f32 %v2515, %v2539
    %v2544 = vadd.f32 %v2516, %v2540
    %v2545 = vadd.f32 %v2517, %v2541
    %v2546 = vmul.f32 %v2271, %v2526
    %v2547 = vmul.f32 %v2271, %v2527
    %v2548 = vmul.f32 %v2271, %v2528
    %v2549 = vmul.f32 %v2271, %v2529
    %v2550 = vadd.f32 %v2522, %v2546
    %v2551 = vadd.f32 %v2523, %v2547
    %v2552 = vadd.f32 %v2524, %v2548
    %v2553 = vadd.f32 %v2525, %v2549
    %v2554 = vmul.f32 %v2286, %v2316
    %v2555 = vmul.f32 %v2286, %v2317
    %v2556 = vmul.f32 %v2286, %v2318
    %v2557 = vmul.f32 %v2286, %v2319
    %v2558 = vadd.f32 %v2534, %v2554
    %v2559 = vadd.f32 %v2535, %v2555
    %v2560 = vadd.f32 %v2536, %v2556
    %v2561 = vadd.f32 %v2537, %v2557
    %v2562 = vmul.f32 %v2296, %v2316
    %v2563 = vmul.f32 %v2296, %v2317
    %v2564 = vmul.f32 %v2296, %v2318
    %v2565 = vmul.f32 %v2296, %v2319
    %v2566 = vadd.f32 %v2542, %v2562
    %v2567 = vadd.f32 %v2543, %v2563
    %v2568 = vadd.f32 %v2544, %v2564
    %v2569 = vadd.f32 %v2545, %v2565
    %v2570 = vmul.f32 %v2306, %v2316
    %v2571 = vmul.f32 %v2306, %v2317
    %v2572 = vmul.f32 %v2306, %v2318
    %v2573 = vmul.f32 %v2306, %v2319
    %v2574 = vadd.f32 %v2550, %v2570
    %v2575 = vadd.f32 %v2551, %v2571
    %v2576 = vadd.f32 %v2552, %v2572
    %v2577 = vadd.f32 %v2553, %v2573
    %v2578 = vmul.f32 %v2321, %v2351
    %v2579 = vmul.f32 %v2321, %v2352
    %v2580 = vmul.f32 %v2321, %v2353
    %v2581 = vmul.f32 %v2321, %v2354
    %v2582 = vadd.f32 %v2558, %v2578
    %v2583 = vadd.f32 %v2559, %v2579
    %v2584 = vadd.f32 %v2560, %v2580
    %v2585 = vadd.f32 %v2561, %v2581
    %v2586 = vmul.f32 %v2331, %v2351
    %v2587 = vmul.f32 %v2331, %v2352
    %v2588 = vmul.f32 %v2331, %v2353
    %v2589 = vmul.f32 %v2331, %v2354
    %v2590 = vadd.f32 %v2566, %v2586
    %v2591 = vadd.f32 %v2567, %v2587
    %v2592 = vadd.f32 %v2568, %v2588
    %v2593 = vadd.f32 %v2569, %v2589
    %v2594 = vmul.f32 %v2341, %v2351
    %v2595 = vmul.f32 %v2341, %v2352
    %v2596 = vmul.f32 %v2341, %v2353
    %v2597 = vmul.f32 %v2341, %v2354
    %v2598 = vadd.f32 %v2574, %v2594
    %v2599 = vadd.f32 %v2575, %v2595
    %v2600 = vadd.f32 %v2576, %v2596
    %v2601 = vadd.f32 %v2577, %v2597
    %v2602 = vld [vmem:[%s2280 + $0x1] sm:$0xff]
    %v2603 = vld [vmem:[%s2280 + $0x11] sm:$0xff]
    %v2604 = vld [vmem:[%s2280 + $0x21] sm:$0xff]
    %v2605 = vld [vmem:[%s2280 + $0x31] sm:$0xff]
    %v2606 = vmul.f32 %v2356, %v2602
    %v2607 = vmul.f32 %v2356, %v2603
    %v2608 = vmul.f32 %v2356, %v2604
    %v2609 = vmul.f32 %v2356, %v2605
    %v2610 = vadd.f32 %v2582, %v2606
    %v2611 = vadd.f32 %v2583, %v2607
    %v2612 = vadd.f32 %v2584, %v2608
    %v2613 = vadd.f32 %v2585, %v2609
    %v2614 = vmul.f32 %v2366, %v2602
    %v2615 = vmul.f32 %v2366, %v2603
    %v2616 = vmul.f32 %v2366, %v2604
    %v2617 = vmul.f32 %v2366, %v2605
    %v2618 = vadd.f32 %v2590, %v2614
    %v2619 = vadd.f32 %v2591, %v2615
    %v2620 = vadd.f32 %v2592, %v2616
    %v2621 = vadd.f32 %v2593, %v2617
    %v2622 = vmul.f32 %v2376, %v2602
    %v2623 = vmul.f32 %v2376, %v2603
    %v2624 = vmul.f32 %v2376, %v2604
    %v2625 = vmul.f32 %v2376, %v2605
    %v2626 = vadd.f32 %v2598, %v2622
    %v2627 = vadd.f32 %v2599, %v2623
    %v2628 = vadd.f32 %v2600, %v2624
    %v2629 = vadd.f32 %v2601, %v2625
    %v2630 = vmul.f32 %v2391, %v2421
    %v2631 = vmul.f32 %v2391, %v2422
    %v2632 = vmul.f32 %v2391, %v2423
    %v2633 = vmul.f32 %v2391, %v2424
    %v2634 = vadd.f32 %v2610, %v2630
    %v2635 = vadd.f32 %v2611, %v2631
    %v2636 = vadd.f32 %v2612, %v2632
    %v2637 = vadd.f32 %v2613, %v2633
    %v2638 = vmul.f32 %v2401, %v2421
    %v2639 = vmul.f32 %v2401, %v2422
    %v2640 = vmul.f32 %v2401, %v2423
    %v2641 = vmul.f32 %v2401, %v2424
    %v2642 = vadd.f32 %v2618, %v2638
    %v2643 = vadd.f32 %v2619, %v2639
    %v2644 = vadd.f32 %v2620, %v2640
    %v2645 = vadd.f32 %v2621, %v2641
    %v2646 = vmul.f32 %v2411, %v2421
    %v2647 = vmul.f32 %v2411, %v2422
    %v2648 = vmul.f32 %v2411, %v2423
    %v2649 = vmul.f32 %v2411, %v2424
    %v2650 = vadd.f32 %v2626, %v2646
    %v2651 = vadd.f32 %v2627, %v2647
    %v2652 = vadd.f32 %v2628, %v2648
    %v2653 = vadd.f32 %v2629, %v2649
    %v2654 = vmul.f32 %v2426, %v2456
    %v2655 = vmul.f32 %v2426, %v2457
    %v2656 = vmul.f32 %v2426, %v2458
    %v2657 = vmul.f32 %v2426, %v2459
    %v2658 = vadd.f32 %v2634, %v2654
    %v2659 = vadd.f32 %v2635, %v2655
    %v2660 = vadd.f32 %v2636, %v2656
    %v2661 = vadd.f32 %v2637, %v2657
    %v2662 = vmul.f32 %v2436, %v2456
    %v2663 = vmul.f32 %v2436, %v2457
    %v2664 = vmul.f32 %v2436, %v2458
    %v2665 = vmul.f32 %v2436, %v2459
    %v2666 = vadd.f32 %v2642, %v2662
    %v2667 = vadd.f32 %v2643, %v2663
    %v2668 = vadd.f32 %v2644, %v2664
    %v2669 = vadd.f32 %v2645, %v2665
    %v2670 = vmul.f32 %v2446, %v2456
    %v2671 = vmul.f32 %v2446, %v2457
    %v2672 = vmul.f32 %v2446, %v2458
    %v2673 = vmul.f32 %v2446, %v2459
    %v2674 = vadd.f32 %v2650, %v2670
    %v2675 = vadd.f32 %v2651, %v2671
    %v2676 = vadd.f32 %v2652, %v2672
    %v2677 = vadd.f32 %v2653, %v2673
    %v2678 = vld [vmem:[%s2385 + $0x1] sm:$0xff]
    %v2679 = vld [vmem:[%s2385 + $0x11] sm:$0xff]
    %v2680 = vld [vmem:[%s2385 + $0x21] sm:$0xff]
    %v2681 = vld [vmem:[%s2385 + $0x31] sm:$0xff]
    %v2682 = vmul.f32 %v2461, %v2678
    %v2683 = vmul.f32 %v2461, %v2679
    %v2684 = vmul.f32 %v2461, %v2680
    %v2685 = vmul.f32 %v2461, %v2681
    %v2686 = vadd.f32 %v2658, %v2682
    %v2687 = vadd.f32 %v2659, %v2683
    %v2688 = vadd.f32 %v2660, %v2684
    %v2689 = vadd.f32 %v2661, %v2685
    %v2690 = vmul.f32 %v2471, %v2678
    %v2691 = vmul.f32 %v2471, %v2679
    %v2692 = vmul.f32 %v2471, %v2680
    %v2693 = vmul.f32 %v2471, %v2681
    %v2694 = vadd.f32 %v2666, %v2690
    %v2695 = vadd.f32 %v2667, %v2691
    %v2696 = vadd.f32 %v2668, %v2692
    %v2697 = vadd.f32 %v2669, %v2693
    %v2698 = vmul.f32 %v2481, %v2678
    %v2699 = vmul.f32 %v2481, %v2679
    %v2700 = vmul.f32 %v2481, %v2680
    %v2701 = vmul.f32 %v2481, %v2681
    %v2702 = vadd.f32 %v2674, %v2698
    %v2703 = vadd.f32 %v2675, %v2699
    %v2704 = vadd.f32 %v2676, %v2700
    %v2705 = vadd.f32 %v2677, %v2701
    %v2706 = vmax.f32 %v2466, %v2686
    %v2707 = vmax.f32 %v2467, %v2687
    %v2708 = vmax.f32 %v2468, %v2688
    %v2709 = vmax.f32 %v2469, %v2689
    %v2710 = vmax.f32 %v2476, %v2694
    %v2711 = vmax.f32 %v2477, %v2695
    %v2712 = vmax.f32 %v2478, %v2696
    %v2713 = vmax.f32 %v2479, %v2697
    %v2714 = vmax.f32 %v2486, %v2702
    %v2715 = vmax.f32 %v2487, %v2703
    %v2716 = vmax.f32 %v2488, %v2704
    %v2717 = vmax.f32 %v2489, %v2705
    %v2718 = vmul.f32 %v2193, %v2246
    %v2719 = vmul.f32 %v2193, %v2247
    %v2720 = vmul.f32 %v2193, %v2248
    %v2721 = vmul.f32 %v2193, %v2249
    %v2722 = vmul.f32 %v2199, %v2246
    %v2723 = vmul.f32 %v2199, %v2247
    %v2724 = vmul.f32 %v2199, %v2248
    %v2725 = vmul.f32 %v2199, %v2249
    %v2726 = vmul.f32 %v2205, %v2246
    %v2727 = vmul.f32 %v2205, %v2247
    %v2728 = vmul.f32 %v2205, %v2248
    %v2729 = vmul.f32 %v2205, %v2249
    %v2730 = vmul.f32 %v2216, %v2526
    %v2731 = vmul.f32 %v2216, %v2527
    %v2732 = vmul.f32 %v2216, %v2528
    %v2733 = vmul.f32 %v2216, %v2529
    %v2734 = vadd.f32 %v2718, %v2730
    %v2735 = vadd.f32 %v2719, %v2731
    %v2736 = vadd.f32 %v2720, %v2732
    %v2737 = vadd.f32 %v2721, %v2733
    %v2738 = vmul.f32 %v2226, %v2526
    %v2739 = vmul.f32 %v2226, %v2527
    %v2740 = vmul.f32 %v2226, %v2528
    %v2741 = vmul.f32 %v2226, %v2529
    %v2742 = vadd.f32 %v2722, %v2738
    %v2743 = vadd.f32 %v2723, %v2739
    %v2744 = vadd.f32 %v2724, %v2740
    %v2745 = vadd.f32 %v2725, %v2741
    %v2746 = vmul.f32 %v2236, %v2526
    %v2747 = vmul.f32 %v2236, %v2527
    %v2748 = vmul.f32 %v2236, %v2528
    %v2749 = vmul.f32 %v2236, %v2529
    %v2750 = vadd.f32 %v2726, %v2746
    %v2751 = vadd.f32 %v2727, %v2747
    %v2752 = vadd.f32 %v2728, %v2748
    %v2753 = vadd.f32 %v2729, %v2749
    %v2754 = vld [vmem:[%s2210 + $0x1] sm:$0xff]
    %v2755 = vld [vmem:[%s2210 + $0x11] sm:$0xff]
    %v2756 = vld [vmem:[%s2210 + $0x21] sm:$0xff]
    %v2757 = vld [vmem:[%s2210 + $0x31] sm:$0xff]
    %v2758 = vmul.f32 %v2251, %v2754
    %v2759 = vmul.f32 %v2251, %v2755
    %v2760 = vmul.f32 %v2251, %v2756
    %v2761 = vmul.f32 %v2251, %v2757
    %v2762 = vadd.f32 %v2734, %v2758
    %v2763 = vadd.f32 %v2735, %v2759
    %v2764 = vadd.f32 %v2736, %v2760
    %v2765 = vadd.f32 %v2737, %v2761
    %v2766 = vmul.f32 %v2261, %v2754
    %v2767 = vmul.f32 %v2261, %v2755
    %v2768 = vmul.f32 %v2261, %v2756
    %v2769 = vmul.f32 %v2261, %v2757
    %v2770 = vadd.f32 %v2742, %v2766
    %v2771 = vadd.f32 %v2743, %v2767
    %v2772 = vadd.f32 %v2744, %v2768
    %v2773 = vadd.f32 %v2745, %v2769
    %v2774 = vmul.f32 %v2271, %v2754
    %v2775 = vmul.f32 %v2271, %v2755
    %v2776 = vmul.f32 %v2271, %v2756
    %v2777 = vmul.f32 %v2271, %v2757
    %v2778 = vadd.f32 %v2750, %v2774
    %v2779 = vadd.f32 %v2751, %v2775
    %v2780 = vadd.f32 %v2752, %v2776
    %v2781 = vadd.f32 %v2753, %v2777
    %v2782 = vmul.f32 %v2286, %v2351
    %v2783 = vmul.f32 %v2286, %v2352
    %v2784 = vmul.f32 %v2286, %v2353
    %v2785 = vmul.f32 %v2286, %v2354
    %v2786 = vadd.f32 %v2762, %v2782
    %v2787 = vadd.f32 %v2763, %v2783
    %v2788 = vadd.f32 %v2764, %v2784
    %v2789 = vadd.f32 %v2765, %v2785
    %v2790 = vmul.f32 %v2296, %v2351
    %v2791 = vmul.f32 %v2296, %v2352
    %v2792 = vmul.f32 %v2296, %v2353
    %v2793 = vmul.f32 %v2296, %v2354
    %v2794 = vadd.f32 %v2770, %v2790
    %v2795 = vadd.f32 %v2771, %v2791
    %v2796 = vadd.f32 %v2772, %v2792
    %v2797 = vadd.f32 %v2773, %v2793
    %v2798 = vmul.f32 %v2306, %v2351
    %v2799 = vmul.f32 %v2306, %v2352
    %v2800 = vmul.f32 %v2306, %v2353
    %v2801 = vmul.f32 %v2306, %v2354
    %v2802 = vadd.f32 %v2778, %v2798
    %v2803 = vadd.f32 %v2779, %v2799
    %v2804 = vadd.f32 %v2780, %v2800
    %v2805 = vadd.f32 %v2781, %v2801
    %v2806 = vmul.f32 %v2321, %v2602
    %v2807 = vmul.f32 %v2321, %v2603
    %v2808 = vmul.f32 %v2321, %v2604
    %v2809 = vmul.f32 %v2321, %v2605
    %v2810 = vadd.f32 %v2786, %v2806
    %v2811 = vadd.f32 %v2787, %v2807
    %v2812 = vadd.f32 %v2788, %v2808
    %v2813 = vadd.f32 %v2789, %v2809
    %v2814 = vmul.f32 %v2331, %v2602
    %v2815 = vmul.f32 %v2331, %v2603
    %v2816 = vmul.f32 %v2331, %v2604
    %v2817 = vmul.f32 %v2331, %v2605
    %v2818 = vadd.f32 %v2794, %v2814
    %v2819 = vadd.f32 %v2795, %v2815
    %v2820 = vadd.f32 %v2796, %v2816
    %v2821 = vadd.f32 %v2797, %v2817
    %v2822 = vmul.f32 %v2341, %v2602
    %v2823 = vmul.f32 %v2341, %v2603
    %v2824 = vmul.f32 %v2341, %v2604
    %v2825 = vmul.f32 %v2341, %v2605
    %v2826 = vadd.f32 %v2802, %v2822
    %v2827 = vadd.f32 %v2803, %v2823
    %v2828 = vadd.f32 %v2804, %v2824
    %v2829 = vadd.f32 %v2805, %v2825
    %v2830 = vld [vmem:[%s2315 + $0x1] sm:$0xff]
    %v2831 = vld [vmem:[%s2315 + $0x11] sm:$0xff]
    %v2832 = vld [vmem:[%s2315 + $0x21] sm:$0xff]
    %v2833 = vld [vmem:[%s2315 + $0x31] sm:$0xff]
    %v2834 = vmul.f32 %v2356, %v2830
    %v2835 = vmul.f32 %v2356, %v2831
    %v2836 = vmul.f32 %v2356, %v2832
    %v2837 = vmul.f32 %v2356, %v2833
    %v2838 = vadd.f32 %v2810, %v2834
    %v2839 = vadd.f32 %v2811, %v2835
    %v2840 = vadd.f32 %v2812, %v2836
    %v2841 = vadd.f32 %v2813, %v2837
    %v2842 = vmul.f32 %v2366, %v2830
    %v2843 = vmul.f32 %v2366, %v2831
    %v2844 = vmul.f32 %v2366, %v2832
    %v2845 = vmul.f32 %v2366, %v2833
    %v2846 = vadd.f32 %v2818, %v2842
    %v2847 = vadd.f32 %v2819, %v2843
    %v2848 = vadd.f32 %v2820, %v2844
    %v2849 = vadd.f32 %v2821, %v2845
    %v2850 = vmul.f32 %v2376, %v2830
    %v2851 = vmul.f32 %v2376, %v2831
    %v2852 = vmul.f32 %v2376, %v2832
    %v2853 = vmul.f32 %v2376, %v2833
    %v2854 = vadd.f32 %v2826, %v2850
    %v2855 = vadd.f32 %v2827, %v2851
    %v2856 = vadd.f32 %v2828, %v2852
    %v2857 = vadd.f32 %v2829, %v2853
    %v2858 = vmul.f32 %v2391, %v2456
    %v2859 = vmul.f32 %v2391, %v2457
    %v2860 = vmul.f32 %v2391, %v2458
    %v2861 = vmul.f32 %v2391, %v2459
    %v2862 = vadd.f32 %v2838, %v2858
    %v2863 = vadd.f32 %v2839, %v2859
    %v2864 = vadd.f32 %v2840, %v2860
    %v2865 = vadd.f32 %v2841, %v2861
    %v2866 = vmul.f32 %v2401, %v2456
    %v2867 = vmul.f32 %v2401, %v2457
    %v2868 = vmul.f32 %v2401, %v2458
    %v2869 = vmul.f32 %v2401, %v2459
    %v2870 = vadd.f32 %v2846, %v2866
    %v2871 = vadd.f32 %v2847, %v2867
    %v2872 = vadd.f32 %v2848, %v2868
    %v2873 = vadd.f32 %v2849, %v2869
    %v2874 = vmul.f32 %v2411, %v2456
    %v2875 = vmul.f32 %v2411, %v2457
    %v2876 = vmul.f32 %v2411, %v2458
    %v2877 = vmul.f32 %v2411, %v2459
    %v2878 = vadd.f32 %v2854, %v2874
    %v2879 = vadd.f32 %v2855, %v2875
    %v2880 = vadd.f32 %v2856, %v2876
    %v2881 = vadd.f32 %v2857, %v2877
    %v2882 = vmul.f32 %v2426, %v2678
    %v2883 = vmul.f32 %v2426, %v2679
    %v2884 = vmul.f32 %v2426, %v2680
    %v2885 = vmul.f32 %v2426, %v2681
    %v2886 = vadd.f32 %v2862, %v2882
    %v2887 = vadd.f32 %v2863, %v2883
    %v2888 = vadd.f32 %v2864, %v2884
    %v2889 = vadd.f32 %v2865, %v2885
    %v2890 = vmul.f32 %v2436, %v2678
    %v2891 = vmul.f32 %v2436, %v2679
    %v2892 = vmul.f32 %v2436, %v2680
    %v2893 = vmul.f32 %v2436, %v2681
    %v2894 = vadd.f32 %v2870, %v2890
    %v2895 = vadd.f32 %v2871, %v2891
    %v2896 = vadd.f32 %v2872, %v2892
    %v2897 = vadd.f32 %v2873, %v2893
    %v2898 = vmul.f32 %v2446, %v2678
    %v2899 = vmul.f32 %v2446, %v2679
    %v2900 = vmul.f32 %v2446, %v2680
    %v2901 = vmul.f32 %v2446, %v2681
    %v2902 = vadd.f32 %v2878, %v2898
    %v2903 = vadd.f32 %v2879, %v2899
    %v2904 = vadd.f32 %v2880, %v2900
    %v2905 = vadd.f32 %v2881, %v2901
    %v2906 = vld [vmem:[%s2420 + $0x1] sm:$0xff]
    %v2907 = vld [vmem:[%s2420 + $0x11] sm:$0xff]
    %v2908 = vld [vmem:[%s2420 + $0x21] sm:$0xff]
    %v2909 = vld [vmem:[%s2420 + $0x31] sm:$0xff]
    %v2910 = vmul.f32 %v2461, %v2906
    %v2911 = vmul.f32 %v2461, %v2907
    %v2912 = vmul.f32 %v2461, %v2908
    %v2913 = vmul.f32 %v2461, %v2909
    %v2914 = vadd.f32 %v2886, %v2910
    %v2915 = vadd.f32 %v2887, %v2911
    %v2916 = vadd.f32 %v2888, %v2912
    %v2917 = vadd.f32 %v2889, %v2913
    %v2918 = vmul.f32 %v2471, %v2906
    %v2919 = vmul.f32 %v2471, %v2907
    %v2920 = vmul.f32 %v2471, %v2908
    %v2921 = vmul.f32 %v2471, %v2909
    %v2922 = vadd.f32 %v2894, %v2918
    %v2923 = vadd.f32 %v2895, %v2919
    %v2924 = vadd.f32 %v2896, %v2920
    %v2925 = vadd.f32 %v2897, %v2921
    %v2926 = vmul.f32 %v2481, %v2906
    %v2927 = vmul.f32 %v2481, %v2907
    %v2928 = vmul.f32 %v2481, %v2908
    %v2929 = vmul.f32 %v2481, %v2909
    %v2930 = vadd.f32 %v2902, %v2926
    %v2931 = vadd.f32 %v2903, %v2927
    %v2932 = vadd.f32 %v2904, %v2928
    %v2933 = vadd.f32 %v2905, %v2929
    %v2934 = vmax.f32 %v2706, %v2914
    %v2935 = vmax.f32 %v2707, %v2915
    %v2936 = vmax.f32 %v2708, %v2916
    %v2937 = vmax.f32 %v2709, %v2917
    %v2938 = vmax.f32 %v2710, %v2922
    %v2939 = vmax.f32 %v2711, %v2923
    %v2940 = vmax.f32 %v2712, %v2924
    %v2941 = vmax.f32 %v2713, %v2925
    %v2942 = vmax.f32 %v2714, %v2930
    %v2943 = vmax.f32 %v2715, %v2931
    %v2944 = vmax.f32 %v2716, %v2932
    %v2945 = vmax.f32 %v2717, %v2933
    %v2946 = vmul.f32 %v2193, %v2281
    %v2947 = vmul.f32 %v2193, %v2282
    %v2948 = vmul.f32 %v2193, %v2283
    %v2949 = vmul.f32 %v2193, %v2284
    %v2950 = vmul.f32 %v2199, %v2281
    %v2951 = vmul.f32 %v2199, %v2282
    %v2952 = vmul.f32 %v2199, %v2283
    %v2953 = vmul.f32 %v2199, %v2284
    %v2954 = vmul.f32 %v2205, %v2281
    %v2955 = vmul.f32 %v2205, %v2282
    %v2956 = vmul.f32 %v2205, %v2283
    %v2957 = vmul.f32 %v2205, %v2284
    %v2958 = vmul.f32 %v2216, %v2316
    %v2959 = vmul.f32 %v2216, %v2317
    %v2960 = vmul.f32 %v2216, %v2318
    %v2961 = vmul.f32 %v2216, %v2319
    %v2962 = vadd.f32 %v2946, %v2958
    %v2963 = vadd.f32 %v2947, %v2959
    %v2964 = vadd.f32 %v2948, %v2960
    %v2965 = vadd.f32 %v2949, %v2961
    %v2966 = vmul.f32 %v2226, %v2316
    %v2967 = vmul.f32 %v2226, %v2317
    %v2968 = vmul.f32 %v2226, %v2318
    %v2969 = vmul.f32 %v2226, %v2319
    %v2970 = vadd.f32 %v2950, %v2966
    %v2971 = vadd.f32 %v2951, %v2967
    %v2972 = vadd.f32 %v2952, %v2968
    %v2973 = vadd.f32 %v2953, %v2969
    %v2974 = vmul.f32 %v2236, %v2316
    %v2975 = vmul.f32 %v2236, %v2317
    %v2976 = vmul.f32 %v2236, %v2318
    %v2977 = vmul.f32 %v2236, %v2319
    %v2978 = vadd.f32 %v2954, %v2974
    %v2979 = vadd.f32 %v2955, %v2975
    %v2980 = vadd.f32 %v2956, %v2976
    %v2981 = vadd.f32 %v2957, %v2977
    %v2982 = vmul.f32 %v2251, %v2351
    %v2983 = vmul.f32 %v2251, %v2352
    %v2984 = vmul.f32 %v2251, %v2353
    %v2985 = vmul.f32 %v2251, %v2354
    %v2986 = vadd.f32 %v2962, %v2982
    %v2987 = vadd.f32 %v2963, %v2983
    %v2988 = vadd.f32 %v2964, %v2984
    %v2989 = vadd.f32 %v2965, %v2985
    %v2990 = vmul.f32 %v2261, %v2351
    %v2991 = vmul.f32 %v2261, %v2352
    %v2992 = vmul.f32 %v2261, %v2353
    %v2993 = vmul.f32 %v2261, %v2354
    %v2994 = vadd.f32 %v2970, %v2990
    %v2995 = vadd.f32 %v2971, %v2991
    %v2996 = vadd.f32 %v2972, %v2992
    %v2997 = vadd.f32 %v2973, %v2993
    %v2998 = vmul.f32 %v2271, %v2351
    %v2999 = vmul.f32 %v2271, %v2352
    %v3000 = vmul.f32 %v2271, %v2353
    %v3001 = vmul.f32 %v2271, %v2354
    %v3002 = vadd.f32 %v2978, %v2998
    %v3003 = vadd.f32 %v2979, %v2999
    %v3004 = vadd.f32 %v2980, %v3000
    %v3005 = vadd.f32 %v2981, %v3001
    %v3006 = vmul.f32 %v2286, %v2386
    %v3007 = vmul.f32 %v2286, %v2387
    %v3008 = vmul.f32 %v2286, %v2388
    %v3009 = vmul.f32 %v2286, %v2389
    %v3010 = vadd.f32 %v2986, %v3006
    %v3011 = vadd.f32 %v2987, %v3007
    %v3012 = vadd.f32 %v2988, %v3008
    %v3013 = vadd.f32 %v2989, %v3009
    %v3014 = vmul.f32 %v2296, %v2386
    %v3015 = vmul.f32 %v2296, %v2387
    %v3016 = vmul.f32 %v2296, %v2388
    %v3017 = vmul.f32 %v2296, %v2389
    %v3018 = vadd.f32 %v2994, %v3014
    %v3019 = vadd.f32 %v2995, %v3015
    %v3020 = vadd.f32 %v2996, %v3016
    %v3021 = vadd.f32 %v2997, %v3017
    %v3022 = vmul.f32 %v2306, %v2386
    %v3023 = vmul.f32 %v2306, %v2387
    %v3024 = vmul.f32 %v2306, %v2388
    %v3025 = vmul.f32 %v2306, %v2389
    %v3026 = vadd.f32 %v3002, %v3022
    %v3027 = vadd.f32 %v3003, %v3023
    %v3028 = vadd.f32 %v3004, %v3024
    %v3029 = vadd.f32 %v3005, %v3025
    %v3030 = vmul.f32 %v2321, %v2421
    %v3031 = vmul.f32 %v2321, %v2422
    %v3032 = vmul.f32 %v2321, %v2423
    %v3033 = vmul.f32 %v2321, %v2424
    %v3034 = vadd.f32 %v3010, %v3030
    %v3035 = vadd.f32 %v3011, %v3031
    %v3036 = vadd.f32 %v3012, %v3032
    %v3037 = vadd.f32 %v3013, %v3033
    %v3038 = vmul.f32 %v2331, %v2421
    %v3039 = vmul.f32 %v2331, %v2422
    %v3040 = vmul.f32 %v2331, %v2423
    %v3041 = vmul.f32 %v2331, %v2424
    %v3042 = vadd.f32 %v3018, %v3038
    %v3043 = vadd.f32 %v3019, %v3039
    %v3044 = vadd.f32 %v3020, %v3040
    %v3045 = vadd.f32 %v3021, %v3041
    %v3046 = vmul.f32 %v2341, %v2421
    %v3047 = vmul.f32 %v2341, %v2422
    %v3048 = vmul.f32 %v2341, %v2423
    %v3049 = vmul.f32 %v2341, %v2424
    %v3050 = vadd.f32 %v3026, %v3046
    %v3051 = vadd.f32 %v3027, %v3047
    %v3052 = vadd.f32 %v3028, %v3048
    %v3053 = vadd.f32 %v3029, %v3049
    %v3054 = vmul.f32 %v2356, %v2456
    %v3055 = vmul.f32 %v2356, %v2457
    %v3056 = vmul.f32 %v2356, %v2458
    %v3057 = vmul.f32 %v2356, %v2459
    %v3058 = vadd.f32 %v3034, %v3054
    %v3059 = vadd.f32 %v3035, %v3055
    %v3060 = vadd.f32 %v3036, %v3056
    %v3061 = vadd.f32 %v3037, %v3057
    %v3062 = vmul.f32 %v2366, %v2456
    %v3063 = vmul.f32 %v2366, %v2457
    %v3064 = vmul.f32 %v2366, %v2458
    %v3065 = vmul.f32 %v2366, %v2459
    %v3066 = vadd.f32 %v3042, %v3062
    %v3067 = vadd.f32 %v3043, %v3063
    %v3068 = vadd.f32 %v3044, %v3064
    %v3069 = vadd.f32 %v3045, %v3065
    %v3070 = vmul.f32 %v2376, %v2456
    %v3071 = vmul.f32 %v2376, %v2457
    %v3072 = vmul.f32 %v2376, %v2458
    %v3073 = vmul.f32 %v2376, %v2459
    %v3074 = vadd.f32 %v3050, %v3070
    %v3075 = vadd.f32 %v3051, %v3071
    %v3076 = vadd.f32 %v3052, %v3072
    %v3077 = vadd.f32 %v3053, %v3073
    %s3078 = scalar_lea.vmem %s0, 80
    %v3079 = vld [vmem:[%s3078] sm:$0xff]
    %v3080 = vld [vmem:[%s3078 + $0x10] sm:$0xff]
    %v3081 = vld [vmem:[%s3078 + $0x20] sm:$0xff]
    %v3082 = vld [vmem:[%s3078 + $0x30] sm:$0xff]
    %v3083 = vmul.f32 %v2391, %v3079
    %v3084 = vmul.f32 %v2391, %v3080
    %v3085 = vmul.f32 %v2391, %v3081
    %v3086 = vmul.f32 %v2391, %v3082
    %v3087 = vadd.f32 %v3058, %v3083
    %v3088 = vadd.f32 %v3059, %v3084
    %v3089 = vadd.f32 %v3060, %v3085
    %v3090 = vadd.f32 %v3061, %v3086
    %v3091 = vmul.f32 %v2401, %v3079
    %v3092 = vmul.f32 %v2401, %v3080
    %v3093 = vmul.f32 %v2401, %v3081
    %v3094 = vmul.f32 %v2401, %v3082
    %v3095 = vadd.f32 %v3066, %v3091
    %v3096 = vadd.f32 %v3067, %v3092
    %v3097 = vadd.f32 %v3068, %v3093
    %v3098 = vadd.f32 %v3069, %v3094
    %v3099 = vmul.f32 %v2411, %v3079
    %v3100 = vmul.f32 %v2411, %v3080
    %v3101 = vmul.f32 %v2411, %v3081
    %v3102 = vmul.f32 %v2411, %v3082
    %v3103 = vadd.f32 %v3074, %v3099
    %v3104 = vadd.f32 %v3075, %v3100
    %v3105 = vadd.f32 %v3076, %v3101
    %v3106 = vadd.f32 %v3077, %v3102
    %s3107 = scalar_lea.vmem %s0, 224
    %v3108 = vld [vmem:[%s3107] sm:$0xff]
    %v3109 = vld [vmem:[%s3107 + $0x10] sm:$0xff]
    %v3110 = vld [vmem:[%s3107 + $0x20] sm:$0xff]
    %v3111 = vld [vmem:[%s3107 + $0x30] sm:$0xff]
    %v3112 = vmul.f32 %v2426, %v3108
    %v3113 = vmul.f32 %v2426, %v3109
    %v3114 = vmul.f32 %v2426, %v3110
    %v3115 = vmul.f32 %v2426, %v3111
    %v3116 = vadd.f32 %v3087, %v3112
    %v3117 = vadd.f32 %v3088, %v3113
    %v3118 = vadd.f32 %v3089, %v3114
    %v3119 = vadd.f32 %v3090, %v3115
    %v3120 = vmul.f32 %v2436, %v3108
    %v3121 = vmul.f32 %v2436, %v3109
    %v3122 = vmul.f32 %v2436, %v3110
    %v3123 = vmul.f32 %v2436, %v3111
    %v3124 = vadd.f32 %v3095, %v3120
    %v3125 = vadd.f32 %v3096, %v3121
    %v3126 = vadd.f32 %v3097, %v3122
    %v3127 = vadd.f32 %v3098, %v3123
    %v3128 = vmul.f32 %v2446, %v3108
    %v3129 = vmul.f32 %v2446, %v3109
    %v3130 = vmul.f32 %v2446, %v3110
    %v3131 = vmul.f32 %v2446, %v3111
    %v3132 = vadd.f32 %v3103, %v3128
    %v3133 = vadd.f32 %v3104, %v3129
    %v3134 = vadd.f32 %v3105, %v3130
    %v3135 = vadd.f32 %v3106, %v3131
    %s3136 = scalar_lea.vmem %s0, 368
    %v3137 = vld [vmem:[%s3136] sm:$0xff]
    %v3138 = vld [vmem:[%s3136 + $0x10] sm:$0xff]
    %v3139 = vld [vmem:[%s3136 + $0x20] sm:$0xff]
    %v3140 = vld [vmem:[%s3136 + $0x30] sm:$0xff]
    %v3141 = vmul.f32 %v2461, %v3137
    %v3142 = vmul.f32 %v2461, %v3138
    %v3143 = vmul.f32 %v2461, %v3139
    %v3144 = vmul.f32 %v2461, %v3140
    %v3145 = vadd.f32 %v3116, %v3141
    %v3146 = vadd.f32 %v3117, %v3142
    %v3147 = vadd.f32 %v3118, %v3143
    %v3148 = vadd.f32 %v3119, %v3144
    %v3149 = vmul.f32 %v2471, %v3137
    %v3150 = vmul.f32 %v2471, %v3138
    %v3151 = vmul.f32 %v2471, %v3139
    %v3152 = vmul.f32 %v2471, %v3140
    %v3153 = vadd.f32 %v3124, %v3149
    %v3154 = vadd.f32 %v3125, %v3150
    %v3155 = vadd.f32 %v3126, %v3151
    %v3156 = vadd.f32 %v3127, %v3152
    %v3157 = vmul.f32 %v2481, %v3137
    %v3158 = vmul.f32 %v2481, %v3138
    %v3159 = vmul.f32 %v2481, %v3139
    %v3160 = vmul.f32 %v2481, %v3140
    %v3161 = vadd.f32 %v3132, %v3157
    %v3162 = vadd.f32 %v3133, %v3158
    %v3163 = vadd.f32 %v3134, %v3159
    %v3164 = vadd.f32 %v3135, %v3160
    %v3165 = vmax.f32 %v2934, %v3145
    %v3166 = vmax.f32 %v2935, %v3146
    %v3167 = vmax.f32 %v2936, %v3147
    %v3168 = vmax.f32 %v2937, %v3148
    %v3169 = vmax.f32 %v2938, %v3153
    %v3170 = vmax.f32 %v2939, %v3154
    %v3171 = vmax.f32 %v2940, %v3155
    %v3172 = vmax.f32 %v2941, %v3156
    %v3173 = vmax.f32 %v2942, %v3161
    %v3174 = vmax.f32 %v2943, %v3162
    %v3175 = vmax.f32 %v2944, %v3163
    %v3176 = vmax.f32 %v2945, %v3164
    %v3177 = vmul.f32 %v2193, %v2316
    %v3178 = vmul.f32 %v2193, %v2317
    %v3179 = vmul.f32 %v2193, %v2318
    %v3180 = vmul.f32 %v2193, %v2319
    %v3181 = vmul.f32 %v2199, %v2316
    %v3182 = vmul.f32 %v2199, %v2317
    %v3183 = vmul.f32 %v2199, %v2318
    %v3184 = vmul.f32 %v2199, %v2319
    %v3185 = vmul.f32 %v2205, %v2316
    %v3186 = vmul.f32 %v2205, %v2317
    %v3187 = vmul.f32 %v2205, %v2318
    %v3188 = vmul.f32 %v2205, %v2319
    %v3189 = vmul.f32 %v2216, %v2351
    %v3190 = vmul.f32 %v2216, %v2352
    %v3191 = vmul.f32 %v2216, %v2353
    %v3192 = vmul.f32 %v2216, %v2354
    %v3193 = vadd.f32 %v3177, %v3189
    %v3194 = vadd.f32 %v3178, %v3190
    %v3195 = vadd.f32 %v3179, %v3191
    %v3196 = vadd.f32 %v3180, %v3192
    %v3197 = vmul.f32 %v2226, %v2351
    %v3198 = vmul.f32 %v2226, %v2352
    %v3199 = vmul.f32 %v2226, %v2353
    %v3200 = vmul.f32 %v2226, %v2354
    %v3201 = vadd.f32 %v3181, %v3197
    %v3202 = vadd.f32 %v3182, %v3198
    %v3203 = vadd.f32 %v3183, %v3199
    %v3204 = vadd.f32 %v3184, %v3200
    %v3205 = vmul.f32 %v2236, %v2351
    %v3206 = vmul.f32 %v2236, %v2352
    %v3207 = vmul.f32 %v2236, %v2353
    %v3208 = vmul.f32 %v2236, %v2354
    %v3209 = vadd.f32 %v3185, %v3205
    %v3210 = vadd.f32 %v3186, %v3206
    %v3211 = vadd.f32 %v3187, %v3207
    %v3212 = vadd.f32 %v3188, %v3208
    %v3213 = vmul.f32 %v2251, %v2602
    %v3214 = vmul.f32 %v2251, %v2603
    %v3215 = vmul.f32 %v2251, %v2604
    %v3216 = vmul.f32 %v2251, %v2605
    %v3217 = vadd.f32 %v3193, %v3213
    %v3218 = vadd.f32 %v3194, %v3214
    %v3219 = vadd.f32 %v3195, %v3215
    %v3220 = vadd.f32 %v3196, %v3216
    %v3221 = vmul.f32 %v2261, %v2602
    %v3222 = vmul.f32 %v2261, %v2603
    %v3223 = vmul.f32 %v2261, %v2604
    %v3224 = vmul.f32 %v2261, %v2605
    %v3225 = vadd.f32 %v3201, %v3221
    %v3226 = vadd.f32 %v3202, %v3222
    %v3227 = vadd.f32 %v3203, %v3223
    %v3228 = vadd.f32 %v3204, %v3224
    %v3229 = vmul.f32 %v2271, %v2602
    %v3230 = vmul.f32 %v2271, %v2603
    %v3231 = vmul.f32 %v2271, %v2604
    %v3232 = vmul.f32 %v2271, %v2605
    %v3233 = vadd.f32 %v3209, %v3229
    %v3234 = vadd.f32 %v3210, %v3230
    %v3235 = vadd.f32 %v3211, %v3231
    %v3236 = vadd.f32 %v3212, %v3232
    %v3237 = vmul.f32 %v2286, %v2421
    %v3238 = vmul.f32 %v2286, %v2422
    %v3239 = vmul.f32 %v2286, %v2423
    %v3240 = vmul.f32 %v2286, %v2424
    %v3241 = vadd.f32 %v3217, %v3237
    %v3242 = vadd.f32 %v3218, %v3238
    %v3243 = vadd.f32 %v3219, %v3239
    %v3244 = vadd.f32 %v3220, %v3240
    %v3245 = vmul.f32 %v2296, %v2421
    %v3246 = vmul.f32 %v2296, %v2422
    %v3247 = vmul.f32 %v2296, %v2423
    %v3248 = vmul.f32 %v2296, %v2424
    %v3249 = vadd.f32 %v3225, %v3245
    %v3250 = vadd.f32 %v3226, %v3246
    %v3251 = vadd.f32 %v3227, %v3247
    %v3252 = vadd.f32 %v3228, %v3248
    %v3253 = vmul.f32 %v2306, %v2421
    %v3254 = vmul.f32 %v2306, %v2422
    %v3255 = vmul.f32 %v2306, %v2423
    %v3256 = vmul.f32 %v2306, %v2424
    %v3257 = vadd.f32 %v3233, %v3253
    %v3258 = vadd.f32 %v3234, %v3254
    %v3259 = vadd.f32 %v3235, %v3255
    %v3260 = vadd.f32 %v3236, %v3256
    %v3261 = vmul.f32 %v2321, %v2456
    %v3262 = vmul.f32 %v2321, %v2457
    %v3263 = vmul.f32 %v2321, %v2458
    %v3264 = vmul.f32 %v2321, %v2459
    %v3265 = vadd.f32 %v3241, %v3261
    %v3266 = vadd.f32 %v3242, %v3262
    %v3267 = vadd.f32 %v3243, %v3263
    %v3268 = vadd.f32 %v3244, %v3264
    %v3269 = vmul.f32 %v2331, %v2456
    %v3270 = vmul.f32 %v2331, %v2457
    %v3271 = vmul.f32 %v2331, %v2458
    %v3272 = vmul.f32 %v2331, %v2459
    %v3273 = vadd.f32 %v3249, %v3269
    %v3274 = vadd.f32 %v3250, %v3270
    %v3275 = vadd.f32 %v3251, %v3271
    %v3276 = vadd.f32 %v3252, %v3272
    %v3277 = vmul.f32 %v2341, %v2456
    %v3278 = vmul.f32 %v2341, %v2457
    %v3279 = vmul.f32 %v2341, %v2458
    %v3280 = vmul.f32 %v2341, %v2459
    %v3281 = vadd.f32 %v3257, %v3277
    %v3282 = vadd.f32 %v3258, %v3278
    %v3283 = vadd.f32 %v3259, %v3279
    %v3284 = vadd.f32 %v3260, %v3280
    %v3285 = vmul.f32 %v2356, %v2678
    %v3286 = vmul.f32 %v2356, %v2679
    %v3287 = vmul.f32 %v2356, %v2680
    %v3288 = vmul.f32 %v2356, %v2681
    %v3289 = vadd.f32 %v3265, %v3285
    %v3290 = vadd.f32 %v3266, %v3286
    %v3291 = vadd.f32 %v3267, %v3287
    %v3292 = vadd.f32 %v3268, %v3288
    %v3293 = vmul.f32 %v2366, %v2678
    %v3294 = vmul.f32 %v2366, %v2679
    %v3295 = vmul.f32 %v2366, %v2680
    %v3296 = vmul.f32 %v2366, %v2681
    %v3297 = vadd.f32 %v3273, %v3293
    %v3298 = vadd.f32 %v3274, %v3294
    %v3299 = vadd.f32 %v3275, %v3295
    %v3300 = vadd.f32 %v3276, %v3296
    %v3301 = vmul.f32 %v2376, %v2678
    %v3302 = vmul.f32 %v2376, %v2679
    %v3303 = vmul.f32 %v2376, %v2680
    %v3304 = vmul.f32 %v2376, %v2681
    %v3305 = vadd.f32 %v3281, %v3301
    %v3306 = vadd.f32 %v3282, %v3302
    %v3307 = vadd.f32 %v3283, %v3303
    %v3308 = vadd.f32 %v3284, %v3304
    %v3309 = vmul.f32 %v2391, %v3108
    %v3310 = vmul.f32 %v2391, %v3109
    %v3311 = vmul.f32 %v2391, %v3110
    %v3312 = vmul.f32 %v2391, %v3111
    %v3313 = vadd.f32 %v3289, %v3309
    %v3314 = vadd.f32 %v3290, %v3310
    %v3315 = vadd.f32 %v3291, %v3311
    %v3316 = vadd.f32 %v3292, %v3312
    %v3317 = vmul.f32 %v2401, %v3108
    %v3318 = vmul.f32 %v2401, %v3109
    %v3319 = vmul.f32 %v2401, %v3110
    %v3320 = vmul.f32 %v2401, %v3111
    %v3321 = vadd.f32 %v3297, %v3317
    %v3322 = vadd.f32 %v3298, %v3318
    %v3323 = vadd.f32 %v3299, %v3319
    %v3324 = vadd.f32 %v3300, %v3320
    %v3325 = vmul.f32 %v2411, %v3108
    %v3326 = vmul.f32 %v2411, %v3109
    %v3327 = vmul.f32 %v2411, %v3110
    %v3328 = vmul.f32 %v2411, %v3111
    %v3329 = vadd.f32 %v3305, %v3325
    %v3330 = vadd.f32 %v3306, %v3326
    %v3331 = vadd.f32 %v3307, %v3327
    %v3332 = vadd.f32 %v3308, %v3328
    %v3333 = vmul.f32 %v2426, %v3137
    %v3334 = vmul.f32 %v2426, %v3138
    %v3335 = vmul.f32 %v2426, %v3139
    %v3336 = vmul.f32 %v2426, %v3140
    %v3337 = vadd.f32 %v3313, %v3333
    %v3338 = vadd.f32 %v3314, %v3334
    %v3339 = vadd.f32 %v3315, %v3335
    %v3340 = vadd.f32 %v3316, %v3336
    %v3341 = vmul.f32 %v2436, %v3137
    %v3342 = vmul.f32 %v2436, %v3138
    %v3343 = vmul.f32 %v2436, %v3139
    %v3344 = vmul.f32 %v2436, %v3140
    %v3345 = vadd.f32 %v3321, %v3341
    %v3346 = vadd.f32 %v3322, %v3342
    %v3347 = vadd.f32 %v3323, %v3343
    %v3348 = vadd.f32 %v3324, %v3344
    %v3349 = vmul.f32 %v2446, %v3137
    %v3350 = vmul.f32 %v2446, %v3138
    %v3351 = vmul.f32 %v2446, %v3139
    %v3352 = vmul.f32 %v2446, %v3140
    %v3353 = vadd.f32 %v3329, %v3349
    %v3354 = vadd.f32 %v3330, %v3350
    %v3355 = vadd.f32 %v3331, %v3351
    %v3356 = vadd.f32 %v3332, %v3352
    %v3357 = vld [vmem:[%s3078 + $0x1] sm:$0xff]
    %v3358 = vld [vmem:[%s3078 + $0x11] sm:$0xff]
    %v3359 = vld [vmem:[%s3078 + $0x21] sm:$0xff]
    %v3360 = vld [vmem:[%s3078 + $0x31] sm:$0xff]
    %v3361 = vmul.f32 %v2461, %v3357
    %v3362 = vmul.f32 %v2461, %v3358
    %v3363 = vmul.f32 %v2461, %v3359
    %v3364 = vmul.f32 %v2461, %v3360
    %v3365 = vadd.f32 %v3337, %v3361
    %v3366 = vadd.f32 %v3338, %v3362
    %v3367 = vadd.f32 %v3339, %v3363
    %v3368 = vadd.f32 %v3340, %v3364
    %v3369 = vmul.f32 %v2471, %v3357
    %v3370 = vmul.f32 %v2471, %v3358
    %v3371 = vmul.f32 %v2471, %v3359
    %v3372 = vmul.f32 %v2471, %v3360
    %v3373 = vadd.f32 %v3345, %v3369
    %v3374 = vadd.f32 %v3346, %v3370
    %v3375 = vadd.f32 %v3347, %v3371
    %v3376 = vadd.f32 %v3348, %v3372
    %v3377 = vmul.f32 %v2481, %v3357
    %v3378 = vmul.f32 %v2481, %v3358
    %v3379 = vmul.f32 %v2481, %v3359
    %v3380 = vmul.f32 %v2481, %v3360
    %v3381 = vadd.f32 %v3353, %v3377
    %v3382 = vadd.f32 %v3354, %v3378
    %v3383 = vadd.f32 %v3355, %v3379
    %v3384 = vadd.f32 %v3356, %v3380
    %v3385 = vmax.f32 %v3165, %v3365
    %v3386 = vmax.f32 %v3166, %v3366
    %v3387 = vmax.f32 %v3167, %v3367
    %v3388 = vmax.f32 %v3168, %v3368
    %v3389 = vmax.f32 %v3169, %v3373
    %v3390 = vmax.f32 %v3170, %v3374
    %v3391 = vmax.f32 %v3171, %v3375
    %v3392 = vmax.f32 %v3172, %v3376
    %v3393 = vmax.f32 %v3173, %v3381
    %v3394 = vmax.f32 %v3174, %v3382
    %v3395 = vmax.f32 %v3175, %v3383
    %v3396 = vmax.f32 %v3176, %v3384
    %v3397 = vmul.f32 %v2193, %v2351
    %v3398 = vmul.f32 %v2193, %v2352
    %v3399 = vmul.f32 %v2193, %v2353
    %v3400 = vmul.f32 %v2193, %v2354
    %v3401 = vmul.f32 %v2199, %v2351
    %v3402 = vmul.f32 %v2199, %v2352
    %v3403 = vmul.f32 %v2199, %v2353
    %v3404 = vmul.f32 %v2199, %v2354
    %v3405 = vmul.f32 %v2205, %v2351
    %v3406 = vmul.f32 %v2205, %v2352
    %v3407 = vmul.f32 %v2205, %v2353
    %v3408 = vmul.f32 %v2205, %v2354
    %v3409 = vmul.f32 %v2216, %v2602
    %v3410 = vmul.f32 %v2216, %v2603
    %v3411 = vmul.f32 %v2216, %v2604
    %v3412 = vmul.f32 %v2216, %v2605
    %v3413 = vadd.f32 %v3397, %v3409
    %v3414 = vadd.f32 %v3398, %v3410
    %v3415 = vadd.f32 %v3399, %v3411
    %v3416 = vadd.f32 %v3400, %v3412
    %v3417 = vmul.f32 %v2226, %v2602
    %v3418 = vmul.f32 %v2226, %v2603
    %v3419 = vmul.f32 %v2226, %v2604
    %v3420 = vmul.f32 %v2226, %v2605
    %v3421 = vadd.f32 %v3401, %v3417
    %v3422 = vadd.f32 %v3402, %v3418
    %v3423 = vadd.f32 %v3403, %v3419
    %v3424 = vadd.f32 %v3404, %v3420
    %v3425 = vmul.f32 %v2236, %v2602
    %v3426 = vmul.f32 %v2236, %v2603
    %v3427 = vmul.f32 %v2236, %v2604
    %v3428 = vmul.f32 %v2236, %v2605
    %v3429 = vadd.f32 %v3405, %v3425
    %v3430 = vadd.f32 %v3406, %v3426
    %v3431 = vadd.f32 %v3407, %v3427
    %v3432 = vadd.f32 %v3408, %v3428
    %v3433 = vmul.f32 %v2251, %v2830
    %v3434 = vmul.f32 %v2251, %v2831
    %v3435 = vmul.f32 %v2251, %v2832
    %v3436 = vmul.f32 %v2251, %v2833
    %v3437 = vadd.f32 %v3413, %v3433
    %v3438 = vadd.f32 %v3414, %v3434
    %v3439 = vadd.f32 %v3415, %v3435
    %v3440 = vadd.f32 %v3416, %v3436
    %v3441 = vmul.f32 %v2261, %v2830
    %v3442 = vmul.f32 %v2261, %v2831
    %v3443 = vmul.f32 %v2261, %v2832
    %v3444 = vmul.f32 %v2261, %v2833
    %v3445 = vadd.f32 %v3421, %v3441
    %v3446 = vadd.f32 %v3422, %v3442
    %v3447 = vadd.f32 %v3423, %v3443
    %v3448 = vadd.f32 %v3424, %v3444
    %v3449 = vmul.f32 %v2271, %v2830
    %v3450 = vmul.f32 %v2271, %v2831
    %v3451 = vmul.f32 %v2271, %v2832
    %v3452 = vmul.f32 %v2271, %v2833
    %v3453 = vadd.f32 %v3429, %v3449
    %v3454 = vadd.f32 %v3430, %v3450
    %v3455 = vadd.f32 %v3431, %v3451
    %v3456 = vadd.f32 %v3432, %v3452
    %v3457 = vmul.f32 %v2286, %v2456
    %v3458 = vmul.f32 %v2286, %v2457
    %v3459 = vmul.f32 %v2286, %v2458
    %v3460 = vmul.f32 %v2286, %v2459
    %v3461 = vadd.f32 %v3437, %v3457
    %v3462 = vadd.f32 %v3438, %v3458
    %v3463 = vadd.f32 %v3439, %v3459
    %v3464 = vadd.f32 %v3440, %v3460
    %v3465 = vmul.f32 %v2296, %v2456
    %v3466 = vmul.f32 %v2296, %v2457
    %v3467 = vmul.f32 %v2296, %v2458
    %v3468 = vmul.f32 %v2296, %v2459
    %v3469 = vadd.f32 %v3445, %v3465
    %v3470 = vadd.f32 %v3446, %v3466
    %v3471 = vadd.f32 %v3447, %v3467
    %v3472 = vadd.f32 %v3448, %v3468
    %v3473 = vmul.f32 %v2306, %v2456
    %v3474 = vmul.f32 %v2306, %v2457
    %v3475 = vmul.f32 %v2306, %v2458
    %v3476 = vmul.f32 %v2306, %v2459
    %v3477 = vadd.f32 %v3453, %v3473
    %v3478 = vadd.f32 %v3454, %v3474
    %v3479 = vadd.f32 %v3455, %v3475
    %v3480 = vadd.f32 %v3456, %v3476
    %v3481 = vmul.f32 %v2321, %v2678
    %v3482 = vmul.f32 %v2321, %v2679
    %v3483 = vmul.f32 %v2321, %v2680
    %v3484 = vmul.f32 %v2321, %v2681
    %v3485 = vadd.f32 %v3461, %v3481
    %v3486 = vadd.f32 %v3462, %v3482
    %v3487 = vadd.f32 %v3463, %v3483
    %v3488 = vadd.f32 %v3464, %v3484
    %v3489 = vmul.f32 %v2331, %v2678
    %v3490 = vmul.f32 %v2331, %v2679
    %v3491 = vmul.f32 %v2331, %v2680
    %v3492 = vmul.f32 %v2331, %v2681
    %v3493 = vadd.f32 %v3469, %v3489
    %v3494 = vadd.f32 %v3470, %v3490
    %v3495 = vadd.f32 %v3471, %v3491
    %v3496 = vadd.f32 %v3472, %v3492
    %v3497 = vmul.f32 %v2341, %v2678
    %v3498 = vmul.f32 %v2341, %v2679
    %v3499 = vmul.f32 %v2341, %v2680
    %v3500 = vmul.f32 %v2341, %v2681
    %v3501 = vadd.f32 %v3477, %v3497
    %v3502 = vadd.f32 %v3478, %v3498
    %v3503 = vadd.f32 %v3479, %v3499
    %v3504 = vadd.f32 %v3480, %v3500
    %v3505 = vmul.f32 %v2356, %v2906
    %v3506 = vmul.f32 %v2356, %v2907
    %v3507 = vmul.f32 %v2356, %v2908
    %v3508 = vmul.f32 %v2356, %v2909
    %v3509 = vadd.f32 %v3485, %v3505
    %v3510 = vadd.f32 %v3486, %v3506
    %v3511 = vadd.f32 %v3487, %v3507
    %v3512 = vadd.f32 %v3488, %v3508
    %v3513 = vmul.f32 %v2366, %v2906
    %v3514 = vmul.f32 %v2366, %v2907
    %v3515 = vmul.f32 %v2366, %v2908
    %v3516 = vmul.f32 %v2366, %v2909
    %v3517 = vadd.f32 %v3493, %v3513
    %v3518 = vadd.f32 %v3494, %v3514
    %v3519 = vadd.f32 %v3495, %v3515
    %v3520 = vadd.f32 %v3496, %v3516
    %v3521 = vmul.f32 %v2376, %v2906
    %v3522 = vmul.f32 %v2376, %v2907
    %v3523 = vmul.f32 %v2376, %v2908
    %v3524 = vmul.f32 %v2376, %v2909
    %v3525 = vadd.f32 %v3501, %v3521
    %v3526 = vadd.f32 %v3502, %v3522
    %v3527 = vadd.f32 %v3503, %v3523
    %v3528 = vadd.f32 %v3504, %v3524
    %v3529 = vmul.f32 %v2391, %v3137
    %v3530 = vmul.f32 %v2391, %v3138
    %v3531 = vmul.f32 %v2391, %v3139
    %v3532 = vmul.f32 %v2391, %v3140
    %v3533 = vadd.f32 %v3509, %v3529
    %v3534 = vadd.f32 %v3510, %v3530
    %v3535 = vadd.f32 %v3511, %v3531
    %v3536 = vadd.f32 %v3512, %v3532
    %v3537 = vmul.f32 %v2401, %v3137
    %v3538 = vmul.f32 %v2401, %v3138
    %v3539 = vmul.f32 %v2401, %v3139
    %v3540 = vmul.f32 %v2401, %v3140
    %v3541 = vadd.f32 %v3517, %v3537
    %v3542 = vadd.f32 %v3518, %v3538
    %v3543 = vadd.f32 %v3519, %v3539
    %v3544 = vadd.f32 %v3520, %v3540
    %v3545 = vmul.f32 %v2411, %v3137
    %v3546 = vmul.f32 %v2411, %v3138
    %v3547 = vmul.f32 %v2411, %v3139
    %v3548 = vmul.f32 %v2411, %v3140
    %v3549 = vadd.f32 %v3525, %v3545
    %v3550 = vadd.f32 %v3526, %v3546
    %v3551 = vadd.f32 %v3527, %v3547
    %v3552 = vadd.f32 %v3528, %v3548
    %v3553 = vmul.f32 %v2426, %v3357
    %v3554 = vmul.f32 %v2426, %v3358
    %v3555 = vmul.f32 %v2426, %v3359
    %v3556 = vmul.f32 %v2426, %v3360
    %v3557 = vadd.f32 %v3533, %v3553
    %v3558 = vadd.f32 %v3534, %v3554
    %v3559 = vadd.f32 %v3535, %v3555
    %v3560 = vadd.f32 %v3536, %v3556
    %v3561 = vmul.f32 %v2436, %v3357
    %v3562 = vmul.f32 %v2436, %v3358
    %v3563 = vmul.f32 %v2436, %v3359
    %v3564 = vmul.f32 %v2436, %v3360
    %v3565 = vadd.f32 %v3541, %v3561
    %v3566 = vadd.f32 %v3542, %v3562
    %v3567 = vadd.f32 %v3543, %v3563
    %v3568 = vadd.f32 %v3544, %v3564
    %v3569 = vmul.f32 %v2446, %v3357
    %v3570 = vmul.f32 %v2446, %v3358
    %v3571 = vmul.f32 %v2446, %v3359
    %v3572 = vmul.f32 %v2446, %v3360
    %v3573 = vadd.f32 %v3549, %v3569
    %v3574 = vadd.f32 %v3550, %v3570
    %v3575 = vadd.f32 %v3551, %v3571
    %v3576 = vadd.f32 %v3552, %v3572
    %v3577 = vld [vmem:[%s3107 + $0x1] sm:$0xff]
    %v3578 = vld [vmem:[%s3107 + $0x11] sm:$0xff]
    %v3579 = vld [vmem:[%s3107 + $0x21] sm:$0xff]
    %v3580 = vld [vmem:[%s3107 + $0x31] sm:$0xff]
    %v3581 = vmul.f32 %v2461, %v3577
    %v3582 = vmul.f32 %v2461, %v3578
    %v3583 = vmul.f32 %v2461, %v3579
    %v3584 = vmul.f32 %v2461, %v3580
    %v3585 = vadd.f32 %v3557, %v3581
    %v3586 = vadd.f32 %v3558, %v3582
    %v3587 = vadd.f32 %v3559, %v3583
    %v3588 = vadd.f32 %v3560, %v3584
    %v3589 = vmul.f32 %v2471, %v3577
    %v3590 = vmul.f32 %v2471, %v3578
    %v3591 = vmul.f32 %v2471, %v3579
    %v3592 = vmul.f32 %v2471, %v3580
    %v3593 = vadd.f32 %v3565, %v3589
    %v3594 = vadd.f32 %v3566, %v3590
    %v3595 = vadd.f32 %v3567, %v3591
    %v3596 = vadd.f32 %v3568, %v3592
    %v3597 = vmul.f32 %v2481, %v3577
    %v3598 = vmul.f32 %v2481, %v3578
    %v3599 = vmul.f32 %v2481, %v3579
    %v3600 = vmul.f32 %v2481, %v3580
    %v3601 = vadd.f32 %v3573, %v3597
    %v3602 = vadd.f32 %v3574, %v3598
    %v3603 = vadd.f32 %v3575, %v3599
    %v3604 = vadd.f32 %v3576, %v3600
    %v3605 = vmax.f32 %v3385, %v3585
    %v3606 = vmax.f32 %v3386, %v3586
    %v3607 = vmax.f32 %v3387, %v3587
    %v3608 = vmax.f32 %v3388, %v3588
    %v3609 = vmax.f32 %v3389, %v3593
    %v3610 = vmax.f32 %v3390, %v3594
    %v3611 = vmax.f32 %v3391, %v3595
    %v3612 = vmax.f32 %v3392, %v3596
    %v3613 = vmax.f32 %v3393, %v3601
    %v3614 = vmax.f32 %v3394, %v3602
    %v3615 = vmax.f32 %v3395, %v3603
    %v3616 = vmax.f32 %v3396, %v3604
    %v3617 = vmul.f32 %v2193, %v2386
    %v3618 = vmul.f32 %v2193, %v2387
    %v3619 = vmul.f32 %v2193, %v2388
    %v3620 = vmul.f32 %v2193, %v2389
    %v3621 = vmul.f32 %v2199, %v2386
    %v3622 = vmul.f32 %v2199, %v2387
    %v3623 = vmul.f32 %v2199, %v2388
    %v3624 = vmul.f32 %v2199, %v2389
    %v3625 = vmul.f32 %v2205, %v2386
    %v3626 = vmul.f32 %v2205, %v2387
    %v3627 = vmul.f32 %v2205, %v2388
    %v3628 = vmul.f32 %v2205, %v2389
    %v3629 = vmul.f32 %v2216, %v2421
    %v3630 = vmul.f32 %v2216, %v2422
    %v3631 = vmul.f32 %v2216, %v2423
    %v3632 = vmul.f32 %v2216, %v2424
    %v3633 = vadd.f32 %v3617, %v3629
    %v3634 = vadd.f32 %v3618, %v3630
    %v3635 = vadd.f32 %v3619, %v3631
    %v3636 = vadd.f32 %v3620, %v3632
    %v3637 = vmul.f32 %v2226, %v2421
    %v3638 = vmul.f32 %v2226, %v2422
    %v3639 = vmul.f32 %v2226, %v2423
    %v3640 = vmul.f32 %v2226, %v2424
    %v3641 = vadd.f32 %v3621, %v3637
    %v3642 = vadd.f32 %v3622, %v3638
    %v3643 = vadd.f32 %v3623, %v3639
    %v3644 = vadd.f32 %v3624, %v3640
    %v3645 = vmul.f32 %v2236, %v2421
    %v3646 = vmul.f32 %v2236, %v2422
    %v3647 = vmul.f32 %v2236, %v2423
    %v3648 = vmul.f32 %v2236, %v2424
    %v3649 = vadd.f32 %v3625, %v3645
    %v3650 = vadd.f32 %v3626, %v3646
    %v3651 = vadd.f32 %v3627, %v3647
    %v3652 = vadd.f32 %v3628, %v3648
    %v3653 = vmul.f32 %v2251, %v2456
    %v3654 = vmul.f32 %v2251, %v2457
    %v3655 = vmul.f32 %v2251, %v2458
    %v3656 = vmul.f32 %v2251, %v2459
    %v3657 = vadd.f32 %v3633, %v3653
    %v3658 = vadd.f32 %v3634, %v3654
    %v3659 = vadd.f32 %v3635, %v3655
    %v3660 = vadd.f32 %v3636, %v3656
    %v3661 = vmul.f32 %v2261, %v2456
    %v3662 = vmul.f32 %v2261, %v2457
    %v3663 = vmul.f32 %v2261, %v2458
    %v3664 = vmul.f32 %v2261, %v2459
    %v3665 = vadd.f32 %v3641, %v3661
    %v3666 = vadd.f32 %v3642, %v3662
    %v3667 = vadd.f32 %v3643, %v3663
    %v3668 = vadd.f32 %v3644, %v3664
    %v3669 = vmul.f32 %v2271, %v2456
    %v3670 = vmul.f32 %v2271, %v2457
    %v3671 = vmul.f32 %v2271, %v2458
    %v3672 = vmul.f32 %v2271, %v2459
    %v3673 = vadd.f32 %v3649, %v3669
    %v3674 = vadd.f32 %v3650, %v3670
    %v3675 = vadd.f32 %v3651, %v3671
    %v3676 = vadd.f32 %v3652, %v3672
    %v3677 = vmul.f32 %v2286, %v3079
    %v3678 = vmul.f32 %v2286, %v3080
    %v3679 = vmul.f32 %v2286, %v3081
    %v3680 = vmul.f32 %v2286, %v3082
    %v3681 = vadd.f32 %v3657, %v3677
    %v3682 = vadd.f32 %v3658, %v3678
    %v3683 = vadd.f32 %v3659, %v3679
    %v3684 = vadd.f32 %v3660, %v3680
    %v3685 = vmul.f32 %v2296, %v3079
    %v3686 = vmul.f32 %v2296, %v3080
    %v3687 = vmul.f32 %v2296, %v3081
    %v3688 = vmul.f32 %v2296, %v3082
    %v3689 = vadd.f32 %v3665, %v3685
    %v3690 = vadd.f32 %v3666, %v3686
    %v3691 = vadd.f32 %v3667, %v3687
    %v3692 = vadd.f32 %v3668, %v3688
    %v3693 = vmul.f32 %v2306, %v3079
    %v3694 = vmul.f32 %v2306, %v3080
    %v3695 = vmul.f32 %v2306, %v3081
    %v3696 = vmul.f32 %v2306, %v3082
    %v3697 = vadd.f32 %v3673, %v3693
    %v3698 = vadd.f32 %v3674, %v3694
    %v3699 = vadd.f32 %v3675, %v3695
    %v3700 = vadd.f32 %v3676, %v3696
    %v3701 = vmul.f32 %v2321, %v3108
    %v3702 = vmul.f32 %v2321, %v3109
    %v3703 = vmul.f32 %v2321, %v3110
    %v3704 = vmul.f32 %v2321, %v3111
    %v3705 = vadd.f32 %v3681, %v3701
    %v3706 = vadd.f32 %v3682, %v3702
    %v3707 = vadd.f32 %v3683, %v3703
    %v3708 = vadd.f32 %v3684, %v3704
    %v3709 = vmul.f32 %v2331, %v3108
    %v3710 = vmul.f32 %v2331, %v3109
    %v3711 = vmul.f32 %v2331, %v3110
    %v3712 = vmul.f32 %v2331, %v3111
    %v3713 = vadd.f32 %v3689, %v3709
    %v3714 = vadd.f32 %v3690, %v3710
    %v3715 = vadd.f32 %v3691, %v3711
    %v3716 = vadd.f32 %v3692, %v3712
    %v3717 = vmul.f32 %v2341, %v3108
    %v3718 = vmul.f32 %v2341, %v3109
    %v3719 = vmul.f32 %v2341, %v3110
    %v3720 = vmul.f32 %v2341, %v3111
    %v3721 = vadd.f32 %v3697, %v3717
    %v3722 = vadd.f32 %v3698, %v3718
    %v3723 = vadd.f32 %v3699, %v3719
    %v3724 = vadd.f32 %v3700, %v3720
    %v3725 = vmul.f32 %v2356, %v3137
    %v3726 = vmul.f32 %v2356, %v3138
    %v3727 = vmul.f32 %v2356, %v3139
    %v3728 = vmul.f32 %v2356, %v3140
    %v3729 = vadd.f32 %v3705, %v3725
    %v3730 = vadd.f32 %v3706, %v3726
    %v3731 = vadd.f32 %v3707, %v3727
    %v3732 = vadd.f32 %v3708, %v3728
    %v3733 = vmul.f32 %v2366, %v3137
    %v3734 = vmul.f32 %v2366, %v3138
    %v3735 = vmul.f32 %v2366, %v3139
    %v3736 = vmul.f32 %v2366, %v3140
    %v3737 = vadd.f32 %v3713, %v3733
    %v3738 = vadd.f32 %v3714, %v3734
    %v3739 = vadd.f32 %v3715, %v3735
    %v3740 = vadd.f32 %v3716, %v3736
    %v3741 = vmul.f32 %v2376, %v3137
    %v3742 = vmul.f32 %v2376, %v3138
    %v3743 = vmul.f32 %v2376, %v3139
    %v3744 = vmul.f32 %v2376, %v3140
    %v3745 = vadd.f32 %v3721, %v3741
    %v3746 = vadd.f32 %v3722, %v3742
    %v3747 = vadd.f32 %v3723, %v3743
    %v3748 = vadd.f32 %v3724, %v3744
    %s3749 = scalar_lea.vmem %s0, 512
    %v3750 = vld [vmem:[%s3749] sm:$0xff]
    %v3751 = vld [vmem:[%s3749 + $0x10] sm:$0xff]
    %v3752 = vld [vmem:[%s3749 + $0x20] sm:$0xff]
    %v3753 = vld [vmem:[%s3749 + $0x30] sm:$0xff]
    %v3754 = vmul.f32 %v2391, %v3750
    %v3755 = vmul.f32 %v2391, %v3751
    %v3756 = vmul.f32 %v2391, %v3752
    %v3757 = vmul.f32 %v2391, %v3753
    %v3758 = vadd.f32 %v3729, %v3754
    %v3759 = vadd.f32 %v3730, %v3755
    %v3760 = vadd.f32 %v3731, %v3756
    %v3761 = vadd.f32 %v3732, %v3757
    %v3762 = vmul.f32 %v2401, %v3750
    %v3763 = vmul.f32 %v2401, %v3751
    %v3764 = vmul.f32 %v2401, %v3752
    %v3765 = vmul.f32 %v2401, %v3753
    %v3766 = vadd.f32 %v3737, %v3762
    %v3767 = vadd.f32 %v3738, %v3763
    %v3768 = vadd.f32 %v3739, %v3764
    %v3769 = vadd.f32 %v3740, %v3765
    %v3770 = vmul.f32 %v2411, %v3750
    %v3771 = vmul.f32 %v2411, %v3751
    %v3772 = vmul.f32 %v2411, %v3752
    %v3773 = vmul.f32 %v2411, %v3753
    %v3774 = vadd.f32 %v3745, %v3770
    %v3775 = vadd.f32 %v3746, %v3771
    %v3776 = vadd.f32 %v3747, %v3772
    %v3777 = vadd.f32 %v3748, %v3773
    %s3778 = scalar_lea.vmem %s0, 656
    %v3779 = vld [vmem:[%s3778] sm:$0xff]
    %v3780 = vld [vmem:[%s3778 + $0x10] sm:$0xff]
    %v3781 = vld [vmem:[%s3778 + $0x20] sm:$0xff]
    %v3782 = vld [vmem:[%s3778 + $0x30] sm:$0xff]
    %v3783 = vmul.f32 %v2426, %v3779
    %v3784 = vmul.f32 %v2426, %v3780
    %v3785 = vmul.f32 %v2426, %v3781
    %v3786 = vmul.f32 %v2426, %v3782
    %v3787 = vadd.f32 %v3758, %v3783
    %v3788 = vadd.f32 %v3759, %v3784
    %v3789 = vadd.f32 %v3760, %v3785
    %v3790 = vadd.f32 %v3761, %v3786
    %v3791 = vmul.f32 %v2436, %v3779
    %v3792 = vmul.f32 %v2436, %v3780
    %v3793 = vmul.f32 %v2436, %v3781
    %v3794 = vmul.f32 %v2436, %v3782
    %v3795 = vadd.f32 %v3766, %v3791
    %v3796 = vadd.f32 %v3767, %v3792
    %v3797 = vadd.f32 %v3768, %v3793
    %v3798 = vadd.f32 %v3769, %v3794
    %v3799 = vmul.f32 %v2446, %v3779
    %v3800 = vmul.f32 %v2446, %v3780
    %v3801 = vmul.f32 %v2446, %v3781
    %v3802 = vmul.f32 %v2446, %v3782
    %v3803 = vadd.f32 %v3774, %v3799
    %v3804 = vadd.f32 %v3775, %v3800
    %v3805 = vadd.f32 %v3776, %v3801
    %v3806 = vadd.f32 %v3777, %v3802
    %s3807 = scalar_lea.vmem %s0, 800
    %v3808 = vld [vmem:[%s3807] sm:$0xff]
    %v3809 = vld [vmem:[%s3807 + $0x10] sm:$0xff]
    %v3810 = vld [vmem:[%s3807 + $0x20] sm:$0xff]
    %v3811 = vld [vmem:[%s3807 + $0x30] sm:$0xff]
    %v3812 = vmul.f32 %v2461, %v3808
    %v3813 = vmul.f32 %v2461, %v3809
    %v3814 = vmul.f32 %v2461, %v3810
    %v3815 = vmul.f32 %v2461, %v3811
    %v3816 = vadd.f32 %v3787, %v3812
    %v3817 = vadd.f32 %v3788, %v3813
    %v3818 = vadd.f32 %v3789, %v3814
    %v3819 = vadd.f32 %v3790, %v3815
    %v3820 = vmul.f32 %v2471, %v3808
    %v3821 = vmul.f32 %v2471, %v3809
    %v3822 = vmul.f32 %v2471, %v3810
    %v3823 = vmul.f32 %v2471, %v3811
    %v3824 = vadd.f32 %v3795, %v3820
    %v3825 = vadd.f32 %v3796, %v3821
    %v3826 = vadd.f32 %v3797, %v3822
    %v3827 = vadd.f32 %v3798, %v3823
    %v3828 = vmul.f32 %v2481, %v3808
    %v3829 = vmul.f32 %v2481, %v3809
    %v3830 = vmul.f32 %v2481, %v3810
    %v3831 = vmul.f32 %v2481, %v3811
    %v3832 = vadd.f32 %v3803, %v3828
    %v3833 = vadd.f32 %v3804, %v3829
    %v3834 = vadd.f32 %v3805, %v3830
    %v3835 = vadd.f32 %v3806, %v3831
    %v3836 = vmax.f32 %v3605, %v3816
    %v3837 = vmax.f32 %v3606, %v3817
    %v3838 = vmax.f32 %v3607, %v3818
    %v3839 = vmax.f32 %v3608, %v3819
    %v3840 = vmax.f32 %v3609, %v3824
    %v3841 = vmax.f32 %v3610, %v3825
    %v3842 = vmax.f32 %v3611, %v3826
    %v3843 = vmax.f32 %v3612, %v3827
    %v3844 = vmax.f32 %v3613, %v3832
    %v3845 = vmax.f32 %v3614, %v3833
    %v3846 = vmax.f32 %v3615, %v3834
    %v3847 = vmax.f32 %v3616, %v3835
    %v3848 = vmul.f32 %v2193, %v2421
    %v3849 = vmul.f32 %v2193, %v2422
    %v3850 = vmul.f32 %v2193, %v2423
    %v3851 = vmul.f32 %v2193, %v2424
    %v3852 = vmul.f32 %v2199, %v2421
    %v3853 = vmul.f32 %v2199, %v2422
    %v3854 = vmul.f32 %v2199, %v2423
    %v3855 = vmul.f32 %v2199, %v2424
    %v3856 = vmul.f32 %v2205, %v2421
    %v3857 = vmul.f32 %v2205, %v2422
    %v3858 = vmul.f32 %v2205, %v2423
    %v3859 = vmul.f32 %v2205, %v2424
    %v3860 = vmul.f32 %v2216, %v2456
    %v3861 = vmul.f32 %v2216, %v2457
    %v3862 = vmul.f32 %v2216, %v2458
    %v3863 = vmul.f32 %v2216, %v2459
    %v3864 = vadd.f32 %v3848, %v3860
    %v3865 = vadd.f32 %v3849, %v3861
    %v3866 = vadd.f32 %v3850, %v3862
    %v3867 = vadd.f32 %v3851, %v3863
    %v3868 = vmul.f32 %v2226, %v2456
    %v3869 = vmul.f32 %v2226, %v2457
    %v3870 = vmul.f32 %v2226, %v2458
    %v3871 = vmul.f32 %v2226, %v2459
    %v3872 = vadd.f32 %v3852, %v3868
    %v3873 = vadd.f32 %v3853, %v3869
    %v3874 = vadd.f32 %v3854, %v3870
    %v3875 = vadd.f32 %v3855, %v3871
    %v3876 = vmul.f32 %v2236, %v2456
    %v3877 = vmul.f32 %v2236, %v2457
    %v3878 = vmul.f32 %v2236, %v2458
    %v3879 = vmul.f32 %v2236, %v2459
    %v3880 = vadd.f32 %v3856, %v3876
    %v3881 = vadd.f32 %v3857, %v3877
    %v3882 = vadd.f32 %v3858, %v3878
    %v3883 = vadd.f32 %v3859, %v3879
    %v3884 = vmul.f32 %v2251, %v2678
    %v3885 = vmul.f32 %v2251, %v2679
    %v3886 = vmul.f32 %v2251, %v2680
    %v3887 = vmul.f32 %v2251, %v2681
    %v3888 = vadd.f32 %v3864, %v3884
    %v3889 = vadd.f32 %v3865, %v3885
    %v3890 = vadd.f32 %v3866, %v3886
    %v3891 = vadd.f32 %v3867, %v3887
    %v3892 = vmul.f32 %v2261, %v2678
    %v3893 = vmul.f32 %v2261, %v2679
    %v3894 = vmul.f32 %v2261, %v2680
    %v3895 = vmul.f32 %v2261, %v2681
    %v3896 = vadd.f32 %v3872, %v3892
    %v3897 = vadd.f32 %v3873, %v3893
    %v3898 = vadd.f32 %v3874, %v3894
    %v3899 = vadd.f32 %v3875, %v3895
    %v3900 = vmul.f32 %v2271, %v2678
    %v3901 = vmul.f32 %v2271, %v2679
    %v3902 = vmul.f32 %v2271, %v2680
    %v3903 = vmul.f32 %v2271, %v2681
    %v3904 = vadd.f32 %v3880, %v3900
    %v3905 = vadd.f32 %v3881, %v3901
    %v3906 = vadd.f32 %v3882, %v3902
    %v3907 = vadd.f32 %v3883, %v3903
    %v3908 = vmul.f32 %v2286, %v3108
    %v3909 = vmul.f32 %v2286, %v3109
    %v3910 = vmul.f32 %v2286, %v3110
    %v3911 = vmul.f32 %v2286, %v3111
    %v3912 = vadd.f32 %v3888, %v3908
    %v3913 = vadd.f32 %v3889, %v3909
    %v3914 = vadd.f32 %v3890, %v3910
    %v3915 = vadd.f32 %v3891, %v3911
    %v3916 = vmul.f32 %v2296, %v3108
    %v3917 = vmul.f32 %v2296, %v3109
    %v3918 = vmul.f32 %v2296, %v3110
    %v3919 = vmul.f32 %v2296, %v3111
    %v3920 = vadd.f32 %v3896, %v3916
    %v3921 = vadd.f32 %v3897, %v3917
    %v3922 = vadd.f32 %v3898, %v3918
    %v3923 = vadd.f32 %v3899, %v3919
    %v3924 = vmul.f32 %v2306, %v3108
    %v3925 = vmul.f32 %v2306, %v3109
    %v3926 = vmul.f32 %v2306, %v3110
    %v3927 = vmul.f32 %v2306, %v3111
    %v3928 = vadd.f32 %v3904, %v3924
    %v3929 = vadd.f32 %v3905, %v3925
    %v3930 = vadd.f32 %v3906, %v3926
    %v3931 = vadd.f32 %v3907, %v3927
    %v3932 = vmul.f32 %v2321, %v3137
    %v3933 = vmul.f32 %v2321, %v3138
    %v3934 = vmul.f32 %v2321, %v3139
    %v3935 = vmul.f32 %v2321, %v3140
    %v3936 = vadd.f32 %v3912, %v3932
    %v3937 = vadd.f32 %v3913, %v3933
    %v3938 = vadd.f32 %v3914, %v3934
    %v3939 = vadd.f32 %v3915, %v3935
    %v3940 = vmul.f32 %v2331, %v3137
    %v3941 = vmul.f32 %v2331, %v3138
    %v3942 = vmul.f32 %v2331, %v3139
    %v3943 = vmul.f32 %v2331, %v3140
    %v3944 = vadd.f32 %v3920, %v3940
    %v3945 = vadd.f32 %v3921, %v3941
    %v3946 = vadd.f32 %v3922, %v3942
    %v3947 = vadd.f32 %v3923, %v3943
    %v3948 = vmul.f32 %v2341, %v3137
    %v3949 = vmul.f32 %v2341, %v3138
    %v3950 = vmul.f32 %v2341, %v3139
    %v3951 = vmul.f32 %v2341, %v3140
    %v3952 = vadd.f32 %v3928, %v3948
    %v3953 = vadd.f32 %v3929, %v3949
    %v3954 = vadd.f32 %v3930, %v3950
    %v3955 = vadd.f32 %v3931, %v3951
    %v3956 = vmul.f32 %v2356, %v3357
    %v3957 = vmul.f32 %v2356, %v3358
    %v3958 = vmul.f32 %v2356, %v3359
    %v3959 = vmul.f32 %v2356, %v3360
    %v3960 = vadd.f32 %v3936, %v3956
    %v3961 = vadd.f32 %v3937, %v3957
    %v3962 = vadd.f32 %v3938, %v3958
    %v3963 = vadd.f32 %v3939, %v3959
    %v3964 = vmul.f32 %v2366, %v3357
    %v3965 = vmul.f32 %v2366, %v3358
    %v3966 = vmul.f32 %v2366, %v3359
    %v3967 = vmul.f32 %v2366, %v3360
    %v3968 = vadd.f32 %v3944, %v3964
    %v3969 = vadd.f32 %v3945, %v3965
    %v3970 = vadd.f32 %v3946, %v3966
    %v3971 = vadd.f32 %v3947, %v3967
    %v3972 = vmul.f32 %v2376, %v3357
    %v3973 = vmul.f32 %v2376, %v3358
    %v3974 = vmul.f32 %v2376, %v3359
    %v3975 = vmul.f32 %v2376, %v3360
    %v3976 = vadd.f32 %v3952, %v3972
    %v3977 = vadd.f32 %v3953, %v3973
    %v3978 = vadd.f32 %v3954, %v3974
    %v3979 = vadd.f32 %v3955, %v3975
    %v3980 = vmul.f32 %v2391, %v3779
    %v3981 = vmul.f32 %v2391, %v3780
    %v3982 = vmul.f32 %v2391, %v3781
    %v3983 = vmul.f32 %v2391, %v3782
    %v3984 = vadd.f32 %v3960, %v3980
    %v3985 = vadd.f32 %v3961, %v3981
    %v3986 = vadd.f32 %v3962, %v3982
    %v3987 = vadd.f32 %v3963, %v3983
    %v3988 = vmul.f32 %v2401, %v3779
    %v3989 = vmul.f32 %v2401, %v3780
    %v3990 = vmul.f32 %v2401, %v3781
    %v3991 = vmul.f32 %v2401, %v3782
    %v3992 = vadd.f32 %v3968, %v3988
    %v3993 = vadd.f32 %v3969, %v3989
    %v3994 = vadd.f32 %v3970, %v3990
    %v3995 = vadd.f32 %v3971, %v3991
    %v3996 = vmul.f32 %v2411, %v3779
    %v3997 = vmul.f32 %v2411, %v3780
    %v3998 = vmul.f32 %v2411, %v3781
    %v3999 = vmul.f32 %v2411, %v3782
    %v4000 = vadd.f32 %v3976, %v3996
    %v4001 = vadd.f32 %v3977, %v3997
    %v4002 = vadd.f32 %v3978, %v3998
    %v4003 = vadd.f32 %v3979, %v3999
    %v4004 = vmul.f32 %v2426, %v3808
    %v4005 = vmul.f32 %v2426, %v3809
    %v4006 = vmul.f32 %v2426, %v3810
    %v4007 = vmul.f32 %v2426, %v3811
    %v4008 = vadd.f32 %v3984, %v4004
    %v4009 = vadd.f32 %v3985, %v4005
    %v4010 = vadd.f32 %v3986, %v4006
    %v4011 = vadd.f32 %v3987, %v4007
    %v4012 = vmul.f32 %v2436, %v3808
    %v4013 = vmul.f32 %v2436, %v3809
    %v4014 = vmul.f32 %v2436, %v3810
    %v4015 = vmul.f32 %v2436, %v3811
    %v4016 = vadd.f32 %v3992, %v4012
    %v4017 = vadd.f32 %v3993, %v4013
    %v4018 = vadd.f32 %v3994, %v4014
    %v4019 = vadd.f32 %v3995, %v4015
    %v4020 = vmul.f32 %v2446, %v3808
    %v4021 = vmul.f32 %v2446, %v3809
    %v4022 = vmul.f32 %v2446, %v3810
    %v4023 = vmul.f32 %v2446, %v3811
    %v4024 = vadd.f32 %v4000, %v4020
    %v4025 = vadd.f32 %v4001, %v4021
    %v4026 = vadd.f32 %v4002, %v4022
    %v4027 = vadd.f32 %v4003, %v4023
    %v4028 = vld [vmem:[%s3749 + $0x1] sm:$0xff]
    %v4029 = vld [vmem:[%s3749 + $0x11] sm:$0xff]
    %v4030 = vld [vmem:[%s3749 + $0x21] sm:$0xff]
    %v4031 = vld [vmem:[%s3749 + $0x31] sm:$0xff]
    %v4032 = vmul.f32 %v2461, %v4028
    %v4033 = vmul.f32 %v2461, %v4029
    %v4034 = vmul.f32 %v2461, %v4030
    %v4035 = vmul.f32 %v2461, %v4031
    %v4036 = vadd.f32 %v4008, %v4032
    %v4037 = vadd.f32 %v4009, %v4033
    %v4038 = vadd.f32 %v4010, %v4034
    %v4039 = vadd.f32 %v4011, %v4035
    %v4040 = vmul.f32 %v2471, %v4028
    %v4041 = vmul.f32 %v2471, %v4029
    %v4042 = vmul.f32 %v2471, %v4030
    %v4043 = vmul.f32 %v2471, %v4031
    %v4044 = vadd.f32 %v4016, %v4040
    %v4045 = vadd.f32 %v4017, %v4041
    %v4046 = vadd.f32 %v4018, %v4042
    %v4047 = vadd.f32 %v4019, %v4043
    %v4048 = vmul.f32 %v2481, %v4028
    %v4049 = vmul.f32 %v2481, %v4029
    %v4050 = vmul.f32 %v2481, %v4030
    %v4051 = vmul.f32 %v2481, %v4031
    %v4052 = vadd.f32 %v4024, %v4048
    %v4053 = vadd.f32 %v4025, %v4049
    %v4054 = vadd.f32 %v4026, %v4050
    %v4055 = vadd.f32 %v4027, %v4051
    %v4056 = vmax.f32 %v3836, %v4036
    %v4057 = vmax.f32 %v3837, %v4037
    %v4058 = vmax.f32 %v3838, %v4038
    %v4059 = vmax.f32 %v3839, %v4039
    %v4060 = vmax.f32 %v3840, %v4044
    %v4061 = vmax.f32 %v3841, %v4045
    %v4062 = vmax.f32 %v3842, %v4046
    %v4063 = vmax.f32 %v3843, %v4047
    %v4064 = vmax.f32 %v3844, %v4052
    %v4065 = vmax.f32 %v3845, %v4053
    %v4066 = vmax.f32 %v3846, %v4054
    %v4067 = vmax.f32 %v3847, %v4055
    %v4068 = vmul.f32 %v2193, %v2456
    %v4069 = vmul.f32 %v2193, %v2457
    %v4070 = vmul.f32 %v2193, %v2458
    %v4071 = vmul.f32 %v2193, %v2459
    %v4072 = vmul.f32 %v2199, %v2456
    %v4073 = vmul.f32 %v2199, %v2457
    %v4074 = vmul.f32 %v2199, %v2458
    %v4075 = vmul.f32 %v2199, %v2459
    %v4076 = vmul.f32 %v2205, %v2456
    %v4077 = vmul.f32 %v2205, %v2457
    %v4078 = vmul.f32 %v2205, %v2458
    %v4079 = vmul.f32 %v2205, %v2459
    %v4080 = vmul.f32 %v2216, %v2678
    %v4081 = vmul.f32 %v2216, %v2679
    %v4082 = vmul.f32 %v2216, %v2680
    %v4083 = vmul.f32 %v2216, %v2681
    %v4084 = vadd.f32 %v4068, %v4080
    %v4085 = vadd.f32 %v4069, %v4081
    %v4086 = vadd.f32 %v4070, %v4082
    %v4087 = vadd.f32 %v4071, %v4083
    %v4088 = vmul.f32 %v2226, %v2678
    %v4089 = vmul.f32 %v2226, %v2679
    %v4090 = vmul.f32 %v2226, %v2680
    %v4091 = vmul.f32 %v2226, %v2681
    %v4092 = vadd.f32 %v4072, %v4088
    %v4093 = vadd.f32 %v4073, %v4089
    %v4094 = vadd.f32 %v4074, %v4090
    %v4095 = vadd.f32 %v4075, %v4091
    %v4096 = vmul.f32 %v2236, %v2678
    %v4097 = vmul.f32 %v2236, %v2679
    %v4098 = vmul.f32 %v2236, %v2680
    %v4099 = vmul.f32 %v2236, %v2681
    %v4100 = vadd.f32 %v4076, %v4096
    %v4101 = vadd.f32 %v4077, %v4097
    %v4102 = vadd.f32 %v4078, %v4098
    %v4103 = vadd.f32 %v4079, %v4099
    %v4104 = vmul.f32 %v2251, %v2906
    %v4105 = vmul.f32 %v2251, %v2907
    %v4106 = vmul.f32 %v2251, %v2908
    %v4107 = vmul.f32 %v2251, %v2909
    %v4108 = vadd.f32 %v4084, %v4104
    %v4109 = vadd.f32 %v4085, %v4105
    %v4110 = vadd.f32 %v4086, %v4106
    %v4111 = vadd.f32 %v4087, %v4107
    %v4112 = vmul.f32 %v2261, %v2906
    %v4113 = vmul.f32 %v2261, %v2907
    %v4114 = vmul.f32 %v2261, %v2908
    %v4115 = vmul.f32 %v2261, %v2909
    %v4116 = vadd.f32 %v4092, %v4112
    %v4117 = vadd.f32 %v4093, %v4113
    %v4118 = vadd.f32 %v4094, %v4114
    %v4119 = vadd.f32 %v4095, %v4115
    %v4120 = vmul.f32 %v2271, %v2906
    %v4121 = vmul.f32 %v2271, %v2907
    %v4122 = vmul.f32 %v2271, %v2908
    %v4123 = vmul.f32 %v2271, %v2909
    %v4124 = vadd.f32 %v4100, %v4120
    %v4125 = vadd.f32 %v4101, %v4121
    %v4126 = vadd.f32 %v4102, %v4122
    %v4127 = vadd.f32 %v4103, %v4123
    %v4128 = vmul.f32 %v2286, %v3137
    %v4129 = vmul.f32 %v2286, %v3138
    %v4130 = vmul.f32 %v2286, %v3139
    %v4131 = vmul.f32 %v2286, %v3140
    %v4132 = vadd.f32 %v4108, %v4128
    %v4133 = vadd.f32 %v4109, %v4129
    %v4134 = vadd.f32 %v4110, %v4130
    %v4135 = vadd.f32 %v4111, %v4131
    %v4136 = vmul.f32 %v2296, %v3137
    %v4137 = vmul.f32 %v2296, %v3138
    %v4138 = vmul.f32 %v2296, %v3139
    %v4139 = vmul.f32 %v2296, %v3140
    %v4140 = vadd.f32 %v4116, %v4136
    %v4141 = vadd.f32 %v4117, %v4137
    %v4142 = vadd.f32 %v4118, %v4138
    %v4143 = vadd.f32 %v4119, %v4139
    %v4144 = vmul.f32 %v2306, %v3137
    %v4145 = vmul.f32 %v2306, %v3138
    %v4146 = vmul.f32 %v2306, %v3139
    %v4147 = vmul.f32 %v2306, %v3140
    %v4148 = vadd.f32 %v4124, %v4144
    %v4149 = vadd.f32 %v4125, %v4145
    %v4150 = vadd.f32 %v4126, %v4146
    %v4151 = vadd.f32 %v4127, %v4147
    %v4152 = vmul.f32 %v2321, %v3357
    %v4153 = vmul.f32 %v2321, %v3358
    %v4154 = vmul.f32 %v2321, %v3359
    %v4155 = vmul.f32 %v2321, %v3360
    %v4156 = vadd.f32 %v4132, %v4152
    %v4157 = vadd.f32 %v4133, %v4153
    %v4158 = vadd.f32 %v4134, %v4154
    %v4159 = vadd.f32 %v4135, %v4155
    %v4160 = vmul.f32 %v2331, %v3357
    %v4161 = vmul.f32 %v2331, %v3358
    %v4162 = vmul.f32 %v2331, %v3359
    %v4163 = vmul.f32 %v2331, %v3360
    %v4164 = vadd.f32 %v4140, %v4160
    %v4165 = vadd.f32 %v4141, %v4161
    %v4166 = vadd.f32 %v4142, %v4162
    %v4167 = vadd.f32 %v4143, %v4163
    %v4168 = vmul.f32 %v2341, %v3357
    %v4169 = vmul.f32 %v2341, %v3358
    %v4170 = vmul.f32 %v2341, %v3359
    %v4171 = vmul.f32 %v2341, %v3360
    %v4172 = vadd.f32 %v4148, %v4168
    %v4173 = vadd.f32 %v4149, %v4169
    %v4174 = vadd.f32 %v4150, %v4170
    %v4175 = vadd.f32 %v4151, %v4171
    %v4176 = vmul.f32 %v2356, %v3577
    %v4177 = vmul.f32 %v2356, %v3578
    %v4178 = vmul.f32 %v2356, %v3579
    %v4179 = vmul.f32 %v2356, %v3580
    %v4180 = vadd.f32 %v4156, %v4176
    %v4181 = vadd.f32 %v4157, %v4177
    %v4182 = vadd.f32 %v4158, %v4178
    %v4183 = vadd.f32 %v4159, %v4179
    %v4184 = vmul.f32 %v2366, %v3577
    %v4185 = vmul.f32 %v2366, %v3578
    %v4186 = vmul.f32 %v2366, %v3579
    %v4187 = vmul.f32 %v2366, %v3580
    %v4188 = vadd.f32 %v4164, %v4184
    %v4189 = vadd.f32 %v4165, %v4185
    %v4190 = vadd.f32 %v4166, %v4186
    %v4191 = vadd.f32 %v4167, %v4187
    %v4192 = vmul.f32 %v2376, %v3577
    %v4193 = vmul.f32 %v2376, %v3578
    %v4194 = vmul.f32 %v2376, %v3579
    %v4195 = vmul.f32 %v2376, %v3580
    %v4196 = vadd.f32 %v4172, %v4192
    %v4197 = vadd.f32 %v4173, %v4193
    %v4198 = vadd.f32 %v4174, %v4194
    %v4199 = vadd.f32 %v4175, %v4195
    %v4200 = vmul.f32 %v2391, %v3808
    %v4201 = vmul.f32 %v2391, %v3809
    %v4202 = vmul.f32 %v2391, %v3810
    %v4203 = vmul.f32 %v2391, %v3811
    %v4204 = vadd.f32 %v4180, %v4200
    %v4205 = vadd.f32 %v4181, %v4201
    %v4206 = vadd.f32 %v4182, %v4202
    %v4207 = vadd.f32 %v4183, %v4203
    %v4208 = vmul.f32 %v2401, %v3808
    %v4209 = vmul.f32 %v2401, %v3809
    %v4210 = vmul.f32 %v2401, %v3810
    %v4211 = vmul.f32 %v2401, %v3811
    %v4212 = vadd.f32 %v4188, %v4208
    %v4213 = vadd.f32 %v4189, %v4209
    %v4214 = vadd.f32 %v4190, %v4210
    %v4215 = vadd.f32 %v4191, %v4211
    %v4216 = vmul.f32 %v2411, %v3808
    %v4217 = vmul.f32 %v2411, %v3809
    %v4218 = vmul.f32 %v2411, %v3810
    %v4219 = vmul.f32 %v2411, %v3811
    %v4220 = vadd.f32 %v4196, %v4216
    %v4221 = vadd.f32 %v4197, %v4217
    %v4222 = vadd.f32 %v4198, %v4218
    %v4223 = vadd.f32 %v4199, %v4219
    %v4224 = vmul.f32 %v2426, %v4028
    %v4225 = vmul.f32 %v2426, %v4029
    %v4226 = vmul.f32 %v2426, %v4030
    %v4227 = vmul.f32 %v2426, %v4031
    %v4228 = vadd.f32 %v4204, %v4224
    %v4229 = vadd.f32 %v4205, %v4225
    %v4230 = vadd.f32 %v4206, %v4226
    %v4231 = vadd.f32 %v4207, %v4227
    %v4232 = vmul.f32 %v2436, %v4028
    %v4233 = vmul.f32 %v2436, %v4029
    %v4234 = vmul.f32 %v2436, %v4030
    %v4235 = vmul.f32 %v2436, %v4031
    %v4236 = vadd.f32 %v4212, %v4232
    %v4237 = vadd.f32 %v4213, %v4233
    %v4238 = vadd.f32 %v4214, %v4234
    %v4239 = vadd.f32 %v4215, %v4235
    %v4240 = vmul.f32 %v2446, %v4028
    %v4241 = vmul.f32 %v2446, %v4029
    %v4242 = vmul.f32 %v2446, %v4030
    %v4243 = vmul.f32 %v2446, %v4031
    %v4244 = vadd.f32 %v4220, %v4240
    %v4245 = vadd.f32 %v4221, %v4241
    %v4246 = vadd.f32 %v4222, %v4242
    %v4247 = vadd.f32 %v4223, %v4243
    %v4248 = vld [vmem:[%s3778 + $0x1] sm:$0xff]
    %v4249 = vld [vmem:[%s3778 + $0x11] sm:$0xff]
    %v4250 = vld [vmem:[%s3778 + $0x21] sm:$0xff]
    %v4251 = vld [vmem:[%s3778 + $0x31] sm:$0xff]
    %v4252 = vmul.f32 %v2461, %v4248
    %v4253 = vmul.f32 %v2461, %v4249
    %v4254 = vmul.f32 %v2461, %v4250
    %v4255 = vmul.f32 %v2461, %v4251
    %v4256 = vadd.f32 %v4228, %v4252
    %v4257 = vadd.f32 %v4229, %v4253
    %v4258 = vadd.f32 %v4230, %v4254
    %v4259 = vadd.f32 %v4231, %v4255
    %v4260 = vmul.f32 %v2471, %v4248
    %v4261 = vmul.f32 %v2471, %v4249
    %v4262 = vmul.f32 %v2471, %v4250
    %v4263 = vmul.f32 %v2471, %v4251
    %v4264 = vadd.f32 %v4236, %v4260
    %v4265 = vadd.f32 %v4237, %v4261
    %v4266 = vadd.f32 %v4238, %v4262
    %v4267 = vadd.f32 %v4239, %v4263
    %v4268 = vmul.f32 %v2481, %v4248
    %v4269 = vmul.f32 %v2481, %v4249
    %v4270 = vmul.f32 %v2481, %v4250
    %v4271 = vmul.f32 %v2481, %v4251
    %v4272 = vadd.f32 %v4244, %v4268
    %v4273 = vadd.f32 %v4245, %v4269
    %v4274 = vadd.f32 %v4246, %v4270
    %v4275 = vadd.f32 %v4247, %v4271
    %v4276 = vmax.f32 %v4056, %v4256
    %v4277 = vmax.f32 %v4057, %v4257
    %v4278 = vmax.f32 %v4058, %v4258
    %v4279 = vmax.f32 %v4059, %v4259
    %v4280 = vmax.f32 %v4060, %v4264
    %v4281 = vmax.f32 %v4061, %v4265
    %v4282 = vmax.f32 %v4062, %v4266
    %v4283 = vmax.f32 %v4063, %v4267
    %v4284 = vmax.f32 %v4064, %v4272
    %v4285 = vmax.f32 %v4065, %v4273
    %v4286 = vmax.f32 %v4066, %v4274
    %v4287 = vmax.f32 %v4067, %v4275
    %s4288 = sld [smem:[#allocation5]]
    %v4289 = vstv %s4288
    %v4290 = vadd.f32 %v4276, %v4289
    %v4291 = vadd.f32 %v4277, %v4289
    %v4292 = vadd.f32 %v4278, %v4289
    %v4293 = vadd.f32 %v4279, %v4289
    %v4294 = vmax.f32 %v4290, 0.0
    %v4295 = vmax.f32 %v4291, 0.0
    %v4296 = vmax.f32 %v4292, 0.0
    %v4297 = vmax.f32 %v4293, 0.0
    %4298 = vst [vmem:[#allocation2 + $0x20] sm:$0xff] %v4294
    %4299 = vst [vmem:[#allocation2 + $0x28] sm:$0xff] %v4295
    %4300 = vst [vmem:[#allocation2 + $0x30] sm:$0xff] %v4296
    %4301 = vst [vmem:[#allocation2 + $0x38] sm:$0xff] %v4297
    %s4302 = sld [smem:[#allocation5 + $0x1]]
    %v4303 = vstv %s4302
    %v4304 = vadd.f32 %v4280, %v4303
    %v4305 = vadd.f32 %v4281, %v4303
    %v4306 = vadd.f32 %v4282, %v4303
    %v4307 = vadd.f32 %v4283, %v4303
    %v4308 = vmax.f32 %v4304, 0.0
    %v4309 = vmax.f32 %v4305, 0.0
    %v4310 = vmax.f32 %v4306, 0.0
    %v4311 = vmax.f32 %v4307, 0.0
    %4312 = vst [vmem:[#allocation2 + $0x60] sm:$0xff] %v4308
    %4313 = vst [vmem:[#allocation2 + $0x68] sm:$0xff] %v4309
    %4314 = vst [vmem:[#allocation2 + $0x70] sm:$0xff] %v4310
    %4315 = vst [vmem:[#allocation2 + $0x78] sm:$0xff] %v4311
    %s4316 = sld [smem:[#allocation5 + $0x2]]
    %v4317 = vstv %s4316
    %v4318 = vadd.f32 %v4284, %v4317
    %v4319 = vadd.f32 %v4285, %v4317
    %v4320 = vadd.f32 %v4286, %v4317
    %v4321 = vadd.f32 %v4287, %v4317
    %v4322 = vmax.f32 %v4318, 0.0
    %v4323 = vmax.f32 %v4319, 0.0
    %v4324 = vmax.f32 %v4320, 0.0
    %v4325 = vmax.f32 %v4321, 0.0
    %4326 = vst [vmem:[#allocation2 + $0xa0] sm:$0xff] %v4322
    %4327 = vst [vmem:[#allocation2 + $0xa8] sm:$0xff] %v4323
    %4328 = vst [vmem:[#allocation2 + $0xb0] sm:$0xff] %v4324
    %4329 = vst [vmem:[#allocation2 + $0xb8] sm:$0xff] %v4325
    %v4330 = vld [vmem:[%s3] sm:$0xff]
    %v4331 = vld [vmem:[%s3 + $0x8] sm:$0xff]
    %v4332 = vld [vmem:[%s3 + $0x10] sm:$0x3]
    %v4333 = vld [vmem:[%s3 + $0x18] sm:$0x3]
    %v4334 = vld [vmem:[#allocation2] sm:$0xff]
    %v4335 = vld [vmem:[#allocation2 + $0x8] sm:$0xff]
    %v4336 = vld [vmem:[#allocation2 + $0x10] sm:$0xff]
    %v4337 = vld [vmem:[#allocation2 + $0x18] sm:$0xff]
    %v4338 = vld [vmem:[#allocation2 + $0x20] sm:$0xff]
    %v4339 = vld [vmem:[#allocation2 + $0x28] sm:$0xff]
    %v4340 = vld [vmem:[#allocation2 + $0x30] sm:$0xff]
    %v4341 = vld [vmem:[#allocation2 + $0x38] sm:$0xff]
    %v4342 = vld [vmem:[#allocation2 + $0x40] sm:$0xff]
    %v4343 = vld [vmem:[#allocation2 + $0x48] sm:$0xff]
    %v4344 = vld [vmem:[#allocation2 + $0x50] sm:$0xff]
    %v4345 = vld [vmem:[#allocation2 + $0x58] sm:$0xff]
    %v4346 = vld [vmem:[#allocation2 + $0x60] sm:$0xff]
    %v4347 = vld [vmem:[#allocation2 + $0x68] sm:$0xff]
    %v4348 = vld [vmem:[#allocation2 + $0x70] sm:$0xff]
    %v4349 = vld [vmem:[#allocation2 + $0x78] sm:$0xff]
    %v4350 = vld [vmem:[#allocation2 + $0x80] sm:$0xff]
    %v4351 = vld [vmem:[#allocation2 + $0x88] sm:$0xff]
    %v4352 = vld [vmem:[#allocation2 + $0x90] sm:$0xff]
    %v4353 = vld [vmem:[#allocation2 + $0x98] sm:$0xff]
    %v4354 = vld [vmem:[#allocation2 + $0xa0] sm:$0xff]
    %v4355 = vld [vmem:[#allocation2 + $0xa8] sm:$0xff]
    %v4356 = vld [vmem:[#allocation2 + $0xb0] sm:$0xff]
    %v4357 = vld [vmem:[#allocation2 + $0xb8] sm:$0xff]
    %v4358 = vld [vmem:[%s4] sm:$0xff]
    %v4359 = vld [vmem:[%s4 + $0x8] sm:$0x3]
    %4361 = vset.pattern.permute.xlu0 0
    %4362 = vperm.xlu0 %4361, %v4358
    %v4363 = vpop.permute.xlu0 %4362
    %4366 = vset.pattern.permute.xlu0 0
    %4367 = vperm.xlu0 %4366, %v4359
    %v4368 = vpop.permute.xlu0 %4367
    %vm4370 = vcmask 523264
    %v4372 = vsel %vm4370, %v4331, 0
    %v4375 = vsel %vm4370, %v4333, 0
    %4377 = vmatprep.subr.mxu0 0.0
    %4378 = vmatpush1.msra.mxu0 %v4334
    %4379 = vmatprep.subr.mxu0 0.0
    %4380 = vmatpush1.msra.mxu0 %v4335
    %4381 = vmatprep.subr.mxu0 0.0
    %4382 = vmatpush1.msra.mxu0 %v4336
    %4383 = vmatprep.subr.mxu0 0.0
    %4384 = vmatpush1.msra.mxu0 %v4337
    %4385 = vmatprep.subr.mxu0 0.0
    %4386 = vmatpush1.msra.mxu0 %v4338
    %4387 = vmatprep.subr.mxu0 0.0
    %4388 = vmatpush1.msra.mxu0 %v4339
    %4389 = vmatprep.subr.mxu0 0.0
    %4390 = vmatpush1.msra.mxu0 %v4340
    %4391 = vmatprep.subr.mxu0 0.0
    %4392 = vmatpush1.msra.mxu0 %v4341
    %4393 = vmatprep.subr.mxu0 0.0
    %4394 = vmatpush1.msra.mxu0 %v4342
    %4395 = vmatprep.subr.mxu0 0.0
    %4396 = vmatpush1.msra.mxu0 %v4343
    %4397 = vmatprep.subr.mxu0 0.0
    %4398 = vmatpush1.msra.mxu0 %v4344
    %4399 = vmatprep.subr.mxu0 0.0
    %4400 = vmatpush1.msra.mxu0 %v4345
    %4401 = vmatprep.subr.mxu0 0.0
    %4402 = vmatpush1.msra.mxu0 %v4346
    %4403 = vmatprep.subr.mxu0 0.0
    %4404 = vmatpush1.msra.mxu0 %v4347
    %4405 = vmatprep.subr.mxu0 0.0
    %4406 = vmatpush1.msra.mxu0 %v4348
    %4407 = vmatprep.subr.mxu0 0.0
    %4408 = vmatpush1.msra.mxu0 %v4349
    %4409 = vmatprep.subr.mxu0 0.0
    %4410 = vmatpush1.msra.mxu0 %v4350
    %4411 = vmatprep.subr.mxu0 0.0
    %4412 = vmatpush1.msra.mxu0 %v4351
    %4413 = vmatprep.subr.mxu0 0.0
    %4414 = vmatpush1.msra.mxu0 %v4352
    %4415 = vmatprep.subr.mxu0 0.0
    %4416 = vmatpush1.msra.mxu0 %v4353
    %4417 = vmatprep.subr.mxu0 0.0
    %4418 = vmatpush1.msra.mxu0 %v4354
    %4419 = vmatprep.subr.mxu0 0.0
    %4420 = vmatpush1.msra.mxu0 %v4355
    %4421 = vmatprep.subr.mxu0 0.0
    %4422 = vmatpush1.msra.mxu0 %v4356
    %4423 = vmatprep.subr.mxu0 0.0
    %4424 = vmatpush1.msra.mxu0 %v4357
    %4425 = vmatprep.subr.mxu0 0.0
    %4426 = vmatpush1.msra.mxu0 0.0
    %4427 = vmatprep.subr.mxu0 0.0
    %4428 = vmatpush1.msra.mxu0 0.0
    %4429 = vmatprep.subr.mxu0 0.0
    %4430 = vmatpush1.msra.mxu0 0.0
    %4431 = vmatprep.subr.mxu0 0.0
    %4432 = vmatpush1.msra.mxu0 0.0
    %4433 = vmatprep.subr.mxu0 0.0
    %4434 = vmatpush1.msra.mxu0 0.0
    %4435 = vmatprep.subr.mxu0 0.0
    %4436 = vmatpush1.msra.mxu0 0.0
    %4437 = vmatprep.subr.mxu0 0.0
    %4438 = vmatpush1.msra.mxu0 0.0
    %4439 = vmatprep.subr.mxu0 0.0
    %4440 = vmatpush1.msra.mxu0 0.0
    %4441 = vmatprep.mubr.f32.mxu0 %v4372
    %4442 = vmatmul.mubr.f32.gmra.mrb[0].mxu0 %v4330
    %v4443 = vpop.f32.mrb[0].mxu0
    %v4444 = vadd.f32 %v4363, %v4443
    %v4445 = vpop.f32.mrb[0].mxu0
    %4446 = vmatprep.mubr.f32.mxu0 %v4375
    %4447 = vmatmul.mubr.f32.gmra.mrb[0].mxu0 %v4332
    %v4448 = vpop.f32.mrb[0].mxu0
    %v4449 = vadd.f32 %v4368, %v4448
    %v4450 = vpop.f32.mrb[0].mxu0
    %4451 = vdwg.mxu0
    %vm4452 = vcmask 1041408
    %v4453 = vsel %vm4452, %v4449, -inf
    %v4454 = vmax.f32 %v4444, %v4453
    %v4455 = vrot.slane %v4454, 4
    %v4456 = vmax.f32 %v4454, %v4455
    %v4457 = vrot.slane %v4456, 2
    %v4458 = vmax.f32 %v4456, %v4457
    %v4459 = vrot.slane %v4458, 1
    %v4460 = vmax.f32 %v4458, %v4459
    %v4461 = vsub.f32 %v4444, %v4460
    %v4462 = vsub.f32 %v4449, %v4460
    %v4463 = vmul.f32 %v4461, 1.442695
    %v4464 = vpow.pop %v4463
    %v4465 = vmul.f32 %v4462, 1.442695
    %v4466 = vpow.pop %v4465
    %v4467 = vsel %vm4452, %v4466, 0.0
    %v4468 = vadd.f32 %v4464, %v4467
    %v4469 = vrot.slane %v4468, 4
    %v4470 = vadd.f32 %v4468, %v4469
    %v4471 = vrot.slane %v4470, 2
    %v4472 = vadd.f32 %v4470, %v4471
    %v4473 = vrot.slane %v4472, 1
    %v4474 = vadd.f32 %v4472, %v4473
    %v4475 = vlog2.pop %v4474
    %v4476 = vmul.f32 %v4475, 0.6931472
    %v4477 = vsub.f32 %v4461, %v4476
    %v4478 = vsub.f32 %v4462, %v4476
    %4479 = vst [vmem:[%s5] sm:$0xff] %v4477
    %4480 = vst [vmem:[%s5 + $0x8] sm:$0x3] %v4478
    // Predicated region
    $region30: #{_convnet_forward_impl.1} parent=1 // pred_check
      _
    $region31: #{_convnet_forward_impl.1} parent=1 // pred_check_branch
      %4482 = sbr.rel (0) target = $region33
    $region32: #{_convnet_forward_impl.1} parent=1 // pred_region
      _
    $region33: #{_convnet_forward_impl.1} parent=1 // pred_fallthru
      _
    // Predicated region
    $region34: #{_convnet_forward_impl.1} parent=1 // pred_check
      _
    $region35: #{_convnet_forward_impl.1} parent=1 // pred_check_branch
      %4484 = sbr.rel (0) target = $region37
    $region36: #{_convnet_forward_impl.1} parent=1 // pred_region
      _
    $region37: #{_convnet_forward_impl.1} parent=1 // pred_fallthru
      _
    %4485 = vsyncpa [#allocation4], 1
    %4486 = vsyncpa [#allocation6], 1

</llo_original>
